<compile_context>
chip_gen: v5e
topology: v5e:2x2
jax: 0.10.0
libtpu: 0.0.40
codegen_flags: <defaults>
</compile_context>

<pallas_src>
import functools

import jax
import jax.numpy as jnp
from jax.experimental import pallas as pl
from jax.experimental.pallas import tpu as pltpu


def _round_up(x, m):
    return (x + m - 1) // m * m


_VMEM_LIMIT = 32 * 1024 * 1024  # well within v5e/v6e/v7x budgets; blocks are tiny


# ---------------------------------------------------------------------------
# Convolution (valid, stride 1) + bias + ReLU.
#
# The wrapper folds the KW taps into the channel/lane dim (5x, cheap, in XLA):
#   xk[b, h*OWp + w', kw*IC + ic] = x[b, ic, h, w' + kw]     (0 for w' >= OW)
# so the kernel only has to accumulate over the KH row taps, each of which is
# a single aligned sublane slice + one MXU matmul:
#   acc += xk[(oh+kh)*OWp + w', :] @ wk[kh]      (wk[kh] : (KW*IC, OC))
# ---------------------------------------------------------------------------
def _conv_kernel(xk_ref, wk_ref, b_ref, o_ref, acc_ref, *, kh_taps, owp, out_rows):
    # xk_ref : (1, H*OWp, KW*IC)  bf16
    # wk_ref : (KH, KW*IC, OC)    bf16   (VMEM resident across the grid)
    # b_ref  : (1, OC)            f32
    # o_ref  : (1, OH*OWp, OC)    f32
    # acc_ref: (OH*OWp, OC)       f32 scratch accumulator
    acc_ref[...] = jnp.dot(
        xk_ref[0, 0:out_rows, :], wk_ref[0], preferred_element_type=jnp.float32
    )
    for kh in range(1, kh_taps):
        lhs = xk_ref[0, kh * owp : kh * owp + out_rows, :]
        acc_ref[...] += jnp.dot(lhs, wk_ref[kh], preferred_element_type=jnp.float32)
    o_ref[0] = jnp.maximum(acc_ref[...] + b_ref[...], 0.0).astype(o_ref.dtype)


def conv2d_bias_relu(x_nchw, w, b):
    """x: (B, IC, H, W) f32, w: (KH, KW, IC, OC) f32, b: (OC,) f32 -> (B, OC, OH, OW)."""
    B, IC, H, W = x_nchw.shape
    KH, KW, _, OC = w.shape
    OH, OW = H - KH + 1, W - KW + 1
    OWp = _round_up(OW, 8)                      # sublane-aligned row stride
    out_rows = OH * OWp

    # ---- XLA glue: fold the KW taps into the lane dim (5x, not 25x im2col) ----
    cols = []
    for kw in range(KW):
        sl = x_nchw[:, :, :, kw:kw + OW]                              # (B, IC, H, OW)
        sl = jnp.pad(sl, ((0, 0), (0, 0), (0, 0), (0, OWp - OW)))     # (B, IC, H, OWp)
        cols.append(sl)
    xk = jnp.stack(cols, axis=1)                                      # (B, KW, IC, H, OWp)
    xk = xk.transpose(0, 3, 4, 1, 2).reshape(B, H * OWp, KW * IC)
    xk = xk.astype(jnp.bfloat16)

    wk = w.reshape(KH, KW * IC, OC).astype(jnp.bfloat16)              # row = kw*IC + ic
    bias = b.reshape(1, OC).astype(jnp.float32)

    kernel = functools.partial(_conv_kernel, kh_taps=KH, owp=OWp, out_rows=out_rows)
    out = pl.pallas_call(
        kernel,
        out_shape=jax.ShapeDtypeStruct((B, out_rows, OC), jnp.float32),
        grid=(B,),
        in_specs=[
            pl.BlockSpec((1, H * OWp, KW * IC), lambda i: (i, 0, 0)),
            pl.BlockSpec((KH, KW * IC, OC), lambda i: (0, 0, 0)),
            pl.BlockSpec((1, OC), lambda i: (0, 0)),
        ],
        out_specs=pl.BlockSpec((1, out_rows, OC), lambda i: (i, 0, 0)),
        scratch_shapes=[pltpu.VMEM((out_rows, OC), jnp.float32)],
        compiler_params=pltpu.CompilerParams(
            dimension_semantics=("parallel",),
            vmem_limit_bytes=_VMEM_LIMIT,
        ),
    )(xk, wk, bias)

    # back to NCHW, drop the OWp padding columns (exact-size output, no 128-pad)
    out = out.reshape(B, OH, OWp, OC).transpose(0, 3, 1, 2)[:, :, :, :OW]
    return out


# ---------------------------------------------------------------------------
# 2x2 / stride-2 max pool (floor mode) as plain jnp, per review guidance.
# ---------------------------------------------------------------------------
def maxpool2x2_nchw(x):
    B, C, H, W = x.shape
    return x.reshape(B, C, H // 2, 2, W // 2, 2).max(axis=(3, 5))


# ---------------------------------------------------------------------------
# Fused fc1 -> fc2 -> fc3 (all weights VMEM-resident, intermediates never hit HBM)
# ---------------------------------------------------------------------------
def _fc_fused_kernel(x_ref, w1_ref, b1_ref, w2_ref, b2_ref, w3_ref, b3_ref, o_ref):
    h = jnp.dot(x_ref[...], w1_ref[...], preferred_element_type=jnp.float32) + b1_ref[...]
    h = jnp.maximum(h, 0.0).astype(jnp.bfloat16)
    h = jnp.dot(h, w2_ref[...], preferred_element_type=jnp.float32) + b2_ref[...]
    h = jnp.maximum(h, 0.0).astype(jnp.bfloat16)
    h = jnp.dot(h, w3_ref[...], preferred_element_type=jnp.float32) + b3_ref[...]
    # The reference module applies ReLU after fc3 as well.
    o_ref[...] = jnp.maximum(h, 0.0).astype(o_ref.dtype)


def fc_stack(x, params):
    """x: (B, 800) f32 -> (B, 10) f32, fused fc1/fc2/fc3 with ReLUs."""
    B, K = x.shape
    TM = min(256, _round_up(B, 8))
    Bp = _round_up(B, TM)
    xp = jnp.zeros((Bp, K), jnp.bfloat16).at[:B].set(x.astype(jnp.bfloat16))

    w1 = params["fc1_w"].astype(jnp.bfloat16)
    w2 = params["fc2_w"].astype(jnp.bfloat16)
    w3 = params["fc3_w"].astype(jnp.bfloat16)
    b1 = params["fc1_b"].reshape(1, -1).astype(jnp.float32)
    b2 = params["fc2_b"].reshape(1, -1).astype(jnp.float32)
    b3 = params["fc3_b"].reshape(1, -1).astype(jnp.float32)
    N1, N2, N3 = w1.shape[1], w2.shape[1], w3.shape[1]

    out = pl.pallas_call(
        _fc_fused_kernel,
        out_shape=jax.ShapeDtypeStruct((Bp, N3), jnp.float32),
        grid=(Bp // TM,),
        in_specs=[
            pl.BlockSpec((TM, K), lambda i: (i, 0)),
            pl.BlockSpec((K, N1), lambda i: (0, 0)),
            pl.BlockSpec((1, N1), lambda i: (0, 0)),
            pl.BlockSpec((N1, N2), lambda i: (0, 0)),
            pl.BlockSpec((1, N2), lambda i: (0, 0)),
            pl.BlockSpec((N2, N3), lambda i: (0, 0)),
            pl.BlockSpec((1, N3), lambda i: (0, 0)),
        ],
        out_specs=pl.BlockSpec((TM, N3), lambda i: (i, 0)),
        compiler_params=pltpu.CompilerParams(
            dimension_semantics=("parallel",),
            vmem_limit_bytes=_VMEM_LIMIT,
        ),
    )(xp, w1, b1, w2, b2, w3, b3)
    return out[:B]


# ---------------------------------------------------------------------------
# Parameters (deterministic, PyTorch default-style uniform init)
# ---------------------------------------------------------------------------
def init_params(key):
    ks = jax.random.split(key, 10)

    def uinit(k, shape, fan_in):
        bound = 1.0 / (fan_in ** 0.5)
        return jax.random.uniform(k, shape, jnp.float32, -bound, bound)

    return {
        "conv1_w": uinit(ks[0], (5, 5, 3, 16), 3 * 5 * 5),
        "conv1_b": uinit(ks[1], (16,), 3 * 5 * 5),
        "conv2_w": uinit(ks[2], (5, 5, 16, 32), 16 * 5 * 5),
        "conv2_b": uinit(ks[3], (32,), 16 * 5 * 5),
        "fc1_w": uinit(ks[4], (32 * 5 * 5, 120), 32 * 5 * 5),
        "fc1_b": uinit(ks[5], (120,), 32 * 5 * 5),
        "fc2_w": uinit(ks[6], (120, 84), 120),
        "fc2_b": uinit(ks[7], (84,), 120),
        "fc3_w": uinit(ks[8], (84, 10), 84),
        "fc3_b": uinit(ks[9], (10,), 84),
    }


# ---------------------------------------------------------------------------
# Full LeNet forward (NCHW in, like PyTorch)
# ---------------------------------------------------------------------------
def lenet_forward(params, x_nchw):
    x = conv2d_bias_relu(x_nchw, params["conv1_w"], params["conv1_b"])   # (B,16,28,28)
    x = maxpool2x2_nchw(x)                                               # (B,16,14,14)
    x = conv2d_bias_relu(x, params["conv2_w"], params["conv2_b"])        # (B,32,10,10)
    x = maxpool2x2_nchw(x)                                               # (B,32,5,5)
    x = x.reshape(x.shape[0], 32 * 5 * 5)   # NCHW flatten == torch .view(-1, 800)
    return fc_stack(x, params)                                           # (B,10)


if __name__ == "__main__":
    key = jax.random.PRNGKey(0)
    pkey, xkey = jax.random.split(key)
    params = init_params(pkey)
    # LeNet geometry (fc1 = 32*5*5) implies a 32x32 RGB input.
    x = jax.random.normal(xkey, (2, 3, 32, 32), jnp.float32)             # NCHW like PyTorch
    out = jax.jit(lenet_forward)(params, x)
    out = jax.block_until_ready(out)
    assert out.shape == (2, 10)
    print("KERNEL_OK")
</pallas_src>

<mosaic_0001>
module attributes {stable_mosaic.version = 11 : i64} {
  func.func @_conv_kernel(%arg0: i32, %arg1: memref<1x1024x15xbf16, #tpu.memory_space<vmem>>, %arg2: memref<5x15x16xbf16, #tpu.memory_space<vmem>>, %arg3: memref<1x16xf32, #tpu.memory_space<vmem>>, %arg4: memref<1x896x16xf32, #tpu.memory_space<vmem>>, %arg5: memref<896x16xf32, #tpu.memory_space<vmem>>) attributes {dimension_semantics = [#tpu.dimension_semantics<parallel>], iteration_bounds = array<i64: 2>, scalar_prefetch = 0 : i64, scratch_operands = 1 : i64, tpu.core_type = #tpu.core_type<tc>, window_params = [{transform_indices = @transform_0, window_bounds = array<i64: 1, 1024, 15>}, {pipeline_mode = #tpu.pipeline_mode<synchronous>, transform_indices = @transform_1, window_bounds = array<i64: 5, 15, 16>}, {pipeline_mode = #tpu.pipeline_mode<synchronous>, transform_indices = @transform_2, window_bounds = array<i64: 1, 16>}, {transform_indices = @transform_3, window_bounds = array<i64: 1, 896, 16>}]} {
    %c0 = arith.constant 0 : index
    %c0_0 = arith.constant 0 : index
    %c0_1 = arith.constant 0 : index
    %0 = vector.load %arg1[%c0, %c0_0, %c0_1] : memref<1x1024x15xbf16, #tpu.memory_space<vmem>>, vector<1x896x15xbf16>
    %1 = vector.shape_cast %0 : vector<1x896x15xbf16> to vector<896x15xbf16>
    %c0_2 = arith.constant 0 : index
    %c0_3 = arith.constant 0 : index
    %c0_4 = arith.constant 0 : index
    %2 = vector.load %arg2[%c0_2, %c0_3, %c0_4] : memref<5x15x16xbf16, #tpu.memory_space<vmem>>, vector<1x15x16xbf16>
    %3 = vector.shape_cast %2 : vector<1x15x16xbf16> to vector<15x16xbf16>
    %cst = arith.constant dense<0.000000e+00> : vector<896x16xf32>
    %4 = tpu.matmul %1, %3, %cst {dimension_numbers = #tpu.dot_dimension_numbers<[1], [0], [0], [1], [0, 0, 1, 1], [], []>} : vector<896x15xbf16>, vector<15x16xbf16>, vector<896x16xf32> -> vector<896x16xf32>
    %c0_5 = arith.constant 0 : index
    %c0_6 = arith.constant 0 : index
    %5 = vector.load %arg5[%c0_5, %c0_6] : memref<896x16xf32, #tpu.memory_space<vmem>>, vector<896x16xf32>
    tpu.vector_store %arg5[%c0_5, %c0_6], %4 {strides = array<i32>} : memref<896x16xf32, #tpu.memory_space<vmem>>, vector<896x16xf32>,
    %c0_7 = arith.constant 0 : index
    %c32 = arith.constant 32 : index
    %c0_8 = arith.constant 0 : index
    %6 = vector.load %arg1[%c0_7, %c32, %c0_8] : memref<1x1024x15xbf16, #tpu.memory_space<vmem>>, vector<1x896x15xbf16>
    %7 = vector.shape_cast %6 : vector<1x896x15xbf16> to vector<896x15xbf16>
    %c0_9 = arith.constant 0 : index
    %c0_10 = arith.constant 0 : index
    %8 = vector.load %arg5[%c0_9, %c0_10] : memref<896x16xf32, #tpu.memory_space<vmem>>, vector<896x16xf32>
    %c1 = arith.constant 1 : index
    %c0_11 = arith.constant 0 : index
    %c0_12 = arith.constant 0 : index
    %9 = vector.load %arg2[%c1, %c0_11, %c0_12] : memref<5x15x16xbf16, #tpu.memory_space<vmem>>, vector<1x15x16xbf16>
    %10 = vector.shape_cast %9 : vector<1x15x16xbf16> to vector<15x16xbf16>
    %cst_13 = arith.constant dense<0.000000e+00> : vector<896x16xf32>
    %11 = tpu.matmul %7, %10, %cst_13 {dimension_numbers = #tpu.dot_dimension_numbers<[1], [0], [0], [1], [0, 0, 1, 1], [], []>} : vector<896x15xbf16>, vector<15x16xbf16>, vector<896x16xf32> -> vector<896x16xf32>
    %12 = arith.addf %8, %11 : vector<896x16xf32>
    %c0_14 = arith.constant 0 : index
    %c0_15 = arith.constant 0 : index
    %13 = vector.load %arg5[%c0_14, %c0_15] : memref<896x16xf32, #tpu.memory_space<vmem>>, vector<896x16xf32>
    tpu.vector_store %arg5[%c0_14, %c0_15], %12 {strides = array<i32>} : memref<896x16xf32, #tpu.memory_space<vmem>>, vector<896x16xf32>,
    %c0_16 = arith.constant 0 : index
    %c64 = arith.constant 64 : index
    %c0_17 = arith.constant 0 : index
    %14 = vector.load %arg1[%c0_16, %c64, %c0_17] : memref<1x1024x15xbf16, #tpu.memory_space<vmem>>, vector<1x896x15xbf16>
    %15 = vector.shape_cast %14 : vector<1x896x15xbf16> to vector<896x15xbf16>
    %c0_18 = arith.constant 0 : index
    %c0_19 = arith.constant 0 : index
    %16 = vector.load %arg5[%c0_18, %c0_19] : memref<896x16xf32, #tpu.memory_space<vmem>>, vector<896x16xf32>
    %c2 = arith.constant 2 : index
    %c0_20 = arith.constant 0 : index
    %c0_21 = arith.constant 0 : index
    %17 = vector.load %arg2[%c2, %c0_20, %c0_21] : memref<5x15x16xbf16, #tpu.memory_space<vmem>>, vector<1x15x16xbf16>
    %18 = vector.shape_cast %17 : vector<1x15x16xbf16> to vector<15x16xbf16>
    %cst_22 = arith.constant dense<0.000000e+00> : vector<896x16xf32>
    %19 = tpu.matmul %15, %18, %cst_22 {dimension_numbers = #tpu.dot_dimension_numbers<[1], [0], [0], [1], [0, 0, 1, 1], [], []>} : vector<896x15xbf16>, vector<15x16xbf16>, vector<896x16xf32> -> vector<896x16xf32>
    %20 = arith.addf %16, %19 : vector<896x16xf32>
    %c0_23 = arith.constant 0 : index
    %c0_24 = arith.constant 0 : index
    %21 = vector.load %arg5[%c0_23, %c0_24] : memref<896x16xf32, #tpu.memory_space<vmem>>, vector<896x16xf32>
    tpu.vector_store %arg5[%c0_23, %c0_24], %20 {strides = array<i32>} : memref<896x16xf32, #tpu.memory_space<vmem>>, vector<896x16xf32>,
    %c0_25 = arith.constant 0 : index
    %c96 = arith.constant 96 : index
    %c0_26 = arith.constant 0 : index
    %22 = vector.load %arg1[%c0_25, %c96, %c0_26] : memref<1x1024x15xbf16, #tpu.memory_space<vmem>>, vector<1x896x15xbf16>
    %23 = vector.shape_cast %22 : vector<1x896x15xbf16> to vector<896x15xbf16>
    %c0_27 = arith.constant 0 : index
    %c0_28 = arith.constant 0 : index
    %24 = vector.load %arg5[%c0_27, %c0_28] : memref<896x16xf32, #tpu.memory_space<vmem>>, vector<896x16xf32>
    %c3 = arith.constant 3 : index
    %c0_29 = arith.constant 0 : index
    %c0_30 = arith.constant 0 : index
    %25 = vector.load %arg2[%c3, %c0_29, %c0_30] : memref<5x15x16xbf16, #tpu.memory_space<vmem>>, vector<1x15x16xbf16>
    %26 = vector.shape_cast %25 : vector<1x15x16xbf16> to vector<15x16xbf16>
    %cst_31 = arith.constant dense<0.000000e+00> : vector<896x16xf32>
    %27 = tpu.matmul %23, %26, %cst_31 {dimension_numbers = #tpu.dot_dimension_numbers<[1], [0], [0], [1], [0, 0, 1, 1], [], []>} : vector<896x15xbf16>, vector<15x16xbf16>, vector<896x16xf32> -> vector<896x16xf32>
    %28 = arith.addf %24, %27 : vector<896x16xf32>
    %c0_32 = arith.constant 0 : index
    %c0_33 = arith.constant 0 : index
    %29 = vector.load %arg5[%c0_32, %c0_33] : memref<896x16xf32, #tpu.memory_space<vmem>>, vector<896x16xf32>
    tpu.vector_store %arg5[%c0_32, %c0_33], %28 {strides = array<i32>} : memref<896x16xf32, #tpu.memory_space<vmem>>, vector<896x16xf32>,
    %c0_34 = arith.constant 0 : index
    %c128 = arith.constant 128 : index
    %c0_35 = arith.constant 0 : index
    %30 = vector.load %arg1[%c0_34, %c128, %c0_35] : memref<1x1024x15xbf16, #tpu.memory_space<vmem>>, vector<1x896x15xbf16>
    %31 = vector.shape_cast %30 : vector<1x896x15xbf16> to vector<896x15xbf16>
    %c0_36 = arith.constant 0 : index
    %c0_37 = arith.constant 0 : index
    %32 = vector.load %arg5[%c0_36, %c0_37] : memref<896x16xf32, #tpu.memory_space<vmem>>, vector<896x16xf32>
    %c4 = arith.constant 4 : index
    %c0_38 = arith.constant 0 : index
    %c0_39 = arith.constant 0 : index
    %33 = vector.load %arg2[%c4, %c0_38, %c0_39] : memref<5x15x16xbf16, #tpu.memory_space<vmem>>, vector<1x15x16xbf16>
    %34 = vector.shape_cast %33 : vector<1x15x16xbf16> to vector<15x16xbf16>
    %cst_40 = arith.constant dense<0.000000e+00> : vector<896x16xf32>
    %35 = tpu.matmul %31, %34, %cst_40 {dimension_numbers = #tpu.dot_dimension_numbers<[1], [0], [0], [1], [0, 0, 1, 1], [], []>} : vector<896x15xbf16>, vector<15x16xbf16>, vector<896x16xf32> -> vector<896x16xf32>
    %36 = arith.addf %32, %35 : vector<896x16xf32>
    %c0_41 = arith.constant 0 : index
    %c0_42 = arith.constant 0 : index
    %37 = vector.load %arg5[%c0_41, %c0_42] : memref<896x16xf32, #tpu.memory_space<vmem>>, vector<896x16xf32>
    tpu.vector_store %arg5[%c0_41, %c0_42], %36 {strides = array<i32>} : memref<896x16xf32, #tpu.memory_space<vmem>>, vector<896x16xf32>,
    %c0_43 = arith.constant 0 : index
    %c0_44 = arith.constant 0 : index
    %38 = vector.load %arg5[%c0_43, %c0_44] : memref<896x16xf32, #tpu.memory_space<vmem>>, vector<896x16xf32>
    %c0_45 = arith.constant 0 : index
    %c0_46 = arith.constant 0 : index
    %39 = vector.load %arg3[%c0_45, %c0_46] : memref<1x16xf32, #tpu.memory_space<vmem>>, vector<1x16xf32>
    %40 = vector.broadcast %39 : vector<1x16xf32> to vector<896x16xf32>
    %41 = arith.addf %38, %40 : vector<896x16xf32>
    %cst_47 = arith.constant 0.000000e+00 : f32
    %42 = vector.broadcast %cst_47 : f32 to vector<896x16xf32>
    %43 = arith.maximumf %41, %42 : vector<896x16xf32>
    %c0_48 = arith.constant 0 : index
    %c0_49 = arith.constant 0 : index
    %c0_50 = arith.constant 0 : index
    %44 = vector.load %arg4[%c0_48, %c0_49, %c0_50] : memref<1x896x16xf32, #tpu.memory_space<vmem>>, vector<1x896x16xf32>
    %45 = vector.shape_cast %44 : vector<1x896x16xf32> to vector<896x16xf32>
    %46 = vector.shape_cast %43 : vector<896x16xf32> to vector<1x896x16xf32>
    tpu.vector_store %arg4[%c0_48, %c0_49, %c0_50], %46 {strides = array<i32>} : memref<1x896x16xf32, #tpu.memory_space<vmem>>, vector<1x896x16xf32>,
    return
  }
  func.func @transform_0(%arg0: i32) -> (i32, i32, i32) {
    %c0_i32 = arith.constant 0 : i32
    %c0_i32_0 = arith.constant 0 : i32
    %c0_i32_1 = arith.constant 0 : i32
    return %arg0, %c0_i32, %c0_i32_0 : i32, i32, i32
  }
  func.func @transform_1(%arg0: i32) -> (i32, i32, i32) {
    %c0_i32 = arith.constant 0 : i32
    %c0_i32_0 = arith.constant 0 : i32
    %c0_i32_1 = arith.constant 0 : i32
    %c0_i32_2 = arith.constant 0 : i32
    return %c0_i32, %c0_i32_0, %c0_i32_1 : i32, i32, i32
  }
  func.func @transform_2(%arg0: i32) -> (i32, i32) {
    %c0_i32 = arith.constant 0 : i32
    %c0_i32_0 = arith.constant 0 : i32
    %c0_i32_1 = arith.constant 0 : i32
    return %c0_i32, %c0_i32_0 : i32, i32
  }
  func.func @transform_3(%arg0: i32) -> (i32, i32, i32) {
    %c0_i32 = arith.constant 0 : i32
    %c0_i32_0 = arith.constant 0 : i32
    %c0_i32_1 = arith.constant 0 : i32
    return %arg0, %c0_i32, %c0_i32_0 : i32, i32, i32
  }
}

module attributes {stable_mosaic.version = 11 : i64} {
  func.func @_conv_kernel(%arg0: i32, %arg1: memref<1x224x80xbf16, #tpu.memory_space<vmem>>, %arg2: memref<5x80x32xbf16, #tpu.memory_space<vmem>>, %arg3: memref<1x32xf32, #tpu.memory_space<vmem>>, %arg4: memref<1x160x32xf32, #tpu.memory_space<vmem>>, %arg5: memref<160x32xf32, #tpu.memory_space<vmem>>) attributes {dimension_semantics = [#tpu.dimension_semantics<parallel>], iteration_bounds = array<i64: 2>, scalar_prefetch = 0 : i64, scratch_operands = 1 : i64, tpu.core_type = #tpu.core_type<tc>, window_params = [{transform_indices = @transform_0, window_bounds = array<i64: 1, 224, 80>}, {pipeline_mode = #tpu.pipeline_mode<synchronous>, transform_indices = @transform_1, window_bounds = array<i64: 5, 80, 32>}, {pipeline_mode = #tpu.pipeline_mode<synchronous>, transform_indices = @transform_2, window_bounds = array<i64: 1, 32>}, {transform_indices = @transform_3, window_bounds = array<i64: 1, 160, 32>}]} {
    %c0 = arith.constant 0 : index
    %c0_0 = arith.constant 0 : index
    %c0_1 = arith.constant 0 : index
    %0 = vector.load %arg1[%c0, %c0_0, %c0_1] : memref<1x224x80xbf16, #tpu.memory_space<vmem>>, vector<1x160x80xbf16>
    %1 = vector.shape_cast %0 : vector<1x160x80xbf16> to vector<160x80xbf16>
    %c0_2 = arith.constant 0 : index
    %c0_3 = arith.constant 0 : index
    %c0_4 = arith.constant 0 : index
    %2 = vector.load %arg2[%c0_2, %c0_3, %c0_4] : memref<5x80x32xbf16, #tpu.memory_space<vmem>>, vector<1x80x32xbf16>
    %3 = vector.shape_cast %2 : vector<1x80x32xbf16> to vector<80x32xbf16>
    %cst = arith.constant dense<0.000000e+00> : vector<160x32xf32>
    %4 = tpu.matmul %1, %3, %cst {dimension_numbers = #tpu.dot_dimension_numbers<[1], [0], [0], [1], [0, 0, 1, 1], [], []>} : vector<160x80xbf16>, vector<80x32xbf16>, vector<160x32xf32> -> vector<160x32xf32>
    %c0_5 = arith.constant 0 : index
    %c0_6 = arith.constant 0 : index
    %5 = vector.load %arg5[%c0_5, %c0_6] : memref<160x32xf32, #tpu.memory_space<vmem>>, vector<160x32xf32>
    tpu.vector_store %arg5[%c0_5, %c0_6], %4 {strides = array<i32>} : memref<160x32xf32, #tpu.memory_space<vmem>>, vector<160x32xf32>,
    %c0_7 = arith.constant 0 : index
    %c16 = arith.constant 16 : index
    %c0_8 = arith.constant 0 : index
    %6 = vector.load %arg1[%c0_7, %c16, %c0_8] : memref<1x224x80xbf16, #tpu.memory_space<vmem>>, vector<1x160x80xbf16>
    %7 = vector.shape_cast %6 : vector<1x160x80xbf16> to vector<160x80xbf16>
    %c0_9 = arith.constant 0 : index
    %c0_10 = arith.constant 0 : index
    %8 = vector.load %arg5[%c0_9, %c0_10] : memref<160x32xf32, #tpu.memory_space<vmem>>, vector<160x32xf32>
    %c1 = arith.constant 1 : index
    %c0_11 = arith.constant 0 : index
    %c0_12 = arith.constant 0 : index
    %9 = vector.load %arg2[%c1, %c0_11, %c0_12] : memref<5x80x32xbf16, #tpu.memory_space<vmem>>, vector<1x80x32xbf16>
    %10 = vector.shape_cast %9 : vector<1x80x32xbf16> to vector<80x32xbf16>
    %cst_13 = arith.constant dense<0.000000e+00> : vector<160x32xf32>
    %11 = tpu.matmul %7, %10, %cst_13 {dimension_numbers = #tpu.dot_dimension_numbers<[1], [0], [0], [1], [0, 0, 1, 1], [], []>} : vector<160x80xbf16>, vector<80x32xbf16>, vector<160x32xf32> -> vector<160x32xf32>
    %12 = arith.addf %8, %11 : vector<160x32xf32>
    %c0_14 = arith.constant 0 : index
    %c0_15 = arith.constant 0 : index
    %13 = vector.load %arg5[%c0_14, %c0_15] : memref<160x32xf32, #tpu.memory_space<vmem>>, vector<160x32xf32>
    tpu.vector_store %arg5[%c0_14, %c0_15], %12 {strides = array<i32>} : memref<160x32xf32, #tpu.memory_space<vmem>>, vector<160x32xf32>,
    %c0_16 = arith.constant 0 : index
    %c32 = arith.constant 32 : index
    %c0_17 = arith.constant 0 : index
    %14 = vector.load %arg1[%c0_16, %c32, %c0_17] : memref<1x224x80xbf16, #tpu.memory_space<vmem>>, vector<1x160x80xbf16>
    %15 = vector.shape_cast %14 : vector<1x160x80xbf16> to vector<160x80xbf16>
    %c0_18 = arith.constant 0 : index
    %c0_19 = arith.constant 0 : index
    %16 = vector.load %arg5[%c0_18, %c0_19] : memref<160x32xf32, #tpu.memory_space<vmem>>, vector<160x32xf32>
    %c2 = arith.constant 2 : index
    %c0_20 = arith.constant 0 : index
    %c0_21 = arith.constant 0 : index
    %17 = vector.load %arg2[%c2, %c0_20, %c0_21] : memref<5x80x32xbf16, #tpu.memory_space<vmem>>, vector<1x80x32xbf16>
    %18 = vector.shape_cast %17 : vector<1x80x32xbf16> to vector<80x32xbf16>
    %cst_22 = arith.constant dense<0.000000e+00> : vector<160x32xf32>
    %19 = tpu.matmul %15, %18, %cst_22 {dimension_numbers = #tpu.dot_dimension_numbers<[1], [0], [0], [1], [0, 0, 1, 1], [], []>} : vector<160x80xbf16>, vector<80x32xbf16>, vector<160x32xf32> -> vector<160x32xf32>
    %20 = arith.addf %16, %19 : vector<160x32xf32>
    %c0_23 = arith.constant 0 : index
    %c0_24 = arith.constant 0 : index
    %21 = vector.load %arg5[%c0_23, %c0_24] : memref<160x32xf32, #tpu.memory_space<vmem>>, vector<160x32xf32>
    tpu.vector_store %arg5[%c0_23, %c0_24], %20 {strides = array<i32>} : memref<160x32xf32, #tpu.memory_space<vmem>>, vector<160x32xf32>,
    %c0_25 = arith.constant 0 : index
    %c48 = arith.constant 48 : index
    %c0_26 = arith.constant 0 : index
    %22 = vector.load %arg1[%c0_25, %c48, %c0_26] : memref<1x224x80xbf16, #tpu.memory_space<vmem>>, vector<1x160x80xbf16>
    %23 = vector.shape_cast %22 : vector<1x160x80xbf16> to vector<160x80xbf16>
    %c0_27 = arith.constant 0 : index
    %c0_28 = arith.constant 0 : index
    %24 = vector.load %arg5[%c0_27, %c0_28] : memref<160x32xf32, #tpu.memory_space<vmem>>, vector<160x32xf32>
    %c3 = arith.constant 3 : index
    %c0_29 = arith.constant 0 : index
    %c0_30 = arith.constant 0 : index
    %25 = vector.load %arg2[%c3, %c0_29, %c0_30] : memref<5x80x32xbf16, #tpu.memory_space<vmem>>, vector<1x80x32xbf16>
    %26 = vector.shape_cast %25 : vector<1x80x32xbf16> to vector<80x32xbf16>
    %cst_31 = arith.constant dense<0.000000e+00> : vector<160x32xf32>
    %27 = tpu.matmul %23, %26, %cst_31 {dimension_numbers = #tpu.dot_dimension_numbers<[1], [0], [0], [1], [0, 0, 1, 1], [], []>} : vector<160x80xbf16>, vector<80x32xbf16>, vector<160x32xf32> -> vector<160x32xf32>
    %28 = arith.addf %24, %27 : vector<160x32xf32>
    %c0_32 = arith.constant 0 : index
    %c0_33 = arith.constant 0 : index
    %29 = vector.load %arg5[%c0_32, %c0_33] : memref<160x32xf32, #tpu.memory_space<vmem>>, vector<160x32xf32>
    tpu.vector_store %arg5[%c0_32, %c0_33], %28 {strides = array<i32>} : memref<160x32xf32, #tpu.memory_space<vmem>>, vector<160x32xf32>,
    %c0_34 = arith.constant 0 : index
    %c64 = arith.constant 64 : index
    %c0_35 = arith.constant 0 : index
    %30 = vector.load %arg1[%c0_34, %c64, %c0_35] : memref<1x224x80xbf16, #tpu.memory_space<vmem>>, vector<1x160x80xbf16>
    %31 = vector.shape_cast %30 : vector<1x160x80xbf16> to vector<160x80xbf16>
    %c0_36 = arith.constant 0 : index
    %c0_37 = arith.constant 0 : index
    %32 = vector.load %arg5[%c0_36, %c0_37] : memref<160x32xf32, #tpu.memory_space<vmem>>, vector<160x32xf32>
    %c4 = arith.constant 4 : index
    %c0_38 = arith.constant 0 : index
    %c0_39 = arith.constant 0 : index
    %33 = vector.load %arg2[%c4, %c0_38, %c0_39] : memref<5x80x32xbf16, #tpu.memory_space<vmem>>, vector<1x80x32xbf16>
    %34 = vector.shape_cast %33 : vector<1x80x32xbf16> to vector<80x32xbf16>
    %cst_40 = arith.constant dense<0.000000e+00> : vector<160x32xf32>
    %35 = tpu.matmul %31, %34, %cst_40 {dimension_numbers = #tpu.dot_dimension_numbers<[1], [0], [0], [1], [0, 0, 1, 1], [], []>} : vector<160x80xbf16>, vector<80x32xbf16>, vector<160x32xf32> -> vector<160x32xf32>
    %36 = arith.addf %32, %35 : vector<160x32xf32>
    %c0_41 = arith.constant 0 : index
    %c0_42 = arith.constant 0 : index
    %37 = vector.load %arg5[%c0_41, %c0_42] : memref<160x32xf32, #tpu.memory_space<vmem>>, vector<160x32xf32>
    tpu.vector_store %arg5[%c0_41, %c0_42], %36 {strides = array<i32>} : memref<160x32xf32, #tpu.memory_space<vmem>>, vector<160x32xf32>,
    %c0_43 = arith.constant 0 : index
    %c0_44 = arith.constant 0 : index
    %38 = vector.load %arg5[%c0_43, %c0_44] : memref<160x32xf32, #tpu.memory_space<vmem>>, vector<160x32xf32>
    %c0_45 = arith.constant 0 : index
    %c0_46 = arith.constant 0 : index
    %39 = vector.load %arg3[%c0_45, %c0_46] : memref<1x32xf32, #tpu.memory_space<vmem>>, vector<1x32xf32>
    %40 = vector.broadcast %39 : vector<1x32xf32> to vector<160x32xf32>
    %41 = arith.addf %38, %40 : vector<160x32xf32>
    %cst_47 = arith.constant 0.000000e+00 : f32
    %42 = vector.broadcast %cst_47 : f32 to vector<160x32xf32>
    %43 = arith.maximumf %41, %42 : vector<160x32xf32>
    %c0_48 = arith.constant 0 : index
    %c0_49 = arith.constant 0 : index
    %c0_50 = arith.constant 0 : index
    %44 = vector.load %arg4[%c0_48, %c0_49, %c0_50] : memref<1x160x32xf32, #tpu.memory_space<vmem>>, vector<1x160x32xf32>
    %45 = vector.shape_cast %44 : vector<1x160x32xf32> to vector<160x32xf32>
    %46 = vector.shape_cast %43 : vector<160x32xf32> to vector<1x160x32xf32>
    tpu.vector_store %arg4[%c0_48, %c0_49, %c0_50], %46 {strides = array<i32>} : memref<1x160x32xf32, #tpu.memory_space<vmem>>, vector<1x160x32xf32>,
    return
  }
  func.func @transform_0(%arg0: i32) -> (i32, i32, i32) {
    %c0_i32 = arith.constant 0 : i32
    %c0_i32_0 = arith.constant 0 : i32
    %c0_i32_1 = arith.constant 0 : i32
    return %arg0, %c0_i32, %c0_i32_0 : i32, i32, i32
  }
  func.func @transform_1(%arg0: i32) -> (i32, i32, i32) {
    %c0_i32 = arith.constant 0 : i32
    %c0_i32_0 = arith.constant 0 : i32
    %c0_i32_1 = arith.constant 0 : i32
    %c0_i32_2 = arith.constant 0 : i32
    return %c0_i32, %c0_i32_0, %c0_i32_1 : i32, i32, i32
  }
  func.func @transform_2(%arg0: i32) -> (i32, i32) {
    %c0_i32 = arith.constant 0 : i32
    %c0_i32_0 = arith.constant 0 : i32
    %c0_i32_1 = arith.constant 0 : i32
    return %c0_i32, %c0_i32_0 : i32, i32
  }
  func.func @transform_3(%arg0: i32) -> (i32, i32, i32) {
    %c0_i32 = arith.constant 0 : i32
    %c0_i32_0 = arith.constant 0 : i32
    %c0_i32_1 = arith.constant 0 : i32
    return %arg0, %c0_i32, %c0_i32_0 : i32, i32, i32
  }
}

module attributes {stable_mosaic.version = 11 : i64} {
  func.func @_fc_fused_kernel(%arg0: i32, %arg1: memref<8x800xbf16, #tpu.memory_space<vmem>>, %arg2: memref<800x120xbf16, #tpu.memory_space<vmem>>, %arg3: memref<1x120xf32, #tpu.memory_space<vmem>>, %arg4: memref<120x84xbf16, #tpu.memory_space<vmem>>, %arg5: memref<1x84xf32, #tpu.memory_space<vmem>>, %arg6: memref<84x10xbf16, #tpu.memory_space<vmem>>, %arg7: memref<1x10xf32, #tpu.memory_space<vmem>>, %arg8: memref<8x10xf32, #tpu.memory_space<vmem>>) attributes {dimension_semantics = [#tpu.dimension_semantics<parallel>], iteration_bounds = array<i64: 1>, scalar_prefetch = 0 : i64, scratch_operands = 0 : i64, tpu.core_type = #tpu.core_type<tc>, window_params = [{transform_indices = @transform_0, window_bounds = array<i64: 8, 800>}, {pipeline_mode = #tpu.pipeline_mode<synchronous>, transform_indices = @transform_1, window_bounds = array<i64: 800, 120>}, {pipeline_mode = #tpu.pipeline_mode<synchronous>, transform_indices = @transform_2, window_bounds = array<i64: 1, 120>}, {pipeline_mode = #tpu.pipeline_mode<synchronous>, transform_indices = @transform_3, window_bounds = array<i64: 120, 84>}, {pipeline_mode = #tpu.pipeline_mode<synchronous>, transform_indices = @transform_4, window_bounds = array<i64: 1, 84>}, {pipeline_mode = #tpu.pipeline_mode<synchronous>, transform_indices = @transform_5, window_bounds = array<i64: 84, 10>}, {pipeline_mode = #tpu.pipeline_mode<synchronous>, transform_indices = @transform_6, window_bounds = array<i64: 1, 10>}, {transform_indices = @transform_7, window_bounds = array<i64: 8, 10>}]} {
    %c0 = arith.constant 0 : index
    %c0_0 = arith.constant 0 : index
    %0 = vector.load %arg1[%c0, %c0_0] : memref<8x800xbf16, #tpu.memory_space<vmem>>, vector<8x800xbf16>
    %c0_1 = arith.constant 0 : index
    %c0_2 = arith.constant 0 : index
    %1 = vector.load %arg2[%c0_1, %c0_2] : memref<800x120xbf16, #tpu.memory_space<vmem>>, vector<800x120xbf16>
    %cst = arith.constant dense<0.000000e+00> : vector<8x120xf32>
    %2 = tpu.matmul %0, %1, %cst {dimension_numbers = #tpu.dot_dimension_numbers<[1], [0], [0], [1], [0, 0, 1, 1], [], []>} : vector<8x800xbf16>, vector<800x120xbf16>, vector<8x120xf32> -> vector<8x120xf32>
    %c0_3 = arith.constant 0 : index
    %c0_4 = arith.constant 0 : index
    %3 = vector.load %arg3[%c0_3, %c0_4] : memref<1x120xf32, #tpu.memory_space<vmem>>, vector<1x120xf32>
    %4 = vector.broadcast %3 : vector<1x120xf32> to vector<8x120xf32>
    %5 = arith.addf %2, %4 : vector<8x120xf32>
    %cst_5 = arith.constant 0.000000e+00 : f32
    %6 = vector.broadcast %cst_5 : f32 to vector<8x120xf32>
    %7 = arith.maximumf %5, %6 : vector<8x120xf32>
    %8 = arith.truncf %7 : vector<8x120xf32> to vector<8x120xbf16>
    %c0_6 = arith.constant 0 : index
    %c0_7 = arith.constant 0 : index
    %9 = vector.load %arg4[%c0_6, %c0_7] : memref<120x84xbf16, #tpu.memory_space<vmem>>, vector<120x84xbf16>
    %cst_8 = arith.constant dense<0.000000e+00> : vector<8x84xf32>
    %10 = tpu.matmul %8, %9, %cst_8 {dimension_numbers = #tpu.dot_dimension_numbers<[1], [0], [0], [1], [0, 0, 1, 1], [], []>} : vector<8x120xbf16>, vector<120x84xbf16>, vector<8x84xf32> -> vector<8x84xf32>
    %c0_9 = arith.constant 0 : index
    %c0_10 = arith.constant 0 : index
    %11 = vector.load %arg5[%c0_9, %c0_10] : memref<1x84xf32, #tpu.memory_space<vmem>>, vector<1x84xf32>
    %12 = vector.broadcast %11 : vector<1x84xf32> to vector<8x84xf32>
    %13 = arith.addf %10, %12 : vector<8x84xf32>
    %cst_11 = arith.constant 0.000000e+00 : f32
    %14 = vector.broadcast %cst_11 : f32 to vector<8x84xf32>
    %15 = arith.maximumf %13, %14 : vector<8x84xf32>
    %16 = arith.truncf %15 : vector<8x84xf32> to vector<8x84xbf16>
    %c0_12 = arith.constant 0 : index
    %c0_13 = arith.constant 0 : index
    %17 = vector.load %arg6[%c0_12, %c0_13] : memref<84x10xbf16, #tpu.memory_space<vmem>>, vector<84x10xbf16>
    %cst_14 = arith.constant dense<0.000000e+00> : vector<8x10xf32>
    %18 = tpu.matmul %16, %17, %cst_14 {dimension_numbers = #tpu.dot_dimension_numbers<[1], [0], [0], [1], [0, 0, 1, 1], [], []>} : vector<8x84xbf16>, vector<84x10xbf16>, vector<8x10xf32> -> vector<8x10xf32>
    %c0_15 = arith.constant 0 : index
    %c0_16 = arith.constant 0 : index
    %19 = vector.load %arg7[%c0_15, %c0_16] : memref<1x10xf32, #tpu.memory_space<vmem>>, vector<1x10xf32>
    %20 = vector.broadcast %19 : vector<1x10xf32> to vector<8x10xf32>
    %21 = arith.addf %18, %20 : vector<8x10xf32>
    %cst_17 = arith.constant 0.000000e+00 : f32
    %22 = vector.broadcast %cst_17 : f32 to vector<8x10xf32>
    %23 = arith.maximumf %21, %22 : vector<8x10xf32>
    %c0_18 = arith.constant 0 : index
    %c0_19 = arith.constant 0 : index
    %24 = vector.load %arg8[%c0_18, %c0_19] : memref<8x10xf32, #tpu.memory_space<vmem>>, vector<8x10xf32>
    tpu.vector_store %arg8[%c0_18, %c0_19], %23 {strides = array<i32>} : memref<8x10xf32, #tpu.memory_space<vmem>>, vector<8x10xf32>,
    return
  }
  func.func @transform_0(%arg0: i32) -> (i32, i32) {
    %c0_i32 = arith.constant 0 : i32
    %c0_i32_0 = arith.constant 0 : i32
    return %arg0, %c0_i32 : i32, i32
  }
  func.func @transform_1(%arg0: i32) -> (i32, i32) {
    %c0_i32 = arith.constant 0 : i32
    %c0_i32_0 = arith.constant 0 : i32
    %c0_i32_1 = arith.constant 0 : i32
    return %c0_i32, %c0_i32_0 : i32, i32
  }
  func.func @transform_2(%arg0: i32) -> (i32, i32) {
    %c0_i32 = arith.constant 0 : i32
    %c0_i32_0 = arith.constant 0 : i32
    %c0_i32_1 = arith.constant 0 : i32
    return %c0_i32, %c0_i32_0 : i32, i32
  }
  func.func @transform_3(%arg0: i32) -> (i32, i32) {
    %c0_i32 = arith.constant 0 : i32
    %c0_i32_0 = arith.constant 0 : i32
    %c0_i32_1 = arith.constant 0 : i32
    return %c0_i32, %c0_i32_0 : i32, i32
  }
  func.func @transform_4(%arg0: i32) -> (i32, i32) {
    %c0_i32 = arith.constant 0 : i32
    %c0_i32_0 = arith.constant 0 : i32
    %c0_i32_1 = arith.constant 0 : i32
    return %c0_i32, %c0_i32_0 : i32, i32
  }
  func.func @transform_5(%arg0: i32) -> (i32, i32) {
    %c0_i32 = arith.constant 0 : i32
    %c0_i32_0 = arith.constant 0 : i32
    %c0_i32_1 = arith.constant 0 : i32
    return %c0_i32, %c0_i32_0 : i32, i32
  }
  func.func @transform_6(%arg0: i32) -> (i32, i32) {
    %c0_i32 = arith.constant 0 : i32
    %c0_i32_0 = arith.constant 0 : i32
    %c0_i32_1 = arith.constant 0 : i32
    return %c0_i32, %c0_i32_0 : i32, i32
  }
  func.func @transform_7(%arg0: i32) -> (i32, i32) {
    %c0_i32 = arith.constant 0 : i32
    %c0_i32_0 = arith.constant 0 : i32
    return %arg0, %c0_i32 : i32, i32
  }
}

</mosaic_0001>

<llo_original>
// kernel: lenet_forward.3
$region0: #{lenet_forward.3}
  #allocation0 [shape = 'u32[]', space=smem, size = 0x4, offset = 0x4, fixed_abs, tag = 'smem constant byte address 0x4 - core index']
  #allocation1 [shape = 'u32[72,128]{1,0:T(1,128)}', space=vmem, size = 0x9000, scoped, tag = 'internal scratch']
  #allocation2 [shape = 'f32[896,16]{1,0:T(8,128)}', space=vmem, size = 0x70000, scoped, tag = 'scratch operand']
  %s0 = inlined_call_operand.vmem [shape: bf16[2,1024,15], index: 0, kind: input, shape index: {}]
  %s1 = inlined_call_operand.vmem [shape: bf16[5,15,16], index: 1, kind: input, shape index: {}]
  %s2 = inlined_call_operand.vmem [shape: f32[1,16], index: 2, kind: input, shape index: {}]
  %s3 = inlined_call_operand.vmem [shape: f32[2,896,16], index: 3, kind: output, shape index: {}]
  %s4 = sld [smem:[#allocation0]]
  $region45: #{lenet_forward.3} parent=0
    _
  %s6 = ssub.s32 1, %s4
  %s7 = scalar_select 0, %s6, %s4
  loop: start=0, step=1, limit=4
  $region2: #{lenet_forward.3} parent=0 // loop_pre_header
    _
  $region3: #{lenet_forward.3} parent=0 // loop_header
    %s9 = sphi 0, %s13
    %p10 = scmp.ge.s32.totalorder %s9, 4
    %s19 = sphi 0, %s21
    %s22 = sphi 0, %s19
    %s23 = sphi 0, %s22
    %s39 = sphi 0, %s23
    %s43 = sphi 0, %s43
    %s45 = sphi 0, %s43
    %s46 = sphi 0, %s45
    %s60 = sphi 0, %s46
    %s64 = sphi 0, %s64
    %s66 = sphi 0, %s64
    %s67 = sphi 0, %s66
    %s81 = sphi 0, %s67
    %s87 = sphi 0, %s89
    %s90 = sphi 0, %s87
    %s91 = sphi 0, %s90
    %s107 = sphi 0, %s91
  $region4: #{lenet_forward.3} parent=0 // loop_header_branch
    %12 = sbr.rel (%p10) target = $region8
  $region5: #{lenet_forward.3} parent=0 // loop_body
    %s14 = ssub.s32 %s9, 1
    %s15 = ssub.s32 %s9, 2
    %s16 = sadd.s32 %s9, 1
    %s17 = ssub.s32 %s9, %s16
    %p18 = scmp.eq.s32.totalorder %s17, 0
    %s20 = sadd.s32 %s19, 1
    %s21 = scalar_select %p18, %s19, %s20
    %p24 = pneg %p18
    %p25 = scmp.eq.s32.totalorder %s9, 1
    %p26 = por %p24, %p25
    %p27 = scmp.ne.s32.totalorder %s19, %s22
    %p28 = scmp.eq.s32.totalorder %s9, 0
    %p29 = por %p27, %p28
    %p30 = scmp.ne.s32.totalorder %s19, %s22
    %p31 = scmp.eq.s32.totalorder %s14, 1
    %p32 = por %p30, %p31
    %p33 = scmp.ne.s32.totalorder %s22, %s23
    %p34 = scmp.eq.s32.totalorder %s14, 0
    %p35 = por %p33, %p34
    %p36 = scmp.ne.s32.totalorder %s22, %s23
    %p37 = scmp.eq.s32.totalorder %s15, 1
    %p38 = por %p36, %p37
    %p40 = scmp.ne.s32.totalorder %s23, %s39
    %p41 = scmp.eq.s32.totalorder %s15, 0
    %p42 = por %p40, %p41
    %s44 = sadd.s32 %s43, 1
    %p47 = scmp.eq.s32.totalorder %s9, 1
    %p48 = scmp.ne.s32.totalorder %s43, %s45
    %p49 = scmp.eq.s32.totalorder %s9, 0
    %p50 = por %p48, %p49
    %p51 = scmp.ne.s32.totalorder %s43, %s45
    %p52 = scmp.eq.s32.totalorder %s14, 1
    %p53 = por %p51, %p52
    %p54 = scmp.ne.s32.totalorder %s45, %s46
    %p55 = scmp.eq.s32.totalorder %s14, 0
    %p56 = por %p54, %p55
    %p57 = scmp.ne.s32.totalorder %s45, %s46
    %p58 = scmp.eq.s32.totalorder %s15, 1
    %p59 = por %p57, %p58
    %p61 = scmp.ne.s32.totalorder %s46, %s60
    %p62 = scmp.eq.s32.totalorder %s15, 0
    %p63 = por %p61, %p62
    %s65 = sadd.s32 %s64, 1
    %p68 = scmp.eq.s32.totalorder %s9, 1
    %p69 = scmp.ne.s32.totalorder %s64, %s66
    %p70 = scmp.eq.s32.totalorder %s9, 0
    %p71 = por %p69, %p70
    %p72 = scmp.ne.s32.totalorder %s64, %s66
    %p73 = scmp.eq.s32.totalorder %s14, 1
    %p74 = por %p72, %p73
    %p75 = scmp.ne.s32.totalorder %s66, %s67
    %p76 = scmp.eq.s32.totalorder %s14, 0
    %p77 = por %p75, %p76
    %p78 = scmp.ne.s32.totalorder %s66, %s67
    %p79 = scmp.eq.s32.totalorder %s15, 1
    %p80 = por %p78, %p79
    %p82 = scmp.ne.s32.totalorder %s67, %s81
    %p83 = scmp.eq.s32.totalorder %s15, 0
    %p84 = por %p82, %p83
    %s85 = ssub.s32 %s9, %s16
    %p86 = scmp.eq.s32.totalorder %s85, 0
    %s88 = sadd.s32 %s87, 1
    %s89 = scalar_select %p86, %s87, %s88
    %p92 = pneg %p86
    %p93 = scmp.eq.s32.totalorder %s9, 1
    %p94 = por %p92, %p93
    %p95 = scmp.ne.s32.totalorder %s87, %s90
    %p96 = scmp.eq.s32.totalorder %s9, 0
    %p97 = por %p95, %p96
    %p98 = scmp.ne.s32.totalorder %s87, %s90
    %p99 = scmp.eq.s32.totalorder %s14, 1
    %p100 = por %p98, %p99
    %p101 = scmp.ne.s32.totalorder %s90, %s91
    %p102 = scmp.eq.s32.totalorder %s14, 0
    %p103 = por %p101, %p102
    %p104 = scmp.ne.s32.totalorder %s90, %s91
    %p105 = scmp.eq.s32.totalorder %s15, 1
    %p106 = por %p104, %p105
    %p108 = scmp.ne.s32.totalorder %s91, %s107
    %p109 = scmp.eq.s32.totalorder %s15, 0
    %p110 = por %p108, %p109
    %p111 = scmp.le.s32.totalorder 1, %s9
    %p112 = scmp.lt.s32.totalorder %s9, 3
    %p113 = pnand %p111, %p112
    %p114 = pneg %p113
    // Predicated region
    $region9: #{lenet_forward.3} parent=5 // pred_check
      _
    $region10: #{lenet_forward.3} parent=5 // pred_check_branch
      %116 = sbr.rel (%p113) target = $region12
    $region11: #{lenet_forward.3} parent=5 // pred_region
      %s117 = ssub.s32 %s9, 1
      // Predicated region
      $region13: #{lenet_forward.3} parent=11 // pred_check
        %p118 = pneg %p56
      $region14: #{lenet_forward.3} parent=11 // pred_check_branch
        %120 = sbr.rel (%p118) target = $region16
      $region15: #{lenet_forward.3} parent=11 // pred_region
        _
      $region16: #{lenet_forward.3} parent=11 // pred_fallthru
        _
      // Predicated region
      $region17: #{lenet_forward.3} parent=11 // pred_check
        %p121 = pneg %p77
      $region18: #{lenet_forward.3} parent=11 // pred_check_branch
        %123 = sbr.rel (%p121) target = $region20
      $region19: #{lenet_forward.3} parent=11 // pred_region
        _
      $region20: #{lenet_forward.3} parent=11 // pred_fallthru
        _
    $region12: #{lenet_forward.3} parent=5 // pred_fallthru
      _
    %p124 = scmp.lt.s32.totalorder %s9, 2
    // Predicated region
    $region21: #{lenet_forward.3} parent=5 // pred_check
      %p125 = pneg %p124
    $region22: #{lenet_forward.3} parent=5 // pred_check_branch
      %127 = sbr.rel (%p125) target = $region24
    $region23: #{lenet_forward.3} parent=5 // pred_region
      // Predicated region
      $region25: #{lenet_forward.3} parent=23 // pred_check
        %p128 = pneg %p29
      $region26: #{lenet_forward.3} parent=23 // pred_check_branch
        %130 = sbr.rel (%p128) target = $region28
      $region27: #{lenet_forward.3} parent=23 // pred_region
        %p131 = scmp.lt.s32.totalorder %s9, 1
        %s132 = scalar_select %p131, %s9, 1
        %s133 = smul.addr %s132, 128
        %s134 = smul.addr %s133, 4
        %s135 = scalar_lea.vmem %s0, %s134
      $region28: #{lenet_forward.3} parent=23 // pred_fallthru
        _
    $region24: #{lenet_forward.3} parent=5 // pred_fallthru
      _
    %p136 = scmp.le.s32.totalorder 1, %s9
    %p137 = scmp.lt.s32.totalorder %s9, 3
    %p138 = pnand %p136, %p137
    %p139 = pneg %p138
    // Predicated region
    $region29: #{lenet_forward.3} parent=5 // pred_check
      _
    $region30: #{lenet_forward.3} parent=5 // pred_check_branch
      %141 = sbr.rel (%p138) target = $region32
    $region31: #{lenet_forward.3} parent=5 // pred_region
      %s142 = ssub.s32 %s9, 1
      %p143 = scmp.lt.s32.totalorder %s14, 1
      %s144 = scalar_select %p143, %s14, 1
      %s145 = smul.addr %s144, 128
      %s146 = smul.addr %s145, 4
      %s147 = scalar_lea.vmem %s0, %s146
      %p148 = pneg %p35
      %p149 = pneg %p32
      %p150 = pneg %p56
      %p151 = pneg %p53
      %p152 = pneg %p77
      %p153 = pneg %p74
      %p154 = pneg %p103
      %p155 = pneg %p100
      %p156 = scmp.lt.s32.totalorder %s14, 1
      %s157 = scalar_select %p156, %s14, 1
      %s158 = smul.addr %s157, 112
      %s159 = smul.addr %s158, 8
      %s160 = scalar_lea.vmem %s3, %s159
      %p161 = scmp.lt.s32.totalorder %s14, 1
      %s162 = scalar_select %p161, %s14, 1
      %s163 = smul.addr %s162, 128
      %s164 = smul.addr %s163, 4
      %s165 = scalar_lea.vmem %s0, %s164
      %p166 = scmp.lt.s32.totalorder %s14, 1
      %s167 = scalar_select %p166, %s14, 1
      %s168 = smul.addr %s167, 112
      %s169 = smul.addr %s168, 8
      %s170 = scalar_lea.vmem %s3, %s169
      %v172 = vld [vmem:[%s165] sm:$0xf]
      %v173 = vld [vmem:[%s165 + $0x4] sm:$0xf]
      %v174 = vld [vmem:[%s165 + $0x8] sm:$0xf]
      %v175 = vld [vmem:[%s165 + $0xc] sm:$0xf]
      %v176 = vld [vmem:[%s165 + $0x10] sm:$0xf]
      %v177 = vld [vmem:[%s165 + $0x14] sm:$0xf]
      %v178 = vld [vmem:[%s165 + $0x18] sm:$0xf]
      %v179 = vld [vmem:[%s165 + $0x1c] sm:$0xf]
      %v180 = vld [vmem:[%s165 + $0x20] sm:$0xf]
      %v181 = vld [vmem:[%s165 + $0x24] sm:$0xf]
      %v182 = vld [vmem:[%s165 + $0x28] sm:$0xf]
      %v183 = vld [vmem:[%s165 + $0x2c] sm:$0xf]
      %v184 = vld [vmem:[%s165 + $0x30] sm:$0xf]
      %v185 = vld [vmem:[%s165 + $0x34] sm:$0xf]
      %v186 = vld [vmem:[%s165 + $0x38] sm:$0xf]
      %v187 = vld [vmem:[%s165 + $0x3c] sm:$0xf]
      %v188 = vld [vmem:[%s165 + $0x40] sm:$0xf]
      %v189 = vld [vmem:[%s165 + $0x44] sm:$0xf]
      %v190 = vld [vmem:[%s165 + $0x48] sm:$0xf]
      %v191 = vld [vmem:[%s165 + $0x4c] sm:$0xf]
      %v192 = vld [vmem:[%s165 + $0x50] sm:$0xf]
      %v193 = vld [vmem:[%s165 + $0x54] sm:$0xf]
      %v194 = vld [vmem:[%s165 + $0x58] sm:$0xf]
      %v195 = vld [vmem:[%s165 + $0x5c] sm:$0xf]
      %v196 = vld [vmem:[%s165 + $0x60] sm:$0xf]
      %v197 = vld [vmem:[%s165 + $0x64] sm:$0xf]
      %v198 = vld [vmem:[%s165 + $0x68] sm:$0xf]
      %v199 = vld [vmem:[%s165 + $0x6c] sm:$0xf]
      %v200 = vld [vmem:[%s165 + $0x70] sm:$0xf]
      %v201 = vld [vmem:[%s165 + $0x74] sm:$0xf]
      %v202 = vld [vmem:[%s165 + $0x78] sm:$0xf]
      %v203 = vld [vmem:[%s165 + $0x7c] sm:$0xf]
      %v204 = vld [vmem:[%s165 + $0x80] sm:$0xf]
      %v205 = vld [vmem:[%s165 + $0x84] sm:$0xf]
      %v206 = vld [vmem:[%s165 + $0x88] sm:$0xf]
      %v207 = vld [vmem:[%s165 + $0x8c] sm:$0xf]
      %v208 = vld [vmem:[%s165 + $0x90] sm:$0xf]
      %v209 = vld [vmem:[%s165 + $0x94] sm:$0xf]
      %v210 = vld [vmem:[%s165 + $0x98] sm:$0xf]
      %v211 = vld [vmem:[%s165 + $0x9c] sm:$0xf]
      %v212 = vld [vmem:[%s165 + $0xa0] sm:$0xf]
      %v213 = vld [vmem:[%s165 + $0xa4] sm:$0xf]
      %v214 = vld [vmem:[%s165 + $0xa8] sm:$0xf]
      %v215 = vld [vmem:[%s165 + $0xac] sm:$0xf]
      %v216 = vld [vmem:[%s165 + $0xb0] sm:$0xf]
      %v217 = vld [vmem:[%s165 + $0xb4] sm:$0xf]
      %v218 = vld [vmem:[%s165 + $0xb8] sm:$0xf]
      %v219 = vld [vmem:[%s165 + $0xbc] sm:$0xf]
      %v220 = vld [vmem:[%s165 + $0xc0] sm:$0xf]
      %v221 = vld [vmem:[%s165 + $0xc4] sm:$0xf]
      %v222 = vld [vmem:[%s165 + $0xc8] sm:$0xf]
      %v223 = vld [vmem:[%s165 + $0xcc] sm:$0xf]
      %v224 = vld [vmem:[%s165 + $0xd0] sm:$0xf]
      %v225 = vld [vmem:[%s165 + $0xd4] sm:$0xf]
      %v226 = vld [vmem:[%s165 + $0xd8] sm:$0xf]
      %v227 = vld [vmem:[%s165 + $0xdc] sm:$0xf]
      %v228 = vld [vmem:[%s165 + $0xe0] sm:$0xf]
      %v229 = vld [vmem:[%s165 + $0xe4] sm:$0xf]
      %v230 = vld [vmem:[%s165 + $0xe8] sm:$0xf]
      %v231 = vld [vmem:[%s165 + $0xec] sm:$0xf]
      %v232 = vld [vmem:[%s165 + $0xf0] sm:$0xf]
      %v233 = vld [vmem:[%s165 + $0xf4] sm:$0xf]
      %v234 = vld [vmem:[%s165 + $0xf8] sm:$0xf]
      %v235 = vld [vmem:[%s165 + $0xfc] sm:$0xf]
      %v236 = vld [vmem:[%s165 + $0x100] sm:$0xf]
      %v237 = vld [vmem:[%s165 + $0x104] sm:$0xf]
      %v238 = vld [vmem:[%s165 + $0x108] sm:$0xf]
      %v239 = vld [vmem:[%s165 + $0x10c] sm:$0xf]
      %v240 = vld [vmem:[%s165 + $0x110] sm:$0xf]
      %v241 = vld [vmem:[%s165 + $0x114] sm:$0xf]
      %v242 = vld [vmem:[%s165 + $0x118] sm:$0xf]
      %v243 = vld [vmem:[%s165 + $0x11c] sm:$0xf]
      %v244 = vld [vmem:[%s165 + $0x120] sm:$0xf]
      %v245 = vld [vmem:[%s165 + $0x124] sm:$0xf]
      %v246 = vld [vmem:[%s165 + $0x128] sm:$0xf]
      %v247 = vld [vmem:[%s165 + $0x12c] sm:$0xf]
      %v248 = vld [vmem:[%s165 + $0x130] sm:$0xf]
      %v249 = vld [vmem:[%s165 + $0x134] sm:$0xf]
      %v250 = vld [vmem:[%s165 + $0x138] sm:$0xf]
      %v251 = vld [vmem:[%s165 + $0x13c] sm:$0xf]
      %v252 = vld [vmem:[%s165 + $0x140] sm:$0xf]
      %v253 = vld [vmem:[%s165 + $0x144] sm:$0xf]
      %v254 = vld [vmem:[%s165 + $0x148] sm:$0xf]
      %v255 = vld [vmem:[%s165 + $0x14c] sm:$0xf]
      %v256 = vld [vmem:[%s165 + $0x150] sm:$0xf]
      %v257 = vld [vmem:[%s165 + $0x154] sm:$0xf]
      %v258 = vld [vmem:[%s165 + $0x158] sm:$0xf]
      %v259 = vld [vmem:[%s165 + $0x15c] sm:$0xf]
      %v260 = vld [vmem:[%s165 + $0x160] sm:$0xf]
      %v261 = vld [vmem:[%s165 + $0x164] sm:$0xf]
      %v262 = vld [vmem:[%s165 + $0x168] sm:$0xf]
      %v263 = vld [vmem:[%s165 + $0x16c] sm:$0xf]
      %v264 = vld [vmem:[%s165 + $0x170] sm:$0xf]
      %v265 = vld [vmem:[%s165 + $0x174] sm:$0xf]
      %v266 = vld [vmem:[%s165 + $0x178] sm:$0xf]
      %v267 = vld [vmem:[%s165 + $0x17c] sm:$0xf]
      %v268 = vld [vmem:[%s165 + $0x180] sm:$0xf]
      %v269 = vld [vmem:[%s165 + $0x184] sm:$0xf]
      %v270 = vld [vmem:[%s165 + $0x188] sm:$0xf]
      %v271 = vld [vmem:[%s165 + $0x18c] sm:$0xf]
      %v272 = vld [vmem:[%s165 + $0x190] sm:$0xf]
      %v273 = vld [vmem:[%s165 + $0x194] sm:$0xf]
      %v274 = vld [vmem:[%s165 + $0x198] sm:$0xf]
      %v275 = vld [vmem:[%s165 + $0x19c] sm:$0xf]
      %v276 = vld [vmem:[%s165 + $0x1a0] sm:$0xf]
      %v277 = vld [vmem:[%s165 + $0x1a4] sm:$0xf]
      %v278 = vld [vmem:[%s165 + $0x1a8] sm:$0xf]
      %v279 = vld [vmem:[%s165 + $0x1ac] sm:$0xf]
      %v280 = vld [vmem:[%s165 + $0x1b0] sm:$0xf]
      %v281 = vld [vmem:[%s165 + $0x1b4] sm:$0xf]
      %v282 = vld [vmem:[%s165 + $0x1b8] sm:$0xf]
      %v283 = vld [vmem:[%s165 + $0x1bc] sm:$0xf]
      %v284 = vld [vmem:[%s1] sm:$0xf]
      %v285 = vld [vmem:[%s1 + $0x4] sm:$0xf]
      %v398 = vunpack.c.l.b16 %v172
      %v399 = vunpack.c.l.b16 %v173
      %v400 = vunpack.c.l.b16 %v174
      %v401 = vunpack.c.l.b16 %v175
      %v402 = vunpack.c.l.b16 %v176
      %v403 = vunpack.c.l.b16 %v177
      %v404 = vunpack.c.l.b16 %v178
      %v405 = vunpack.c.l.b16 %v179
      %v406 = vunpack.c.l.b16 %v180
      %v407 = vunpack.c.l.b16 %v181
      %v408 = vunpack.c.l.b16 %v182
      %v409 = vunpack.c.l.b16 %v183
      %v410 = vunpack.c.l.b16 %v184
      %v411 = vunpack.c.l.b16 %v185
      %v412 = vunpack.c.l.b16 %v186
      %v413 = vunpack.c.l.b16 %v187
      %v414 = vunpack.c.l.b16 %v188
      %v415 = vunpack.c.l.b16 %v189
      %v416 = vunpack.c.l.b16 %v190
      %v417 = vunpack.c.l.b16 %v191
      %v418 = vunpack.c.l.b16 %v192
      %v419 = vunpack.c.l.b16 %v193
      %v420 = vunpack.c.l.b16 %v194
      %v421 = vunpack.c.l.b16 %v195
      %v422 = vunpack.c.l.b16 %v196
      %v423 = vunpack.c.l.b16 %v197
      %v424 = vunpack.c.l.b16 %v198
      %v425 = vunpack.c.l.b16 %v199
      %v426 = vunpack.c.l.b16 %v200
      %v427 = vunpack.c.l.b16 %v201
      %v428 = vunpack.c.l.b16 %v202
      %v429 = vunpack.c.l.b16 %v203
      %v430 = vunpack.c.l.b16 %v204
      %v431 = vunpack.c.l.b16 %v205
      %v432 = vunpack.c.l.b16 %v206
      %v433 = vunpack.c.l.b16 %v207
      %v434 = vunpack.c.l.b16 %v208
      %v435 = vunpack.c.l.b16 %v209
      %v436 = vunpack.c.l.b16 %v210
      %v437 = vunpack.c.l.b16 %v211
      %v438 = vunpack.c.l.b16 %v212
      %v439 = vunpack.c.l.b16 %v213
      %v440 = vunpack.c.l.b16 %v214
      %v441 = vunpack.c.l.b16 %v215
      %v442 = vunpack.c.l.b16 %v216
      %v443 = vunpack.c.l.b16 %v217
      %v444 = vunpack.c.l.b16 %v218
      %v445 = vunpack.c.l.b16 %v219
      %v446 = vunpack.c.l.b16 %v220
      %v447 = vunpack.c.l.b16 %v221
      %v448 = vunpack.c.l.b16 %v222
      %v449 = vunpack.c.l.b16 %v223
      %v450 = vunpack.c.l.b16 %v224
      %v451 = vunpack.c.l.b16 %v225
      %v452 = vunpack.c.l.b16 %v226
      %v453 = vunpack.c.l.b16 %v227
      %v454 = vunpack.c.l.b16 %v228
      %v455 = vunpack.c.l.b16 %v229
      %v456 = vunpack.c.l.b16 %v230
      %v457 = vunpack.c.l.b16 %v231
      %v458 = vunpack.c.l.b16 %v232
      %v459 = vunpack.c.l.b16 %v233
      %v460 = vunpack.c.l.b16 %v234
      %v461 = vunpack.c.l.b16 %v235
      %v462 = vunpack.c.l.b16 %v236
      %v463 = vunpack.c.l.b16 %v237
      %v464 = vunpack.c.l.b16 %v238
      %v465 = vunpack.c.l.b16 %v239
      %v466 = vunpack.c.l.b16 %v240
      %v467 = vunpack.c.l.b16 %v241
      %v468 = vunpack.c.l.b16 %v242
      %v469 = vunpack.c.l.b16 %v243
      %v470 = vunpack.c.l.b16 %v244
      %v471 = vunpack.c.l.b16 %v245
      %v472 = vunpack.c.l.b16 %v246
      %v473 = vunpack.c.l.b16 %v247
      %v474 = vunpack.c.l.b16 %v248
      %v475 = vunpack.c.l.b16 %v249
      %v476 = vunpack.c.l.b16 %v250
      %v477 = vunpack.c.l.b16 %v251
      %v478 = vunpack.c.l.b16 %v252
      %v479 = vunpack.c.l.b16 %v253
      %v480 = vunpack.c.l.b16 %v254
      %v481 = vunpack.c.l.b16 %v255
      %v482 = vunpack.c.l.b16 %v256
      %v483 = vunpack.c.l.b16 %v257
      %v484 = vunpack.c.l.b16 %v258
      %v485 = vunpack.c.l.b16 %v259
      %v486 = vunpack.c.l.b16 %v260
      %v487 = vunpack.c.l.b16 %v261
      %v488 = vunpack.c.l.b16 %v262
      %v489 = vunpack.c.l.b16 %v263
      %v490 = vunpack.c.l.b16 %v264
      %v491 = vunpack.c.l.b16 %v265
      %v492 = vunpack.c.l.b16 %v266
      %v493 = vunpack.c.l.b16 %v267
      %v494 = vunpack.c.l.b16 %v268
      %v495 = vunpack.c.l.b16 %v269
      %v496 = vunpack.c.l.b16 %v270
      %v497 = vunpack.c.l.b16 %v271
      %v498 = vunpack.c.l.b16 %v272
      %v499 = vunpack.c.l.b16 %v273
      %v500 = vunpack.c.l.b16 %v274
      %v501 = vunpack.c.l.b16 %v275
      %v502 = vunpack.c.l.b16 %v276
      %v503 = vunpack.c.l.b16 %v277
      %v504 = vunpack.c.l.b16 %v278
      %v505 = vunpack.c.l.b16 %v279
      %v506 = vunpack.c.l.b16 %v280
      %v507 = vunpack.c.l.b16 %v281
      %v508 = vunpack.c.l.b16 %v282
      %v509 = vunpack.c.l.b16 %v283
      %v510 = vpack.c.b16 %v399, %v398
      %v511 = vpack.c.b16 %v401, %v400
      %v512 = vpack.c.b16 %v403, %v402
      %v513 = vpack.c.b16 %v405, %v404
      %v514 = vpack.c.b16 %v407, %v406
      %v515 = vpack.c.b16 %v409, %v408
      %v516 = vpack.c.b16 %v411, %v410
      %v517 = vpack.c.b16 %v413, %v412
      %v518 = vpack.c.b16 %v415, %v414
      %v519 = vpack.c.b16 %v417, %v416
      %v520 = vpack.c.b16 %v419, %v418
      %v521 = vpack.c.b16 %v421, %v420
      %v522 = vpack.c.b16 %v423, %v422
      %v523 = vpack.c.b16 %v425, %v424
      %v524 = vpack.c.b16 %v427, %v426
      %v525 = vpack.c.b16 %v429, %v428
      %v526 = vpack.c.b16 %v431, %v430
      %v527 = vpack.c.b16 %v433, %v432
      %v528 = vpack.c.b16 %v435, %v434
      %v529 = vpack.c.b16 %v437, %v436
      %v530 = vpack.c.b16 %v439, %v438
      %v531 = vpack.c.b16 %v441, %v440
      %v532 = vpack.c.b16 %v443, %v442
      %v533 = vpack.c.b16 %v445, %v444
      %v534 = vpack.c.b16 %v447, %v446
      %v535 = vpack.c.b16 %v449, %v448
      %v536 = vpack.c.b16 %v451, %v450
      %v537 = vpack.c.b16 %v453, %v452
      %v538 = vpack.c.b16 %v455, %v454
      %v539 = vpack.c.b16 %v457, %v456
      %v540 = vpack.c.b16 %v459, %v458
      %v541 = vpack.c.b16 %v461, %v460
      %v542 = vpack.c.b16 %v463, %v462
      %v543 = vpack.c.b16 %v465, %v464
      %v544 = vpack.c.b16 %v467, %v466
      %v545 = vpack.c.b16 %v469, %v468
      %v546 = vpack.c.b16 %v471, %v470
      %v547 = vpack.c.b16 %v473, %v472
      %v548 = vpack.c.b16 %v475, %v474
      %v549 = vpack.c.b16 %v477, %v476
      %v550 = vpack.c.b16 %v479, %v478
      %v551 = vpack.c.b16 %v481, %v480
      %v552 = vpack.c.b16 %v483, %v482
      %v553 = vpack.c.b16 %v485, %v484
      %v554 = vpack.c.b16 %v487, %v486
      %v555 = vpack.c.b16 %v489, %v488
      %v556 = vpack.c.b16 %v491, %v490
      %v557 = vpack.c.b16 %v493, %v492
      %v558 = vpack.c.b16 %v495, %v494
      %v559 = vpack.c.b16 %v497, %v496
      %v560 = vpack.c.b16 %v499, %v498
      %v561 = vpack.c.b16 %v501, %v500
      %v562 = vpack.c.b16 %v503, %v502
      %v563 = vpack.c.b16 %v505, %v504
      %v564 = vpack.c.b16 %v507, %v506
      %v565 = vpack.c.b16 %v509, %v508
      %v568 = vunpack.c.l.b16 %v284
      %v569 = vunpack.c.l.b16 %v285
      %v570 = vpack.c.b16 %v569, %v568
      %vm571 = vcmask 121856
      %v573 = vsel %vm571, %v510, 0
      %v576 = vsel %vm571, %v511, 0
      %v579 = vsel %vm571, %v512, 0
      %v582 = vsel %vm571, %v513, 0
      %v585 = vsel %vm571, %v514, 0
      %v588 = vsel %vm571, %v515, 0
      %v591 = vsel %vm571, %v516, 0
      %v594 = vsel %vm571, %v517, 0
      %v597 = vsel %vm571, %v518, 0
      %v600 = vsel %vm571, %v519, 0
      %v603 = vsel %vm571, %v520, 0
      %v606 = vsel %vm571, %v521, 0
      %v609 = vsel %vm571, %v522, 0
      %v612 = vsel %vm571, %v523, 0
      %v615 = vsel %vm571, %v524, 0
      %v618 = vsel %vm571, %v525, 0
      %v621 = vsel %vm571, %v526, 0
      %v624 = vsel %vm571, %v527, 0
      %v627 = vsel %vm571, %v528, 0
      %v630 = vsel %vm571, %v529, 0
      %v633 = vsel %vm571, %v530, 0
      %v636 = vsel %vm571, %v531, 0
      %v639 = vsel %vm571, %v532, 0
      %v642 = vsel %vm571, %v533, 0
      %v645 = vsel %vm571, %v534, 0
      %v648 = vsel %vm571, %v535, 0
      %v651 = vsel %vm571, %v536, 0
      %v654 = vsel %vm571, %v537, 0
      %v657 = vsel %vm571, %v538, 0
      %v660 = vsel %vm571, %v539, 0
      %v663 = vsel %vm571, %v540, 0
      %v666 = vsel %vm571, %v541, 0
      %v669 = vsel %vm571, %v542, 0
      %v672 = vsel %vm571, %v543, 0
      %v675 = vsel %vm571, %v544, 0
      %v678 = vsel %vm571, %v545, 0
      %v681 = vsel %vm571, %v546, 0
      %v684 = vsel %vm571, %v547, 0
      %v687 = vsel %vm571, %v548, 0
      %v690 = vsel %vm571, %v549, 0
      %v693 = vsel %vm571, %v550, 0
      %v696 = vsel %vm571, %v551, 0
      %v699 = vsel %vm571, %v552, 0
      %v702 = vsel %vm571, %v553, 0
      %v705 = vsel %vm571, %v554, 0
      %v708 = vsel %vm571, %v555, 0
      %v711 = vsel %vm571, %v556, 0
      %v714 = vsel %vm571, %v557, 0
      %v717 = vsel %vm571, %v558, 0
      %v720 = vsel %vm571, %v559, 0
      %v723 = vsel %vm571, %v560, 0
      %v726 = vsel %vm571, %v561, 0
      %v729 = vsel %vm571, %v562, 0
      %v732 = vsel %vm571, %v563, 0
      %v735 = vsel %vm571, %v564, 0
      %v738 = vsel %vm571, %v565, 0
      %vm740 = vcmask 1046528
      %vm741 = vcmask 1047552
      %v742 = vsel %vm740, 4294967295, 65535
      %v743 = vsel %vm741, %v742, 0
      %v745 = vand.u32 %v570, %v743
      %747 = vmatpush.bf16.msra.mxu0 0
      %748 = vmatpush.bf16.msra.mxu0 0
      %749 = vmatpush.bf16.msra.mxu0 0
      %750 = vmatpush.bf16.msra.mxu0 0
      %751 = vmatpush.bf16.msra.mxu0 0
      %752 = vmatpush.bf16.msra.mxu0 0
      %753 = vmatpush.bf16.msra.mxu0 0
      %754 = vmatpush.bf16.msra.mxu0 %v745
      %755 = vmatmul.bf16.gmra.mxu0 %v573
      %v756 = vpop.f32.mrf.mxu0
      %v757 = vadd.f32 0.0, %v756
      %v758 = vpop.f32.mrf.mxu0
      %v759 = vadd.f32 0.0, %v758
      %760 = vmatmul.bf16.gmra.mxu0 %v576
      %v761 = vpop.f32.mrf.mxu0
      %v762 = vadd.f32 0.0, %v761
      %v763 = vpop.f32.mrf.mxu0
      %v764 = vadd.f32 0.0, %v763
      %765 = vmatmul.bf16.gmra.mxu0 %v579
      %v766 = vpop.f32.mrf.mxu0
      %v767 = vadd.f32 0.0, %v766
      %v768 = vpop.f32.mrf.mxu0
      %v769 = vadd.f32 0.0, %v768
      %770 = vmatmul.bf16.gmra.mxu0 %v582
      %v771 = vpop.f32.mrf.mxu0
      %v772 = vadd.f32 0.0, %v771
      %v773 = vpop.f32.mrf.mxu0
      %v774 = vadd.f32 0.0, %v773
      %775 = vmatmul.bf16.gmra.mxu0 %v585
      %v776 = vpop.f32.mrf.mxu0
      %v777 = vadd.f32 0.0, %v776
      %v778 = vpop.f32.mrf.mxu0
      %v779 = vadd.f32 0.0, %v778
      %780 = vmatmul.bf16.gmra.mxu0 %v588
      %v781 = vpop.f32.mrf.mxu0
      %v782 = vadd.f32 0.0, %v781
      %v783 = vpop.f32.mrf.mxu0
      %v784 = vadd.f32 0.0, %v783
      %785 = vmatmul.bf16.gmra.mxu0 %v591
      %v786 = vpop.f32.mrf.mxu0
      %v787 = vadd.f32 0.0, %v786
      %v788 = vpop.f32.mrf.mxu0
      %v789 = vadd.f32 0.0, %v788
      %790 = vmatmul.bf16.gmra.mxu0 %v594
      %v791 = vpop.f32.mrf.mxu0
      %v792 = vadd.f32 0.0, %v791
      %v793 = vpop.f32.mrf.mxu0
      %v794 = vadd.f32 0.0, %v793
      %795 = vmatmul.bf16.gmra.mxu0 %v597
      %v796 = vpop.f32.mrf.mxu0
      %v797 = vadd.f32 0.0, %v796
      %v798 = vpop.f32.mrf.mxu0
      %v799 = vadd.f32 0.0, %v798
      %800 = vmatmul.bf16.gmra.mxu0 %v600
      %v801 = vpop.f32.mrf.mxu0
      %v802 = vadd.f32 0.0, %v801
      %v803 = vpop.f32.mrf.mxu0
      %v804 = vadd.f32 0.0, %v803
      %805 = vmatmul.bf16.gmra.mxu0 %v603
      %v806 = vpop.f32.mrf.mxu0
      %v807 = vadd.f32 0.0, %v806
      %v808 = vpop.f32.mrf.mxu0
      %v809 = vadd.f32 0.0, %v808
      %810 = vmatmul.bf16.gmra.mxu0 %v606
      %v811 = vpop.f32.mrf.mxu0
      %v812 = vadd.f32 0.0, %v811
      %v813 = vpop.f32.mrf.mxu0
      %v814 = vadd.f32 0.0, %v813
      %815 = vmatmul.bf16.gmra.mxu0 %v609
      %v816 = vpop.f32.mrf.mxu0
      %v817 = vadd.f32 0.0, %v816
      %v818 = vpop.f32.mrf.mxu0
      %v819 = vadd.f32 0.0, %v818
      %820 = vmatmul.bf16.gmra.mxu0 %v612
      %v821 = vpop.f32.mrf.mxu0
      %v822 = vadd.f32 0.0, %v821
      %v823 = vpop.f32.mrf.mxu0
      %v824 = vadd.f32 0.0, %v823
      %825 = vmatmul.bf16.gmra.mxu0 %v615
      %v826 = vpop.f32.mrf.mxu0
      %v827 = vadd.f32 0.0, %v826
      %v828 = vpop.f32.mrf.mxu0
      %v829 = vadd.f32 0.0, %v828
      %830 = vmatmul.bf16.gmra.mxu0 %v618
      %v831 = vpop.f32.mrf.mxu0
      %v832 = vadd.f32 0.0, %v831
      %v833 = vpop.f32.mrf.mxu0
      %v834 = vadd.f32 0.0, %v833
      %835 = vmatmul.bf16.gmra.mxu0 %v621
      %v836 = vpop.f32.mrf.mxu0
      %v837 = vadd.f32 0.0, %v836
      %v838 = vpop.f32.mrf.mxu0
      %v839 = vadd.f32 0.0, %v838
      %840 = vmatmul.bf16.gmra.mxu0 %v624
      %v841 = vpop.f32.mrf.mxu0
      %v842 = vadd.f32 0.0, %v841
      %v843 = vpop.f32.mrf.mxu0
      %v844 = vadd.f32 0.0, %v843
      %845 = vmatmul.bf16.gmra.mxu0 %v627
      %v846 = vpop.f32.mrf.mxu0
      %v847 = vadd.f32 0.0, %v846
      %v848 = vpop.f32.mrf.mxu0
      %v849 = vadd.f32 0.0, %v848
      %850 = vmatmul.bf16.gmra.mxu0 %v630
      %v851 = vpop.f32.mrf.mxu0
      %v852 = vadd.f32 0.0, %v851
      %v853 = vpop.f32.mrf.mxu0
      %v854 = vadd.f32 0.0, %v853
      %855 = vmatmul.bf16.gmra.mxu0 %v633
      %v856 = vpop.f32.mrf.mxu0
      %v857 = vadd.f32 0.0, %v856
      %v858 = vpop.f32.mrf.mxu0
      %v859 = vadd.f32 0.0, %v858
      %860 = vmatmul.bf16.gmra.mxu0 %v636
      %v861 = vpop.f32.mrf.mxu0
      %v862 = vadd.f32 0.0, %v861
      %v863 = vpop.f32.mrf.mxu0
      %v864 = vadd.f32 0.0, %v863
      %865 = vmatmul.bf16.gmra.mxu0 %v639
      %v866 = vpop.f32.mrf.mxu0
      %v867 = vadd.f32 0.0, %v866
      %v868 = vpop.f32.mrf.mxu0
      %v869 = vadd.f32 0.0, %v868
      %870 = vmatmul.bf16.gmra.mxu0 %v642
      %v871 = vpop.f32.mrf.mxu0
      %v872 = vadd.f32 0.0, %v871
      %v873 = vpop.f32.mrf.mxu0
      %v874 = vadd.f32 0.0, %v873
      %875 = vmatmul.bf16.gmra.mxu0 %v645
      %v876 = vpop.f32.mrf.mxu0
      %v877 = vadd.f32 0.0, %v876
      %v878 = vpop.f32.mrf.mxu0
      %v879 = vadd.f32 0.0, %v878
      %880 = vmatmul.bf16.gmra.mxu0 %v648
      %v881 = vpop.f32.mrf.mxu0
      %v882 = vadd.f32 0.0, %v881
      %v883 = vpop.f32.mrf.mxu0
      %v884 = vadd.f32 0.0, %v883
      %885 = vmatmul.bf16.gmra.mxu0 %v651
      %v886 = vpop.f32.mrf.mxu0
      %v887 = vadd.f32 0.0, %v886
      %v888 = vpop.f32.mrf.mxu0
      %v889 = vadd.f32 0.0, %v888
      %890 = vmatmul.bf16.gmra.mxu0 %v654
      %v891 = vpop.f32.mrf.mxu0
      %v892 = vadd.f32 0.0, %v891
      %v893 = vpop.f32.mrf.mxu0
      %v894 = vadd.f32 0.0, %v893
      %895 = vmatmul.bf16.gmra.mxu0 %v657
      %v896 = vpop.f32.mrf.mxu0
      %v897 = vadd.f32 0.0, %v896
      %v898 = vpop.f32.mrf.mxu0
      %v899 = vadd.f32 0.0, %v898
      %900 = vmatmul.bf16.gmra.mxu0 %v660
      %v901 = vpop.f32.mrf.mxu0
      %v902 = vadd.f32 0.0, %v901
      %v903 = vpop.f32.mrf.mxu0
      %v904 = vadd.f32 0.0, %v903
      %905 = vmatmul.bf16.gmra.mxu0 %v663
      %v906 = vpop.f32.mrf.mxu0
      %v907 = vadd.f32 0.0, %v906
      %v908 = vpop.f32.mrf.mxu0
      %v909 = vadd.f32 0.0, %v908
      %910 = vmatmul.bf16.gmra.mxu0 %v666
      %v911 = vpop.f32.mrf.mxu0
      %v912 = vadd.f32 0.0, %v911
      %v913 = vpop.f32.mrf.mxu0
      %v914 = vadd.f32 0.0, %v913
      %915 = vmatmul.bf16.gmra.mxu0 %v669
      %v916 = vpop.f32.mrf.mxu0
      %v917 = vadd.f32 0.0, %v916
      %v918 = vpop.f32.mrf.mxu0
      %v919 = vadd.f32 0.0, %v918
      %920 = vmatmul.bf16.gmra.mxu0 %v672
      %v921 = vpop.f32.mrf.mxu0
      %v922 = vadd.f32 0.0, %v921
      %v923 = vpop.f32.mrf.mxu0
      %v924 = vadd.f32 0.0, %v923
      %925 = vmatmul.bf16.gmra.mxu0 %v675
      %v926 = vpop.f32.mrf.mxu0
      %v927 = vadd.f32 0.0, %v926
      %v928 = vpop.f32.mrf.mxu0
      %v929 = vadd.f32 0.0, %v928
      %930 = vmatmul.bf16.gmra.mxu0 %v678
      %v931 = vpop.f32.mrf.mxu0
      %v932 = vadd.f32 0.0, %v931
      %v933 = vpop.f32.mrf.mxu0
      %v934 = vadd.f32 0.0, %v933
      %935 = vmatmul.bf16.gmra.mxu0 %v681
      %v936 = vpop.f32.mrf.mxu0
      %v937 = vadd.f32 0.0, %v936
      %v938 = vpop.f32.mrf.mxu0
      %v939 = vadd.f32 0.0, %v938
      %940 = vmatmul.bf16.gmra.mxu0 %v684
      %v941 = vpop.f32.mrf.mxu0
      %v942 = vadd.f32 0.0, %v941
      %v943 = vpop.f32.mrf.mxu0
      %v944 = vadd.f32 0.0, %v943
      %945 = vmatmul.bf16.gmra.mxu0 %v687
      %v946 = vpop.f32.mrf.mxu0
      %v947 = vadd.f32 0.0, %v946
      %v948 = vpop.f32.mrf.mxu0
      %v949 = vadd.f32 0.0, %v948
      %950 = vmatmul.bf16.gmra.mxu0 %v690
      %v951 = vpop.f32.mrf.mxu0
      %v952 = vadd.f32 0.0, %v951
      %v953 = vpop.f32.mrf.mxu0
      %v954 = vadd.f32 0.0, %v953
      %955 = vmatmul.bf16.gmra.mxu0 %v693
      %v956 = vpop.f32.mrf.mxu0
      %v957 = vadd.f32 0.0, %v956
      %v958 = vpop.f32.mrf.mxu0
      %v959 = vadd.f32 0.0, %v958
      %960 = vmatmul.bf16.gmra.mxu0 %v696
      %v961 = vpop.f32.mrf.mxu0
      %v962 = vadd.f32 0.0, %v961
      %v963 = vpop.f32.mrf.mxu0
      %v964 = vadd.f32 0.0, %v963
      %965 = vmatmul.bf16.gmra.mxu0 %v699
      %v966 = vpop.f32.mrf.mxu0
      %v967 = vadd.f32 0.0, %v966
      %v968 = vpop.f32.mrf.mxu0
      %v969 = vadd.f32 0.0, %v968
      %970 = vmatmul.bf16.gmra.mxu0 %v702
      %v971 = vpop.f32.mrf.mxu0
      %v972 = vadd.f32 0.0, %v971
      %v973 = vpop.f32.mrf.mxu0
      %v974 = vadd.f32 0.0, %v973
      %975 = vmatmul.bf16.gmra.mxu0 %v705
      %v976 = vpop.f32.mrf.mxu0
      %v977 = vadd.f32 0.0, %v976
      %v978 = vpop.f32.mrf.mxu0
      %v979 = vadd.f32 0.0, %v978
      %980 = vmatmul.bf16.gmra.mxu0 %v708
      %v981 = vpop.f32.mrf.mxu0
      %v982 = vadd.f32 0.0, %v981
      %v983 = vpop.f32.mrf.mxu0
      %v984 = vadd.f32 0.0, %v983
      %985 = vmatmul.bf16.gmra.mxu0 %v711
      %v986 = vpop.f32.mrf.mxu0
      %v987 = vadd.f32 0.0, %v986
      %v988 = vpop.f32.mrf.mxu0
      %v989 = vadd.f32 0.0, %v988
      %990 = vmatmul.bf16.gmra.mxu0 %v714
      %v991 = vpop.f32.mrf.mxu0
      %v992 = vadd.f32 0.0, %v991
      %v993 = vpop.f32.mrf.mxu0
      %v994 = vadd.f32 0.0, %v993
      %995 = vmatmul.bf16.gmra.mxu0 %v717
      %v996 = vpop.f32.mrf.mxu0
      %v997 = vadd.f32 0.0, %v996
      %v998 = vpop.f32.mrf.mxu0
      %v999 = vadd.f32 0.0, %v998
      %1000 = vmatmul.bf16.gmra.mxu0 %v720
      %v1001 = vpop.f32.mrf.mxu0
      %v1002 = vadd.f32 0.0, %v1001
      %v1003 = vpop.f32.mrf.mxu0
      %v1004 = vadd.f32 0.0, %v1003
      %1005 = vmatmul.bf16.gmra.mxu0 %v723
      %v1006 = vpop.f32.mrf.mxu0
      %v1007 = vadd.f32 0.0, %v1006
      %v1008 = vpop.f32.mrf.mxu0
      %v1009 = vadd.f32 0.0, %v1008
      %1010 = vmatmul.bf16.gmra.mxu0 %v726
      %v1011 = vpop.f32.mrf.mxu0
      %v1012 = vadd.f32 0.0, %v1011
      %v1013 = vpop.f32.mrf.mxu0
      %v1014 = vadd.f32 0.0, %v1013
      %1015 = vmatmul.bf16.gmra.mxu0 %v729
      %v1016 = vpop.f32.mrf.mxu0
      %v1017 = vadd.f32 0.0, %v1016
      %v1018 = vpop.f32.mrf.mxu0
      %v1019 = vadd.f32 0.0, %v1018
      %1020 = vmatmul.bf16.gmra.mxu0 %v732
      %v1021 = vpop.f32.mrf.mxu0
      %v1022 = vadd.f32 0.0, %v1021
      %v1023 = vpop.f32.mrf.mxu0
      %v1024 = vadd.f32 0.0, %v1023
      %1025 = vmatmul.bf16.gmra.mxu0 %v735
      %v1026 = vpop.f32.mrf.mxu0
      %v1027 = vadd.f32 0.0, %v1026
      %v1028 = vpop.f32.mrf.mxu0
      %v1029 = vadd.f32 0.0, %v1028
      %1030 = vmatmul.bf16.gmra.mxu0 %v738
      %v1031 = vpop.f32.mrf.mxu0
      %v1032 = vadd.f32 0.0, %v1031
      %v1033 = vpop.f32.mrf.mxu0
      %v1034 = vadd.f32 0.0, %v1033
      %1035 = vdwg.mxu0
      %vm1036 = vcmask 130048
      %1037 = vst.msk [vmem:[#allocation2] sm:$0xff] %vm1036, %v757
      %1038 = vst.msk [vmem:[#allocation2 + $0x8] sm:$0xff] %vm1036, %v759
      %1039 = vst.msk [vmem:[#allocation2 + $0x10] sm:$0xff] %vm1036, %v762
      %1040 = vst.msk [vmem:[#allocation2 + $0x18] sm:$0xff] %vm1036, %v764
      %1041 = vst.msk [vmem:[#allocation2 + $0x20] sm:$0xff] %vm1036, %v767
      %1042 = vst.msk [vmem:[#allocation2 + $0x28] sm:$0xff] %vm1036, %v769
      %1043 = vst.msk [vmem:[#allocation2 + $0x30] sm:$0xff] %vm1036, %v772
      %1044 = vst.msk [vmem:[#allocation2 + $0x38] sm:$0xff] %vm1036, %v774
      %1045 = vst.msk [vmem:[#allocation2 + $0x40] sm:$0xff] %vm1036, %v777
      %1046 = vst.msk [vmem:[#allocation2 + $0x48] sm:$0xff] %vm1036, %v779
      %1047 = vst.msk [vmem:[#allocation2 + $0x50] sm:$0xff] %vm1036, %v782
      %1048 = vst.msk [vmem:[#allocation2 + $0x58] sm:$0xff] %vm1036, %v784
      %1049 = vst.msk [vmem:[#allocation2 + $0x60] sm:$0xff] %vm1036, %v787
      %1050 = vst.msk [vmem:[#allocation2 + $0x68] sm:$0xff] %vm1036, %v789
      %1051 = vst.msk [vmem:[#allocation2 + $0x70] sm:$0xff] %vm1036, %v792
      %1052 = vst.msk [vmem:[#allocation2 + $0x78] sm:$0xff] %vm1036, %v794
      %1053 = vst.msk [vmem:[#allocation2 + $0x80] sm:$0xff] %vm1036, %v797
      %1054 = vst.msk [vmem:[#allocation2 + $0x88] sm:$0xff] %vm1036, %v799
      %1055 = vst.msk [vmem:[#allocation2 + $0x90] sm:$0xff] %vm1036, %v802
      %1056 = vst.msk [vmem:[#allocation2 + $0x98] sm:$0xff] %vm1036, %v804
      %1057 = vst.msk [vmem:[#allocation2 + $0xa0] sm:$0xff] %vm1036, %v807
      %1058 = vst.msk [vmem:[#allocation2 + $0xa8] sm:$0xff] %vm1036, %v809
      %1059 = vst.msk [vmem:[#allocation2 + $0xb0] sm:$0xff] %vm1036, %v812
      %1060 = vst.msk [vmem:[#allocation2 + $0xb8] sm:$0xff] %vm1036, %v814
      %1061 = vst.msk [vmem:[#allocation2 + $0xc0] sm:$0xff] %vm1036, %v817
      %1062 = vst.msk [vmem:[#allocation2 + $0xc8] sm:$0xff] %vm1036, %v819
      %1063 = vst.msk [vmem:[#allocation2 + $0xd0] sm:$0xff] %vm1036, %v822
      %1064 = vst.msk [vmem:[#allocation2 + $0xd8] sm:$0xff] %vm1036, %v824
      %1065 = vst.msk [vmem:[#allocation2 + $0xe0] sm:$0xff] %vm1036, %v827
      %1066 = vst.msk [vmem:[#allocation2 + $0xe8] sm:$0xff] %vm1036, %v829
      %1067 = vst.msk [vmem:[#allocation2 + $0xf0] sm:$0xff] %vm1036, %v832
      %1068 = vst.msk [vmem:[#allocation2 + $0xf8] sm:$0xff] %vm1036, %v834
      %1069 = vst.msk [vmem:[#allocation2 + $0x100] sm:$0xff] %vm1036, %v837
      %1070 = vst.msk [vmem:[#allocation2 + $0x108] sm:$0xff] %vm1036, %v839
      %1071 = vst.msk [vmem:[#allocation2 + $0x110] sm:$0xff] %vm1036, %v842
      %1072 = vst.msk [vmem:[#allocation2 + $0x118] sm:$0xff] %vm1036, %v844
      %1073 = vst.msk [vmem:[#allocation2 + $0x120] sm:$0xff] %vm1036, %v847
      %1074 = vst.msk [vmem:[#allocation2 + $0x128] sm:$0xff] %vm1036, %v849
      %1075 = vst.msk [vmem:[#allocation2 + $0x130] sm:$0xff] %vm1036, %v852
      %1076 = vst.msk [vmem:[#allocation2 + $0x138] sm:$0xff] %vm1036, %v854
      %1077 = vst.msk [vmem:[#allocation2 + $0x140] sm:$0xff] %vm1036, %v857
      %1078 = vst.msk [vmem:[#allocation2 + $0x148] sm:$0xff] %vm1036, %v859
      %1079 = vst.msk [vmem:[#allocation2 + $0x150] sm:$0xff] %vm1036, %v862
      %1080 = vst.msk [vmem:[#allocation2 + $0x158] sm:$0xff] %vm1036, %v864
      %1081 = vst.msk [vmem:[#allocation2 + $0x160] sm:$0xff] %vm1036, %v867
      %1082 = vst.msk [vmem:[#allocation2 + $0x168] sm:$0xff] %vm1036, %v869
      %1083 = vst.msk [vmem:[#allocation2 + $0x170] sm:$0xff] %vm1036, %v872
      %1084 = vst.msk [vmem:[#allocation2 + $0x178] sm:$0xff] %vm1036, %v874
      %1085 = vst.msk [vmem:[#allocation2 + $0x180] sm:$0xff] %vm1036, %v877
      %1086 = vst.msk [vmem:[#allocation2 + $0x188] sm:$0xff] %vm1036, %v879
      %1087 = vst.msk [vmem:[#allocation2 + $0x190] sm:$0xff] %vm1036, %v882
      %1088 = vst.msk [vmem:[#allocation2 + $0x198] sm:$0xff] %vm1036, %v884
      %1089 = vst.msk [vmem:[#allocation2 + $0x1a0] sm:$0xff] %vm1036, %v887
      %1090 = vst.msk [vmem:[#allocation2 + $0x1a8] sm:$0xff] %vm1036, %v889
      %1091 = vst.msk [vmem:[#allocation2 + $0x1b0] sm:$0xff] %vm1036, %v892
      %1092 = vst.msk [vmem:[#allocation2 + $0x1b8] sm:$0xff] %vm1036, %v894
      %1093 = vst.msk [vmem:[#allocation2 + $0x1c0] sm:$0xff] %vm1036, %v897
      %1094 = vst.msk [vmem:[#allocation2 + $0x1c8] sm:$0xff] %vm1036, %v899
      %1095 = vst.msk [vmem:[#allocation2 + $0x1d0] sm:$0xff] %vm1036, %v902
      %1096 = vst.msk [vmem:[#allocation2 + $0x1d8] sm:$0xff] %vm1036, %v904
      %1097 = vst.msk [vmem:[#allocation2 + $0x1e0] sm:$0xff] %vm1036, %v907
      %1098 = vst.msk [vmem:[#allocation2 + $0x1e8] sm:$0xff] %vm1036, %v909
      %1099 = vst.msk [vmem:[#allocation2 + $0x1f0] sm:$0xff] %vm1036, %v912
      %1100 = vst.msk [vmem:[#allocation2 + $0x1f8] sm:$0xff] %vm1036, %v914
      %1101 = vst.msk [vmem:[#allocation2 + $0x200] sm:$0xff] %vm1036, %v917
      %1102 = vst.msk [vmem:[#allocation2 + $0x208] sm:$0xff] %vm1036, %v919
      %1103 = vst.msk [vmem:[#allocation2 + $0x210] sm:$0xff] %vm1036, %v922
      %1104 = vst.msk [vmem:[#allocation2 + $0x218] sm:$0xff] %vm1036, %v924
      %1105 = vst.msk [vmem:[#allocation2 + $0x220] sm:$0xff] %vm1036, %v927
      %1106 = vst.msk [vmem:[#allocation2 + $0x228] sm:$0xff] %vm1036, %v929
      %1107 = vst.msk [vmem:[#allocation2 + $0x230] sm:$0xff] %vm1036, %v932
      %1108 = vst.msk [vmem:[#allocation2 + $0x238] sm:$0xff] %vm1036, %v934
      %1109 = vst.msk [vmem:[#allocation2 + $0x240] sm:$0xff] %vm1036, %v937
      %1110 = vst.msk [vmem:[#allocation2 + $0x248] sm:$0xff] %vm1036, %v939
      %1111 = vst.msk [vmem:[#allocation2 + $0x250] sm:$0xff] %vm1036, %v942
      %1112 = vst.msk [vmem:[#allocation2 + $0x258] sm:$0xff] %vm1036, %v944
      %1113 = vst.msk [vmem:[#allocation2 + $0x260] sm:$0xff] %vm1036, %v947
      %1114 = vst.msk [vmem:[#allocation2 + $0x268] sm:$0xff] %vm1036, %v949
      %1115 = vst.msk [vmem:[#allocation2 + $0x270] sm:$0xff] %vm1036, %v952
      %1116 = vst.msk [vmem:[#allocation2 + $0x278] sm:$0xff] %vm1036, %v954
      %1117 = vst.msk [vmem:[#allocation2 + $0x280] sm:$0xff] %vm1036, %v957
      %1118 = vst.msk [vmem:[#allocation2 + $0x288] sm:$0xff] %vm1036, %v959
      %1119 = vst.msk [vmem:[#allocation2 + $0x290] sm:$0xff] %vm1036, %v962
      %1120 = vst.msk [vmem:[#allocation2 + $0x298] sm:$0xff] %vm1036, %v964
      %1121 = vst.msk [vmem:[#allocation2 + $0x2a0] sm:$0xff] %vm1036, %v967
      %1122 = vst.msk [vmem:[#allocation2 + $0x2a8] sm:$0xff] %vm1036, %v969
      %1123 = vst.msk [vmem:[#allocation2 + $0x2b0] sm:$0xff] %vm1036, %v972
      %1124 = vst.msk [vmem:[#allocation2 + $0x2b8] sm:$0xff] %vm1036, %v974
      %1125 = vst.msk [vmem:[#allocation2 + $0x2c0] sm:$0xff] %vm1036, %v977
      %1126 = vst.msk [vmem:[#allocation2 + $0x2c8] sm:$0xff] %vm1036, %v979
      %1127 = vst.msk [vmem:[#allocation2 + $0x2d0] sm:$0xff] %vm1036, %v982
      %1128 = vst.msk [vmem:[#allocation2 + $0x2d8] sm:$0xff] %vm1036, %v984
      %1129 = vst.msk [vmem:[#allocation2 + $0x2e0] sm:$0xff] %vm1036, %v987
      %1130 = vst.msk [vmem:[#allocation2 + $0x2e8] sm:$0xff] %vm1036, %v989
      %1131 = vst.msk [vmem:[#allocation2 + $0x2f0] sm:$0xff] %vm1036, %v992
      %1132 = vst.msk [vmem:[#allocation2 + $0x2f8] sm:$0xff] %vm1036, %v994
      %1133 = vst.msk [vmem:[#allocation2 + $0x300] sm:$0xff] %vm1036, %v997
      %1134 = vst.msk [vmem:[#allocation2 + $0x308] sm:$0xff] %vm1036, %v999
      %1135 = vst.msk [vmem:[#allocation2 + $0x310] sm:$0xff] %vm1036, %v1002
      %1136 = vst.msk [vmem:[#allocation2 + $0x318] sm:$0xff] %vm1036, %v1004
      %1137 = vst.msk [vmem:[#allocation2 + $0x320] sm:$0xff] %vm1036, %v1007
      %1138 = vst.msk [vmem:[#allocation2 + $0x328] sm:$0xff] %vm1036, %v1009
      %1139 = vst.msk [vmem:[#allocation2 + $0x330] sm:$0xff] %vm1036, %v1012
      %1140 = vst.msk [vmem:[#allocation2 + $0x338] sm:$0xff] %vm1036, %v1014
      %1141 = vst.msk [vmem:[#allocation2 + $0x340] sm:$0xff] %vm1036, %v1017
      %1142 = vst.msk [vmem:[#allocation2 + $0x348] sm:$0xff] %vm1036, %v1019
      %1143 = vst.msk [vmem:[#allocation2 + $0x350] sm:$0xff] %vm1036, %v1022
      %1144 = vst.msk [vmem:[#allocation2 + $0x358] sm:$0xff] %vm1036, %v1024
      %1145 = vst.msk [vmem:[#allocation2 + $0x360] sm:$0xff] %vm1036, %v1027
      %1146 = vst.msk [vmem:[#allocation2 + $0x368] sm:$0xff] %vm1036, %v1029
      %1147 = vst.msk [vmem:[#allocation2 + $0x370] sm:$0xff] %vm1036, %v1032
      %1148 = vst.msk [vmem:[#allocation2 + $0x378] sm:$0xff] %vm1036, %v1034
      %v1149 = vld [vmem:[%s165 + $0x10] sm:$0xf]
      %v1150 = vld [vmem:[%s165 + $0x14] sm:$0xf]
      %v1151 = vld [vmem:[%s165 + $0x18] sm:$0xf]
      %v1152 = vld [vmem:[%s165 + $0x1c] sm:$0xf]
      %v1153 = vld [vmem:[%s165 + $0x20] sm:$0xf]
      %v1154 = vld [vmem:[%s165 + $0x24] sm:$0xf]
      %v1155 = vld [vmem:[%s165 + $0x28] sm:$0xf]
      %v1156 = vld [vmem:[%s165 + $0x2c] sm:$0xf]
      %v1157 = vld [vmem:[%s165 + $0x30] sm:$0xf]
      %v1158 = vld [vmem:[%s165 + $0x34] sm:$0xf]
      %v1159 = vld [vmem:[%s165 + $0x38] sm:$0xf]
      %v1160 = vld [vmem:[%s165 + $0x3c] sm:$0xf]
      %v1161 = vld [vmem:[%s165 + $0x40] sm:$0xf]
      %v1162 = vld [vmem:[%s165 + $0x44] sm:$0xf]
      %v1163 = vld [vmem:[%s165 + $0x48] sm:$0xf]
      %v1164 = vld [vmem:[%s165 + $0x4c] sm:$0xf]
      %v1165 = vld [vmem:[%s165 + $0x50] sm:$0xf]
      %v1166 = vld [vmem:[%s165 + $0x54] sm:$0xf]
      %v1167 = vld [vmem:[%s165 + $0x58] sm:$0xf]
      %v1168 = vld [vmem:[%s165 + $0x5c] sm:$0xf]
      %v1169 = vld [vmem:[%s165 + $0x60] sm:$0xf]
      %v1170 = vld [vmem:[%s165 + $0x64] sm:$0xf]
      %v1171 = vld [vmem:[%s165 + $0x68] sm:$0xf]
      %v1172 = vld [vmem:[%s165 + $0x6c] sm:$0xf]
      %v1173 = vld [vmem:[%s165 + $0x70] sm:$0xf]
      %v1174 = vld [vmem:[%s165 + $0x74] sm:$0xf]
      %v1175 = vld [vmem:[%s165 + $0x78] sm:$0xf]
      %v1176 = vld [vmem:[%s165 + $0x7c] sm:$0xf]
      %v1177 = vld [vmem:[%s165 + $0x80] sm:$0xf]
      %v1178 = vld [vmem:[%s165 + $0x84] sm:$0xf]
      %v1179 = vld [vmem:[%s165 + $0x88] sm:$0xf]
      %v1180 = vld [vmem:[%s165 + $0x8c] sm:$0xf]
      %v1181 = vld [vmem:[%s165 + $0x90] sm:$0xf]
      %v1182 = vld [vmem:[%s165 + $0x94] sm:$0xf]
      %v1183 = vld [vmem:[%s165 + $0x98] sm:$0xf]
      %v1184 = vld [vmem:[%s165 + $0x9c] sm:$0xf]
      %v1185 = vld [vmem:[%s165 + $0xa0] sm:$0xf]
      %v1186 = vld [vmem:[%s165 + $0xa4] sm:$0xf]
      %v1187 = vld [vmem:[%s165 + $0xa8] sm:$0xf]
      %v1188 = vld [vmem:[%s165 + $0xac] sm:$0xf]
      %v1189 = vld [vmem:[%s165 + $0xb0] sm:$0xf]
      %v1190 = vld [vmem:[%s165 + $0xb4] sm:$0xf]
      %v1191 = vld [vmem:[%s165 + $0xb8] sm:$0xf]
      %v1192 = vld [vmem:[%s165 + $0xbc] sm:$0xf]
      %v1193 = vld [vmem:[%s165 + $0xc0] sm:$0xf]
      %v1194 = vld [vmem:[%s165 + $0xc4] sm:$0xf]
      %v1195 = vld [vmem:[%s165 + $0xc8] sm:$0xf]
      %v1196 = vld [vmem:[%s165 + $0xcc] sm:$0xf]
      %v1197 = vld [vmem:[%s165 + $0xd0] sm:$0xf]
      %v1198 = vld [vmem:[%s165 + $0xd4] sm:$0xf]
      %v1199 = vld [vmem:[%s165 + $0xd8] sm:$0xf]
      %v1200 = vld [vmem:[%s165 + $0xdc] sm:$0xf]
      %v1201 = vld [vmem:[%s165 + $0xe0] sm:$0xf]
      %v1202 = vld [vmem:[%s165 + $0xe4] sm:$0xf]
      %v1203 = vld [vmem:[%s165 + $0xe8] sm:$0xf]
      %v1204 = vld [vmem:[%s165 + $0xec] sm:$0xf]
      %v1205 = vld [vmem:[%s165 + $0xf0] sm:$0xf]
      %v1206 = vld [vmem:[%s165 + $0xf4] sm:$0xf]
      %v1207 = vld [vmem:[%s165 + $0xf8] sm:$0xf]
      %v1208 = vld [vmem:[%s165 + $0xfc] sm:$0xf]
      %v1209 = vld [vmem:[%s165 + $0x100] sm:$0xf]
      %v1210 = vld [vmem:[%s165 + $0x104] sm:$0xf]
      %v1211 = vld [vmem:[%s165 + $0x108] sm:$0xf]
      %v1212 = vld [vmem:[%s165 + $0x10c] sm:$0xf]
      %v1213 = vld [vmem:[%s165 + $0x110] sm:$0xf]
      %v1214 = vld [vmem:[%s165 + $0x114] sm:$0xf]
      %v1215 = vld [vmem:[%s165 + $0x118] sm:$0xf]
      %v1216 = vld [vmem:[%s165 + $0x11c] sm:$0xf]
      %v1217 = vld [vmem:[%s165 + $0x120] sm:$0xf]
      %v1218 = vld [vmem:[%s165 + $0x124] sm:$0xf]
      %v1219 = vld [vmem:[%s165 + $0x128] sm:$0xf]
      %v1220 = vld [vmem:[%s165 + $0x12c] sm:$0xf]
      %v1221 = vld [vmem:[%s165 + $0x130] sm:$0xf]
      %v1222 = vld [vmem:[%s165 + $0x134] sm:$0xf]
      %v1223 = vld [vmem:[%s165 + $0x138] sm:$0xf]
      %v1224 = vld [vmem:[%s165 + $0x13c] sm:$0xf]
      %v1225 = vld [vmem:[%s165 + $0x140] sm:$0xf]
      %v1226 = vld [vmem:[%s165 + $0x144] sm:$0xf]
      %v1227 = vld [vmem:[%s165 + $0x148] sm:$0xf]
      %v1228 = vld [vmem:[%s165 + $0x14c] sm:$0xf]
      %v1229 = vld [vmem:[%s165 + $0x150] sm:$0xf]
      %v1230 = vld [vmem:[%s165 + $0x154] sm:$0xf]
      %v1231 = vld [vmem:[%s165 + $0x158] sm:$0xf]
      %v1232 = vld [vmem:[%s165 + $0x15c] sm:$0xf]
      %v1233 = vld [vmem:[%s165 + $0x160] sm:$0xf]
      %v1234 = vld [vmem:[%s165 + $0x164] sm:$0xf]
      %v1235 = vld [vmem:[%s165 + $0x168] sm:$0xf]
      %v1236 = vld [vmem:[%s165 + $0x16c] sm:$0xf]
      %v1237 = vld [vmem:[%s165 + $0x170] sm:$0xf]
      %v1238 = vld [vmem:[%s165 + $0x174] sm:$0xf]
      %v1239 = vld [vmem:[%s165 + $0x178] sm:$0xf]
      %v1240 = vld [vmem:[%s165 + $0x17c] sm:$0xf]
      %v1241 = vld [vmem:[%s165 + $0x180] sm:$0xf]
      %v1242 = vld [vmem:[%s165 + $0x184] sm:$0xf]
      %v1243 = vld [vmem:[%s165 + $0x188] sm:$0xf]
      %v1244 = vld [vmem:[%s165 + $0x18c] sm:$0xf]
      %v1245 = vld [vmem:[%s165 + $0x190] sm:$0xf]
      %v1246 = vld [vmem:[%s165 + $0x194] sm:$0xf]
      %v1247 = vld [vmem:[%s165 + $0x198] sm:$0xf]
      %v1248 = vld [vmem:[%s165 + $0x19c] sm:$0xf]
      %v1249 = vld [vmem:[%s165 + $0x1a0] sm:$0xf]
      %v1250 = vld [vmem:[%s165 + $0x1a4] sm:$0xf]
      %v1251 = vld [vmem:[%s165 + $0x1a8] sm:$0xf]
      %v1252 = vld [vmem:[%s165 + $0x1ac] sm:$0xf]
      %v1253 = vld [vmem:[%s165 + $0x1b0] sm:$0xf]
      %v1254 = vld [vmem:[%s165 + $0x1b4] sm:$0xf]
      %v1255 = vld [vmem:[%s165 + $0x1b8] sm:$0xf]
      %v1256 = vld [vmem:[%s165 + $0x1bc] sm:$0xf]
      %v1257 = vld [vmem:[%s165 + $0x1c0] sm:$0xf]
      %v1258 = vld [vmem:[%s165 + $0x1c4] sm:$0xf]
      %v1259 = vld [vmem:[%s165 + $0x1c8] sm:$0xf]
      %v1260 = vld [vmem:[%s165 + $0x1cc] sm:$0xf]
      %v1261 = vld [vmem:[#allocation2] sm:$0xff]
      %v1262 = vld [vmem:[#allocation2 + $0x8] sm:$0xff]
      %v1263 = vld [vmem:[#allocation2 + $0x10] sm:$0xff]
      %v1264 = vld [vmem:[#allocation2 + $0x18] sm:$0xff]
      %v1265 = vld [vmem:[#allocation2 + $0x20] sm:$0xff]
      %v1266 = vld [vmem:[#allocation2 + $0x28] sm:$0xff]
      %v1267 = vld [vmem:[#allocation2 + $0x30] sm:$0xff]
      %v1268 = vld [vmem:[#allocation2 + $0x38] sm:$0xff]
      %v1269 = vld [vmem:[#allocation2 + $0x40] sm:$0xff]
      %v1270 = vld [vmem:[#allocation2 + $0x48] sm:$0xff]
      %v1271 = vld [vmem:[#allocation2 + $0x50] sm:$0xff]
      %v1272 = vld [vmem:[#allocation2 + $0x58] sm:$0xff]
      %v1273 = vld [vmem:[#allocation2 + $0x60] sm:$0xff]
      %v1274 = vld [vmem:[#allocation2 + $0x68] sm:$0xff]
      %v1275 = vld [vmem:[#allocation2 + $0x70] sm:$0xff]
      %v1276 = vld [vmem:[#allocation2 + $0x78] sm:$0xff]
      %v1277 = vld [vmem:[#allocation2 + $0x80] sm:$0xff]
      %v1278 = vld [vmem:[#allocation2 + $0x88] sm:$0xff]
      %v1279 = vld [vmem:[#allocation2 + $0x90] sm:$0xff]
      %v1280 = vld [vmem:[#allocation2 + $0x98] sm:$0xff]
      %v1281 = vld [vmem:[#allocation2 + $0xa0] sm:$0xff]
      %v1282 = vld [vmem:[#allocation2 + $0xa8] sm:$0xff]
      %v1283 = vld [vmem:[#allocation2 + $0xb0] sm:$0xff]
      %v1284 = vld [vmem:[#allocation2 + $0xb8] sm:$0xff]
      %v1285 = vld [vmem:[#allocation2 + $0xc0] sm:$0xff]
      %v1286 = vld [vmem:[#allocation2 + $0xc8] sm:$0xff]
      %v1287 = vld [vmem:[#allocation2 + $0xd0] sm:$0xff]
      %v1288 = vld [vmem:[#allocation2 + $0xd8] sm:$0xff]
      %v1289 = vld [vmem:[#allocation2 + $0xe0] sm:$0xff]
      %v1290 = vld [vmem:[#allocation2 + $0xe8] sm:$0xff]
      %v1291 = vld [vmem:[#allocation2 + $0xf0] sm:$0xff]
      %v1292 = vld [vmem:[#allocation2 + $0xf8] sm:$0xff]
      %v1293 = vld [vmem:[#allocation2 + $0x100] sm:$0xff]
      %v1294 = vld [vmem:[#allocation2 + $0x108] sm:$0xff]
      %v1295 = vld [vmem:[#allocation2 + $0x110] sm:$0xff]
      %v1296 = vld [vmem:[#allocation2 + $0x118] sm:$0xff]
      %v1297 = vld [vmem:[#allocation2 + $0x120] sm:$0xff]
      %v1298 = vld [vmem:[#allocation2 + $0x128] sm:$0xff]
      %v1299 = vld [vmem:[#allocation2 + $0x130] sm:$0xff]
      %v1300 = vld [vmem:[#allocation2 + $0x138] sm:$0xff]
      %v1301 = vld [vmem:[#allocation2 + $0x140] sm:$0xff]
      %v1302 = vld [vmem:[#allocation2 + $0x148] sm:$0xff]
      %v1303 = vld [vmem:[#allocation2 + $0x150] sm:$0xff]
      %v1304 = vld [vmem:[#allocation2 + $0x158] sm:$0xff]
      %v1305 = vld [vmem:[#allocation2 + $0x160] sm:$0xff]
      %v1306 = vld [vmem:[#allocation2 + $0x168] sm:$0xff]
      %v1307 = vld [vmem:[#allocation2 + $0x170] sm:$0xff]
      %v1308 = vld [vmem:[#allocation2 + $0x178] sm:$0xff]
      %v1309 = vld [vmem:[#allocation2 + $0x180] sm:$0xff]
      %v1310 = vld [vmem:[#allocation2 + $0x188] sm:$0xff]
      %v1311 = vld [vmem:[#allocation2 + $0x190] sm:$0xff]
      %v1312 = vld [vmem:[#allocation2 + $0x198] sm:$0xff]
      %v1313 = vld [vmem:[#allocation2 + $0x1a0] sm:$0xff]
      %v1314 = vld [vmem:[#allocation2 + $0x1a8] sm:$0xff]
      %v1315 = vld [vmem:[#allocation2 + $0x1b0] sm:$0xff]
      %v1316 = vld [vmem:[#allocation2 + $0x1b8] sm:$0xff]
      %v1317 = vld [vmem:[#allocation2 + $0x1c0] sm:$0xff]
      %v1318 = vld [vmem:[#allocation2 + $0x1c8] sm:$0xff]
      %v1319 = vld [vmem:[#allocation2 + $0x1d0] sm:$0xff]
      %v1320 = vld [vmem:[#allocation2 + $0x1d8] sm:$0xff]
      %v1321 = vld [vmem:[#allocation2 + $0x1e0] sm:$0xff]
      %v1322 = vld [vmem:[#allocation2 + $0x1e8] sm:$0xff]
      %v1323 = vld [vmem:[#allocation2 + $0x1f0] sm:$0xff]
      %v1324 = vld [vmem:[#allocation2 + $0x1f8] sm:$0xff]
      %v1325 = vld [vmem:[#allocation2 + $0x200] sm:$0xff]
      %v1326 = vld [vmem:[#allocation2 + $0x208] sm:$0xff]
      %v1327 = vld [vmem:[#allocation2 + $0x210] sm:$0xff]
      %v1328 = vld [vmem:[#allocation2 + $0x218] sm:$0xff]
      %v1329 = vld [vmem:[#allocation2 + $0x220] sm:$0xff]
      %v1330 = vld [vmem:[#allocation2 + $0x228] sm:$0xff]
      %v1331 = vld [vmem:[#allocation2 + $0x230] sm:$0xff]
      %v1332 = vld [vmem:[#allocation2 + $0x238] sm:$0xff]
      %v1333 = vld [vmem:[#allocation2 + $0x240] sm:$0xff]
      %v1334 = vld [vmem:[#allocation2 + $0x248] sm:$0xff]
      %v1335 = vld [vmem:[#allocation2 + $0x250] sm:$0xff]
      %v1336 = vld [vmem:[#allocation2 + $0x258] sm:$0xff]
      %v1337 = vld [vmem:[#allocation2 + $0x260] sm:$0xff]
      %v1338 = vld [vmem:[#allocation2 + $0x268] sm:$0xff]
      %v1339 = vld [vmem:[#allocation2 + $0x270] sm:$0xff]
      %v1340 = vld [vmem:[#allocation2 + $0x278] sm:$0xff]
      %v1341 = vld [vmem:[#allocation2 + $0x280] sm:$0xff]
      %v1342 = vld [vmem:[#allocation2 + $0x288] sm:$0xff]
      %v1343 = vld [vmem:[#allocation2 + $0x290] sm:$0xff]
      %v1344 = vld [vmem:[#allocation2 + $0x298] sm:$0xff]
      %v1345 = vld [vmem:[#allocation2 + $0x2a0] sm:$0xff]
      %v1346 = vld [vmem:[#allocation2 + $0x2a8] sm:$0xff]
      %v1347 = vld [vmem:[#allocation2 + $0x2b0] sm:$0xff]
      %v1348 = vld [vmem:[#allocation2 + $0x2b8] sm:$0xff]
      %v1349 = vld [vmem:[#allocation2 + $0x2c0] sm:$0xff]
      %v1350 = vld [vmem:[#allocation2 + $0x2c8] sm:$0xff]
      %v1351 = vld [vmem:[#allocation2 + $0x2d0] sm:$0xff]
      %v1352 = vld [vmem:[#allocation2 + $0x2d8] sm:$0xff]
      %v1353 = vld [vmem:[#allocation2 + $0x2e0] sm:$0xff]
      %v1354 = vld [vmem:[#allocation2 + $0x2e8] sm:$0xff]
      %v1355 = vld [vmem:[#allocation2 + $0x2f0] sm:$0xff]
      %v1356 = vld [vmem:[#allocation2 + $0x2f8] sm:$0xff]
      %v1357 = vld [vmem:[#allocation2 + $0x300] sm:$0xff]
      %v1358 = vld [vmem:[#allocation2 + $0x308] sm:$0xff]
      %v1359 = vld [vmem:[#allocation2 + $0x310] sm:$0xff]
      %v1360 = vld [vmem:[#allocation2 + $0x318] sm:$0xff]
      %v1361 = vld [vmem:[#allocation2 + $0x320] sm:$0xff]
      %v1362 = vld [vmem:[#allocation2 + $0x328] sm:$0xff]
      %v1363 = vld [vmem:[#allocation2 + $0x330] sm:$0xff]
      %v1364 = vld [vmem:[#allocation2 + $0x338] sm:$0xff]
      %v1365 = vld [vmem:[#allocation2 + $0x340] sm:$0xff]
      %v1366 = vld [vmem:[#allocation2 + $0x348] sm:$0xff]
      %v1367 = vld [vmem:[#allocation2 + $0x350] sm:$0xff]
      %v1368 = vld [vmem:[#allocation2 + $0x358] sm:$0xff]
      %v1369 = vld [vmem:[#allocation2 + $0x360] sm:$0xff]
      %v1370 = vld [vmem:[#allocation2 + $0x368] sm:$0xff]
      %v1371 = vld [vmem:[#allocation2 + $0x370] sm:$0xff]
      %v1372 = vld [vmem:[#allocation2 + $0x378] sm:$0xff]
      %s1373 = scalar_lea.vmem %s1, 8
      %v1374 = vld [vmem:[%s1373] sm:$0xf]
      %v1375 = vld [vmem:[%s1373 + $0x4] sm:$0xf]
      %v1488 = vunpack.c.l.b16 %v1149
      %v1489 = vunpack.c.l.b16 %v1150
      %v1490 = vunpack.c.l.b16 %v1151
      %v1491 = vunpack.c.l.b16 %v1152
      %v1492 = vunpack.c.l.b16 %v1153
      %v1493 = vunpack.c.l.b16 %v1154
      %v1494 = vunpack.c.l.b16 %v1155
      %v1495 = vunpack.c.l.b16 %v1156
      %v1496 = vunpack.c.l.b16 %v1157
      %v1497 = vunpack.c.l.b16 %v1158
      %v1498 = vunpack.c.l.b16 %v1159
      %v1499 = vunpack.c.l.b16 %v1160
      %v1500 = vunpack.c.l.b16 %v1161
      %v1501 = vunpack.c.l.b16 %v1162
      %v1502 = vunpack.c.l.b16 %v1163
      %v1503 = vunpack.c.l.b16 %v1164
      %v1504 = vunpack.c.l.b16 %v1165
      %v1505 = vunpack.c.l.b16 %v1166
      %v1506 = vunpack.c.l.b16 %v1167
      %v1507 = vunpack.c.l.b16 %v1168
      %v1508 = vunpack.c.l.b16 %v1169
      %v1509 = vunpack.c.l.b16 %v1170
      %v1510 = vunpack.c.l.b16 %v1171
      %v1511 = vunpack.c.l.b16 %v1172
      %v1512 = vunpack.c.l.b16 %v1173
      %v1513 = vunpack.c.l.b16 %v1174
      %v1514 = vunpack.c.l.b16 %v1175
      %v1515 = vunpack.c.l.b16 %v1176
      %v1516 = vunpack.c.l.b16 %v1177
      %v1517 = vunpack.c.l.b16 %v1178
      %v1518 = vunpack.c.l.b16 %v1179
      %v1519 = vunpack.c.l.b16 %v1180
      %v1520 = vunpack.c.l.b16 %v1181
      %v1521 = vunpack.c.l.b16 %v1182
      %v1522 = vunpack.c.l.b16 %v1183
      %v1523 = vunpack.c.l.b16 %v1184
      %v1524 = vunpack.c.l.b16 %v1185
      %v1525 = vunpack.c.l.b16 %v1186
      %v1526 = vunpack.c.l.b16 %v1187
      %v1527 = vunpack.c.l.b16 %v1188
      %v1528 = vunpack.c.l.b16 %v1189
      %v1529 = vunpack.c.l.b16 %v1190
      %v1530 = vunpack.c.l.b16 %v1191
      %v1531 = vunpack.c.l.b16 %v1192
      %v1532 = vunpack.c.l.b16 %v1193
      %v1533 = vunpack.c.l.b16 %v1194
      %v1534 = vunpack.c.l.b16 %v1195
      %v1535 = vunpack.c.l.b16 %v1196
      %v1536 = vunpack.c.l.b16 %v1197
      %v1537 = vunpack.c.l.b16 %v1198
      %v1538 = vunpack.c.l.b16 %v1199
      %v1539 = vunpack.c.l.b16 %v1200
      %v1540 = vunpack.c.l.b16 %v1201
      %v1541 = vunpack.c.l.b16 %v1202
      %v1542 = vunpack.c.l.b16 %v1203
      %v1543 = vunpack.c.l.b16 %v1204
      %v1544 = vunpack.c.l.b16 %v1205
      %v1545 = vunpack.c.l.b16 %v1206
      %v1546 = vunpack.c.l.b16 %v1207
      %v1547 = vunpack.c.l.b16 %v1208
      %v1548 = vunpack.c.l.b16 %v1209
      %v1549 = vunpack.c.l.b16 %v1210
      %v1550 = vunpack.c.l.b16 %v1211
      %v1551 = vunpack.c.l.b16 %v1212
      %v1552 = vunpack.c.l.b16 %v1213
      %v1553 = vunpack.c.l.b16 %v1214
      %v1554 = vunpack.c.l.b16 %v1215
      %v1555 = vunpack.c.l.b16 %v1216
      %v1556 = vunpack.c.l.b16 %v1217
      %v1557 = vunpack.c.l.b16 %v1218
      %v1558 = vunpack.c.l.b16 %v1219
      %v1559 = vunpack.c.l.b16 %v1220
      %v1560 = vunpack.c.l.b16 %v1221
      %v1561 = vunpack.c.l.b16 %v1222
      %v1562 = vunpack.c.l.b16 %v1223
      %v1563 = vunpack.c.l.b16 %v1224
      %v1564 = vunpack.c.l.b16 %v1225
      %v1565 = vunpack.c.l.b16 %v1226
      %v1566 = vunpack.c.l.b16 %v1227
      %v1567 = vunpack.c.l.b16 %v1228
      %v1568 = vunpack.c.l.b16 %v1229
      %v1569 = vunpack.c.l.b16 %v1230
      %v1570 = vunpack.c.l.b16 %v1231
      %v1571 = vunpack.c.l.b16 %v1232
      %v1572 = vunpack.c.l.b16 %v1233
      %v1573 = vunpack.c.l.b16 %v1234
      %v1574 = vunpack.c.l.b16 %v1235
      %v1575 = vunpack.c.l.b16 %v1236
      %v1576 = vunpack.c.l.b16 %v1237
      %v1577 = vunpack.c.l.b16 %v1238
      %v1578 = vunpack.c.l.b16 %v1239
      %v1579 = vunpack.c.l.b16 %v1240
      %v1580 = vunpack.c.l.b16 %v1241
      %v1581 = vunpack.c.l.b16 %v1242
      %v1582 = vunpack.c.l.b16 %v1243
      %v1583 = vunpack.c.l.b16 %v1244
      %v1584 = vunpack.c.l.b16 %v1245
      %v1585 = vunpack.c.l.b16 %v1246
      %v1586 = vunpack.c.l.b16 %v1247
      %v1587 = vunpack.c.l.b16 %v1248
      %v1588 = vunpack.c.l.b16 %v1249
      %v1589 = vunpack.c.l.b16 %v1250
      %v1590 = vunpack.c.l.b16 %v1251
      %v1591 = vunpack.c.l.b16 %v1252
      %v1592 = vunpack.c.l.b16 %v1253
      %v1593 = vunpack.c.l.b16 %v1254
      %v1594 = vunpack.c.l.b16 %v1255
      %v1595 = vunpack.c.l.b16 %v1256
      %v1596 = vunpack.c.l.b16 %v1257
      %v1597 = vunpack.c.l.b16 %v1258
      %v1598 = vunpack.c.l.b16 %v1259
      %v1599 = vunpack.c.l.b16 %v1260
      %v1600 = vpack.c.b16 %v1489, %v1488
      %v1601 = vpack.c.b16 %v1491, %v1490
      %v1602 = vpack.c.b16 %v1493, %v1492
      %v1603 = vpack.c.b16 %v1495, %v1494
      %v1604 = vpack.c.b16 %v1497, %v1496
      %v1605 = vpack.c.b16 %v1499, %v1498
      %v1606 = vpack.c.b16 %v1501, %v1500
      %v1607 = vpack.c.b16 %v1503, %v1502
      %v1608 = vpack.c.b16 %v1505, %v1504
      %v1609 = vpack.c.b16 %v1507, %v1506
      %v1610 = vpack.c.b16 %v1509, %v1508
      %v1611 = vpack.c.b16 %v1511, %v1510
      %v1612 = vpack.c.b16 %v1513, %v1512
      %v1613 = vpack.c.b16 %v1515, %v1514
      %v1614 = vpack.c.b16 %v1517, %v1516
      %v1615 = vpack.c.b16 %v1519, %v1518
      %v1616 = vpack.c.b16 %v1521, %v1520
      %v1617 = vpack.c.b16 %v1523, %v1522
      %v1618 = vpack.c.b16 %v1525, %v1524
      %v1619 = vpack.c.b16 %v1527, %v1526
      %v1620 = vpack.c.b16 %v1529, %v1528
      %v1621 = vpack.c.b16 %v1531, %v1530
      %v1622 = vpack.c.b16 %v1533, %v1532
      %v1623 = vpack.c.b16 %v1535, %v1534
      %v1624 = vpack.c.b16 %v1537, %v1536
      %v1625 = vpack.c.b16 %v1539, %v1538
      %v1626 = vpack.c.b16 %v1541, %v1540
      %v1627 = vpack.c.b16 %v1543, %v1542
      %v1628 = vpack.c.b16 %v1545, %v1544
      %v1629 = vpack.c.b16 %v1547, %v1546
      %v1630 = vpack.c.b16 %v1549, %v1548
      %v1631 = vpack.c.b16 %v1551, %v1550
      %v1632 = vpack.c.b16 %v1553, %v1552
      %v1633 = vpack.c.b16 %v1555, %v1554
      %v1634 = vpack.c.b16 %v1557, %v1556
      %v1635 = vpack.c.b16 %v1559, %v1558
      %v1636 = vpack.c.b16 %v1561, %v1560
      %v1637 = vpack.c.b16 %v1563, %v1562
      %v1638 = vpack.c.b16 %v1565, %v1564
      %v1639 = vpack.c.b16 %v1567, %v1566
      %v1640 = vpack.c.b16 %v1569, %v1568
      %v1641 = vpack.c.b16 %v1571, %v1570
      %v1642 = vpack.c.b16 %v1573, %v1572
      %v1643 = vpack.c.b16 %v1575, %v1574
      %v1644 = vpack.c.b16 %v1577, %v1576
      %v1645 = vpack.c.b16 %v1579, %v1578
      %v1646 = vpack.c.b16 %v1581, %v1580
      %v1647 = vpack.c.b16 %v1583, %v1582
      %v1648 = vpack.c.b16 %v1585, %v1584
      %v1649 = vpack.c.b16 %v1587, %v1586
      %v1650 = vpack.c.b16 %v1589, %v1588
      %v1651 = vpack.c.b16 %v1591, %v1590
      %v1652 = vpack.c.b16 %v1593, %v1592
      %v1653 = vpack.c.b16 %v1595, %v1594
      %v1654 = vpack.c.b16 %v1597, %v1596
      %v1655 = vpack.c.b16 %v1599, %v1598
      %v1658 = vunpack.c.l.b16 %v1374
      %v1659 = vunpack.c.l.b16 %v1375
      %v1660 = vpack.c.b16 %v1659, %v1658
      %v1662 = vsel %vm571, %v1600, 0
      %v1665 = vsel %vm571, %v1601, 0
      %v1668 = vsel %vm571, %v1602, 0
      %v1671 = vsel %vm571, %v1603, 0
      %v1674 = vsel %vm571, %v1604, 0
      %v1677 = vsel %vm571, %v1605, 0
      %v1680 = vsel %vm571, %v1606, 0
      %v1683 = vsel %vm571, %v1607, 0
      %v1686 = vsel %vm571, %v1608, 0
      %v1689 = vsel %vm571, %v1609, 0
      %v1692 = vsel %vm571, %v1610, 0
      %v1695 = vsel %vm571, %v1611, 0
      %v1698 = vsel %vm571, %v1612, 0
      %v1701 = vsel %vm571, %v1613, 0
      %v1704 = vsel %vm571, %v1614, 0
      %v1707 = vsel %vm571, %v1615, 0
      %v1710 = vsel %vm571, %v1616, 0
      %v1713 = vsel %vm571, %v1617, 0
      %v1716 = vsel %vm571, %v1618, 0
      %v1719 = vsel %vm571, %v1619, 0
      %v1722 = vsel %vm571, %v1620, 0
      %v1725 = vsel %vm571, %v1621, 0
      %v1728 = vsel %vm571, %v1622, 0
      %v1731 = vsel %vm571, %v1623, 0
      %v1734 = vsel %vm571, %v1624, 0
      %v1737 = vsel %vm571, %v1625, 0
      %v1740 = vsel %vm571, %v1626, 0
      %v1743 = vsel %vm571, %v1627, 0
      %v1746 = vsel %vm571, %v1628, 0
      %v1749 = vsel %vm571, %v1629, 0
      %v1752 = vsel %vm571, %v1630, 0
      %v1755 = vsel %vm571, %v1631, 0
      %v1758 = vsel %vm571, %v1632, 0
      %v1761 = vsel %vm571, %v1633, 0
      %v1764 = vsel %vm571, %v1634, 0
      %v1767 = vsel %vm571, %v1635, 0
      %v1770 = vsel %vm571, %v1636, 0
      %v1773 = vsel %vm571, %v1637, 0
      %v1776 = vsel %vm571, %v1638, 0
      %v1779 = vsel %vm571, %v1639, 0
      %v1782 = vsel %vm571, %v1640, 0
      %v1785 = vsel %vm571, %v1641, 0
      %v1788 = vsel %vm571, %v1642, 0
      %v1791 = vsel %vm571, %v1643, 0
      %v1794 = vsel %vm571, %v1644, 0
      %v1797 = vsel %vm571, %v1645, 0
      %v1800 = vsel %vm571, %v1646, 0
      %v1803 = vsel %vm571, %v1647, 0
      %v1806 = vsel %vm571, %v1648, 0
      %v1809 = vsel %vm571, %v1649, 0
      %v1812 = vsel %vm571, %v1650, 0
      %v1815 = vsel %vm571, %v1651, 0
      %v1818 = vsel %vm571, %v1652, 0
      %v1821 = vsel %vm571, %v1653, 0
      %v1824 = vsel %vm571, %v1654, 0
      %v1827 = vsel %vm571, %v1655, 0
      %v1830 = vand.u32 %v1660, %v743
      %1832 = vmatpush.bf16.msra.mxu0 0
      %1833 = vmatpush.bf16.msra.mxu0 0
      %1834 = vmatpush.bf16.msra.mxu0 0
      %1835 = vmatpush.bf16.msra.mxu0 0
      %1836 = vmatpush.bf16.msra.mxu0 0
      %1837 = vmatpush.bf16.msra.mxu0 0
      %1838 = vmatpush.bf16.msra.mxu0 0
      %1839 = vmatpush.bf16.msra.mxu0 %v1830
      %1840 = vmatmul.bf16.gmra.mxu0 %v1662
      %v1841 = vpop.f32.mrf.mxu0
      %v1842 = vadd.f32 0.0, %v1841
      %v1843 = vpop.f32.mrf.mxu0
      %v1844 = vadd.f32 0.0, %v1843
      %1845 = vmatmul.bf16.gmra.mxu0 %v1665
      %v1846 = vpop.f32.mrf.mxu0
      %v1847 = vadd.f32 0.0, %v1846
      %v1848 = vpop.f32.mrf.mxu0
      %v1849 = vadd.f32 0.0, %v1848
      %1850 = vmatmul.bf16.gmra.mxu0 %v1668
      %v1851 = vpop.f32.mrf.mxu0
      %v1852 = vadd.f32 0.0, %v1851
      %v1853 = vpop.f32.mrf.mxu0
      %v1854 = vadd.f32 0.0, %v1853
      %1855 = vmatmul.bf16.gmra.mxu0 %v1671
      %v1856 = vpop.f32.mrf.mxu0
      %v1857 = vadd.f32 0.0, %v1856
      %v1858 = vpop.f32.mrf.mxu0
      %v1859 = vadd.f32 0.0, %v1858
      %1860 = vmatmul.bf16.gmra.mxu0 %v1674
      %v1861 = vpop.f32.mrf.mxu0
      %v1862 = vadd.f32 0.0, %v1861
      %v1863 = vpop.f32.mrf.mxu0
      %v1864 = vadd.f32 0.0, %v1863
      %1865 = vmatmul.bf16.gmra.mxu0 %v1677
      %v1866 = vpop.f32.mrf.mxu0
      %v1867 = vadd.f32 0.0, %v1866
      %v1868 = vpop.f32.mrf.mxu0
      %v1869 = vadd.f32 0.0, %v1868
      %1870 = vmatmul.bf16.gmra.mxu0 %v1680
      %v1871 = vpop.f32.mrf.mxu0
      %v1872 = vadd.f32 0.0, %v1871
      %v1873 = vpop.f32.mrf.mxu0
      %v1874 = vadd.f32 0.0, %v1873
      %1875 = vmatmul.bf16.gmra.mxu0 %v1683
      %v1876 = vpop.f32.mrf.mxu0
      %v1877 = vadd.f32 0.0, %v1876
      %v1878 = vpop.f32.mrf.mxu0
      %v1879 = vadd.f32 0.0, %v1878
      %1880 = vmatmul.bf16.gmra.mxu0 %v1686
      %v1881 = vpop.f32.mrf.mxu0
      %v1882 = vadd.f32 0.0, %v1881
      %v1883 = vpop.f32.mrf.mxu0
      %v1884 = vadd.f32 0.0, %v1883
      %1885 = vmatmul.bf16.gmra.mxu0 %v1689
      %v1886 = vpop.f32.mrf.mxu0
      %v1887 = vadd.f32 0.0, %v1886
      %v1888 = vpop.f32.mrf.mxu0
      %v1889 = vadd.f32 0.0, %v1888
      %1890 = vmatmul.bf16.gmra.mxu0 %v1692
      %v1891 = vpop.f32.mrf.mxu0
      %v1892 = vadd.f32 0.0, %v1891
      %v1893 = vpop.f32.mrf.mxu0
      %v1894 = vadd.f32 0.0, %v1893
      %1895 = vmatmul.bf16.gmra.mxu0 %v1695
      %v1896 = vpop.f32.mrf.mxu0
      %v1897 = vadd.f32 0.0, %v1896
      %v1898 = vpop.f32.mrf.mxu0
      %v1899 = vadd.f32 0.0, %v1898
      %1900 = vmatmul.bf16.gmra.mxu0 %v1698
      %v1901 = vpop.f32.mrf.mxu0
      %v1902 = vadd.f32 0.0, %v1901
      %v1903 = vpop.f32.mrf.mxu0
      %v1904 = vadd.f32 0.0, %v1903
      %1905 = vmatmul.bf16.gmra.mxu0 %v1701
      %v1906 = vpop.f32.mrf.mxu0
      %v1907 = vadd.f32 0.0, %v1906
      %v1908 = vpop.f32.mrf.mxu0
      %v1909 = vadd.f32 0.0, %v1908
      %1910 = vmatmul.bf16.gmra.mxu0 %v1704
      %v1911 = vpop.f32.mrf.mxu0
      %v1912 = vadd.f32 0.0, %v1911
      %v1913 = vpop.f32.mrf.mxu0
      %v1914 = vadd.f32 0.0, %v1913
      %1915 = vmatmul.bf16.gmra.mxu0 %v1707
      %v1916 = vpop.f32.mrf.mxu0
      %v1917 = vadd.f32 0.0, %v1916
      %v1918 = vpop.f32.mrf.mxu0
      %v1919 = vadd.f32 0.0, %v1918
      %1920 = vmatmul.bf16.gmra.mxu0 %v1710
      %v1921 = vpop.f32.mrf.mxu0
      %v1922 = vadd.f32 0.0, %v1921
      %v1923 = vpop.f32.mrf.mxu0
      %v1924 = vadd.f32 0.0, %v1923
      %1925 = vmatmul.bf16.gmra.mxu0 %v1713
      %v1926 = vpop.f32.mrf.mxu0
      %v1927 = vadd.f32 0.0, %v1926
      %v1928 = vpop.f32.mrf.mxu0
      %v1929 = vadd.f32 0.0, %v1928
      %1930 = vmatmul.bf16.gmra.mxu0 %v1716
      %v1931 = vpop.f32.mrf.mxu0
      %v1932 = vadd.f32 0.0, %v1931
      %v1933 = vpop.f32.mrf.mxu0
      %v1934 = vadd.f32 0.0, %v1933
      %1935 = vmatmul.bf16.gmra.mxu0 %v1719
      %v1936 = vpop.f32.mrf.mxu0
      %v1937 = vadd.f32 0.0, %v1936
      %v1938 = vpop.f32.mrf.mxu0
      %v1939 = vadd.f32 0.0, %v1938
      %1940 = vmatmul.bf16.gmra.mxu0 %v1722
      %v1941 = vpop.f32.mrf.mxu0
      %v1942 = vadd.f32 0.0, %v1941
      %v1943 = vpop.f32.mrf.mxu0
      %v1944 = vadd.f32 0.0, %v1943
      %1945 = vmatmul.bf16.gmra.mxu0 %v1725
      %v1946 = vpop.f32.mrf.mxu0
      %v1947 = vadd.f32 0.0, %v1946
      %v1948 = vpop.f32.mrf.mxu0
      %v1949 = vadd.f32 0.0, %v1948
      %1950 = vmatmul.bf16.gmra.mxu0 %v1728
      %v1951 = vpop.f32.mrf.mxu0
      %v1952 = vadd.f32 0.0, %v1951
      %v1953 = vpop.f32.mrf.mxu0
      %v1954 = vadd.f32 0.0, %v1953
      %1955 = vmatmul.bf16.gmra.mxu0 %v1731
      %v1956 = vpop.f32.mrf.mxu0
      %v1957 = vadd.f32 0.0, %v1956
      %v1958 = vpop.f32.mrf.mxu0
      %v1959 = vadd.f32 0.0, %v1958
      %1960 = vmatmul.bf16.gmra.mxu0 %v1734
      %v1961 = vpop.f32.mrf.mxu0
      %v1962 = vadd.f32 0.0, %v1961
      %v1963 = vpop.f32.mrf.mxu0
      %v1964 = vadd.f32 0.0, %v1963
      %1965 = vmatmul.bf16.gmra.mxu0 %v1737
      %v1966 = vpop.f32.mrf.mxu0
      %v1967 = vadd.f32 0.0, %v1966
      %v1968 = vpop.f32.mrf.mxu0
      %v1969 = vadd.f32 0.0, %v1968
      %1970 = vmatmul.bf16.gmra.mxu0 %v1740
      %v1971 = vpop.f32.mrf.mxu0
      %v1972 = vadd.f32 0.0, %v1971
      %v1973 = vpop.f32.mrf.mxu0
      %v1974 = vadd.f32 0.0, %v1973
      %1975 = vmatmul.bf16.gmra.mxu0 %v1743
      %v1976 = vpop.f32.mrf.mxu0
      %v1977 = vadd.f32 0.0, %v1976
      %v1978 = vpop.f32.mrf.mxu0
      %v1979 = vadd.f32 0.0, %v1978
      %1980 = vmatmul.bf16.gmra.mxu0 %v1746
      %v1981 = vpop.f32.mrf.mxu0
      %v1982 = vadd.f32 0.0, %v1981
      %v1983 = vpop.f32.mrf.mxu0
      %v1984 = vadd.f32 0.0, %v1983
      %1985 = vmatmul.bf16.gmra.mxu0 %v1749
      %v1986 = vpop.f32.mrf.mxu0
      %v1987 = vadd.f32 0.0, %v1986
      %v1988 = vpop.f32.mrf.mxu0
      %v1989 = vadd.f32 0.0, %v1988
      %1990 = vmatmul.bf16.gmra.mxu0 %v1752
      %v1991 = vpop.f32.mrf.mxu0
      %v1992 = vadd.f32 0.0, %v1991
      %v1993 = vpop.f32.mrf.mxu0
      %v1994 = vadd.f32 0.0, %v1993
      %1995 = vmatmul.bf16.gmra.mxu0 %v1755
      %v1996 = vpop.f32.mrf.mxu0
      %v1997 = vadd.f32 0.0, %v1996
      %v1998 = vpop.f32.mrf.mxu0
      %v1999 = vadd.f32 0.0, %v1998
      %2000 = vmatmul.bf16.gmra.mxu0 %v1758
      %v2001 = vpop.f32.mrf.mxu0
      %v2002 = vadd.f32 0.0, %v2001
      %v2003 = vpop.f32.mrf.mxu0
      %v2004 = vadd.f32 0.0, %v2003
      %2005 = vmatmul.bf16.gmra.mxu0 %v1761
      %v2006 = vpop.f32.mrf.mxu0
      %v2007 = vadd.f32 0.0, %v2006
      %v2008 = vpop.f32.mrf.mxu0
      %v2009 = vadd.f32 0.0, %v2008
      %2010 = vmatmul.bf16.gmra.mxu0 %v1764
      %v2011 = vpop.f32.mrf.mxu0
      %v2012 = vadd.f32 0.0, %v2011
      %v2013 = vpop.f32.mrf.mxu0
      %v2014 = vadd.f32 0.0, %v2013
      %2015 = vmatmul.bf16.gmra.mxu0 %v1767
      %v2016 = vpop.f32.mrf.mxu0
      %v2017 = vadd.f32 0.0, %v2016
      %v2018 = vpop.f32.mrf.mxu0
      %v2019 = vadd.f32 0.0, %v2018
      %2020 = vmatmul.bf16.gmra.mxu0 %v1770
      %v2021 = vpop.f32.mrf.mxu0
      %v2022 = vadd.f32 0.0, %v2021
      %v2023 = vpop.f32.mrf.mxu0
      %v2024 = vadd.f32 0.0, %v2023
      %2025 = vmatmul.bf16.gmra.mxu0 %v1773
      %v2026 = vpop.f32.mrf.mxu0
      %v2027 = vadd.f32 0.0, %v2026
      %v2028 = vpop.f32.mrf.mxu0
      %v2029 = vadd.f32 0.0, %v2028
      %2030 = vmatmul.bf16.gmra.mxu0 %v1776
      %v2031 = vpop.f32.mrf.mxu0
      %v2032 = vadd.f32 0.0, %v2031
      %v2033 = vpop.f32.mrf.mxu0
      %v2034 = vadd.f32 0.0, %v2033
      %2035 = vmatmul.bf16.gmra.mxu0 %v1779
      %v2036 = vpop.f32.mrf.mxu0
      %v2037 = vadd.f32 0.0, %v2036
      %v2038 = vpop.f32.mrf.mxu0
      %v2039 = vadd.f32 0.0, %v2038
      %2040 = vmatmul.bf16.gmra.mxu0 %v1782
      %v2041 = vpop.f32.mrf.mxu0
      %v2042 = vadd.f32 0.0, %v2041
      %v2043 = vpop.f32.mrf.mxu0
      %v2044 = vadd.f32 0.0, %v2043
      %2045 = vmatmul.bf16.gmra.mxu0 %v1785
      %v2046 = vpop.f32.mrf.mxu0
      %v2047 = vadd.f32 0.0, %v2046
      %v2048 = vpop.f32.mrf.mxu0
      %v2049 = vadd.f32 0.0, %v2048
      %2050 = vmatmul.bf16.gmra.mxu0 %v1788
      %v2051 = vpop.f32.mrf.mxu0
      %v2052 = vadd.f32 0.0, %v2051
      %v2053 = vpop.f32.mrf.mxu0
      %v2054 = vadd.f32 0.0, %v2053
      %2055 = vmatmul.bf16.gmra.mxu0 %v1791
      %v2056 = vpop.f32.mrf.mxu0
      %v2057 = vadd.f32 0.0, %v2056
      %v2058 = vpop.f32.mrf.mxu0
      %v2059 = vadd.f32 0.0, %v2058
      %2060 = vmatmul.bf16.gmra.mxu0 %v1794
      %v2061 = vpop.f32.mrf.mxu0
      %v2062 = vadd.f32 0.0, %v2061
      %v2063 = vpop.f32.mrf.mxu0
      %v2064 = vadd.f32 0.0, %v2063
      %2065 = vmatmul.bf16.gmra.mxu0 %v1797
      %v2066 = vpop.f32.mrf.mxu0
      %v2067 = vadd.f32 0.0, %v2066
      %v2068 = vpop.f32.mrf.mxu0
      %v2069 = vadd.f32 0.0, %v2068
      %2070 = vmatmul.bf16.gmra.mxu0 %v1800
      %v2071 = vpop.f32.mrf.mxu0
      %v2072 = vadd.f32 0.0, %v2071
      %v2073 = vpop.f32.mrf.mxu0
      %v2074 = vadd.f32 0.0, %v2073
      %2075 = vmatmul.bf16.gmra.mxu0 %v1803
      %v2076 = vpop.f32.mrf.mxu0
      %v2077 = vadd.f32 0.0, %v2076
      %v2078 = vpop.f32.mrf.mxu0
      %v2079 = vadd.f32 0.0, %v2078
      %2080 = vmatmul.bf16.gmra.mxu0 %v1806
      %v2081 = vpop.f32.mrf.mxu0
      %v2082 = vadd.f32 0.0, %v2081
      %v2083 = vpop.f32.mrf.mxu0
      %v2084 = vadd.f32 0.0, %v2083
      %2085 = vmatmul.bf16.gmra.mxu0 %v1809
      %v2086 = vpop.f32.mrf.mxu0
      %v2087 = vadd.f32 0.0, %v2086
      %v2088 = vpop.f32.mrf.mxu0
      %v2089 = vadd.f32 0.0, %v2088
      %2090 = vmatmul.bf16.gmra.mxu0 %v1812
      %v2091 = vpop.f32.mrf.mxu0
      %v2092 = vadd.f32 0.0, %v2091
      %v2093 = vpop.f32.mrf.mxu0
      %v2094 = vadd.f32 0.0, %v2093
      %2095 = vmatmul.bf16.gmra.mxu0 %v1815
      %v2096 = vpop.f32.mrf.mxu0
      %v2097 = vadd.f32 0.0, %v2096
      %v2098 = vpop.f32.mrf.mxu0
      %v2099 = vadd.f32 0.0, %v2098
      %2100 = vmatmul.bf16.gmra.mxu0 %v1818
      %v2101 = vpop.f32.mrf.mxu0
      %v2102 = vadd.f32 0.0, %v2101
      %v2103 = vpop.f32.mrf.mxu0
      %v2104 = vadd.f32 0.0, %v2103
      %2105 = vmatmul.bf16.gmra.mxu0 %v1821
      %v2106 = vpop.f32.mrf.mxu0
      %v2107 = vadd.f32 0.0, %v2106
      %v2108 = vpop.f32.mrf.mxu0
      %v2109 = vadd.f32 0.0, %v2108
      %2110 = vmatmul.bf16.gmra.mxu0 %v1824
      %v2111 = vpop.f32.mrf.mxu0
      %v2112 = vadd.f32 0.0, %v2111
      %v2113 = vpop.f32.mrf.mxu0
      %v2114 = vadd.f32 0.0, %v2113
      %2115 = vmatmul.bf16.gmra.mxu0 %v1827
      %v2116 = vpop.f32.mrf.mxu0
      %v2117 = vadd.f32 0.0, %v2116
      %v2118 = vpop.f32.mrf.mxu0
      %v2119 = vadd.f32 0.0, %v2118
      %2120 = vdwg.mxu0
      %v2121 = vadd.f32 %v1261, %v1842
      %v2122 = vadd.f32 %v1262, %v1844
      %v2123 = vadd.f32 %v1263, %v1847
      %v2124 = vadd.f32 %v1264, %v1849
      %v2125 = vadd.f32 %v1265, %v1852
      %v2126 = vadd.f32 %v1266, %v1854
      %v2127 = vadd.f32 %v1267, %v1857
      %v2128 = vadd.f32 %v1268, %v1859
      %v2129 = vadd.f32 %v1269, %v1862
      %v2130 = vadd.f32 %v1270, %v1864
      %v2131 = vadd.f32 %v1271, %v1867
      %v2132 = vadd.f32 %v1272, %v1869
      %v2133 = vadd.f32 %v1273, %v1872
      %v2134 = vadd.f32 %v1274, %v1874
      %v2135 = vadd.f32 %v1275, %v1877
      %v2136 = vadd.f32 %v1276, %v1879
      %v2137 = vadd.f32 %v1277, %v1882
      %v2138 = vadd.f32 %v1278, %v1884
      %v2139 = vadd.f32 %v1279, %v1887
      %v2140 = vadd.f32 %v1280, %v1889
      %v2141 = vadd.f32 %v1281, %v1892
      %v2142 = vadd.f32 %v1282, %v1894
      %v2143 = vadd.f32 %v1283, %v1897
      %v2144 = vadd.f32 %v1284, %v1899
      %v2145 = vadd.f32 %v1285, %v1902
      %v2146 = vadd.f32 %v1286, %v1904
      %v2147 = vadd.f32 %v1287, %v1907
      %v2148 = vadd.f32 %v1288, %v1909
      %v2149 = vadd.f32 %v1289, %v1912
      %v2150 = vadd.f32 %v1290, %v1914
      %v2151 = vadd.f32 %v1291, %v1917
      %v2152 = vadd.f32 %v1292, %v1919
      %v2153 = vadd.f32 %v1293, %v1922
      %v2154 = vadd.f32 %v1294, %v1924
      %v2155 = vadd.f32 %v1295, %v1927
      %v2156 = vadd.f32 %v1296, %v1929
      %v2157 = vadd.f32 %v1297, %v1932
      %v2158 = vadd.f32 %v1298, %v1934
      %v2159 = vadd.f32 %v1299, %v1937
      %v2160 = vadd.f32 %v1300, %v1939
      %v2161 = vadd.f32 %v1301, %v1942
      %v2162 = vadd.f32 %v1302, %v1944
      %v2163 = vadd.f32 %v1303, %v1947
      %v2164 = vadd.f32 %v1304, %v1949
      %v2165 = vadd.f32 %v1305, %v1952
      %v2166 = vadd.f32 %v1306, %v1954
      %v2167 = vadd.f32 %v1307, %v1957
      %v2168 = vadd.f32 %v1308, %v1959
      %v2169 = vadd.f32 %v1309, %v1962
      %v2170 = vadd.f32 %v1310, %v1964
      %v2171 = vadd.f32 %v1311, %v1967
      %v2172 = vadd.f32 %v1312, %v1969
      %v2173 = vadd.f32 %v1313, %v1972
      %v2174 = vadd.f32 %v1314, %v1974
      %v2175 = vadd.f32 %v1315, %v1977
      %v2176 = vadd.f32 %v1316, %v1979
      %v2177 = vadd.f32 %v1317, %v1982
      %v2178 = vadd.f32 %v1318, %v1984
      %v2179 = vadd.f32 %v1319, %v1987
      %v2180 = vadd.f32 %v1320, %v1989
      %v2181 = vadd.f32 %v1321, %v1992
      %v2182 = vadd.f32 %v1322, %v1994
      %v2183 = vadd.f32 %v1323, %v1997
      %v2184 = vadd.f32 %v1324, %v1999
      %v2185 = vadd.f32 %v1325, %v2002
      %v2186 = vadd.f32 %v1326, %v2004
      %v2187 = vadd.f32 %v1327, %v2007
      %v2188 = vadd.f32 %v1328, %v2009
      %v2189 = vadd.f32 %v1329, %v2012
      %v2190 = vadd.f32 %v1330, %v2014
      %v2191 = vadd.f32 %v1331, %v2017
      %v2192 = vadd.f32 %v1332, %v2019
      %v2193 = vadd.f32 %v1333, %v2022
      %v2194 = vadd.f32 %v1334, %v2024
      %v2195 = vadd.f32 %v1335, %v2027
      %v2196 = vadd.f32 %v1336, %v2029
      %v2197 = vadd.f32 %v1337, %v2032
      %v2198 = vadd.f32 %v1338, %v2034
      %v2199 = vadd.f32 %v1339, %v2037
      %v2200 = vadd.f32 %v1340, %v2039
      %v2201 = vadd.f32 %v1341, %v2042
      %v2202 = vadd.f32 %v1342, %v2044
      %v2203 = vadd.f32 %v1343, %v2047
      %v2204 = vadd.f32 %v1344, %v2049
      %v2205 = vadd.f32 %v1345, %v2052
      %v2206 = vadd.f32 %v1346, %v2054
      %v2207 = vadd.f32 %v1347, %v2057
      %v2208 = vadd.f32 %v1348, %v2059
      %v2209 = vadd.f32 %v1349, %v2062
      %v2210 = vadd.f32 %v1350, %v2064
      %v2211 = vadd.f32 %v1351, %v2067
      %v2212 = vadd.f32 %v1352, %v2069
      %v2213 = vadd.f32 %v1353, %v2072
      %v2214 = vadd.f32 %v1354, %v2074
      %v2215 = vadd.f32 %v1355, %v2077
      %v2216 = vadd.f32 %v1356, %v2079
      %v2217 = vadd.f32 %v1357, %v2082
      %v2218 = vadd.f32 %v1358, %v2084
      %v2219 = vadd.f32 %v1359, %v2087
      %v2220 = vadd.f32 %v1360, %v2089
      %v2221 = vadd.f32 %v1361, %v2092
      %v2222 = vadd.f32 %v1362, %v2094
      %v2223 = vadd.f32 %v1363, %v2097
      %v2224 = vadd.f32 %v1364, %v2099
      %v2225 = vadd.f32 %v1365, %v2102
      %v2226 = vadd.f32 %v1366, %v2104
      %v2227 = vadd.f32 %v1367, %v2107
      %v2228 = vadd.f32 %v1368, %v2109
      %v2229 = vadd.f32 %v1369, %v2112
      %v2230 = vadd.f32 %v1370, %v2114
      %v2231 = vadd.f32 %v1371, %v2117
      %v2232 = vadd.f32 %v1372, %v2119
      %2233 = vst.msk [vmem:[#allocation2] sm:$0xff] %vm1036, %v2121
      %2234 = vst.msk [vmem:[#allocation2 + $0x8] sm:$0xff] %vm1036, %v2122
      %2235 = vst.msk [vmem:[#allocation2 + $0x10] sm:$0xff] %vm1036, %v2123
      %2236 = vst.msk [vmem:[#allocation2 + $0x18] sm:$0xff] %vm1036, %v2124
      %2237 = vst.msk [vmem:[#allocation2 + $0x20] sm:$0xff] %vm1036, %v2125
      %2238 = vst.msk [vmem:[#allocation2 + $0x28] sm:$0xff] %vm1036, %v2126
      %2239 = vst.msk [vmem:[#allocation2 + $0x30] sm:$0xff] %vm1036, %v2127
      %2240 = vst.msk [vmem:[#allocation2 + $0x38] sm:$0xff] %vm1036, %v2128
      %2241 = vst.msk [vmem:[#allocation2 + $0x40] sm:$0xff] %vm1036, %v2129
      %2242 = vst.msk [vmem:[#allocation2 + $0x48] sm:$0xff] %vm1036, %v2130
      %2243 = vst.msk [vmem:[#allocation2 + $0x50] sm:$0xff] %vm1036, %v2131
      %2244 = vst.msk [vmem:[#allocation2 + $0x58] sm:$0xff] %vm1036, %v2132
      %2245 = vst.msk [vmem:[#allocation2 + $0x60] sm:$0xff] %vm1036, %v2133
      %2246 = vst.msk [vmem:[#allocation2 + $0x68] sm:$0xff] %vm1036, %v2134
      %2247 = vst.msk [vmem:[#allocation2 + $0x70] sm:$0xff] %vm1036, %v2135
      %2248 = vst.msk [vmem:[#allocation2 + $0x78] sm:$0xff] %vm1036, %v2136
      %2249 = vst.msk [vmem:[#allocation2 + $0x80] sm:$0xff] %vm1036, %v2137
      %2250 = vst.msk [vmem:[#allocation2 + $0x88] sm:$0xff] %vm1036, %v2138
      %2251 = vst.msk [vmem:[#allocation2 + $0x90] sm:$0xff] %vm1036, %v2139
      %2252 = vst.msk [vmem:[#allocation2 + $0x98] sm:$0xff] %vm1036, %v2140
      %2253 = vst.msk [vmem:[#allocation2 + $0xa0] sm:$0xff] %vm1036, %v2141
      %2254 = vst.msk [vmem:[#allocation2 + $0xa8] sm:$0xff] %vm1036, %v2142
      %2255 = vst.msk [vmem:[#allocation2 + $0xb0] sm:$0xff] %vm1036, %v2143
      %2256 = vst.msk [vmem:[#allocation2 + $0xb8] sm:$0xff] %vm1036, %v2144
      %2257 = vst.msk [vmem:[#allocation2 + $0xc0] sm:$0xff] %vm1036, %v2145
      %2258 = vst.msk [vmem:[#allocation2 + $0xc8] sm:$0xff] %vm1036, %v2146
      %2259 = vst.msk [vmem:[#allocation2 + $0xd0] sm:$0xff] %vm1036, %v2147
      %2260 = vst.msk [vmem:[#allocation2 + $0xd8] sm:$0xff] %vm1036, %v2148
      %2261 = vst.msk [vmem:[#allocation2 + $0xe0] sm:$0xff] %vm1036, %v2149
      %2262 = vst.msk [vmem:[#allocation2 + $0xe8] sm:$0xff] %vm1036, %v2150
      %2263 = vst.msk [vmem:[#allocation2 + $0xf0] sm:$0xff] %vm1036, %v2151
      %2264 = vst.msk [vmem:[#allocation2 + $0xf8] sm:$0xff] %vm1036, %v2152
      %2265 = vst.msk [vmem:[#allocation2 + $0x100] sm:$0xff] %vm1036, %v2153
      %2266 = vst.msk [vmem:[#allocation2 + $0x108] sm:$0xff] %vm1036, %v2154
      %2267 = vst.msk [vmem:[#allocation2 + $0x110] sm:$0xff] %vm1036, %v2155
      %2268 = vst.msk [vmem:[#allocation2 + $0x118] sm:$0xff] %vm1036, %v2156
      %2269 = vst.msk [vmem:[#allocation2 + $0x120] sm:$0xff] %vm1036, %v2157
      %2270 = vst.msk [vmem:[#allocation2 + $0x128] sm:$0xff] %vm1036, %v2158
      %2271 = vst.msk [vmem:[#allocation2 + $0x130] sm:$0xff] %vm1036, %v2159
      %2272 = vst.msk [vmem:[#allocation2 + $0x138] sm:$0xff] %vm1036, %v2160
      %2273 = vst.msk [vmem:[#allocation2 + $0x140] sm:$0xff] %vm1036, %v2161
      %2274 = vst.msk [vmem:[#allocation2 + $0x148] sm:$0xff] %vm1036, %v2162
      %2275 = vst.msk [vmem:[#allocation2 + $0x150] sm:$0xff] %vm1036, %v2163
      %2276 = vst.msk [vmem:[#allocation2 + $0x158] sm:$0xff] %vm1036, %v2164
      %2277 = vst.msk [vmem:[#allocation2 + $0x160] sm:$0xff] %vm1036, %v2165
      %2278 = vst.msk [vmem:[#allocation2 + $0x168] sm:$0xff] %vm1036, %v2166
      %2279 = vst.msk [vmem:[#allocation2 + $0x170] sm:$0xff] %vm1036, %v2167
      %2280 = vst.msk [vmem:[#allocation2 + $0x178] sm:$0xff] %vm1036, %v2168
      %2281 = vst.msk [vmem:[#allocation2 + $0x180] sm:$0xff] %vm1036, %v2169
      %2282 = vst.msk [vmem:[#allocation2 + $0x188] sm:$0xff] %vm1036, %v2170
      %2283 = vst.msk [vmem:[#allocation2 + $0x190] sm:$0xff] %vm1036, %v2171
      %2284 = vst.msk [vmem:[#allocation2 + $0x198] sm:$0xff] %vm1036, %v2172
      %2285 = vst.msk [vmem:[#allocation2 + $0x1a0] sm:$0xff] %vm1036, %v2173
      %2286 = vst.msk [vmem:[#allocation2 + $0x1a8] sm:$0xff] %vm1036, %v2174
      %2287 = vst.msk [vmem:[#allocation2 + $0x1b0] sm:$0xff] %vm1036, %v2175
      %2288 = vst.msk [vmem:[#allocation2 + $0x1b8] sm:$0xff] %vm1036, %v2176
      %2289 = vst.msk [vmem:[#allocation2 + $0x1c0] sm:$0xff] %vm1036, %v2177
      %2290 = vst.msk [vmem:[#allocation2 + $0x1c8] sm:$0xff] %vm1036, %v2178
      %2291 = vst.msk [vmem:[#allocation2 + $0x1d0] sm:$0xff] %vm1036, %v2179
      %2292 = vst.msk [vmem:[#allocation2 + $0x1d8] sm:$0xff] %vm1036, %v2180
      %2293 = vst.msk [vmem:[#allocation2 + $0x1e0] sm:$0xff] %vm1036, %v2181
      %2294 = vst.msk [vmem:[#allocation2 + $0x1e8] sm:$0xff] %vm1036, %v2182
      %2295 = vst.msk [vmem:[#allocation2 + $0x1f0] sm:$0xff] %vm1036, %v2183
      %2296 = vst.msk [vmem:[#allocation2 + $0x1f8] sm:$0xff] %vm1036, %v2184
      %2297 = vst.msk [vmem:[#allocation2 + $0x200] sm:$0xff] %vm1036, %v2185
      %2298 = vst.msk [vmem:[#allocation2 + $0x208] sm:$0xff] %vm1036, %v2186
      %2299 = vst.msk [vmem:[#allocation2 + $0x210] sm:$0xff] %vm1036, %v2187
      %2300 = vst.msk [vmem:[#allocation2 + $0x218] sm:$0xff] %vm1036, %v2188
      %2301 = vst.msk [vmem:[#allocation2 + $0x220] sm:$0xff] %vm1036, %v2189
      %2302 = vst.msk [vmem:[#allocation2 + $0x228] sm:$0xff] %vm1036, %v2190
      %2303 = vst.msk [vmem:[#allocation2 + $0x230] sm:$0xff] %vm1036, %v2191
      %2304 = vst.msk [vmem:[#allocation2 + $0x238] sm:$0xff] %vm1036, %v2192
      %2305 = vst.msk [vmem:[#allocation2 + $0x240] sm:$0xff] %vm1036, %v2193
      %2306 = vst.msk [vmem:[#allocation2 + $0x248] sm:$0xff] %vm1036, %v2194
      %2307 = vst.msk [vmem:[#allocation2 + $0x250] sm:$0xff] %vm1036, %v2195
      %2308 = vst.msk [vmem:[#allocation2 + $0x258] sm:$0xff] %vm1036, %v2196
      %2309 = vst.msk [vmem:[#allocation2 + $0x260] sm:$0xff] %vm1036, %v2197
      %2310 = vst.msk [vmem:[#allocation2 + $0x268] sm:$0xff] %vm1036, %v2198
      %2311 = vst.msk [vmem:[#allocation2 + $0x270] sm:$0xff] %vm1036, %v2199
      %2312 = vst.msk [vmem:[#allocation2 + $0x278] sm:$0xff] %vm1036, %v2200
      %2313 = vst.msk [vmem:[#allocation2 + $0x280] sm:$0xff] %vm1036, %v2201
      %2314 = vst.msk [vmem:[#allocation2 + $0x288] sm:$0xff] %vm1036, %v2202
      %2315 = vst.msk [vmem:[#allocation2 + $0x290] sm:$0xff] %vm1036, %v2203
      %2316 = vst.msk [vmem:[#allocation2 + $0x298] sm:$0xff] %vm1036, %v2204
      %2317 = vst.msk [vmem:[#allocation2 + $0x2a0] sm:$0xff] %vm1036, %v2205
      %2318 = vst.msk [vmem:[#allocation2 + $0x2a8] sm:$0xff] %vm1036, %v2206
      %2319 = vst.msk [vmem:[#allocation2 + $0x2b0] sm:$0xff] %vm1036, %v2207
      %2320 = vst.msk [vmem:[#allocation2 + $0x2b8] sm:$0xff] %vm1036, %v2208
      %2321 = vst.msk [vmem:[#allocation2 + $0x2c0] sm:$0xff] %vm1036, %v2209
      %2322 = vst.msk [vmem:[#allocation2 + $0x2c8] sm:$0xff] %vm1036, %v2210
      %2323 = vst.msk [vmem:[#allocation2 + $0x2d0] sm:$0xff] %vm1036, %v2211
      %2324 = vst.msk [vmem:[#allocation2 + $0x2d8] sm:$0xff] %vm1036, %v2212
      %2325 = vst.msk [vmem:[#allocation2 + $0x2e0] sm:$0xff] %vm1036, %v2213
      %2326 = vst.msk [vmem:[#allocation2 + $0x2e8] sm:$0xff] %vm1036, %v2214
      %2327 = vst.msk [vmem:[#allocation2 + $0x2f0] sm:$0xff] %vm1036, %v2215
      %2328 = vst.msk [vmem:[#allocation2 + $0x2f8] sm:$0xff] %vm1036, %v2216
      %2329 = vst.msk [vmem:[#allocation2 + $0x300] sm:$0xff] %vm1036, %v2217
      %2330 = vst.msk [vmem:[#allocation2 + $0x308] sm:$0xff] %vm1036, %v2218
      %2331 = vst.msk [vmem:[#allocation2 + $0x310] sm:$0xff] %vm1036, %v2219
      %2332 = vst.msk [vmem:[#allocation2 + $0x318] sm:$0xff] %vm1036, %v2220
      %2333 = vst.msk [vmem:[#allocation2 + $0x320] sm:$0xff] %vm1036, %v2221
      %2334 = vst.msk [vmem:[#allocation2 + $0x328] sm:$0xff] %vm1036, %v2222
      %2335 = vst.msk [vmem:[#allocation2 + $0x330] sm:$0xff] %vm1036, %v2223
      %2336 = vst.msk [vmem:[#allocation2 + $0x338] sm:$0xff] %vm1036, %v2224
      %2337 = vst.msk [vmem:[#allocation2 + $0x340] sm:$0xff] %vm1036, %v2225
      %2338 = vst.msk [vmem:[#allocation2 + $0x348] sm:$0xff] %vm1036, %v2226
      %2339 = vst.msk [vmem:[#allocation2 + $0x350] sm:$0xff] %vm1036, %v2227
      %2340 = vst.msk [vmem:[#allocation2 + $0x358] sm:$0xff] %vm1036, %v2228
      %2341 = vst.msk [vmem:[#allocation2 + $0x360] sm:$0xff] %vm1036, %v2229
      %2342 = vst.msk [vmem:[#allocation2 + $0x368] sm:$0xff] %vm1036, %v2230
      %2343 = vst.msk [vmem:[#allocation2 + $0x370] sm:$0xff] %vm1036, %v2231
      %2344 = vst.msk [vmem:[#allocation2 + $0x378] sm:$0xff] %vm1036, %v2232
      %v2345 = vld [vmem:[%s165 + $0x20] sm:$0xf]
      %v2346 = vld [vmem:[%s165 + $0x24] sm:$0xf]
      %v2347 = vld [vmem:[%s165 + $0x28] sm:$0xf]
      %v2348 = vld [vmem:[%s165 + $0x2c] sm:$0xf]
      %v2349 = vld [vmem:[%s165 + $0x30] sm:$0xf]
      %v2350 = vld [vmem:[%s165 + $0x34] sm:$0xf]
      %v2351 = vld [vmem:[%s165 + $0x38] sm:$0xf]
      %v2352 = vld [vmem:[%s165 + $0x3c] sm:$0xf]
      %v2353 = vld [vmem:[%s165 + $0x40] sm:$0xf]
      %v2354 = vld [vmem:[%s165 + $0x44] sm:$0xf]
      %v2355 = vld [vmem:[%s165 + $0x48] sm:$0xf]
      %v2356 = vld [vmem:[%s165 + $0x4c] sm:$0xf]
      %v2357 = vld [vmem:[%s165 + $0x50] sm:$0xf]
      %v2358 = vld [vmem:[%s165 + $0x54] sm:$0xf]
      %v2359 = vld [vmem:[%s165 + $0x58] sm:$0xf]
      %v2360 = vld [vmem:[%s165 + $0x5c] sm:$0xf]
      %v2361 = vld [vmem:[%s165 + $0x60] sm:$0xf]
      %v2362 = vld [vmem:[%s165 + $0x64] sm:$0xf]
      %v2363 = vld [vmem:[%s165 + $0x68] sm:$0xf]
      %v2364 = vld [vmem:[%s165 + $0x6c] sm:$0xf]
      %v2365 = vld [vmem:[%s165 + $0x70] sm:$0xf]
      %v2366 = vld [vmem:[%s165 + $0x74] sm:$0xf]
      %v2367 = vld [vmem:[%s165 + $0x78] sm:$0xf]
      %v2368 = vld [vmem:[%s165 + $0x7c] sm:$0xf]
      %v2369 = vld [vmem:[%s165 + $0x80] sm:$0xf]
      %v2370 = vld [vmem:[%s165 + $0x84] sm:$0xf]
      %v2371 = vld [vmem:[%s165 + $0x88] sm:$0xf]
      %v2372 = vld [vmem:[%s165 + $0x8c] sm:$0xf]
      %v2373 = vld [vmem:[%s165 + $0x90] sm:$0xf]
      %v2374 = vld [vmem:[%s165 + $0x94] sm:$0xf]
      %v2375 = vld [vmem:[%s165 + $0x98] sm:$0xf]
      %v2376 = vld [vmem:[%s165 + $0x9c] sm:$0xf]
      %v2377 = vld [vmem:[%s165 + $0xa0] sm:$0xf]
      %v2378 = vld [vmem:[%s165 + $0xa4] sm:$0xf]
      %v2379 = vld [vmem:[%s165 + $0xa8] sm:$0xf]
      %v2380 = vld [vmem:[%s165 + $0xac] sm:$0xf]
      %v2381 = vld [vmem:[%s165 + $0xb0] sm:$0xf]
      %v2382 = vld [vmem:[%s165 + $0xb4] sm:$0xf]
      %v2383 = vld [vmem:[%s165 + $0xb8] sm:$0xf]
      %v2384 = vld [vmem:[%s165 + $0xbc] sm:$0xf]
      %v2385 = vld [vmem:[%s165 + $0xc0] sm:$0xf]
      %v2386 = vld [vmem:[%s165 + $0xc4] sm:$0xf]
      %v2387 = vld [vmem:[%s165 + $0xc8] sm:$0xf]
      %v2388 = vld [vmem:[%s165 + $0xcc] sm:$0xf]
      %v2389 = vld [vmem:[%s165 + $0xd0] sm:$0xf]
      %v2390 = vld [vmem:[%s165 + $0xd4] sm:$0xf]
      %v2391 = vld [vmem:[%s165 + $0xd8] sm:$0xf]
      %v2392 = vld [vmem:[%s165 + $0xdc] sm:$0xf]
      %v2393 = vld [vmem:[%s165 + $0xe0] sm:$0xf]
      %v2394 = vld [vmem:[%s165 + $0xe4] sm:$0xf]
      %v2395 = vld [vmem:[%s165 + $0xe8] sm:$0xf]
      %v2396 = vld [vmem:[%s165 + $0xec] sm:$0xf]
      %v2397 = vld [vmem:[%s165 + $0xf0] sm:$0xf]
      %v2398 = vld [vmem:[%s165 + $0xf4] sm:$0xf]
      %v2399 = vld [vmem:[%s165 + $0xf8] sm:$0xf]
      %v2400 = vld [vmem:[%s165 + $0xfc] sm:$0xf]
      %v2401 = vld [vmem:[%s165 + $0x100] sm:$0xf]
      %v2402 = vld [vmem:[%s165 + $0x104] sm:$0xf]
      %v2403 = vld [vmem:[%s165 + $0x108] sm:$0xf]
      %v2404 = vld [vmem:[%s165 + $0x10c] sm:$0xf]
      %v2405 = vld [vmem:[%s165 + $0x110] sm:$0xf]
      %v2406 = vld [vmem:[%s165 + $0x114] sm:$0xf]
      %v2407 = vld [vmem:[%s165 + $0x118] sm:$0xf]
      %v2408 = vld [vmem:[%s165 + $0x11c] sm:$0xf]
      %v2409 = vld [vmem:[%s165 + $0x120] sm:$0xf]
      %v2410 = vld [vmem:[%s165 + $0x124] sm:$0xf]
      %v2411 = vld [vmem:[%s165 + $0x128] sm:$0xf]
      %v2412 = vld [vmem:[%s165 + $0x12c] sm:$0xf]
      %v2413 = vld [vmem:[%s165 + $0x130] sm:$0xf]
      %v2414 = vld [vmem:[%s165 + $0x134] sm:$0xf]
      %v2415 = vld [vmem:[%s165 + $0x138] sm:$0xf]
      %v2416 = vld [vmem:[%s165 + $0x13c] sm:$0xf]
      %v2417 = vld [vmem:[%s165 + $0x140] sm:$0xf]
      %v2418 = vld [vmem:[%s165 + $0x144] sm:$0xf]
      %v2419 = vld [vmem:[%s165 + $0x148] sm:$0xf]
      %v2420 = vld [vmem:[%s165 + $0x14c] sm:$0xf]
      %v2421 = vld [vmem:[%s165 + $0x150] sm:$0xf]
      %v2422 = vld [vmem:[%s165 + $0x154] sm:$0xf]
      %v2423 = vld [vmem:[%s165 + $0x158] sm:$0xf]
      %v2424 = vld [vmem:[%s165 + $0x15c] sm:$0xf]
      %v2425 = vld [vmem:[%s165 + $0x160] sm:$0xf]
      %v2426 = vld [vmem:[%s165 + $0x164] sm:$0xf]
      %v2427 = vld [vmem:[%s165 + $0x168] sm:$0xf]
      %v2428 = vld [vmem:[%s165 + $0x16c] sm:$0xf]
      %v2429 = vld [vmem:[%s165 + $0x170] sm:$0xf]
      %v2430 = vld [vmem:[%s165 + $0x174] sm:$0xf]
      %v2431 = vld [vmem:[%s165 + $0x178] sm:$0xf]
      %v2432 = vld [vmem:[%s165 + $0x17c] sm:$0xf]
      %v2433 = vld [vmem:[%s165 + $0x180] sm:$0xf]
      %v2434 = vld [vmem:[%s165 + $0x184] sm:$0xf]
      %v2435 = vld [vmem:[%s165 + $0x188] sm:$0xf]
      %v2436 = vld [vmem:[%s165 + $0x18c] sm:$0xf]
      %v2437 = vld [vmem:[%s165 + $0x190] sm:$0xf]
      %v2438 = vld [vmem:[%s165 + $0x194] sm:$0xf]
      %v2439 = vld [vmem:[%s165 + $0x198] sm:$0xf]
      %v2440 = vld [vmem:[%s165 + $0x19c] sm:$0xf]
      %v2441 = vld [vmem:[%s165 + $0x1a0] sm:$0xf]
      %v2442 = vld [vmem:[%s165 + $0x1a4] sm:$0xf]
      %v2443 = vld [vmem:[%s165 + $0x1a8] sm:$0xf]
      %v2444 = vld [vmem:[%s165 + $0x1ac] sm:$0xf]
      %v2445 = vld [vmem:[%s165 + $0x1b0] sm:$0xf]
      %v2446 = vld [vmem:[%s165 + $0x1b4] sm:$0xf]
      %v2447 = vld [vmem:[%s165 + $0x1b8] sm:$0xf]
      %v2448 = vld [vmem:[%s165 + $0x1bc] sm:$0xf]
      %v2449 = vld [vmem:[%s165 + $0x1c0] sm:$0xf]
      %v2450 = vld [vmem:[%s165 + $0x1c4] sm:$0xf]
      %v2451 = vld [vmem:[%s165 + $0x1c8] sm:$0xf]
      %v2452 = vld [vmem:[%s165 + $0x1cc] sm:$0xf]
      %v2453 = vld [vmem:[%s165 + $0x1d0] sm:$0xf]
      %v2454 = vld [vmem:[%s165 + $0x1d4] sm:$0xf]
      %v2455 = vld [vmem:[%s165 + $0x1d8] sm:$0xf]
      %v2456 = vld [vmem:[%s165 + $0x1dc] sm:$0xf]
      %v2457 = vld [vmem:[#allocation2] sm:$0xff]
      %v2458 = vld [vmem:[#allocation2 + $0x8] sm:$0xff]
      %v2459 = vld [vmem:[#allocation2 + $0x10] sm:$0xff]
      %v2460 = vld [vmem:[#allocation2 + $0x18] sm:$0xff]
      %v2461 = vld [vmem:[#allocation2 + $0x20] sm:$0xff]
      %v2462 = vld [vmem:[#allocation2 + $0x28] sm:$0xff]
      %v2463 = vld [vmem:[#allocation2 + $0x30] sm:$0xff]
      %v2464 = vld [vmem:[#allocation2 + $0x38] sm:$0xff]
      %v2465 = vld [vmem:[#allocation2 + $0x40] sm:$0xff]
      %v2466 = vld [vmem:[#allocation2 + $0x48] sm:$0xff]
      %v2467 = vld [vmem:[#allocation2 + $0x50] sm:$0xff]
      %v2468 = vld [vmem:[#allocation2 + $0x58] sm:$0xff]
      %v2469 = vld [vmem:[#allocation2 + $0x60] sm:$0xff]
      %v2470 = vld [vmem:[#allocation2 + $0x68] sm:$0xff]
      %v2471 = vld [vmem:[#allocation2 + $0x70] sm:$0xff]
      %v2472 = vld [vmem:[#allocation2 + $0x78] sm:$0xff]
      %v2473 = vld [vmem:[#allocation2 + $0x80] sm:$0xff]
      %v2474 = vld [vmem:[#allocation2 + $0x88] sm:$0xff]
      %v2475 = vld [vmem:[#allocation2 + $0x90] sm:$0xff]
      %v2476 = vld [vmem:[#allocation2 + $0x98] sm:$0xff]
      %v2477 = vld [vmem:[#allocation2 + $0xa0] sm:$0xff]
      %v2478 = vld [vmem:[#allocation2 + $0xa8] sm:$0xff]
      %v2479 = vld [vmem:[#allocation2 + $0xb0] sm:$0xff]
      %v2480 = vld [vmem:[#allocation2 + $0xb8] sm:$0xff]
      %v2481 = vld [vmem:[#allocation2 + $0xc0] sm:$0xff]
      %v2482 = vld [vmem:[#allocation2 + $0xc8] sm:$0xff]
      %v2483 = vld [vmem:[#allocation2 + $0xd0] sm:$0xff]
      %v2484 = vld [vmem:[#allocation2 + $0xd8] sm:$0xff]
      %v2485 = vld [vmem:[#allocation2 + $0xe0] sm:$0xff]
      %v2486 = vld [vmem:[#allocation2 + $0xe8] sm:$0xff]
      %v2487 = vld [vmem:[#allocation2 + $0xf0] sm:$0xff]
      %v2488 = vld [vmem:[#allocation2 + $0xf8] sm:$0xff]
      %v2489 = vld [vmem:[#allocation2 + $0x100] sm:$0xff]
      %v2490 = vld [vmem:[#allocation2 + $0x108] sm:$0xff]
      %v2491 = vld [vmem:[#allocation2 + $0x110] sm:$0xff]
      %v2492 = vld [vmem:[#allocation2 + $0x118] sm:$0xff]
      %v2493 = vld [vmem:[#allocation2 + $0x120] sm:$0xff]
      %v2494 = vld [vmem:[#allocation2 + $0x128] sm:$0xff]
      %v2495 = vld [vmem:[#allocation2 + $0x130] sm:$0xff]
      %v2496 = vld [vmem:[#allocation2 + $0x138] sm:$0xff]
      %v2497 = vld [vmem:[#allocation2 + $0x140] sm:$0xff]
      %v2498 = vld [vmem:[#allocation2 + $0x148] sm:$0xff]
      %v2499 = vld [vmem:[#allocation2 + $0x150] sm:$0xff]
      %v2500 = vld [vmem:[#allocation2 + $0x158] sm:$0xff]
      %v2501 = vld [vmem:[#allocation2 + $0x160] sm:$0xff]
      %v2502 = vld [vmem:[#allocation2 + $0x168] sm:$0xff]
      %v2503 = vld [vmem:[#allocation2 + $0x170] sm:$0xff]
      %v2504 = vld [vmem:[#allocation2 + $0x178] sm:$0xff]
      %v2505 = vld [vmem:[#allocation2 + $0x180] sm:$0xff]
      %v2506 = vld [vmem:[#allocation2 + $0x188] sm:$0xff]
      %v2507 = vld [vmem:[#allocation2 + $0x190] sm:$0xff]
      %v2508 = vld [vmem:[#allocation2 + $0x198] sm:$0xff]
      %v2509 = vld [vmem:[#allocation2 + $0x1a0] sm:$0xff]
      %v2510 = vld [vmem:[#allocation2 + $0x1a8] sm:$0xff]
      %v2511 = vld [vmem:[#allocation2 + $0x1b0] sm:$0xff]
      %v2512 = vld [vmem:[#allocation2 + $0x1b8] sm:$0xff]
      %v2513 = vld [vmem:[#allocation2 + $0x1c0] sm:$0xff]
      %v2514 = vld [vmem:[#allocation2 + $0x1c8] sm:$0xff]
      %v2515 = vld [vmem:[#allocation2 + $0x1d0] sm:$0xff]
      %v2516 = vld [vmem:[#allocation2 + $0x1d8] sm:$0xff]
      %v2517 = vld [vmem:[#allocation2 + $0x1e0] sm:$0xff]
      %v2518 = vld [vmem:[#allocation2 + $0x1e8] sm:$0xff]
      %v2519 = vld [vmem:[#allocation2 + $0x1f0] sm:$0xff]
      %v2520 = vld [vmem:[#allocation2 + $0x1f8] sm:$0xff]
      %v2521 = vld [vmem:[#allocation2 + $0x200] sm:$0xff]
      %v2522 = vld [vmem:[#allocation2 + $0x208] sm:$0xff]
      %v2523 = vld [vmem:[#allocation2 + $0x210] sm:$0xff]
      %v2524 = vld [vmem:[#allocation2 + $0x218] sm:$0xff]
      %v2525 = vld [vmem:[#allocation2 + $0x220] sm:$0xff]
      %v2526 = vld [vmem:[#allocation2 + $0x228] sm:$0xff]
      %v2527 = vld [vmem:[#allocation2 + $0x230] sm:$0xff]
      %v2528 = vld [vmem:[#allocation2 + $0x238] sm:$0xff]
      %v2529 = vld [vmem:[#allocation2 + $0x240] sm:$0xff]
      %v2530 = vld [vmem:[#allocation2 + $0x248] sm:$0xff]
      %v2531 = vld [vmem:[#allocation2 + $0x250] sm:$0xff]
      %v2532 = vld [vmem:[#allocation2 + $0x258] sm:$0xff]
      %v2533 = vld [vmem:[#allocation2 + $0x260] sm:$0xff]
      %v2534 = vld [vmem:[#allocation2 + $0x268] sm:$0xff]
      %v2535 = vld [vmem:[#allocation2 + $0x270] sm:$0xff]
      %v2536 = vld [vmem:[#allocation2 + $0x278] sm:$0xff]
      %v2537 = vld [vmem:[#allocation2 + $0x280] sm:$0xff]
      %v2538 = vld [vmem:[#allocation2 + $0x288] sm:$0xff]
      %v2539 = vld [vmem:[#allocation2 + $0x290] sm:$0xff]
      %v2540 = vld [vmem:[#allocation2 + $0x298] sm:$0xff]
      %v2541 = vld [vmem:[#allocation2 + $0x2a0] sm:$0xff]
      %v2542 = vld [vmem:[#allocation2 + $0x2a8] sm:$0xff]
      %v2543 = vld [vmem:[#allocation2 + $0x2b0] sm:$0xff]
      %v2544 = vld [vmem:[#allocation2 + $0x2b8] sm:$0xff]
      %v2545 = vld [vmem:[#allocation2 + $0x2c0] sm:$0xff]
      %v2546 = vld [vmem:[#allocation2 + $0x2c8] sm:$0xff]
      %v2547 = vld [vmem:[#allocation2 + $0x2d0] sm:$0xff]
      %v2548 = vld [vmem:[#allocation2 + $0x2d8] sm:$0xff]
      %v2549 = vld [vmem:[#allocation2 + $0x2e0] sm:$0xff]
      %v2550 = vld [vmem:[#allocation2 + $0x2e8] sm:$0xff]
      %v2551 = vld [vmem:[#allocation2 + $0x2f0] sm:$0xff]
      %v2552 = vld [vmem:[#allocation2 + $0x2f8] sm:$0xff]
      %v2553 = vld [vmem:[#allocation2 + $0x300] sm:$0xff]
      %v2554 = vld [vmem:[#allocation2 + $0x308] sm:$0xff]
      %v2555 = vld [vmem:[#allocation2 + $0x310] sm:$0xff]
      %v2556 = vld [vmem:[#allocation2 + $0x318] sm:$0xff]
      %v2557 = vld [vmem:[#allocation2 + $0x320] sm:$0xff]
      %v2558 = vld [vmem:[#allocation2 + $0x328] sm:$0xff]
      %v2559 = vld [vmem:[#allocation2 + $0x330] sm:$0xff]
      %v2560 = vld [vmem:[#allocation2 + $0x338] sm:$0xff]
      %v2561 = vld [vmem:[#allocation2 + $0x340] sm:$0xff]
      %v2562 = vld [vmem:[#allocation2 + $0x348] sm:$0xff]
      %v2563 = vld [vmem:[#allocation2 + $0x350] sm:$0xff]
      %v2564 = vld [vmem:[#allocation2 + $0x358] sm:$0xff]
      %v2565 = vld [vmem:[#allocation2 + $0x360] sm:$0xff]
      %v2566 = vld [vmem:[#allocation2 + $0x368] sm:$0xff]
      %v2567 = vld [vmem:[#allocation2 + $0x370] sm:$0xff]
      %v2568 = vld [vmem:[#allocation2 + $0x378] sm:$0xff]
      %s2569 = scalar_lea.vmem %s1, 16
      %v2570 = vld [vmem:[%s2569] sm:$0xf]
      %v2571 = vld [vmem:[%s2569 + $0x4] sm:$0xf]
      %v2684 = vunpack.c.l.b16 %v2345
      %v2685 = vunpack.c.l.b16 %v2346
      %v2686 = vunpack.c.l.b16 %v2347
      %v2687 = vunpack.c.l.b16 %v2348
      %v2688 = vunpack.c.l.b16 %v2349
      %v2689 = vunpack.c.l.b16 %v2350
      %v2690 = vunpack.c.l.b16 %v2351
      %v2691 = vunpack.c.l.b16 %v2352
      %v2692 = vunpack.c.l.b16 %v2353
      %v2693 = vunpack.c.l.b16 %v2354
      %v2694 = vunpack.c.l.b16 %v2355
      %v2695 = vunpack.c.l.b16 %v2356
      %v2696 = vunpack.c.l.b16 %v2357
      %v2697 = vunpack.c.l.b16 %v2358
      %v2698 = vunpack.c.l.b16 %v2359
      %v2699 = vunpack.c.l.b16 %v2360
      %v2700 = vunpack.c.l.b16 %v2361
      %v2701 = vunpack.c.l.b16 %v2362
      %v2702 = vunpack.c.l.b16 %v2363
      %v2703 = vunpack.c.l.b16 %v2364
      %v2704 = vunpack.c.l.b16 %v2365
      %v2705 = vunpack.c.l.b16 %v2366
      %v2706 = vunpack.c.l.b16 %v2367
      %v2707 = vunpack.c.l.b16 %v2368
      %v2708 = vunpack.c.l.b16 %v2369
      %v2709 = vunpack.c.l.b16 %v2370
      %v2710 = vunpack.c.l.b16 %v2371
      %v2711 = vunpack.c.l.b16 %v2372
      %v2712 = vunpack.c.l.b16 %v2373
      %v2713 = vunpack.c.l.b16 %v2374
      %v2714 = vunpack.c.l.b16 %v2375
      %v2715 = vunpack.c.l.b16 %v2376
      %v2716 = vunpack.c.l.b16 %v2377
      %v2717 = vunpack.c.l.b16 %v2378
      %v2718 = vunpack.c.l.b16 %v2379
      %v2719 = vunpack.c.l.b16 %v2380
      %v2720 = vunpack.c.l.b16 %v2381
      %v2721 = vunpack.c.l.b16 %v2382
      %v2722 = vunpack.c.l.b16 %v2383
      %v2723 = vunpack.c.l.b16 %v2384
      %v2724 = vunpack.c.l.b16 %v2385
      %v2725 = vunpack.c.l.b16 %v2386
      %v2726 = vunpack.c.l.b16 %v2387
      %v2727 = vunpack.c.l.b16 %v2388
      %v2728 = vunpack.c.l.b16 %v2389
      %v2729 = vunpack.c.l.b16 %v2390
      %v2730 = vunpack.c.l.b16 %v2391
      %v2731 = vunpack.c.l.b16 %v2392
      %v2732 = vunpack.c.l.b16 %v2393
      %v2733 = vunpack.c.l.b16 %v2394
      %v2734 = vunpack.c.l.b16 %v2395
      %v2735 = vunpack.c.l.b16 %v2396
      %v2736 = vunpack.c.l.b16 %v2397
      %v2737 = vunpack.c.l.b16 %v2398
      %v2738 = vunpack.c.l.b16 %v2399
      %v2739 = vunpack.c.l.b16 %v2400
      %v2740 = vunpack.c.l.b16 %v2401
      %v2741 = vunpack.c.l.b16 %v2402
      %v2742 = vunpack.c.l.b16 %v2403
      %v2743 = vunpack.c.l.b16 %v2404
      %v2744 = vunpack.c.l.b16 %v2405
      %v2745 = vunpack.c.l.b16 %v2406
      %v2746 = vunpack.c.l.b16 %v2407
      %v2747 = vunpack.c.l.b16 %v2408
      %v2748 = vunpack.c.l.b16 %v2409
      %v2749 = vunpack.c.l.b16 %v2410
      %v2750 = vunpack.c.l.b16 %v2411
      %v2751 = vunpack.c.l.b16 %v2412
      %v2752 = vunpack.c.l.b16 %v2413
      %v2753 = vunpack.c.l.b16 %v2414
      %v2754 = vunpack.c.l.b16 %v2415
      %v2755 = vunpack.c.l.b16 %v2416
      %v2756 = vunpack.c.l.b16 %v2417
      %v2757 = vunpack.c.l.b16 %v2418
      %v2758 = vunpack.c.l.b16 %v2419
      %v2759 = vunpack.c.l.b16 %v2420
      %v2760 = vunpack.c.l.b16 %v2421
      %v2761 = vunpack.c.l.b16 %v2422
      %v2762 = vunpack.c.l.b16 %v2423
      %v2763 = vunpack.c.l.b16 %v2424
      %v2764 = vunpack.c.l.b16 %v2425
      %v2765 = vunpack.c.l.b16 %v2426
      %v2766 = vunpack.c.l.b16 %v2427
      %v2767 = vunpack.c.l.b16 %v2428
      %v2768 = vunpack.c.l.b16 %v2429
      %v2769 = vunpack.c.l.b16 %v2430
      %v2770 = vunpack.c.l.b16 %v2431
      %v2771 = vunpack.c.l.b16 %v2432
      %v2772 = vunpack.c.l.b16 %v2433
      %v2773 = vunpack.c.l.b16 %v2434
      %v2774 = vunpack.c.l.b16 %v2435
      %v2775 = vunpack.c.l.b16 %v2436
      %v2776 = vunpack.c.l.b16 %v2437
      %v2777 = vunpack.c.l.b16 %v2438
      %v2778 = vunpack.c.l.b16 %v2439
      %v2779 = vunpack.c.l.b16 %v2440
      %v2780 = vunpack.c.l.b16 %v2441
      %v2781 = vunpack.c.l.b16 %v2442
      %v2782 = vunpack.c.l.b16 %v2443
      %v2783 = vunpack.c.l.b16 %v2444
      %v2784 = vunpack.c.l.b16 %v2445
      %v2785 = vunpack.c.l.b16 %v2446
      %v2786 = vunpack.c.l.b16 %v2447
      %v2787 = vunpack.c.l.b16 %v2448
      %v2788 = vunpack.c.l.b16 %v2449
      %v2789 = vunpack.c.l.b16 %v2450
      %v2790 = vunpack.c.l.b16 %v2451
      %v2791 = vunpack.c.l.b16 %v2452
      %v2792 = vunpack.c.l.b16 %v2453
      %v2793 = vunpack.c.l.b16 %v2454
      %v2794 = vunpack.c.l.b16 %v2455
      %v2795 = vunpack.c.l.b16 %v2456
      %v2796 = vpack.c.b16 %v2685, %v2684
      %v2797 = vpack.c.b16 %v2687, %v2686
      %v2798 = vpack.c.b16 %v2689, %v2688
      %v2799 = vpack.c.b16 %v2691, %v2690
      %v2800 = vpack.c.b16 %v2693, %v2692
      %v2801 = vpack.c.b16 %v2695, %v2694
      %v2802 = vpack.c.b16 %v2697, %v2696
      %v2803 = vpack.c.b16 %v2699, %v2698
      %v2804 = vpack.c.b16 %v2701, %v2700
      %v2805 = vpack.c.b16 %v2703, %v2702
      %v2806 = vpack.c.b16 %v2705, %v2704
      %v2807 = vpack.c.b16 %v2707, %v2706
      %v2808 = vpack.c.b16 %v2709, %v2708
      %v2809 = vpack.c.b16 %v2711, %v2710
      %v2810 = vpack.c.b16 %v2713, %v2712
      %v2811 = vpack.c.b16 %v2715, %v2714
      %v2812 = vpack.c.b16 %v2717, %v2716
      %v2813 = vpack.c.b16 %v2719, %v2718
      %v2814 = vpack.c.b16 %v2721, %v2720
      %v2815 = vpack.c.b16 %v2723, %v2722
      %v2816 = vpack.c.b16 %v2725, %v2724
      %v2817 = vpack.c.b16 %v2727, %v2726
      %v2818 = vpack.c.b16 %v2729, %v2728
      %v2819 = vpack.c.b16 %v2731, %v2730
      %v2820 = vpack.c.b16 %v2733, %v2732
      %v2821 = vpack.c.b16 %v2735, %v2734
      %v2822 = vpack.c.b16 %v2737, %v2736
      %v2823 = vpack.c.b16 %v2739, %v2738
      %v2824 = vpack.c.b16 %v2741, %v2740
      %v2825 = vpack.c.b16 %v2743, %v2742
      %v2826 = vpack.c.b16 %v2745, %v2744
      %v2827 = vpack.c.b16 %v2747, %v2746
      %v2828 = vpack.c.b16 %v2749, %v2748
      %v2829 = vpack.c.b16 %v2751, %v2750
      %v2830 = vpack.c.b16 %v2753, %v2752
      %v2831 = vpack.c.b16 %v2755, %v2754
      %v2832 = vpack.c.b16 %v2757, %v2756
      %v2833 = vpack.c.b16 %v2759, %v2758
      %v2834 = vpack.c.b16 %v2761, %v2760
      %v2835 = vpack.c.b16 %v2763, %v2762
      %v2836 = vpack.c.b16 %v2765, %v2764
      %v2837 = vpack.c.b16 %v2767, %v2766
      %v2838 = vpack.c.b16 %v2769, %v2768
      %v2839 = vpack.c.b16 %v2771, %v2770
      %v2840 = vpack.c.b16 %v2773, %v2772
      %v2841 = vpack.c.b16 %v2775, %v2774
      %v2842 = vpack.c.b16 %v2777, %v2776
      %v2843 = vpack.c.b16 %v2779, %v2778
      %v2844 = vpack.c.b16 %v2781, %v2780
      %v2845 = vpack.c.b16 %v2783, %v2782
      %v2846 = vpack.c.b16 %v2785, %v2784
      %v2847 = vpack.c.b16 %v2787, %v2786
      %v2848 = vpack.c.b16 %v2789, %v2788
      %v2849 = vpack.c.b16 %v2791, %v2790
      %v2850 = vpack.c.b16 %v2793, %v2792
      %v2851 = vpack.c.b16 %v2795, %v2794
      %v2854 = vunpack.c.l.b16 %v2570
      %v2855 = vunpack.c.l.b16 %v2571
      %v2856 = vpack.c.b16 %v2855, %v2854
      %v2858 = vsel %vm571, %v2796, 0
      %v2861 = vsel %vm571, %v2797, 0
      %v2864 = vsel %vm571, %v2798, 0
      %v2867 = vsel %vm571, %v2799, 0
      %v2870 = vsel %vm571, %v2800, 0
      %v2873 = vsel %vm571, %v2801, 0
      %v2876 = vsel %vm571, %v2802, 0
      %v2879 = vsel %vm571, %v2803, 0
      %v2882 = vsel %vm571, %v2804, 0
      %v2885 = vsel %vm571, %v2805, 0
      %v2888 = vsel %vm571, %v2806, 0
      %v2891 = vsel %vm571, %v2807, 0
      %v2894 = vsel %vm571, %v2808, 0
      %v2897 = vsel %vm571, %v2809, 0
      %v2900 = vsel %vm571, %v2810, 0
      %v2903 = vsel %vm571, %v2811, 0
      %v2906 = vsel %vm571, %v2812, 0
      %v2909 = vsel %vm571, %v2813, 0
      %v2912 = vsel %vm571, %v2814, 0
      %v2915 = vsel %vm571, %v2815, 0
      %v2918 = vsel %vm571, %v2816, 0
      %v2921 = vsel %vm571, %v2817, 0
      %v2924 = vsel %vm571, %v2818, 0
      %v2927 = vsel %vm571, %v2819, 0
      %v2930 = vsel %vm571, %v2820, 0
      %v2933 = vsel %vm571, %v2821, 0
      %v2936 = vsel %vm571, %v2822, 0
      %v2939 = vsel %vm571, %v2823, 0
      %v2942 = vsel %vm571, %v2824, 0
      %v2945 = vsel %vm571, %v2825, 0
      %v2948 = vsel %vm571, %v2826, 0
      %v2951 = vsel %vm571, %v2827, 0
      %v2954 = vsel %vm571, %v2828, 0
      %v2957 = vsel %vm571, %v2829, 0
      %v2960 = vsel %vm571, %v2830, 0
      %v2963 = vsel %vm571, %v2831, 0
      %v2966 = vsel %vm571, %v2832, 0
      %v2969 = vsel %vm571, %v2833, 0
      %v2972 = vsel %vm571, %v2834, 0
      %v2975 = vsel %vm571, %v2835, 0
      %v2978 = vsel %vm571, %v2836, 0
      %v2981 = vsel %vm571, %v2837, 0
      %v2984 = vsel %vm571, %v2838, 0
      %v2987 = vsel %vm571, %v2839, 0
      %v2990 = vsel %vm571, %v2840, 0
      %v2993 = vsel %vm571, %v2841, 0
      %v2996 = vsel %vm571, %v2842, 0
      %v2999 = vsel %vm571, %v2843, 0
      %v3002 = vsel %vm571, %v2844, 0
      %v3005 = vsel %vm571, %v2845, 0
      %v3008 = vsel %vm571, %v2846, 0
      %v3011 = vsel %vm571, %v2847, 0
      %v3014 = vsel %vm571, %v2848, 0
      %v3017 = vsel %vm571, %v2849, 0
      %v3020 = vsel %vm571, %v2850, 0
      %v3023 = vsel %vm571, %v2851, 0
      %v3026 = vand.u32 %v2856, %v743
      %3028 = vmatpush.bf16.msra.mxu0 0
      %3029 = vmatpush.bf16.msra.mxu0 0
      %3030 = vmatpush.bf16.msra.mxu0 0
      %3031 = vmatpush.bf16.msra.mxu0 0
      %3032 = vmatpush.bf16.msra.mxu0 0
      %3033 = vmatpush.bf16.msra.mxu0 0
      %3034 = vmatpush.bf16.msra.mxu0 0
      %3035 = vmatpush.bf16.msra.mxu0 %v3026
      %3036 = vmatmul.bf16.gmra.mxu0 %v2858
      %v3037 = vpop.f32.mrf.mxu0
      %v3038 = vadd.f32 0.0, %v3037
      %v3039 = vpop.f32.mrf.mxu0
      %v3040 = vadd.f32 0.0, %v3039
      %3041 = vmatmul.bf16.gmra.mxu0 %v2861
      %v3042 = vpop.f32.mrf.mxu0
      %v3043 = vadd.f32 0.0, %v3042
      %v3044 = vpop.f32.mrf.mxu0
      %v3045 = vadd.f32 0.0, %v3044
      %3046 = vmatmul.bf16.gmra.mxu0 %v2864
      %v3047 = vpop.f32.mrf.mxu0
      %v3048 = vadd.f32 0.0, %v3047
      %v3049 = vpop.f32.mrf.mxu0
      %v3050 = vadd.f32 0.0, %v3049
      %3051 = vmatmul.bf16.gmra.mxu0 %v2867
      %v3052 = vpop.f32.mrf.mxu0
      %v3053 = vadd.f32 0.0, %v3052
      %v3054 = vpop.f32.mrf.mxu0
      %v3055 = vadd.f32 0.0, %v3054
      %3056 = vmatmul.bf16.gmra.mxu0 %v2870
      %v3057 = vpop.f32.mrf.mxu0
      %v3058 = vadd.f32 0.0, %v3057
      %v3059 = vpop.f32.mrf.mxu0
      %v3060 = vadd.f32 0.0, %v3059
      %3061 = vmatmul.bf16.gmra.mxu0 %v2873
      %v3062 = vpop.f32.mrf.mxu0
      %v3063 = vadd.f32 0.0, %v3062
      %v3064 = vpop.f32.mrf.mxu0
      %v3065 = vadd.f32 0.0, %v3064
      %3066 = vmatmul.bf16.gmra.mxu0 %v2876
      %v3067 = vpop.f32.mrf.mxu0
      %v3068 = vadd.f32 0.0, %v3067
      %v3069 = vpop.f32.mrf.mxu0
      %v3070 = vadd.f32 0.0, %v3069
      %3071 = vmatmul.bf16.gmra.mxu0 %v2879
      %v3072 = vpop.f32.mrf.mxu0
      %v3073 = vadd.f32 0.0, %v3072
      %v3074 = vpop.f32.mrf.mxu0
      %v3075 = vadd.f32 0.0, %v3074
      %3076 = vmatmul.bf16.gmra.mxu0 %v2882
      %v3077 = vpop.f32.mrf.mxu0
      %v3078 = vadd.f32 0.0, %v3077
      %v3079 = vpop.f32.mrf.mxu0
      %v3080 = vadd.f32 0.0, %v3079
      %3081 = vmatmul.bf16.gmra.mxu0 %v2885
      %v3082 = vpop.f32.mrf.mxu0
      %v3083 = vadd.f32 0.0, %v3082
      %v3084 = vpop.f32.mrf.mxu0
      %v3085 = vadd.f32 0.0, %v3084
      %3086 = vmatmul.bf16.gmra.mxu0 %v2888
      %v3087 = vpop.f32.mrf.mxu0
      %v3088 = vadd.f32 0.0, %v3087
      %v3089 = vpop.f32.mrf.mxu0
      %v3090 = vadd.f32 0.0, %v3089
      %3091 = vmatmul.bf16.gmra.mxu0 %v2891
      %v3092 = vpop.f32.mrf.mxu0
      %v3093 = vadd.f32 0.0, %v3092
      %v3094 = vpop.f32.mrf.mxu0
      %v3095 = vadd.f32 0.0, %v3094
      %3096 = vmatmul.bf16.gmra.mxu0 %v2894
      %v3097 = vpop.f32.mrf.mxu0
      %v3098 = vadd.f32 0.0, %v3097
      %v3099 = vpop.f32.mrf.mxu0
      %v3100 = vadd.f32 0.0, %v3099
      %3101 = vmatmul.bf16.gmra.mxu0 %v2897
      %v3102 = vpop.f32.mrf.mxu0
      %v3103 = vadd.f32 0.0, %v3102
      %v3104 = vpop.f32.mrf.mxu0
      %v3105 = vadd.f32 0.0, %v3104
      %3106 = vmatmul.bf16.gmra.mxu0 %v2900
      %v3107 = vpop.f32.mrf.mxu0
      %v3108 = vadd.f32 0.0, %v3107
      %v3109 = vpop.f32.mrf.mxu0
      %v3110 = vadd.f32 0.0, %v3109
      %3111 = vmatmul.bf16.gmra.mxu0 %v2903
      %v3112 = vpop.f32.mrf.mxu0
      %v3113 = vadd.f32 0.0, %v3112
      %v3114 = vpop.f32.mrf.mxu0
      %v3115 = vadd.f32 0.0, %v3114
      %3116 = vmatmul.bf16.gmra.mxu0 %v2906
      %v3117 = vpop.f32.mrf.mxu0
      %v3118 = vadd.f32 0.0, %v3117
      %v3119 = vpop.f32.mrf.mxu0
      %v3120 = vadd.f32 0.0, %v3119
      %3121 = vmatmul.bf16.gmra.mxu0 %v2909
      %v3122 = vpop.f32.mrf.mxu0
      %v3123 = vadd.f32 0.0, %v3122
      %v3124 = vpop.f32.mrf.mxu0
      %v3125 = vadd.f32 0.0, %v3124
      %3126 = vmatmul.bf16.gmra.mxu0 %v2912
      %v3127 = vpop.f32.mrf.mxu0
      %v3128 = vadd.f32 0.0, %v3127
      %v3129 = vpop.f32.mrf.mxu0
      %v3130 = vadd.f32 0.0, %v3129
      %3131 = vmatmul.bf16.gmra.mxu0 %v2915
      %v3132 = vpop.f32.mrf.mxu0
      %v3133 = vadd.f32 0.0, %v3132
      %v3134 = vpop.f32.mrf.mxu0
      %v3135 = vadd.f32 0.0, %v3134
      %3136 = vmatmul.bf16.gmra.mxu0 %v2918
      %v3137 = vpop.f32.mrf.mxu0
      %v3138 = vadd.f32 0.0, %v3137
      %v3139 = vpop.f32.mrf.mxu0
      %v3140 = vadd.f32 0.0, %v3139
      %3141 = vmatmul.bf16.gmra.mxu0 %v2921
      %v3142 = vpop.f32.mrf.mxu0
      %v3143 = vadd.f32 0.0, %v3142
      %v3144 = vpop.f32.mrf.mxu0
      %v3145 = vadd.f32 0.0, %v3144
      %3146 = vmatmul.bf16.gmra.mxu0 %v2924
      %v3147 = vpop.f32.mrf.mxu0
      %v3148 = vadd.f32 0.0, %v3147
      %v3149 = vpop.f32.mrf.mxu0
      %v3150 = vadd.f32 0.0, %v3149
      %3151 = vmatmul.bf16.gmra.mxu0 %v2927
      %v3152 = vpop.f32.mrf.mxu0
      %v3153 = vadd.f32 0.0, %v3152
      %v3154 = vpop.f32.mrf.mxu0
      %v3155 = vadd.f32 0.0, %v3154
      %3156 = vmatmul.bf16.gmra.mxu0 %v2930
      %v3157 = vpop.f32.mrf.mxu0
      %v3158 = vadd.f32 0.0, %v3157
      %v3159 = vpop.f32.mrf.mxu0
      %v3160 = vadd.f32 0.0, %v3159
      %3161 = vmatmul.bf16.gmra.mxu0 %v2933
      %v3162 = vpop.f32.mrf.mxu0
      %v3163 = vadd.f32 0.0, %v3162
      %v3164 = vpop.f32.mrf.mxu0
      %v3165 = vadd.f32 0.0, %v3164
      %3166 = vmatmul.bf16.gmra.mxu0 %v2936
      %v3167 = vpop.f32.mrf.mxu0
      %v3168 = vadd.f32 0.0, %v3167
      %v3169 = vpop.f32.mrf.mxu0
      %v3170 = vadd.f32 0.0, %v3169
      %3171 = vmatmul.bf16.gmra.mxu0 %v2939
      %v3172 = vpop.f32.mrf.mxu0
      %v3173 = vadd.f32 0.0, %v3172
      %v3174 = vpop.f32.mrf.mxu0
      %v3175 = vadd.f32 0.0, %v3174
      %3176 = vmatmul.bf16.gmra.mxu0 %v2942
      %v3177 = vpop.f32.mrf.mxu0
      %v3178 = vadd.f32 0.0, %v3177
      %v3179 = vpop.f32.mrf.mxu0
      %v3180 = vadd.f32 0.0, %v3179
      %3181 = vmatmul.bf16.gmra.mxu0 %v2945
      %v3182 = vpop.f32.mrf.mxu0
      %v3183 = vadd.f32 0.0, %v3182
      %v3184 = vpop.f32.mrf.mxu0
      %v3185 = vadd.f32 0.0, %v3184
      %3186 = vmatmul.bf16.gmra.mxu0 %v2948
      %v3187 = vpop.f32.mrf.mxu0
      %v3188 = vadd.f32 0.0, %v3187
      %v3189 = vpop.f32.mrf.mxu0
      %v3190 = vadd.f32 0.0, %v3189
      %3191 = vmatmul.bf16.gmra.mxu0 %v2951
      %v3192 = vpop.f32.mrf.mxu0
      %v3193 = vadd.f32 0.0, %v3192
      %v3194 = vpop.f32.mrf.mxu0
      %v3195 = vadd.f32 0.0, %v3194
      %3196 = vmatmul.bf16.gmra.mxu0 %v2954
      %v3197 = vpop.f32.mrf.mxu0
      %v3198 = vadd.f32 0.0, %v3197
      %v3199 = vpop.f32.mrf.mxu0
      %v3200 = vadd.f32 0.0, %v3199
      %3201 = vmatmul.bf16.gmra.mxu0 %v2957
      %v3202 = vpop.f32.mrf.mxu0
      %v3203 = vadd.f32 0.0, %v3202
      %v3204 = vpop.f32.mrf.mxu0
      %v3205 = vadd.f32 0.0, %v3204
      %3206 = vmatmul.bf16.gmra.mxu0 %v2960
      %v3207 = vpop.f32.mrf.mxu0
      %v3208 = vadd.f32 0.0, %v3207
      %v3209 = vpop.f32.mrf.mxu0
      %v3210 = vadd.f32 0.0, %v3209
      %3211 = vmatmul.bf16.gmra.mxu0 %v2963
      %v3212 = vpop.f32.mrf.mxu0
      %v3213 = vadd.f32 0.0, %v3212
      %v3214 = vpop.f32.mrf.mxu0
      %v3215 = vadd.f32 0.0, %v3214
      %3216 = vmatmul.bf16.gmra.mxu0 %v2966
      %v3217 = vpop.f32.mrf.mxu0
      %v3218 = vadd.f32 0.0, %v3217
      %v3219 = vpop.f32.mrf.mxu0
      %v3220 = vadd.f32 0.0, %v3219
      %3221 = vmatmul.bf16.gmra.mxu0 %v2969
      %v3222 = vpop.f32.mrf.mxu0
      %v3223 = vadd.f32 0.0, %v3222
      %v3224 = vpop.f32.mrf.mxu0
      %v3225 = vadd.f32 0.0, %v3224
      %3226 = vmatmul.bf16.gmra.mxu0 %v2972
      %v3227 = vpop.f32.mrf.mxu0
      %v3228 = vadd.f32 0.0, %v3227
      %v3229 = vpop.f32.mrf.mxu0
      %v3230 = vadd.f32 0.0, %v3229
      %3231 = vmatmul.bf16.gmra.mxu0 %v2975
      %v3232 = vpop.f32.mrf.mxu0
      %v3233 = vadd.f32 0.0, %v3232
      %v3234 = vpop.f32.mrf.mxu0
      %v3235 = vadd.f32 0.0, %v3234
      %3236 = vmatmul.bf16.gmra.mxu0 %v2978
      %v3237 = vpop.f32.mrf.mxu0
      %v3238 = vadd.f32 0.0, %v3237
      %v3239 = vpop.f32.mrf.mxu0
      %v3240 = vadd.f32 0.0, %v3239
      %3241 = vmatmul.bf16.gmra.mxu0 %v2981
      %v3242 = vpop.f32.mrf.mxu0
      %v3243 = vadd.f32 0.0, %v3242
      %v3244 = vpop.f32.mrf.mxu0
      %v3245 = vadd.f32 0.0, %v3244
      %3246 = vmatmul.bf16.gmra.mxu0 %v2984
      %v3247 = vpop.f32.mrf.mxu0
      %v3248 = vadd.f32 0.0, %v3247
      %v3249 = vpop.f32.mrf.mxu0
      %v3250 = vadd.f32 0.0, %v3249
      %3251 = vmatmul.bf16.gmra.mxu0 %v2987
      %v3252 = vpop.f32.mrf.mxu0
      %v3253 = vadd.f32 0.0, %v3252
      %v3254 = vpop.f32.mrf.mxu0
      %v3255 = vadd.f32 0.0, %v3254
      %3256 = vmatmul.bf16.gmra.mxu0 %v2990
      %v3257 = vpop.f32.mrf.mxu0
      %v3258 = vadd.f32 0.0, %v3257
      %v3259 = vpop.f32.mrf.mxu0
      %v3260 = vadd.f32 0.0, %v3259
      %3261 = vmatmul.bf16.gmra.mxu0 %v2993
      %v3262 = vpop.f32.mrf.mxu0
      %v3263 = vadd.f32 0.0, %v3262
      %v3264 = vpop.f32.mrf.mxu0
      %v3265 = vadd.f32 0.0, %v3264
      %3266 = vmatmul.bf16.gmra.mxu0 %v2996
      %v3267 = vpop.f32.mrf.mxu0
      %v3268 = vadd.f32 0.0, %v3267
      %v3269 = vpop.f32.mrf.mxu0
      %v3270 = vadd.f32 0.0, %v3269
      %3271 = vmatmul.bf16.gmra.mxu0 %v2999
      %v3272 = vpop.f32.mrf.mxu0
      %v3273 = vadd.f32 0.0, %v3272
      %v3274 = vpop.f32.mrf.mxu0
      %v3275 = vadd.f32 0.0, %v3274
      %3276 = vmatmul.bf16.gmra.mxu0 %v3002
      %v3277 = vpop.f32.mrf.mxu0
      %v3278 = vadd.f32 0.0, %v3277
      %v3279 = vpop.f32.mrf.mxu0
      %v3280 = vadd.f32 0.0, %v3279
      %3281 = vmatmul.bf16.gmra.mxu0 %v3005
      %v3282 = vpop.f32.mrf.mxu0
      %v3283 = vadd.f32 0.0, %v3282
      %v3284 = vpop.f32.mrf.mxu0
      %v3285 = vadd.f32 0.0, %v3284
      %3286 = vmatmul.bf16.gmra.mxu0 %v3008
      %v3287 = vpop.f32.mrf.mxu0
      %v3288 = vadd.f32 0.0, %v3287
      %v3289 = vpop.f32.mrf.mxu0
      %v3290 = vadd.f32 0.0, %v3289
      %3291 = vmatmul.bf16.gmra.mxu0 %v3011
      %v3292 = vpop.f32.mrf.mxu0
      %v3293 = vadd.f32 0.0, %v3292
      %v3294 = vpop.f32.mrf.mxu0
      %v3295 = vadd.f32 0.0, %v3294
      %3296 = vmatmul.bf16.gmra.mxu0 %v3014
      %v3297 = vpop.f32.mrf.mxu0
      %v3298 = vadd.f32 0.0, %v3297
      %v3299 = vpop.f32.mrf.mxu0
      %v3300 = vadd.f32 0.0, %v3299
      %3301 = vmatmul.bf16.gmra.mxu0 %v3017
      %v3302 = vpop.f32.mrf.mxu0
      %v3303 = vadd.f32 0.0, %v3302
      %v3304 = vpop.f32.mrf.mxu0
      %v3305 = vadd.f32 0.0, %v3304
      %3306 = vmatmul.bf16.gmra.mxu0 %v3020
      %v3307 = vpop.f32.mrf.mxu0
      %v3308 = vadd.f32 0.0, %v3307
      %v3309 = vpop.f32.mrf.mxu0
      %v3310 = vadd.f32 0.0, %v3309
      %3311 = vmatmul.bf16.gmra.mxu0 %v3023
      %v3312 = vpop.f32.mrf.mxu0
      %v3313 = vadd.f32 0.0, %v3312
      %v3314 = vpop.f32.mrf.mxu0
      %v3315 = vadd.f32 0.0, %v3314
      %3316 = vdwg.mxu0
      %v3317 = vadd.f32 %v2457, %v3038
      %v3318 = vadd.f32 %v2458, %v3040
      %v3319 = vadd.f32 %v2459, %v3043
      %v3320 = vadd.f32 %v2460, %v3045
      %v3321 = vadd.f32 %v2461, %v3048
      %v3322 = vadd.f32 %v2462, %v3050
      %v3323 = vadd.f32 %v2463, %v3053
      %v3324 = vadd.f32 %v2464, %v3055
      %v3325 = vadd.f32 %v2465, %v3058
      %v3326 = vadd.f32 %v2466, %v3060
      %v3327 = vadd.f32 %v2467, %v3063
      %v3328 = vadd.f32 %v2468, %v3065
      %v3329 = vadd.f32 %v2469, %v3068
      %v3330 = vadd.f32 %v2470, %v3070
      %v3331 = vadd.f32 %v2471, %v3073
      %v3332 = vadd.f32 %v2472, %v3075
      %v3333 = vadd.f32 %v2473, %v3078
      %v3334 = vadd.f32 %v2474, %v3080
      %v3335 = vadd.f32 %v2475, %v3083
      %v3336 = vadd.f32 %v2476, %v3085
      %v3337 = vadd.f32 %v2477, %v3088
      %v3338 = vadd.f32 %v2478, %v3090
      %v3339 = vadd.f32 %v2479, %v3093
      %v3340 = vadd.f32 %v2480, %v3095
      %v3341 = vadd.f32 %v2481, %v3098
      %v3342 = vadd.f32 %v2482, %v3100
      %v3343 = vadd.f32 %v2483, %v3103
      %v3344 = vadd.f32 %v2484, %v3105
      %v3345 = vadd.f32 %v2485, %v3108
      %v3346 = vadd.f32 %v2486, %v3110
      %v3347 = vadd.f32 %v2487, %v3113
      %v3348 = vadd.f32 %v2488, %v3115
      %v3349 = vadd.f32 %v2489, %v3118
      %v3350 = vadd.f32 %v2490, %v3120
      %v3351 = vadd.f32 %v2491, %v3123
      %v3352 = vadd.f32 %v2492, %v3125
      %v3353 = vadd.f32 %v2493, %v3128
      %v3354 = vadd.f32 %v2494, %v3130
      %v3355 = vadd.f32 %v2495, %v3133
      %v3356 = vadd.f32 %v2496, %v3135
      %v3357 = vadd.f32 %v2497, %v3138
      %v3358 = vadd.f32 %v2498, %v3140
      %v3359 = vadd.f32 %v2499, %v3143
      %v3360 = vadd.f32 %v2500, %v3145
      %v3361 = vadd.f32 %v2501, %v3148
      %v3362 = vadd.f32 %v2502, %v3150
      %v3363 = vadd.f32 %v2503, %v3153
      %v3364 = vadd.f32 %v2504, %v3155
      %v3365 = vadd.f32 %v2505, %v3158
      %v3366 = vadd.f32 %v2506, %v3160
      %v3367 = vadd.f32 %v2507, %v3163
      %v3368 = vadd.f32 %v2508, %v3165
      %v3369 = vadd.f32 %v2509, %v3168
      %v3370 = vadd.f32 %v2510, %v3170
      %v3371 = vadd.f32 %v2511, %v3173
      %v3372 = vadd.f32 %v2512, %v3175
      %v3373 = vadd.f32 %v2513, %v3178
      %v3374 = vadd.f32 %v2514, %v3180
      %v3375 = vadd.f32 %v2515, %v3183
      %v3376 = vadd.f32 %v2516, %v3185
      %v3377 = vadd.f32 %v2517, %v3188
      %v3378 = vadd.f32 %v2518, %v3190
      %v3379 = vadd.f32 %v2519, %v3193
      %v3380 = vadd.f32 %v2520, %v3195
      %v3381 = vadd.f32 %v2521, %v3198
      %v3382 = vadd.f32 %v2522, %v3200
      %v3383 = vadd.f32 %v2523, %v3203
      %v3384 = vadd.f32 %v2524, %v3205
      %v3385 = vadd.f32 %v2525, %v3208
      %v3386 = vadd.f32 %v2526, %v3210
      %v3387 = vadd.f32 %v2527, %v3213
      %v3388 = vadd.f32 %v2528, %v3215
      %v3389 = vadd.f32 %v2529, %v3218
      %v3390 = vadd.f32 %v2530, %v3220
      %v3391 = vadd.f32 %v2531, %v3223
      %v3392 = vadd.f32 %v2532, %v3225
      %v3393 = vadd.f32 %v2533, %v3228
      %v3394 = vadd.f32 %v2534, %v3230
      %v3395 = vadd.f32 %v2535, %v3233
      %v3396 = vadd.f32 %v2536, %v3235
      %v3397 = vadd.f32 %v2537, %v3238
      %v3398 = vadd.f32 %v2538, %v3240
      %v3399 = vadd.f32 %v2539, %v3243
      %v3400 = vadd.f32 %v2540, %v3245
      %v3401 = vadd.f32 %v2541, %v3248
      %v3402 = vadd.f32 %v2542, %v3250
      %v3403 = vadd.f32 %v2543, %v3253
      %v3404 = vadd.f32 %v2544, %v3255
      %v3405 = vadd.f32 %v2545, %v3258
      %v3406 = vadd.f32 %v2546, %v3260
      %v3407 = vadd.f32 %v2547, %v3263
      %v3408 = vadd.f32 %v2548, %v3265
      %v3409 = vadd.f32 %v2549, %v3268
      %v3410 = vadd.f32 %v2550, %v3270
      %v3411 = vadd.f32 %v2551, %v3273
      %v3412 = vadd.f32 %v2552, %v3275
      %v3413 = vadd.f32 %v2553, %v3278
      %v3414 = vadd.f32 %v2554, %v3280
      %v3415 = vadd.f32 %v2555, %v3283
      %v3416 = vadd.f32 %v2556, %v3285
      %v3417 = vadd.f32 %v2557, %v3288
      %v3418 = vadd.f32 %v2558, %v3290
      %v3419 = vadd.f32 %v2559, %v3293
      %v3420 = vadd.f32 %v2560, %v3295
      %v3421 = vadd.f32 %v2561, %v3298
      %v3422 = vadd.f32 %v2562, %v3300
      %v3423 = vadd.f32 %v2563, %v3303
      %v3424 = vadd.f32 %v2564, %v3305
      %v3425 = vadd.f32 %v2565, %v3308
      %v3426 = vadd.f32 %v2566, %v3310
      %v3427 = vadd.f32 %v2567, %v3313
      %v3428 = vadd.f32 %v2568, %v3315
      %3429 = vst.msk [vmem:[#allocation2] sm:$0xff] %vm1036, %v3317
      %3430 = vst.msk [vmem:[#allocation2 + $0x8] sm:$0xff] %vm1036, %v3318
      %3431 = vst.msk [vmem:[#allocation2 + $0x10] sm:$0xff] %vm1036, %v3319
      %3432 = vst.msk [vmem:[#allocation2 + $0x18] sm:$0xff] %vm1036, %v3320
      %3433 = vst.msk [vmem:[#allocation2 + $0x20] sm:$0xff] %vm1036, %v3321
      %3434 = vst.msk [vmem:[#allocation2 + $0x28] sm:$0xff] %vm1036, %v3322
      %3435 = vst.msk [vmem:[#allocation2 + $0x30] sm:$0xff] %vm1036, %v3323
      %3436 = vst.msk [vmem:[#allocation2 + $0x38] sm:$0xff] %vm1036, %v3324
      %3437 = vst.msk [vmem:[#allocation2 + $0x40] sm:$0xff] %vm1036, %v3325
      %3438 = vst.msk [vmem:[#allocation2 + $0x48] sm:$0xff] %vm1036, %v3326
      %3439 = vst.msk [vmem:[#allocation2 + $0x50] sm:$0xff] %vm1036, %v3327
      %3440 = vst.msk [vmem:[#allocation2 + $0x58] sm:$0xff] %vm1036, %v3328
      %3441 = vst.msk [vmem:[#allocation2 + $0x60] sm:$0xff] %vm1036, %v3329
      %3442 = vst.msk [vmem:[#allocation2 + $0x68] sm:$0xff] %vm1036, %v3330
      %3443 = vst.msk [vmem:[#allocation2 + $0x70] sm:$0xff] %vm1036, %v3331
      %3444 = vst.msk [vmem:[#allocation2 + $0x78] sm:$0xff] %vm1036, %v3332
      %3445 = vst.msk [vmem:[#allocation2 + $0x80] sm:$0xff] %vm1036, %v3333
      %3446 = vst.msk [vmem:[#allocation2 + $0x88] sm:$0xff] %vm1036, %v3334
      %3447 = vst.msk [vmem:[#allocation2 + $0x90] sm:$0xff] %vm1036, %v3335
      %3448 = vst.msk [vmem:[#allocation2 + $0x98] sm:$0xff] %vm1036, %v3336
      %3449 = vst.msk [vmem:[#allocation2 + $0xa0] sm:$0xff] %vm1036, %v3337
      %3450 = vst.msk [vmem:[#allocation2 + $0xa8] sm:$0xff] %vm1036, %v3338
      %3451 = vst.msk [vmem:[#allocation2 + $0xb0] sm:$0xff] %vm1036, %v3339
      %3452 = vst.msk [vmem:[#allocation2 + $0xb8] sm:$0xff] %vm1036, %v3340
      %3453 = vst.msk [vmem:[#allocation2 + $0xc0] sm:$0xff] %vm1036, %v3341
      %3454 = vst.msk [vmem:[#allocation2 + $0xc8] sm:$0xff] %vm1036, %v3342
      %3455 = vst.msk [vmem:[#allocation2 + $0xd0] sm:$0xff] %vm1036, %v3343
      %3456 = vst.msk [vmem:[#allocation2 + $0xd8] sm:$0xff] %vm1036, %v3344
      %3457 = vst.msk [vmem:[#allocation2 + $0xe0] sm:$0xff] %vm1036, %v3345
      %3458 = vst.msk [vmem:[#allocation2 + $0xe8] sm:$0xff] %vm1036, %v3346
      %3459 = vst.msk [vmem:[#allocation2 + $0xf0] sm:$0xff] %vm1036, %v3347
      %3460 = vst.msk [vmem:[#allocation2 + $0xf8] sm:$0xff] %vm1036, %v3348
      %3461 = vst.msk [vmem:[#allocation2 + $0x100] sm:$0xff] %vm1036, %v3349
      %3462 = vst.msk [vmem:[#allocation2 + $0x108] sm:$0xff] %vm1036, %v3350
      %3463 = vst.msk [vmem:[#allocation2 + $0x110] sm:$0xff] %vm1036, %v3351
      %3464 = vst.msk [vmem:[#allocation2 + $0x118] sm:$0xff] %vm1036, %v3352
      %3465 = vst.msk [vmem:[#allocation2 + $0x120] sm:$0xff] %vm1036, %v3353
      %3466 = vst.msk [vmem:[#allocation2 + $0x128] sm:$0xff] %vm1036, %v3354
      %3467 = vst.msk [vmem:[#allocation2 + $0x130] sm:$0xff] %vm1036, %v3355
      %3468 = vst.msk [vmem:[#allocation2 + $0x138] sm:$0xff] %vm1036, %v3356
      %3469 = vst.msk [vmem:[#allocation2 + $0x140] sm:$0xff] %vm1036, %v3357
      %3470 = vst.msk [vmem:[#allocation2 + $0x148] sm:$0xff] %vm1036, %v3358
      %3471 = vst.msk [vmem:[#allocation2 + $0x150] sm:$0xff] %vm1036, %v3359
      %3472 = vst.msk [vmem:[#allocation2 + $0x158] sm:$0xff] %vm1036, %v3360
      %3473 = vst.msk [vmem:[#allocation2 + $0x160] sm:$0xff] %vm1036, %v3361
      %3474 = vst.msk [vmem:[#allocation2 + $0x168] sm:$0xff] %vm1036, %v3362
      %3475 = vst.msk [vmem:[#allocation2 + $0x170] sm:$0xff] %vm1036, %v3363
      %3476 = vst.msk [vmem:[#allocation2 + $0x178] sm:$0xff] %vm1036, %v3364
      %3477 = vst.msk [vmem:[#allocation2 + $0x180] sm:$0xff] %vm1036, %v3365
      %3478 = vst.msk [vmem:[#allocation2 + $0x188] sm:$0xff] %vm1036, %v3366
      %3479 = vst.msk [vmem:[#allocation2 + $0x190] sm:$0xff] %vm1036, %v3367
      %3480 = vst.msk [vmem:[#allocation2 + $0x198] sm:$0xff] %vm1036, %v3368
      %3481 = vst.msk [vmem:[#allocation2 + $0x1a0] sm:$0xff] %vm1036, %v3369
      %3482 = vst.msk [vmem:[#allocation2 + $0x1a8] sm:$0xff] %vm1036, %v3370
      %3483 = vst.msk [vmem:[#allocation2 + $0x1b0] sm:$0xff] %vm1036, %v3371
      %3484 = vst.msk [vmem:[#allocation2 + $0x1b8] sm:$0xff] %vm1036, %v3372
      %3485 = vst.msk [vmem:[#allocation2 + $0x1c0] sm:$0xff] %vm1036, %v3373
      %3486 = vst.msk [vmem:[#allocation2 + $0x1c8] sm:$0xff] %vm1036, %v3374
      %3487 = vst.msk [vmem:[#allocation2 + $0x1d0] sm:$0xff] %vm1036, %v3375
      %3488 = vst.msk [vmem:[#allocation2 + $0x1d8] sm:$0xff] %vm1036, %v3376
      %3489 = vst.msk [vmem:[#allocation2 + $0x1e0] sm:$0xff] %vm1036, %v3377
      %3490 = vst.msk [vmem:[#allocation2 + $0x1e8] sm:$0xff] %vm1036, %v3378
      %3491 = vst.msk [vmem:[#allocation2 + $0x1f0] sm:$0xff] %vm1036, %v3379
      %3492 = vst.msk [vmem:[#allocation2 + $0x1f8] sm:$0xff] %vm1036, %v3380
      %3493 = vst.msk [vmem:[#allocation2 + $0x200] sm:$0xff] %vm1036, %v3381
      %3494 = vst.msk [vmem:[#allocation2 + $0x208] sm:$0xff] %vm1036, %v3382
      %3495 = vst.msk [vmem:[#allocation2 + $0x210] sm:$0xff] %vm1036, %v3383
      %3496 = vst.msk [vmem:[#allocation2 + $0x218] sm:$0xff] %vm1036, %v3384
      %3497 = vst.msk [vmem:[#allocation2 + $0x220] sm:$0xff] %vm1036, %v3385
      %3498 = vst.msk [vmem:[#allocation2 + $0x228] sm:$0xff] %vm1036, %v3386
      %3499 = vst.msk [vmem:[#allocation2 + $0x230] sm:$0xff] %vm1036, %v3387
      %3500 = vst.msk [vmem:[#allocation2 + $0x238] sm:$0xff] %vm1036, %v3388
      %3501 = vst.msk [vmem:[#allocation2 + $0x240] sm:$0xff] %vm1036, %v3389
      %3502 = vst.msk [vmem:[#allocation2 + $0x248] sm:$0xff] %vm1036, %v3390
      %3503 = vst.msk [vmem:[#allocation2 + $0x250] sm:$0xff] %vm1036, %v3391
      %3504 = vst.msk [vmem:[#allocation2 + $0x258] sm:$0xff] %vm1036, %v3392
      %3505 = vst.msk [vmem:[#allocation2 + $0x260] sm:$0xff] %vm1036, %v3393
      %3506 = vst.msk [vmem:[#allocation2 + $0x268] sm:$0xff] %vm1036, %v3394
      %3507 = vst.msk [vmem:[#allocation2 + $0x270] sm:$0xff] %vm1036, %v3395
      %3508 = vst.msk [vmem:[#allocation2 + $0x278] sm:$0xff] %vm1036, %v3396
      %3509 = vst.msk [vmem:[#allocation2 + $0x280] sm:$0xff] %vm1036, %v3397
      %3510 = vst.msk [vmem:[#allocation2 + $0x288] sm:$0xff] %vm1036, %v3398
      %3511 = vst.msk [vmem:[#allocation2 + $0x290] sm:$0xff] %vm1036, %v3399
      %3512 = vst.msk [vmem:[#allocation2 + $0x298] sm:$0xff] %vm1036, %v3400
      %3513 = vst.msk [vmem:[#allocation2 + $0x2a0] sm:$0xff] %vm1036, %v3401
      %3514 = vst.msk [vmem:[#allocation2 + $0x2a8] sm:$0xff] %vm1036, %v3402
      %3515 = vst.msk [vmem:[#allocation2 + $0x2b0] sm:$0xff] %vm1036, %v3403
      %3516 = vst.msk [vmem:[#allocation2 + $0x2b8] sm:$0xff] %vm1036, %v3404
      %3517 = vst.msk [vmem:[#allocation2 + $0x2c0] sm:$0xff] %vm1036, %v3405
      %3518 = vst.msk [vmem:[#allocation2 + $0x2c8] sm:$0xff] %vm1036, %v3406
      %3519 = vst.msk [vmem:[#allocation2 + $0x2d0] sm:$0xff] %vm1036, %v3407
      %3520 = vst.msk [vmem:[#allocation2 + $0x2d8] sm:$0xff] %vm1036, %v3408
      %3521 = vst.msk [vmem:[#allocation2 + $0x2e0] sm:$0xff] %vm1036, %v3409
      %3522 = vst.msk [vmem:[#allocation2 + $0x2e8] sm:$0xff] %vm1036, %v3410
      %3523 = vst.msk [vmem:[#allocation2 + $0x2f0] sm:$0xff] %vm1036, %v3411
      %3524 = vst.msk [vmem:[#allocation2 + $0x2f8] sm:$0xff] %vm1036, %v3412
      %3525 = vst.msk [vmem:[#allocation2 + $0x300] sm:$0xff] %vm1036, %v3413
      %3526 = vst.msk [vmem:[#allocation2 + $0x308] sm:$0xff] %vm1036, %v3414
      %3527 = vst.msk [vmem:[#allocation2 + $0x310] sm:$0xff] %vm1036, %v3415
      %3528 = vst.msk [vmem:[#allocation2 + $0x318] sm:$0xff] %vm1036, %v3416
      %3529 = vst.msk [vmem:[#allocation2 + $0x320] sm:$0xff] %vm1036, %v3417
      %3530 = vst.msk [vmem:[#allocation2 + $0x328] sm:$0xff] %vm1036, %v3418
      %3531 = vst.msk [vmem:[#allocation2 + $0x330] sm:$0xff] %vm1036, %v3419
      %3532 = vst.msk [vmem:[#allocation2 + $0x338] sm:$0xff] %vm1036, %v3420
      %3533 = vst.msk [vmem:[#allocation2 + $0x340] sm:$0xff] %vm1036, %v3421
      %3534 = vst.msk [vmem:[#allocation2 + $0x348] sm:$0xff] %vm1036, %v3422
      %3535 = vst.msk [vmem:[#allocation2 + $0x350] sm:$0xff] %vm1036, %v3423
      %3536 = vst.msk [vmem:[#allocation2 + $0x358] sm:$0xff] %vm1036, %v3424
      %3537 = vst.msk [vmem:[#allocation2 + $0x360] sm:$0xff] %vm1036, %v3425
      %3538 = vst.msk [vmem:[#allocation2 + $0x368] sm:$0xff] %vm1036, %v3426
      %3539 = vst.msk [vmem:[#allocation2 + $0x370] sm:$0xff] %vm1036, %v3427
      %3540 = vst.msk [vmem:[#allocation2 + $0x378] sm:$0xff] %vm1036, %v3428
      %v3541 = vld [vmem:[%s165 + $0x30] sm:$0xf]
      %v3542 = vld [vmem:[%s165 + $0x34] sm:$0xf]
      %v3543 = vld [vmem:[%s165 + $0x38] sm:$0xf]
      %v3544 = vld [vmem:[%s165 + $0x3c] sm:$0xf]
      %v3545 = vld [vmem:[%s165 + $0x40] sm:$0xf]
      %v3546 = vld [vmem:[%s165 + $0x44] sm:$0xf]
      %v3547 = vld [vmem:[%s165 + $0x48] sm:$0xf]
      %v3548 = vld [vmem:[%s165 + $0x4c] sm:$0xf]
      %v3549 = vld [vmem:[%s165 + $0x50] sm:$0xf]
      %v3550 = vld [vmem:[%s165 + $0x54] sm:$0xf]
      %v3551 = vld [vmem:[%s165 + $0x58] sm:$0xf]
      %v3552 = vld [vmem:[%s165 + $0x5c] sm:$0xf]
      %v3553 = vld [vmem:[%s165 + $0x60] sm:$0xf]
      %v3554 = vld [vmem:[%s165 + $0x64] sm:$0xf]
      %v3555 = vld [vmem:[%s165 + $0x68] sm:$0xf]
      %v3556 = vld [vmem:[%s165 + $0x6c] sm:$0xf]
      %v3557 = vld [vmem:[%s165 + $0x70] sm:$0xf]
      %v3558 = vld [vmem:[%s165 + $0x74] sm:$0xf]
      %v3559 = vld [vmem:[%s165 + $0x78] sm:$0xf]
      %v3560 = vld [vmem:[%s165 + $0x7c] sm:$0xf]
      %v3561 = vld [vmem:[%s165 + $0x80] sm:$0xf]
      %v3562 = vld [vmem:[%s165 + $0x84] sm:$0xf]
      %v3563 = vld [vmem:[%s165 + $0x88] sm:$0xf]
      %v3564 = vld [vmem:[%s165 + $0x8c] sm:$0xf]
      %v3565 = vld [vmem:[%s165 + $0x90] sm:$0xf]
      %v3566 = vld [vmem:[%s165 + $0x94] sm:$0xf]
      %v3567 = vld [vmem:[%s165 + $0x98] sm:$0xf]
      %v3568 = vld [vmem:[%s165 + $0x9c] sm:$0xf]
      %v3569 = vld [vmem:[%s165 + $0xa0] sm:$0xf]
      %v3570 = vld [vmem:[%s165 + $0xa4] sm:$0xf]
      %v3571 = vld [vmem:[%s165 + $0xa8] sm:$0xf]
      %v3572 = vld [vmem:[%s165 + $0xac] sm:$0xf]
      %v3573 = vld [vmem:[%s165 + $0xb0] sm:$0xf]
      %v3574 = vld [vmem:[%s165 + $0xb4] sm:$0xf]
      %v3575 = vld [vmem:[%s165 + $0xb8] sm:$0xf]
      %v3576 = vld [vmem:[%s165 + $0xbc] sm:$0xf]
      %v3577 = vld [vmem:[%s165 + $0xc0] sm:$0xf]
      %v3578 = vld [vmem:[%s165 + $0xc4] sm:$0xf]
      %v3579 = vld [vmem:[%s165 + $0xc8] sm:$0xf]
      %v3580 = vld [vmem:[%s165 + $0xcc] sm:$0xf]
      %v3581 = vld [vmem:[%s165 + $0xd0] sm:$0xf]
      %v3582 = vld [vmem:[%s165 + $0xd4] sm:$0xf]
      %v3583 = vld [vmem:[%s165 + $0xd8] sm:$0xf]
      %v3584 = vld [vmem:[%s165 + $0xdc] sm:$0xf]
      %v3585 = vld [vmem:[%s165 + $0xe0] sm:$0xf]
      %v3586 = vld [vmem:[%s165 + $0xe4] sm:$0xf]
      %v3587 = vld [vmem:[%s165 + $0xe8] sm:$0xf]
      %v3588 = vld [vmem:[%s165 + $0xec] sm:$0xf]
      %v3589 = vld [vmem:[%s165 + $0xf0] sm:$0xf]
      %v3590 = vld [vmem:[%s165 + $0xf4] sm:$0xf]
      %v3591 = vld [vmem:[%s165 + $0xf8] sm:$0xf]
      %v3592 = vld [vmem:[%s165 + $0xfc] sm:$0xf]
      %v3593 = vld [vmem:[%s165 + $0x100] sm:$0xf]
      %v3594 = vld [vmem:[%s165 + $0x104] sm:$0xf]
      %v3595 = vld [vmem:[%s165 + $0x108] sm:$0xf]
      %v3596 = vld [vmem:[%s165 + $0x10c] sm:$0xf]
      %v3597 = vld [vmem:[%s165 + $0x110] sm:$0xf]
      %v3598 = vld [vmem:[%s165 + $0x114] sm:$0xf]
      %v3599 = vld [vmem:[%s165 + $0x118] sm:$0xf]
      %v3600 = vld [vmem:[%s165 + $0x11c] sm:$0xf]
      %v3601 = vld [vmem:[%s165 + $0x120] sm:$0xf]
      %v3602 = vld [vmem:[%s165 + $0x124] sm:$0xf]
      %v3603 = vld [vmem:[%s165 + $0x128] sm:$0xf]
      %v3604 = vld [vmem:[%s165 + $0x12c] sm:$0xf]
      %v3605 = vld [vmem:[%s165 + $0x130] sm:$0xf]
      %v3606 = vld [vmem:[%s165 + $0x134] sm:$0xf]
      %v3607 = vld [vmem:[%s165 + $0x138] sm:$0xf]
      %v3608 = vld [vmem:[%s165 + $0x13c] sm:$0xf]
      %v3609 = vld [vmem:[%s165 + $0x140] sm:$0xf]
      %v3610 = vld [vmem:[%s165 + $0x144] sm:$0xf]
      %v3611 = vld [vmem:[%s165 + $0x148] sm:$0xf]
      %v3612 = vld [vmem:[%s165 + $0x14c] sm:$0xf]
      %v3613 = vld [vmem:[%s165 + $0x150] sm:$0xf]
      %v3614 = vld [vmem:[%s165 + $0x154] sm:$0xf]
      %v3615 = vld [vmem:[%s165 + $0x158] sm:$0xf]
      %v3616 = vld [vmem:[%s165 + $0x15c] sm:$0xf]
      %v3617 = vld [vmem:[%s165 + $0x160] sm:$0xf]
      %v3618 = vld [vmem:[%s165 + $0x164] sm:$0xf]
      %v3619 = vld [vmem:[%s165 + $0x168] sm:$0xf]
      %v3620 = vld [vmem:[%s165 + $0x16c] sm:$0xf]
      %v3621 = vld [vmem:[%s165 + $0x170] sm:$0xf]
      %v3622 = vld [vmem:[%s165 + $0x174] sm:$0xf]
      %v3623 = vld [vmem:[%s165 + $0x178] sm:$0xf]
      %v3624 = vld [vmem:[%s165 + $0x17c] sm:$0xf]
      %v3625 = vld [vmem:[%s165 + $0x180] sm:$0xf]
      %v3626 = vld [vmem:[%s165 + $0x184] sm:$0xf]
      %v3627 = vld [vmem:[%s165 + $0x188] sm:$0xf]
      %v3628 = vld [vmem:[%s165 + $0x18c] sm:$0xf]
      %v3629 = vld [vmem:[%s165 + $0x190] sm:$0xf]
      %v3630 = vld [vmem:[%s165 + $0x194] sm:$0xf]
      %v3631 = vld [vmem:[%s165 + $0x198] sm:$0xf]
      %v3632 = vld [vmem:[%s165 + $0x19c] sm:$0xf]
      %v3633 = vld [vmem:[%s165 + $0x1a0] sm:$0xf]
      %v3634 = vld [vmem:[%s165 + $0x1a4] sm:$0xf]
      %v3635 = vld [vmem:[%s165 + $0x1a8] sm:$0xf]
      %v3636 = vld [vmem:[%s165 + $0x1ac] sm:$0xf]
      %v3637 = vld [vmem:[%s165 + $0x1b0] sm:$0xf]
      %v3638 = vld [vmem:[%s165 + $0x1b4] sm:$0xf]
      %v3639 = vld [vmem:[%s165 + $0x1b8] sm:$0xf]
      %v3640 = vld [vmem:[%s165 + $0x1bc] sm:$0xf]
      %v3641 = vld [vmem:[%s165 + $0x1c0] sm:$0xf]
      %v3642 = vld [vmem:[%s165 + $0x1c4] sm:$0xf]
      %v3643 = vld [vmem:[%s165 + $0x1c8] sm:$0xf]
      %v3644 = vld [vmem:[%s165 + $0x1cc] sm:$0xf]
      %v3645 = vld [vmem:[%s165 + $0x1d0] sm:$0xf]
      %v3646 = vld [vmem:[%s165 + $0x1d4] sm:$0xf]
      %v3647 = vld [vmem:[%s165 + $0x1d8] sm:$0xf]
      %v3648 = vld [vmem:[%s165 + $0x1dc] sm:$0xf]
      %v3649 = vld [vmem:[%s165 + $0x1e0] sm:$0xf]
      %v3650 = vld [vmem:[%s165 + $0x1e4] sm:$0xf]
      %v3651 = vld [vmem:[%s165 + $0x1e8] sm:$0xf]
      %v3652 = vld [vmem:[%s165 + $0x1ec] sm:$0xf]
      %v3653 = vld [vmem:[#allocation2] sm:$0xff]
      %v3654 = vld [vmem:[#allocation2 + $0x8] sm:$0xff]
      %v3655 = vld [vmem:[#allocation2 + $0x10] sm:$0xff]
      %v3656 = vld [vmem:[#allocation2 + $0x18] sm:$0xff]
      %v3657 = vld [vmem:[#allocation2 + $0x20] sm:$0xff]
      %v3658 = vld [vmem:[#allocation2 + $0x28] sm:$0xff]
      %v3659 = vld [vmem:[#allocation2 + $0x30] sm:$0xff]
      %v3660 = vld [vmem:[#allocation2 + $0x38] sm:$0xff]
      %v3661 = vld [vmem:[#allocation2 + $0x40] sm:$0xff]
      %v3662 = vld [vmem:[#allocation2 + $0x48] sm:$0xff]
      %v3663 = vld [vmem:[#allocation2 + $0x50] sm:$0xff]
      %v3664 = vld [vmem:[#allocation2 + $0x58] sm:$0xff]
      %v3665 = vld [vmem:[#allocation2 + $0x60] sm:$0xff]
      %v3666 = vld [vmem:[#allocation2 + $0x68] sm:$0xff]
      %v3667 = vld [vmem:[#allocation2 + $0x70] sm:$0xff]
      %v3668 = vld [vmem:[#allocation2 + $0x78] sm:$0xff]
      %v3669 = vld [vmem:[#allocation2 + $0x80] sm:$0xff]
      %v3670 = vld [vmem:[#allocation2 + $0x88] sm:$0xff]
      %v3671 = vld [vmem:[#allocation2 + $0x90] sm:$0xff]
      %v3672 = vld [vmem:[#allocation2 + $0x98] sm:$0xff]
      %v3673 = vld [vmem:[#allocation2 + $0xa0] sm:$0xff]
      %v3674 = vld [vmem:[#allocation2 + $0xa8] sm:$0xff]
      %v3675 = vld [vmem:[#allocation2 + $0xb0] sm:$0xff]
      %v3676 = vld [vmem:[#allocation2 + $0xb8] sm:$0xff]
      %v3677 = vld [vmem:[#allocation2 + $0xc0] sm:$0xff]
      %v3678 = vld [vmem:[#allocation2 + $0xc8] sm:$0xff]
      %v3679 = vld [vmem:[#allocation2 + $0xd0] sm:$0xff]
      %v3680 = vld [vmem:[#allocation2 + $0xd8] sm:$0xff]
      %v3681 = vld [vmem:[#allocation2 + $0xe0] sm:$0xff]
      %v3682 = vld [vmem:[#allocation2 + $0xe8] sm:$0xff]
      %v3683 = vld [vmem:[#allocation2 + $0xf0] sm:$0xff]
      %v3684 = vld [vmem:[#allocation2 + $0xf8] sm:$0xff]
      %v3685 = vld [vmem:[#allocation2 + $0x100] sm:$0xff]
      %v3686 = vld [vmem:[#allocation2 + $0x108] sm:$0xff]
      %v3687 = vld [vmem:[#allocation2 + $0x110] sm:$0xff]
      %v3688 = vld [vmem:[#allocation2 + $0x118] sm:$0xff]
      %v3689 = vld [vmem:[#allocation2 + $0x120] sm:$0xff]
      %v3690 = vld [vmem:[#allocation2 + $0x128] sm:$0xff]
      %v3691 = vld [vmem:[#allocation2 + $0x130] sm:$0xff]
      %v3692 = vld [vmem:[#allocation2 + $0x138] sm:$0xff]
      %v3693 = vld [vmem:[#allocation2 + $0x140] sm:$0xff]
      %v3694 = vld [vmem:[#allocation2 + $0x148] sm:$0xff]
      %v3695 = vld [vmem:[#allocation2 + $0x150] sm:$0xff]
      %v3696 = vld [vmem:[#allocation2 + $0x158] sm:$0xff]
      %v3697 = vld [vmem:[#allocation2 + $0x160] sm:$0xff]
      %v3698 = vld [vmem:[#allocation2 + $0x168] sm:$0xff]
      %v3699 = vld [vmem:[#allocation2 + $0x170] sm:$0xff]
      %v3700 = vld [vmem:[#allocation2 + $0x178] sm:$0xff]
      %v3701 = vld [vmem:[#allocation2 + $0x180] sm:$0xff]
      %v3702 = vld [vmem:[#allocation2 + $0x188] sm:$0xff]
      %v3703 = vld [vmem:[#allocation2 + $0x190] sm:$0xff]
      %v3704 = vld [vmem:[#allocation2 + $0x198] sm:$0xff]
      %v3705 = vld [vmem:[#allocation2 + $0x1a0] sm:$0xff]
      %v3706 = vld [vmem:[#allocation2 + $0x1a8] sm:$0xff]
      %v3707 = vld [vmem:[#allocation2 + $0x1b0] sm:$0xff]
      %v3708 = vld [vmem:[#allocation2 + $0x1b8] sm:$0xff]
      %v3709 = vld [vmem:[#allocation2 + $0x1c0] sm:$0xff]
      %v3710 = vld [vmem:[#allocation2 + $0x1c8] sm:$0xff]
      %v3711 = vld [vmem:[#allocation2 + $0x1d0] sm:$0xff]
      %v3712 = vld [vmem:[#allocation2 + $0x1d8] sm:$0xff]
      %v3713 = vld [vmem:[#allocation2 + $0x1e0] sm:$0xff]
      %v3714 = vld [vmem:[#allocation2 + $0x1e8] sm:$0xff]
      %v3715 = vld [vmem:[#allocation2 + $0x1f0] sm:$0xff]
      %v3716 = vld [vmem:[#allocation2 + $0x1f8] sm:$0xff]
      %v3717 = vld [vmem:[#allocation2 + $0x200] sm:$0xff]
      %v3718 = vld [vmem:[#allocation2 + $0x208] sm:$0xff]
      %v3719 = vld [vmem:[#allocation2 + $0x210] sm:$0xff]
      %v3720 = vld [vmem:[#allocation2 + $0x218] sm:$0xff]
      %v3721 = vld [vmem:[#allocation2 + $0x220] sm:$0xff]
      %v3722 = vld [vmem:[#allocation2 + $0x228] sm:$0xff]
      %v3723 = vld [vmem:[#allocation2 + $0x230] sm:$0xff]
      %v3724 = vld [vmem:[#allocation2 + $0x238] sm:$0xff]
      %v3725 = vld [vmem:[#allocation2 + $0x240] sm:$0xff]
      %v3726 = vld [vmem:[#allocation2 + $0x248] sm:$0xff]
      %v3727 = vld [vmem:[#allocation2 + $0x250] sm:$0xff]
      %v3728 = vld [vmem:[#allocation2 + $0x258] sm:$0xff]
      %v3729 = vld [vmem:[#allocation2 + $0x260] sm:$0xff]
      %v3730 = vld [vmem:[#allocation2 + $0x268] sm:$0xff]
      %v3731 = vld [vmem:[#allocation2 + $0x270] sm:$0xff]
      %v3732 = vld [vmem:[#allocation2 + $0x278] sm:$0xff]
      %v3733 = vld [vmem:[#allocation2 + $0x280] sm:$0xff]
      %v3734 = vld [vmem:[#allocation2 + $0x288] sm:$0xff]
      %v3735 = vld [vmem:[#allocation2 + $0x290] sm:$0xff]
      %v3736 = vld [vmem:[#allocation2 + $0x298] sm:$0xff]
      %v3737 = vld [vmem:[#allocation2 + $0x2a0] sm:$0xff]
      %v3738 = vld [vmem:[#allocation2 + $0x2a8] sm:$0xff]
      %v3739 = vld [vmem:[#allocation2 + $0x2b0] sm:$0xff]
      %v3740 = vld [vmem:[#allocation2 + $0x2b8] sm:$0xff]
      %v3741 = vld [vmem:[#allocation2 + $0x2c0] sm:$0xff]
      %v3742 = vld [vmem:[#allocation2 + $0x2c8] sm:$0xff]
      %v3743 = vld [vmem:[#allocation2 + $0x2d0] sm:$0xff]
      %v3744 = vld [vmem:[#allocation2 + $0x2d8] sm:$0xff]
      %v3745 = vld [vmem:[#allocation2 + $0x2e0] sm:$0xff]
      %v3746 = vld [vmem:[#allocation2 + $0x2e8] sm:$0xff]
      %v3747 = vld [vmem:[#allocation2 + $0x2f0] sm:$0xff]
      %v3748 = vld [vmem:[#allocation2 + $0x2f8] sm:$0xff]
      %v3749 = vld [vmem:[#allocation2 + $0x300] sm:$0xff]
      %v3750 = vld [vmem:[#allocation2 + $0x308] sm:$0xff]
      %v3751 = vld [vmem:[#allocation2 + $0x310] sm:$0xff]
      %v3752 = vld [vmem:[#allocation2 + $0x318] sm:$0xff]
      %v3753 = vld [vmem:[#allocation2 + $0x320] sm:$0xff]
      %v3754 = vld [vmem:[#allocation2 + $0x328] sm:$0xff]
      %v3755 = vld [vmem:[#allocation2 + $0x330] sm:$0xff]
      %v3756 = vld [vmem:[#allocation2 + $0x338] sm:$0xff]
      %v3757 = vld [vmem:[#allocation2 + $0x340] sm:$0xff]
      %v3758 = vld [vmem:[#allocation2 + $0x348] sm:$0xff]
      %v3759 = vld [vmem:[#allocation2 + $0x350] sm:$0xff]
      %v3760 = vld [vmem:[#allocation2 + $0x358] sm:$0xff]
      %v3761 = vld [vmem:[#allocation2 + $0x360] sm:$0xff]
      %v3762 = vld [vmem:[#allocation2 + $0x368] sm:$0xff]
      %v3763 = vld [vmem:[#allocation2 + $0x370] sm:$0xff]
      %v3764 = vld [vmem:[#allocation2 + $0x378] sm:$0xff]
      %s3765 = scalar_lea.vmem %s1, 24
      %v3766 = vld [vmem:[%s3765] sm:$0xf]
      %v3767 = vld [vmem:[%s3765 + $0x4] sm:$0xf]
      %v3880 = vunpack.c.l.b16 %v3541
      %v3881 = vunpack.c.l.b16 %v3542
      %v3882 = vunpack.c.l.b16 %v3543
      %v3883 = vunpack.c.l.b16 %v3544
      %v3884 = vunpack.c.l.b16 %v3545
      %v3885 = vunpack.c.l.b16 %v3546
      %v3886 = vunpack.c.l.b16 %v3547
      %v3887 = vunpack.c.l.b16 %v3548
      %v3888 = vunpack.c.l.b16 %v3549
      %v3889 = vunpack.c.l.b16 %v3550
      %v3890 = vunpack.c.l.b16 %v3551
      %v3891 = vunpack.c.l.b16 %v3552
      %v3892 = vunpack.c.l.b16 %v3553
      %v3893 = vunpack.c.l.b16 %v3554
      %v3894 = vunpack.c.l.b16 %v3555
      %v3895 = vunpack.c.l.b16 %v3556
      %v3896 = vunpack.c.l.b16 %v3557
      %v3897 = vunpack.c.l.b16 %v3558
      %v3898 = vunpack.c.l.b16 %v3559
      %v3899 = vunpack.c.l.b16 %v3560
      %v3900 = vunpack.c.l.b16 %v3561
      %v3901 = vunpack.c.l.b16 %v3562
      %v3902 = vunpack.c.l.b16 %v3563
      %v3903 = vunpack.c.l.b16 %v3564
      %v3904 = vunpack.c.l.b16 %v3565
      %v3905 = vunpack.c.l.b16 %v3566
      %v3906 = vunpack.c.l.b16 %v3567
      %v3907 = vunpack.c.l.b16 %v3568
      %v3908 = vunpack.c.l.b16 %v3569
      %v3909 = vunpack.c.l.b16 %v3570
      %v3910 = vunpack.c.l.b16 %v3571
      %v3911 = vunpack.c.l.b16 %v3572
      %v3912 = vunpack.c.l.b16 %v3573
      %v3913 = vunpack.c.l.b16 %v3574
      %v3914 = vunpack.c.l.b16 %v3575
      %v3915 = vunpack.c.l.b16 %v3576
      %v3916 = vunpack.c.l.b16 %v3577
      %v3917 = vunpack.c.l.b16 %v3578
      %v3918 = vunpack.c.l.b16 %v3579
      %v3919 = vunpack.c.l.b16 %v3580
      %v3920 = vunpack.c.l.b16 %v3581
      %v3921 = vunpack.c.l.b16 %v3582
      %v3922 = vunpack.c.l.b16 %v3583
      %v3923 = vunpack.c.l.b16 %v3584
      %v3924 = vunpack.c.l.b16 %v3585
      %v3925 = vunpack.c.l.b16 %v3586
      %v3926 = vunpack.c.l.b16 %v3587
      %v3927 = vunpack.c.l.b16 %v3588
      %v3928 = vunpack.c.l.b16 %v3589
      %v3929 = vunpack.c.l.b16 %v3590
      %v3930 = vunpack.c.l.b16 %v3591
      %v3931 = vunpack.c.l.b16 %v3592
      %v3932 = vunpack.c.l.b16 %v3593
      %v3933 = vunpack.c.l.b16 %v3594
      %v3934 = vunpack.c.l.b16 %v3595
      %v3935 = vunpack.c.l.b16 %v3596
      %v3936 = vunpack.c.l.b16 %v3597
      %v3937 = vunpack.c.l.b16 %v3598
      %v3938 = vunpack.c.l.b16 %v3599
      %v3939 = vunpack.c.l.b16 %v3600
      %v3940 = vunpack.c.l.b16 %v3601
      %v3941 = vunpack.c.l.b16 %v3602
      %v3942 = vunpack.c.l.b16 %v3603
      %v3943 = vunpack.c.l.b16 %v3604
      %v3944 = vunpack.c.l.b16 %v3605
      %v3945 = vunpack.c.l.b16 %v3606
      %v3946 = vunpack.c.l.b16 %v3607
      %v3947 = vunpack.c.l.b16 %v3608
      %v3948 = vunpack.c.l.b16 %v3609
      %v3949 = vunpack.c.l.b16 %v3610
      %v3950 = vunpack.c.l.b16 %v3611
      %v3951 = vunpack.c.l.b16 %v3612
      %v3952 = vunpack.c.l.b16 %v3613
      %v3953 = vunpack.c.l.b16 %v3614
      %v3954 = vunpack.c.l.b16 %v3615
      %v3955 = vunpack.c.l.b16 %v3616
      %v3956 = vunpack.c.l.b16 %v3617
      %v3957 = vunpack.c.l.b16 %v3618
      %v3958 = vunpack.c.l.b16 %v3619
      %v3959 = vunpack.c.l.b16 %v3620
      %v3960 = vunpack.c.l.b16 %v3621
      %v3961 = vunpack.c.l.b16 %v3622
      %v3962 = vunpack.c.l.b16 %v3623
      %v3963 = vunpack.c.l.b16 %v3624
      %v3964 = vunpack.c.l.b16 %v3625
      %v3965 = vunpack.c.l.b16 %v3626
      %v3966 = vunpack.c.l.b16 %v3627
      %v3967 = vunpack.c.l.b16 %v3628
      %v3968 = vunpack.c.l.b16 %v3629
      %v3969 = vunpack.c.l.b16 %v3630
      %v3970 = vunpack.c.l.b16 %v3631
      %v3971 = vunpack.c.l.b16 %v3632
      %v3972 = vunpack.c.l.b16 %v3633
      %v3973 = vunpack.c.l.b16 %v3634
      %v3974 = vunpack.c.l.b16 %v3635
      %v3975 = vunpack.c.l.b16 %v3636
      %v3976 = vunpack.c.l.b16 %v3637
      %v3977 = vunpack.c.l.b16 %v3638
      %v3978 = vunpack.c.l.b16 %v3639
      %v3979 = vunpack.c.l.b16 %v3640
      %v3980 = vunpack.c.l.b16 %v3641
      %v3981 = vunpack.c.l.b16 %v3642
      %v3982 = vunpack.c.l.b16 %v3643
      %v3983 = vunpack.c.l.b16 %v3644
      %v3984 = vunpack.c.l.b16 %v3645
      %v3985 = vunpack.c.l.b16 %v3646
      %v3986 = vunpack.c.l.b16 %v3647
      %v3987 = vunpack.c.l.b16 %v3648
      %v3988 = vunpack.c.l.b16 %v3649
      %v3989 = vunpack.c.l.b16 %v3650
      %v3990 = vunpack.c.l.b16 %v3651
      %v3991 = vunpack.c.l.b16 %v3652
      %v3992 = vpack.c.b16 %v3881, %v3880
      %v3993 = vpack.c.b16 %v3883, %v3882
      %v3994 = vpack.c.b16 %v3885, %v3884
      %v3995 = vpack.c.b16 %v3887, %v3886
      %v3996 = vpack.c.b16 %v3889, %v3888
      %v3997 = vpack.c.b16 %v3891, %v3890
      %v3998 = vpack.c.b16 %v3893, %v3892
      %v3999 = vpack.c.b16 %v3895, %v3894
      %v4000 = vpack.c.b16 %v3897, %v3896
      %v4001 = vpack.c.b16 %v3899, %v3898
      %v4002 = vpack.c.b16 %v3901, %v3900
      %v4003 = vpack.c.b16 %v3903, %v3902
      %v4004 = vpack.c.b16 %v3905, %v3904
      %v4005 = vpack.c.b16 %v3907, %v3906
      %v4006 = vpack.c.b16 %v3909, %v3908
      %v4007 = vpack.c.b16 %v3911, %v3910
      %v4008 = vpack.c.b16 %v3913, %v3912
      %v4009 = vpack.c.b16 %v3915, %v3914
      %v4010 = vpack.c.b16 %v3917, %v3916
      %v4011 = vpack.c.b16 %v3919, %v3918
      %v4012 = vpack.c.b16 %v3921, %v3920
      %v4013 = vpack.c.b16 %v3923, %v3922
      %v4014 = vpack.c.b16 %v3925, %v3924
      %v4015 = vpack.c.b16 %v3927, %v3926
      %v4016 = vpack.c.b16 %v3929, %v3928
      %v4017 = vpack.c.b16 %v3931, %v3930
      %v4018 = vpack.c.b16 %v3933, %v3932
      %v4019 = vpack.c.b16 %v3935, %v3934
      %v4020 = vpack.c.b16 %v3937, %v3936
      %v4021 = vpack.c.b16 %v3939, %v3938
      %v4022 = vpack.c.b16 %v3941, %v3940
      %v4023 = vpack.c.b16 %v3943, %v3942
      %v4024 = vpack.c.b16 %v3945, %v3944
      %v4025 = vpack.c.b16 %v3947, %v3946
      %v4026 = vpack.c.b16 %v3949, %v3948
      %v4027 = vpack.c.b16 %v3951, %v3950
      %v4028 = vpack.c.b16 %v3953, %v3952
      %v4029 = vpack.c.b16 %v3955, %v3954
      %v4030 = vpack.c.b16 %v3957, %v3956
      %v4031 = vpack.c.b16 %v3959, %v3958
      %v4032 = vpack.c.b16 %v3961, %v3960
      %v4033 = vpack.c.b16 %v3963, %v3962
      %v4034 = vpack.c.b16 %v3965, %v3964
      %v4035 = vpack.c.b16 %v3967, %v3966
      %v4036 = vpack.c.b16 %v3969, %v3968
      %v4037 = vpack.c.b16 %v3971, %v3970
      %v4038 = vpack.c.b16 %v3973, %v3972
      %v4039 = vpack.c.b16 %v3975, %v3974
      %v4040 = vpack.c.b16 %v3977, %v3976
      %v4041 = vpack.c.b16 %v3979, %v3978
      %v4042 = vpack.c.b16 %v3981, %v3980
      %v4043 = vpack.c.b16 %v3983, %v3982
      %v4044 = vpack.c.b16 %v3985, %v3984
      %v4045 = vpack.c.b16 %v3987, %v3986
      %v4046 = vpack.c.b16 %v3989, %v3988
      %v4047 = vpack.c.b16 %v3991, %v3990
      %v4050 = vunpack.c.l.b16 %v3766
      %v4051 = vunpack.c.l.b16 %v3767
      %v4052 = vpack.c.b16 %v4051, %v4050
      %v4054 = vsel %vm571, %v3992, 0
      %v4057 = vsel %vm571, %v3993, 0
      %v4060 = vsel %vm571, %v3994, 0
      %v4063 = vsel %vm571, %v3995, 0
      %v4066 = vsel %vm571, %v3996, 0
      %v4069 = vsel %vm571, %v3997, 0
      %v4072 = vsel %vm571, %v3998, 0
      %v4075 = vsel %vm571, %v3999, 0
      %v4078 = vsel %vm571, %v4000, 0
      %v4081 = vsel %vm571, %v4001, 0
      %v4084 = vsel %vm571, %v4002, 0
      %v4087 = vsel %vm571, %v4003, 0
      %v4090 = vsel %vm571, %v4004, 0
      %v4093 = vsel %vm571, %v4005, 0
      %v4096 = vsel %vm571, %v4006, 0
      %v4099 = vsel %vm571, %v4007, 0
      %v4102 = vsel %vm571, %v4008, 0
      %v4105 = vsel %vm571, %v4009, 0
      %v4108 = vsel %vm571, %v4010, 0
      %v4111 = vsel %vm571, %v4011, 0
      %v4114 = vsel %vm571, %v4012, 0
      %v4117 = vsel %vm571, %v4013, 0
      %v4120 = vsel %vm571, %v4014, 0
      %v4123 = vsel %vm571, %v4015, 0
      %v4126 = vsel %vm571, %v4016, 0
      %v4129 = vsel %vm571, %v4017, 0
      %v4132 = vsel %vm571, %v4018, 0
      %v4135 = vsel %vm571, %v4019, 0
      %v4138 = vsel %vm571, %v4020, 0
      %v4141 = vsel %vm571, %v4021, 0
      %v4144 = vsel %vm571, %v4022, 0
      %v4147 = vsel %vm571, %v4023, 0
      %v4150 = vsel %vm571, %v4024, 0
      %v4153 = vsel %vm571, %v4025, 0
      %v4156 = vsel %vm571, %v4026, 0
      %v4159 = vsel %vm571, %v4027, 0
      %v4162 = vsel %vm571, %v4028, 0
      %v4165 = vsel %vm571, %v4029, 0
      %v4168 = vsel %vm571, %v4030, 0
      %v4171 = vsel %vm571, %v4031, 0
      %v4174 = vsel %vm571, %v4032, 0
      %v4177 = vsel %vm571, %v4033, 0
      %v4180 = vsel %vm571, %v4034, 0
      %v4183 = vsel %vm571, %v4035, 0
      %v4186 = vsel %vm571, %v4036, 0
      %v4189 = vsel %vm571, %v4037, 0
      %v4192 = vsel %vm571, %v4038, 0
      %v4195 = vsel %vm571, %v4039, 0
      %v4198 = vsel %vm571, %v4040, 0
      %v4201 = vsel %vm571, %v4041, 0
      %v4204 = vsel %vm571, %v4042, 0
      %v4207 = vsel %vm571, %v4043, 0
      %v4210 = vsel %vm571, %v4044, 0
      %v4213 = vsel %vm571, %v4045, 0
      %v4216 = vsel %vm571, %v4046, 0
      %v4219 = vsel %vm571, %v4047, 0
      %v4222 = vand.u32 %v4052, %v743
      %4224 = vmatpush.bf16.msra.mxu0 0
      %4225 = vmatpush.bf16.msra.mxu0 0
      %4226 = vmatpush.bf16.msra.mxu0 0
      %4227 = vmatpush.bf16.msra.mxu0 0
      %4228 = vmatpush.bf16.msra.mxu0 0
      %4229 = vmatpush.bf16.msra.mxu0 0
      %4230 = vmatpush.bf16.msra.mxu0 0
      %4231 = vmatpush.bf16.msra.mxu0 %v4222
      %4232 = vmatmul.bf16.gmra.mxu0 %v4054
      %v4233 = vpop.f32.mrf.mxu0
      %v4234 = vadd.f32 0.0, %v4233
      %v4235 = vpop.f32.mrf.mxu0
      %v4236 = vadd.f32 0.0, %v4235
      %4237 = vmatmul.bf16.gmra.mxu0 %v4057
      %v4238 = vpop.f32.mrf.mxu0
      %v4239 = vadd.f32 0.0, %v4238
      %v4240 = vpop.f32.mrf.mxu0
      %v4241 = vadd.f32 0.0, %v4240
      %4242 = vmatmul.bf16.gmra.mxu0 %v4060
      %v4243 = vpop.f32.mrf.mxu0
      %v4244 = vadd.f32 0.0, %v4243
      %v4245 = vpop.f32.mrf.mxu0
      %v4246 = vadd.f32 0.0, %v4245
      %4247 = vmatmul.bf16.gmra.mxu0 %v4063
      %v4248 = vpop.f32.mrf.mxu0
      %v4249 = vadd.f32 0.0, %v4248
      %v4250 = vpop.f32.mrf.mxu0
      %v4251 = vadd.f32 0.0, %v4250
      %4252 = vmatmul.bf16.gmra.mxu0 %v4066
      %v4253 = vpop.f32.mrf.mxu0
      %v4254 = vadd.f32 0.0, %v4253
      %v4255 = vpop.f32.mrf.mxu0
      %v4256 = vadd.f32 0.0, %v4255
      %4257 = vmatmul.bf16.gmra.mxu0 %v4069
      %v4258 = vpop.f32.mrf.mxu0
      %v4259 = vadd.f32 0.0, %v4258
      %v4260 = vpop.f32.mrf.mxu0
      %v4261 = vadd.f32 0.0, %v4260
      %4262 = vmatmul.bf16.gmra.mxu0 %v4072
      %v4263 = vpop.f32.mrf.mxu0
      %v4264 = vadd.f32 0.0, %v4263
      %v4265 = vpop.f32.mrf.mxu0
      %v4266 = vadd.f32 0.0, %v4265
      %4267 = vmatmul.bf16.gmra.mxu0 %v4075
      %v4268 = vpop.f32.mrf.mxu0
      %v4269 = vadd.f32 0.0, %v4268
      %v4270 = vpop.f32.mrf.mxu0
      %v4271 = vadd.f32 0.0, %v4270
      %4272 = vmatmul.bf16.gmra.mxu0 %v4078
      %v4273 = vpop.f32.mrf.mxu0
      %v4274 = vadd.f32 0.0, %v4273
      %v4275 = vpop.f32.mrf.mxu0
      %v4276 = vadd.f32 0.0, %v4275
      %4277 = vmatmul.bf16.gmra.mxu0 %v4081
      %v4278 = vpop.f32.mrf.mxu0
      %v4279 = vadd.f32 0.0, %v4278
      %v4280 = vpop.f32.mrf.mxu0
      %v4281 = vadd.f32 0.0, %v4280
      %4282 = vmatmul.bf16.gmra.mxu0 %v4084
      %v4283 = vpop.f32.mrf.mxu0
      %v4284 = vadd.f32 0.0, %v4283
      %v4285 = vpop.f32.mrf.mxu0
      %v4286 = vadd.f32 0.0, %v4285
      %4287 = vmatmul.bf16.gmra.mxu0 %v4087
      %v4288 = vpop.f32.mrf.mxu0
      %v4289 = vadd.f32 0.0, %v4288
      %v4290 = vpop.f32.mrf.mxu0
      %v4291 = vadd.f32 0.0, %v4290
      %4292 = vmatmul.bf16.gmra.mxu0 %v4090
      %v4293 = vpop.f32.mrf.mxu0
      %v4294 = vadd.f32 0.0, %v4293
      %v4295 = vpop.f32.mrf.mxu0
      %v4296 = vadd.f32 0.0, %v4295
      %4297 = vmatmul.bf16.gmra.mxu0 %v4093
      %v4298 = vpop.f32.mrf.mxu0
      %v4299 = vadd.f32 0.0, %v4298
      %v4300 = vpop.f32.mrf.mxu0
      %v4301 = vadd.f32 0.0, %v4300
      %4302 = vmatmul.bf16.gmra.mxu0 %v4096
      %v4303 = vpop.f32.mrf.mxu0
      %v4304 = vadd.f32 0.0, %v4303
      %v4305 = vpop.f32.mrf.mxu0
      %v4306 = vadd.f32 0.0, %v4305
      %4307 = vmatmul.bf16.gmra.mxu0 %v4099
      %v4308 = vpop.f32.mrf.mxu0
      %v4309 = vadd.f32 0.0, %v4308
      %v4310 = vpop.f32.mrf.mxu0
      %v4311 = vadd.f32 0.0, %v4310
      %4312 = vmatmul.bf16.gmra.mxu0 %v4102
      %v4313 = vpop.f32.mrf.mxu0
      %v4314 = vadd.f32 0.0, %v4313
      %v4315 = vpop.f32.mrf.mxu0
      %v4316 = vadd.f32 0.0, %v4315
      %4317 = vmatmul.bf16.gmra.mxu0 %v4105
      %v4318 = vpop.f32.mrf.mxu0
      %v4319 = vadd.f32 0.0, %v4318
      %v4320 = vpop.f32.mrf.mxu0
      %v4321 = vadd.f32 0.0, %v4320
      %4322 = vmatmul.bf16.gmra.mxu0 %v4108
      %v4323 = vpop.f32.mrf.mxu0
      %v4324 = vadd.f32 0.0, %v4323
      %v4325 = vpop.f32.mrf.mxu0
      %v4326 = vadd.f32 0.0, %v4325
      %4327 = vmatmul.bf16.gmra.mxu0 %v4111
      %v4328 = vpop.f32.mrf.mxu0
      %v4329 = vadd.f32 0.0, %v4328
      %v4330 = vpop.f32.mrf.mxu0
      %v4331 = vadd.f32 0.0, %v4330
      %4332 = vmatmul.bf16.gmra.mxu0 %v4114
      %v4333 = vpop.f32.mrf.mxu0
      %v4334 = vadd.f32 0.0, %v4333
      %v4335 = vpop.f32.mrf.mxu0
      %v4336 = vadd.f32 0.0, %v4335
      %4337 = vmatmul.bf16.gmra.mxu0 %v4117
      %v4338 = vpop.f32.mrf.mxu0
      %v4339 = vadd.f32 0.0, %v4338
      %v4340 = vpop.f32.mrf.mxu0
      %v4341 = vadd.f32 0.0, %v4340
      %4342 = vmatmul.bf16.gmra.mxu0 %v4120
      %v4343 = vpop.f32.mrf.mxu0
      %v4344 = vadd.f32 0.0, %v4343
      %v4345 = vpop.f32.mrf.mxu0
      %v4346 = vadd.f32 0.0, %v4345
      %4347 = vmatmul.bf16.gmra.mxu0 %v4123
      %v4348 = vpop.f32.mrf.mxu0
      %v4349 = vadd.f32 0.0, %v4348
      %v4350 = vpop.f32.mrf.mxu0
      %v4351 = vadd.f32 0.0, %v4350
      %4352 = vmatmul.bf16.gmra.mxu0 %v4126
      %v4353 = vpop.f32.mrf.mxu0
      %v4354 = vadd.f32 0.0, %v4353
      %v4355 = vpop.f32.mrf.mxu0
      %v4356 = vadd.f32 0.0, %v4355
      %4357 = vmatmul.bf16.gmra.mxu0 %v4129
      %v4358 = vpop.f32.mrf.mxu0
      %v4359 = vadd.f32 0.0, %v4358
      %v4360 = vpop.f32.mrf.mxu0
      %v4361 = vadd.f32 0.0, %v4360
      %4362 = vmatmul.bf16.gmra.mxu0 %v4132
      %v4363 = vpop.f32.mrf.mxu0
      %v4364 = vadd.f32 0.0, %v4363
      %v4365 = vpop.f32.mrf.mxu0
      %v4366 = vadd.f32 0.0, %v4365
      %4367 = vmatmul.bf16.gmra.mxu0 %v4135
      %v4368 = vpop.f32.mrf.mxu0
      %v4369 = vadd.f32 0.0, %v4368
      %v4370 = vpop.f32.mrf.mxu0
      %v4371 = vadd.f32 0.0, %v4370
      %4372 = vmatmul.bf16.gmra.mxu0 %v4138
      %v4373 = vpop.f32.mrf.mxu0
      %v4374 = vadd.f32 0.0, %v4373
      %v4375 = vpop.f32.mrf.mxu0
      %v4376 = vadd.f32 0.0, %v4375
      %4377 = vmatmul.bf16.gmra.mxu0 %v4141
      %v4378 = vpop.f32.mrf.mxu0
      %v4379 = vadd.f32 0.0, %v4378
      %v4380 = vpop.f32.mrf.mxu0
      %v4381 = vadd.f32 0.0, %v4380
      %4382 = vmatmul.bf16.gmra.mxu0 %v4144
      %v4383 = vpop.f32.mrf.mxu0
      %v4384 = vadd.f32 0.0, %v4383
      %v4385 = vpop.f32.mrf.mxu0
      %v4386 = vadd.f32 0.0, %v4385
      %4387 = vmatmul.bf16.gmra.mxu0 %v4147
      %v4388 = vpop.f32.mrf.mxu0
      %v4389 = vadd.f32 0.0, %v4388
      %v4390 = vpop.f32.mrf.mxu0
      %v4391 = vadd.f32 0.0, %v4390
      %4392 = vmatmul.bf16.gmra.mxu0 %v4150
      %v4393 = vpop.f32.mrf.mxu0
      %v4394 = vadd.f32 0.0, %v4393
      %v4395 = vpop.f32.mrf.mxu0
      %v4396 = vadd.f32 0.0, %v4395
      %4397 = vmatmul.bf16.gmra.mxu0 %v4153
      %v4398 = vpop.f32.mrf.mxu0
      %v4399 = vadd.f32 0.0, %v4398
      %v4400 = vpop.f32.mrf.mxu0
      %v4401 = vadd.f32 0.0, %v4400
      %4402 = vmatmul.bf16.gmra.mxu0 %v4156
      %v4403 = vpop.f32.mrf.mxu0
      %v4404 = vadd.f32 0.0, %v4403
      %v4405 = vpop.f32.mrf.mxu0
      %v4406 = vadd.f32 0.0, %v4405
      %4407 = vmatmul.bf16.gmra.mxu0 %v4159
      %v4408 = vpop.f32.mrf.mxu0
      %v4409 = vadd.f32 0.0, %v4408
      %v4410 = vpop.f32.mrf.mxu0
      %v4411 = vadd.f32 0.0, %v4410
      %4412 = vmatmul.bf16.gmra.mxu0 %v4162
      %v4413 = vpop.f32.mrf.mxu0
      %v4414 = vadd.f32 0.0, %v4413
      %v4415 = vpop.f32.mrf.mxu0
      %v4416 = vadd.f32 0.0, %v4415
      %4417 = vmatmul.bf16.gmra.mxu0 %v4165
      %v4418 = vpop.f32.mrf.mxu0
      %v4419 = vadd.f32 0.0, %v4418
      %v4420 = vpop.f32.mrf.mxu0
      %v4421 = vadd.f32 0.0, %v4420
      %4422 = vmatmul.bf16.gmra.mxu0 %v4168
      %v4423 = vpop.f32.mrf.mxu0
      %v4424 = vadd.f32 0.0, %v4423
      %v4425 = vpop.f32.mrf.mxu0
      %v4426 = vadd.f32 0.0, %v4425
      %4427 = vmatmul.bf16.gmra.mxu0 %v4171
      %v4428 = vpop.f32.mrf.mxu0
      %v4429 = vadd.f32 0.0, %v4428
      %v4430 = vpop.f32.mrf.mxu0
      %v4431 = vadd.f32 0.0, %v4430
      %4432 = vmatmul.bf16.gmra.mxu0 %v4174
      %v4433 = vpop.f32.mrf.mxu0
      %v4434 = vadd.f32 0.0, %v4433
      %v4435 = vpop.f32.mrf.mxu0
      %v4436 = vadd.f32 0.0, %v4435
      %4437 = vmatmul.bf16.gmra.mxu0 %v4177
      %v4438 = vpop.f32.mrf.mxu0
      %v4439 = vadd.f32 0.0, %v4438
      %v4440 = vpop.f32.mrf.mxu0
      %v4441 = vadd.f32 0.0, %v4440
      %4442 = vmatmul.bf16.gmra.mxu0 %v4180
      %v4443 = vpop.f32.mrf.mxu0
      %v4444 = vadd.f32 0.0, %v4443
      %v4445 = vpop.f32.mrf.mxu0
      %v4446 = vadd.f32 0.0, %v4445
      %4447 = vmatmul.bf16.gmra.mxu0 %v4183
      %v4448 = vpop.f32.mrf.mxu0
      %v4449 = vadd.f32 0.0, %v4448
      %v4450 = vpop.f32.mrf.mxu0
      %v4451 = vadd.f32 0.0, %v4450
      %4452 = vmatmul.bf16.gmra.mxu0 %v4186
      %v4453 = vpop.f32.mrf.mxu0
      %v4454 = vadd.f32 0.0, %v4453
      %v4455 = vpop.f32.mrf.mxu0
      %v4456 = vadd.f32 0.0, %v4455
      %4457 = vmatmul.bf16.gmra.mxu0 %v4189
      %v4458 = vpop.f32.mrf.mxu0
      %v4459 = vadd.f32 0.0, %v4458
      %v4460 = vpop.f32.mrf.mxu0
      %v4461 = vadd.f32 0.0, %v4460
      %4462 = vmatmul.bf16.gmra.mxu0 %v4192
      %v4463 = vpop.f32.mrf.mxu0
      %v4464 = vadd.f32 0.0, %v4463
      %v4465 = vpop.f32.mrf.mxu0
      %v4466 = vadd.f32 0.0, %v4465
      %4467 = vmatmul.bf16.gmra.mxu0 %v4195
      %v4468 = vpop.f32.mrf.mxu0
      %v4469 = vadd.f32 0.0, %v4468
      %v4470 = vpop.f32.mrf.mxu0
      %v4471 = vadd.f32 0.0, %v4470
      %4472 = vmatmul.bf16.gmra.mxu0 %v4198
      %v4473 = vpop.f32.mrf.mxu0
      %v4474 = vadd.f32 0.0, %v4473
      %v4475 = vpop.f32.mrf.mxu0
      %v4476 = vadd.f32 0.0, %v4475
      %4477 = vmatmul.bf16.gmra.mxu0 %v4201
      %v4478 = vpop.f32.mrf.mxu0
      %v4479 = vadd.f32 0.0, %v4478
      %v4480 = vpop.f32.mrf.mxu0
      %v4481 = vadd.f32 0.0, %v4480
      %4482 = vmatmul.bf16.gmra.mxu0 %v4204
      %v4483 = vpop.f32.mrf.mxu0
      %v4484 = vadd.f32 0.0, %v4483
      %v4485 = vpop.f32.mrf.mxu0
      %v4486 = vadd.f32 0.0, %v4485
      %4487 = vmatmul.bf16.gmra.mxu0 %v4207
      %v4488 = vpop.f32.mrf.mxu0
      %v4489 = vadd.f32 0.0, %v4488
      %v4490 = vpop.f32.mrf.mxu0
      %v4491 = vadd.f32 0.0, %v4490
      %4492 = vmatmul.bf16.gmra.mxu0 %v4210
      %v4493 = vpop.f32.mrf.mxu0
      %v4494 = vadd.f32 0.0, %v4493
      %v4495 = vpop.f32.mrf.mxu0
      %v4496 = vadd.f32 0.0, %v4495
      %4497 = vmatmul.bf16.gmra.mxu0 %v4213
      %v4498 = vpop.f32.mrf.mxu0
      %v4499 = vadd.f32 0.0, %v4498
      %v4500 = vpop.f32.mrf.mxu0
      %v4501 = vadd.f32 0.0, %v4500
      %4502 = vmatmul.bf16.gmra.mxu0 %v4216
      %v4503 = vpop.f32.mrf.mxu0
      %v4504 = vadd.f32 0.0, %v4503
      %v4505 = vpop.f32.mrf.mxu0
      %v4506 = vadd.f32 0.0, %v4505
      %4507 = vmatmul.bf16.gmra.mxu0 %v4219
      %v4508 = vpop.f32.mrf.mxu0
      %v4509 = vadd.f32 0.0, %v4508
      %v4510 = vpop.f32.mrf.mxu0
      %v4511 = vadd.f32 0.0, %v4510
      %4512 = vdwg.mxu0
      %v4513 = vadd.f32 %v3653, %v4234
      %v4514 = vadd.f32 %v3654, %v4236
      %v4515 = vadd.f32 %v3655, %v4239
      %v4516 = vadd.f32 %v3656, %v4241
      %v4517 = vadd.f32 %v3657, %v4244
      %v4518 = vadd.f32 %v3658, %v4246
      %v4519 = vadd.f32 %v3659, %v4249
      %v4520 = vadd.f32 %v3660, %v4251
      %v4521 = vadd.f32 %v3661, %v4254
      %v4522 = vadd.f32 %v3662, %v4256
      %v4523 = vadd.f32 %v3663, %v4259
      %v4524 = vadd.f32 %v3664, %v4261
      %v4525 = vadd.f32 %v3665, %v4264
      %v4526 = vadd.f32 %v3666, %v4266
      %v4527 = vadd.f32 %v3667, %v4269
      %v4528 = vadd.f32 %v3668, %v4271
      %v4529 = vadd.f32 %v3669, %v4274
      %v4530 = vadd.f32 %v3670, %v4276
      %v4531 = vadd.f32 %v3671, %v4279
      %v4532 = vadd.f32 %v3672, %v4281
      %v4533 = vadd.f32 %v3673, %v4284
      %v4534 = vadd.f32 %v3674, %v4286
      %v4535 = vadd.f32 %v3675, %v4289
      %v4536 = vadd.f32 %v3676, %v4291
      %v4537 = vadd.f32 %v3677, %v4294
      %v4538 = vadd.f32 %v3678, %v4296
      %v4539 = vadd.f32 %v3679, %v4299
      %v4540 = vadd.f32 %v3680, %v4301
      %v4541 = vadd.f32 %v3681, %v4304
      %v4542 = vadd.f32 %v3682, %v4306
      %v4543 = vadd.f32 %v3683, %v4309
      %v4544 = vadd.f32 %v3684, %v4311
      %v4545 = vadd.f32 %v3685, %v4314
      %v4546 = vadd.f32 %v3686, %v4316
      %v4547 = vadd.f32 %v3687, %v4319
      %v4548 = vadd.f32 %v3688, %v4321
      %v4549 = vadd.f32 %v3689, %v4324
      %v4550 = vadd.f32 %v3690, %v4326
      %v4551 = vadd.f32 %v3691, %v4329
      %v4552 = vadd.f32 %v3692, %v4331
      %v4553 = vadd.f32 %v3693, %v4334
      %v4554 = vadd.f32 %v3694, %v4336
      %v4555 = vadd.f32 %v3695, %v4339
      %v4556 = vadd.f32 %v3696, %v4341
      %v4557 = vadd.f32 %v3697, %v4344
      %v4558 = vadd.f32 %v3698, %v4346
      %v4559 = vadd.f32 %v3699, %v4349
      %v4560 = vadd.f32 %v3700, %v4351
      %v4561 = vadd.f32 %v3701, %v4354
      %v4562 = vadd.f32 %v3702, %v4356
      %v4563 = vadd.f32 %v3703, %v4359
      %v4564 = vadd.f32 %v3704, %v4361
      %v4565 = vadd.f32 %v3705, %v4364
      %v4566 = vadd.f32 %v3706, %v4366
      %v4567 = vadd.f32 %v3707, %v4369
      %v4568 = vadd.f32 %v3708, %v4371
      %v4569 = vadd.f32 %v3709, %v4374
      %v4570 = vadd.f32 %v3710, %v4376
      %v4571 = vadd.f32 %v3711, %v4379
      %v4572 = vadd.f32 %v3712, %v4381
      %v4573 = vadd.f32 %v3713, %v4384
      %v4574 = vadd.f32 %v3714, %v4386
      %v4575 = vadd.f32 %v3715, %v4389
      %v4576 = vadd.f32 %v3716, %v4391
      %v4577 = vadd.f32 %v3717, %v4394
      %v4578 = vadd.f32 %v3718, %v4396
      %v4579 = vadd.f32 %v3719, %v4399
      %v4580 = vadd.f32 %v3720, %v4401
      %v4581 = vadd.f32 %v3721, %v4404
      %v4582 = vadd.f32 %v3722, %v4406
      %v4583 = vadd.f32 %v3723, %v4409
      %v4584 = vadd.f32 %v3724, %v4411
      %v4585 = vadd.f32 %v3725, %v4414
      %v4586 = vadd.f32 %v3726, %v4416
      %v4587 = vadd.f32 %v3727, %v4419
      %v4588 = vadd.f32 %v3728, %v4421
      %v4589 = vadd.f32 %v3729, %v4424
      %v4590 = vadd.f32 %v3730, %v4426
      %v4591 = vadd.f32 %v3731, %v4429
      %v4592 = vadd.f32 %v3732, %v4431
      %v4593 = vadd.f32 %v3733, %v4434
      %v4594 = vadd.f32 %v3734, %v4436
      %v4595 = vadd.f32 %v3735, %v4439
      %v4596 = vadd.f32 %v3736, %v4441
      %v4597 = vadd.f32 %v3737, %v4444
      %v4598 = vadd.f32 %v3738, %v4446
      %v4599 = vadd.f32 %v3739, %v4449
      %v4600 = vadd.f32 %v3740, %v4451
      %v4601 = vadd.f32 %v3741, %v4454
      %v4602 = vadd.f32 %v3742, %v4456
      %v4603 = vadd.f32 %v3743, %v4459
      %v4604 = vadd.f32 %v3744, %v4461
      %v4605 = vadd.f32 %v3745, %v4464
      %v4606 = vadd.f32 %v3746, %v4466
      %v4607 = vadd.f32 %v3747, %v4469
      %v4608 = vadd.f32 %v3748, %v4471
      %v4609 = vadd.f32 %v3749, %v4474
      %v4610 = vadd.f32 %v3750, %v4476
      %v4611 = vadd.f32 %v3751, %v4479
      %v4612 = vadd.f32 %v3752, %v4481
      %v4613 = vadd.f32 %v3753, %v4484
      %v4614 = vadd.f32 %v3754, %v4486
      %v4615 = vadd.f32 %v3755, %v4489
      %v4616 = vadd.f32 %v3756, %v4491
      %v4617 = vadd.f32 %v3757, %v4494
      %v4618 = vadd.f32 %v3758, %v4496
      %v4619 = vadd.f32 %v3759, %v4499
      %v4620 = vadd.f32 %v3760, %v4501
      %v4621 = vadd.f32 %v3761, %v4504
      %v4622 = vadd.f32 %v3762, %v4506
      %v4623 = vadd.f32 %v3763, %v4509
      %v4624 = vadd.f32 %v3764, %v4511
      %4625 = vst.msk [vmem:[#allocation2] sm:$0xff] %vm1036, %v4513
      %4626 = vst.msk [vmem:[#allocation2 + $0x8] sm:$0xff] %vm1036, %v4514
      %4627 = vst.msk [vmem:[#allocation2 + $0x10] sm:$0xff] %vm1036, %v4515
      %4628 = vst.msk [vmem:[#allocation2 + $0x18] sm:$0xff] %vm1036, %v4516
      %4629 = vst.msk [vmem:[#allocation2 + $0x20] sm:$0xff] %vm1036, %v4517
      %4630 = vst.msk [vmem:[#allocation2 + $0x28] sm:$0xff] %vm1036, %v4518
      %4631 = vst.msk [vmem:[#allocation2 + $0x30] sm:$0xff] %vm1036, %v4519
      %4632 = vst.msk [vmem:[#allocation2 + $0x38] sm:$0xff] %vm1036, %v4520
      %4633 = vst.msk [vmem:[#allocation2 + $0x40] sm:$0xff] %vm1036, %v4521
      %4634 = vst.msk [vmem:[#allocation2 + $0x48] sm:$0xff] %vm1036, %v4522
      %4635 = vst.msk [vmem:[#allocation2 + $0x50] sm:$0xff] %vm1036, %v4523
      %4636 = vst.msk [vmem:[#allocation2 + $0x58] sm:$0xff] %vm1036, %v4524
      %4637 = vst.msk [vmem:[#allocation2 + $0x60] sm:$0xff] %vm1036, %v4525
      %4638 = vst.msk [vmem:[#allocation2 + $0x68] sm:$0xff] %vm1036, %v4526
      %4639 = vst.msk [vmem:[#allocation2 + $0x70] sm:$0xff] %vm1036, %v4527
      %4640 = vst.msk [vmem:[#allocation2 + $0x78] sm:$0xff] %vm1036, %v4528
      %4641 = vst.msk [vmem:[#allocation2 + $0x80] sm:$0xff] %vm1036, %v4529
      %4642 = vst.msk [vmem:[#allocation2 + $0x88] sm:$0xff] %vm1036, %v4530
      %4643 = vst.msk [vmem:[#allocation2 + $0x90] sm:$0xff] %vm1036, %v4531
      %4644 = vst.msk [vmem:[#allocation2 + $0x98] sm:$0xff] %vm1036, %v4532
      %4645 = vst.msk [vmem:[#allocation2 + $0xa0] sm:$0xff] %vm1036, %v4533
      %4646 = vst.msk [vmem:[#allocation2 + $0xa8] sm:$0xff] %vm1036, %v4534
      %4647 = vst.msk [vmem:[#allocation2 + $0xb0] sm:$0xff] %vm1036, %v4535
      %4648 = vst.msk [vmem:[#allocation2 + $0xb8] sm:$0xff] %vm1036, %v4536
      %4649 = vst.msk [vmem:[#allocation2 + $0xc0] sm:$0xff] %vm1036, %v4537
      %4650 = vst.msk [vmem:[#allocation2 + $0xc8] sm:$0xff] %vm1036, %v4538
      %4651 = vst.msk [vmem:[#allocation2 + $0xd0] sm:$0xff] %vm1036, %v4539
      %4652 = vst.msk [vmem:[#allocation2 + $0xd8] sm:$0xff] %vm1036, %v4540
      %4653 = vst.msk [vmem:[#allocation2 + $0xe0] sm:$0xff] %vm1036, %v4541
      %4654 = vst.msk [vmem:[#allocation2 + $0xe8] sm:$0xff] %vm1036, %v4542
      %4655 = vst.msk [vmem:[#allocation2 + $0xf0] sm:$0xff] %vm1036, %v4543
      %4656 = vst.msk [vmem:[#allocation2 + $0xf8] sm:$0xff] %vm1036, %v4544
      %4657 = vst.msk [vmem:[#allocation2 + $0x100] sm:$0xff] %vm1036, %v4545
      %4658 = vst.msk [vmem:[#allocation2 + $0x108] sm:$0xff] %vm1036, %v4546
      %4659 = vst.msk [vmem:[#allocation2 + $0x110] sm:$0xff] %vm1036, %v4547
      %4660 = vst.msk [vmem:[#allocation2 + $0x118] sm:$0xff] %vm1036, %v4548
      %4661 = vst.msk [vmem:[#allocation2 + $0x120] sm:$0xff] %vm1036, %v4549
      %4662 = vst.msk [vmem:[#allocation2 + $0x128] sm:$0xff] %vm1036, %v4550
      %4663 = vst.msk [vmem:[#allocation2 + $0x130] sm:$0xff] %vm1036, %v4551
      %4664 = vst.msk [vmem:[#allocation2 + $0x138] sm:$0xff] %vm1036, %v4552
      %4665 = vst.msk [vmem:[#allocation2 + $0x140] sm:$0xff] %vm1036, %v4553
      %4666 = vst.msk [vmem:[#allocation2 + $0x148] sm:$0xff] %vm1036, %v4554
      %4667 = vst.msk [vmem:[#allocation2 + $0x150] sm:$0xff] %vm1036, %v4555
      %4668 = vst.msk [vmem:[#allocation2 + $0x158] sm:$0xff] %vm1036, %v4556
      %4669 = vst.msk [vmem:[#allocation2 + $0x160] sm:$0xff] %vm1036, %v4557
      %4670 = vst.msk [vmem:[#allocation2 + $0x168] sm:$0xff] %vm1036, %v4558
      %4671 = vst.msk [vmem:[#allocation2 + $0x170] sm:$0xff] %vm1036, %v4559
      %4672 = vst.msk [vmem:[#allocation2 + $0x178] sm:$0xff] %vm1036, %v4560
      %4673 = vst.msk [vmem:[#allocation2 + $0x180] sm:$0xff] %vm1036, %v4561
      %4674 = vst.msk [vmem:[#allocation2 + $0x188] sm:$0xff] %vm1036, %v4562
      %4675 = vst.msk [vmem:[#allocation2 + $0x190] sm:$0xff] %vm1036, %v4563
      %4676 = vst.msk [vmem:[#allocation2 + $0x198] sm:$0xff] %vm1036, %v4564
      %4677 = vst.msk [vmem:[#allocation2 + $0x1a0] sm:$0xff] %vm1036, %v4565
      %4678 = vst.msk [vmem:[#allocation2 + $0x1a8] sm:$0xff] %vm1036, %v4566
      %4679 = vst.msk [vmem:[#allocation2 + $0x1b0] sm:$0xff] %vm1036, %v4567
      %4680 = vst.msk [vmem:[#allocation2 + $0x1b8] sm:$0xff] %vm1036, %v4568
      %4681 = vst.msk [vmem:[#allocation2 + $0x1c0] sm:$0xff] %vm1036, %v4569
      %4682 = vst.msk [vmem:[#allocation2 + $0x1c8] sm:$0xff] %vm1036, %v4570
      %4683 = vst.msk [vmem:[#allocation2 + $0x1d0] sm:$0xff] %vm1036, %v4571
      %4684 = vst.msk [vmem:[#allocation2 + $0x1d8] sm:$0xff] %vm1036, %v4572
      %4685 = vst.msk [vmem:[#allocation2 + $0x1e0] sm:$0xff] %vm1036, %v4573
      %4686 = vst.msk [vmem:[#allocation2 + $0x1e8] sm:$0xff] %vm1036, %v4574
      %4687 = vst.msk [vmem:[#allocation2 + $0x1f0] sm:$0xff] %vm1036, %v4575
      %4688 = vst.msk [vmem:[#allocation2 + $0x1f8] sm:$0xff] %vm1036, %v4576
      %4689 = vst.msk [vmem:[#allocation2 + $0x200] sm:$0xff] %vm1036, %v4577
      %4690 = vst.msk [vmem:[#allocation2 + $0x208] sm:$0xff] %vm1036, %v4578
      %4691 = vst.msk [vmem:[#allocation2 + $0x210] sm:$0xff] %vm1036, %v4579
      %4692 = vst.msk [vmem:[#allocation2 + $0x218] sm:$0xff] %vm1036, %v4580
      %4693 = vst.msk [vmem:[#allocation2 + $0x220] sm:$0xff] %vm1036, %v4581
      %4694 = vst.msk [vmem:[#allocation2 + $0x228] sm:$0xff] %vm1036, %v4582
      %4695 = vst.msk [vmem:[#allocation2 + $0x230] sm:$0xff] %vm1036, %v4583
      %4696 = vst.msk [vmem:[#allocation2 + $0x238] sm:$0xff] %vm1036, %v4584
      %4697 = vst.msk [vmem:[#allocation2 + $0x240] sm:$0xff] %vm1036, %v4585
      %4698 = vst.msk [vmem:[#allocation2 + $0x248] sm:$0xff] %vm1036, %v4586
      %4699 = vst.msk [vmem:[#allocation2 + $0x250] sm:$0xff] %vm1036, %v4587
      %4700 = vst.msk [vmem:[#allocation2 + $0x258] sm:$0xff] %vm1036, %v4588
      %4701 = vst.msk [vmem:[#allocation2 + $0x260] sm:$0xff] %vm1036, %v4589
      %4702 = vst.msk [vmem:[#allocation2 + $0x268] sm:$0xff] %vm1036, %v4590
      %4703 = vst.msk [vmem:[#allocation2 + $0x270] sm:$0xff] %vm1036, %v4591
      %4704 = vst.msk [vmem:[#allocation2 + $0x278] sm:$0xff] %vm1036, %v4592
      %4705 = vst.msk [vmem:[#allocation2 + $0x280] sm:$0xff] %vm1036, %v4593
      %4706 = vst.msk [vmem:[#allocation2 + $0x288] sm:$0xff] %vm1036, %v4594
      %4707 = vst.msk [vmem:[#allocation2 + $0x290] sm:$0xff] %vm1036, %v4595
      %4708 = vst.msk [vmem:[#allocation2 + $0x298] sm:$0xff] %vm1036, %v4596
      %4709 = vst.msk [vmem:[#allocation2 + $0x2a0] sm:$0xff] %vm1036, %v4597
      %4710 = vst.msk [vmem:[#allocation2 + $0x2a8] sm:$0xff] %vm1036, %v4598
      %4711 = vst.msk [vmem:[#allocation2 + $0x2b0] sm:$0xff] %vm1036, %v4599
      %4712 = vst.msk [vmem:[#allocation2 + $0x2b8] sm:$0xff] %vm1036, %v4600
      %4713 = vst.msk [vmem:[#allocation2 + $0x2c0] sm:$0xff] %vm1036, %v4601
      %4714 = vst.msk [vmem:[#allocation2 + $0x2c8] sm:$0xff] %vm1036, %v4602
      %4715 = vst.msk [vmem:[#allocation2 + $0x2d0] sm:$0xff] %vm1036, %v4603
      %4716 = vst.msk [vmem:[#allocation2 + $0x2d8] sm:$0xff] %vm1036, %v4604
      %4717 = vst.msk [vmem:[#allocation2 + $0x2e0] sm:$0xff] %vm1036, %v4605
      %4718 = vst.msk [vmem:[#allocation2 + $0x2e8] sm:$0xff] %vm1036, %v4606
      %4719 = vst.msk [vmem:[#allocation2 + $0x2f0] sm:$0xff] %vm1036, %v4607
      %4720 = vst.msk [vmem:[#allocation2 + $0x2f8] sm:$0xff] %vm1036, %v4608
      %4721 = vst.msk [vmem:[#allocation2 + $0x300] sm:$0xff] %vm1036, %v4609
      %4722 = vst.msk [vmem:[#allocation2 + $0x308] sm:$0xff] %vm1036, %v4610
      %4723 = vst.msk [vmem:[#allocation2 + $0x310] sm:$0xff] %vm1036, %v4611
      %4724 = vst.msk [vmem:[#allocation2 + $0x318] sm:$0xff] %vm1036, %v4612
      %4725 = vst.msk [vmem:[#allocation2 + $0x320] sm:$0xff] %vm1036, %v4613
      %4726 = vst.msk [vmem:[#allocation2 + $0x328] sm:$0xff] %vm1036, %v4614
      %4727 = vst.msk [vmem:[#allocation2 + $0x330] sm:$0xff] %vm1036, %v4615
      %4728 = vst.msk [vmem:[#allocation2 + $0x338] sm:$0xff] %vm1036, %v4616
      %4729 = vst.msk [vmem:[#allocation2 + $0x340] sm:$0xff] %vm1036, %v4617
      %4730 = vst.msk [vmem:[#allocation2 + $0x348] sm:$0xff] %vm1036, %v4618
      %4731 = vst.msk [vmem:[#allocation2 + $0x350] sm:$0xff] %vm1036, %v4619
      %4732 = vst.msk [vmem:[#allocation2 + $0x358] sm:$0xff] %vm1036, %v4620
      %4733 = vst.msk [vmem:[#allocation2 + $0x360] sm:$0xff] %vm1036, %v4621
      %4734 = vst.msk [vmem:[#allocation2 + $0x368] sm:$0xff] %vm1036, %v4622
      %4735 = vst.msk [vmem:[#allocation2 + $0x370] sm:$0xff] %vm1036, %v4623
      %4736 = vst.msk [vmem:[#allocation2 + $0x378] sm:$0xff] %vm1036, %v4624
      %v4737 = vld [vmem:[%s165 + $0x40] sm:$0xf]
      %v4738 = vld [vmem:[%s165 + $0x44] sm:$0xf]
      %v4739 = vld [vmem:[%s165 + $0x48] sm:$0xf]
      %v4740 = vld [vmem:[%s165 + $0x4c] sm:$0xf]
      %v4741 = vld [vmem:[%s165 + $0x50] sm:$0xf]
      %v4742 = vld [vmem:[%s165 + $0x54] sm:$0xf]
      %v4743 = vld [vmem:[%s165 + $0x58] sm:$0xf]
      %v4744 = vld [vmem:[%s165 + $0x5c] sm:$0xf]
      %v4745 = vld [vmem:[%s165 + $0x60] sm:$0xf]
      %v4746 = vld [vmem:[%s165 + $0x64] sm:$0xf]
      %v4747 = vld [vmem:[%s165 + $0x68] sm:$0xf]
      %v4748 = vld [vmem:[%s165 + $0x6c] sm:$0xf]
      %v4749 = vld [vmem:[%s165 + $0x70] sm:$0xf]
      %v4750 = vld [vmem:[%s165 + $0x74] sm:$0xf]
      %v4751 = vld [vmem:[%s165 + $0x78] sm:$0xf]
      %v4752 = vld [vmem:[%s165 + $0x7c] sm:$0xf]
      %v4753 = vld [vmem:[%s165 + $0x80] sm:$0xf]
      %v4754 = vld [vmem:[%s165 + $0x84] sm:$0xf]
      %v4755 = vld [vmem:[%s165 + $0x88] sm:$0xf]
      %v4756 = vld [vmem:[%s165 + $0x8c] sm:$0xf]
      %v4757 = vld [vmem:[%s165 + $0x90] sm:$0xf]
      %v4758 = vld [vmem:[%s165 + $0x94] sm:$0xf]
      %v4759 = vld [vmem:[%s165 + $0x98] sm:$0xf]
      %v4760 = vld [vmem:[%s165 + $0x9c] sm:$0xf]
      %v4761 = vld [vmem:[%s165 + $0xa0] sm:$0xf]
      %v4762 = vld [vmem:[%s165 + $0xa4] sm:$0xf]
      %v4763 = vld [vmem:[%s165 + $0xa8] sm:$0xf]
      %v4764 = vld [vmem:[%s165 + $0xac] sm:$0xf]
      %v4765 = vld [vmem:[%s165 + $0xb0] sm:$0xf]
      %v4766 = vld [vmem:[%s165 + $0xb4] sm:$0xf]
      %v4767 = vld [vmem:[%s165 + $0xb8] sm:$0xf]
      %v4768 = vld [vmem:[%s165 + $0xbc] sm:$0xf]
      %v4769 = vld [vmem:[%s165 + $0xc0] sm:$0xf]
      %v4770 = vld [vmem:[%s165 + $0xc4] sm:$0xf]
      %v4771 = vld [vmem:[%s165 + $0xc8] sm:$0xf]
      %v4772 = vld [vmem:[%s165 + $0xcc] sm:$0xf]
      %v4773 = vld [vmem:[%s165 + $0xd0] sm:$0xf]
      %v4774 = vld [vmem:[%s165 + $0xd4] sm:$0xf]
      %v4775 = vld [vmem:[%s165 + $0xd8] sm:$0xf]
      %v4776 = vld [vmem:[%s165 + $0xdc] sm:$0xf]
      %v4777 = vld [vmem:[%s165 + $0xe0] sm:$0xf]
      %v4778 = vld [vmem:[%s165 + $0xe4] sm:$0xf]
      %v4779 = vld [vmem:[%s165 + $0xe8] sm:$0xf]
      %v4780 = vld [vmem:[%s165 + $0xec] sm:$0xf]
      %v4781 = vld [vmem:[%s165 + $0xf0] sm:$0xf]
      %v4782 = vld [vmem:[%s165 + $0xf4] sm:$0xf]
      %v4783 = vld [vmem:[%s165 + $0xf8] sm:$0xf]
      %v4784 = vld [vmem:[%s165 + $0xfc] sm:$0xf]
      %v4785 = vld [vmem:[%s165 + $0x100] sm:$0xf]
      %v4786 = vld [vmem:[%s165 + $0x104] sm:$0xf]
      %v4787 = vld [vmem:[%s165 + $0x108] sm:$0xf]
      %v4788 = vld [vmem:[%s165 + $0x10c] sm:$0xf]
      %v4789 = vld [vmem:[%s165 + $0x110] sm:$0xf]
      %v4790 = vld [vmem:[%s165 + $0x114] sm:$0xf]
      %v4791 = vld [vmem:[%s165 + $0x118] sm:$0xf]
      %v4792 = vld [vmem:[%s165 + $0x11c] sm:$0xf]
      %v4793 = vld [vmem:[%s165 + $0x120] sm:$0xf]
      %v4794 = vld [vmem:[%s165 + $0x124] sm:$0xf]
      %v4795 = vld [vmem:[%s165 + $0x128] sm:$0xf]
      %v4796 = vld [vmem:[%s165 + $0x12c] sm:$0xf]
      %v4797 = vld [vmem:[%s165 + $0x130] sm:$0xf]
      %v4798 = vld [vmem:[%s165 + $0x134] sm:$0xf]
      %v4799 = vld [vmem:[%s165 + $0x138] sm:$0xf]
      %v4800 = vld [vmem:[%s165 + $0x13c] sm:$0xf]
      %v4801 = vld [vmem:[%s165 + $0x140] sm:$0xf]
      %v4802 = vld [vmem:[%s165 + $0x144] sm:$0xf]
      %v4803 = vld [vmem:[%s165 + $0x148] sm:$0xf]
      %v4804 = vld [vmem:[%s165 + $0x14c] sm:$0xf]
      %v4805 = vld [vmem:[%s165 + $0x150] sm:$0xf]
      %v4806 = vld [vmem:[%s165 + $0x154] sm:$0xf]
      %v4807 = vld [vmem:[%s165 + $0x158] sm:$0xf]
      %v4808 = vld [vmem:[%s165 + $0x15c] sm:$0xf]
      %v4809 = vld [vmem:[%s165 + $0x160] sm:$0xf]
      %v4810 = vld [vmem:[%s165 + $0x164] sm:$0xf]
      %v4811 = vld [vmem:[%s165 + $0x168] sm:$0xf]
      %v4812 = vld [vmem:[%s165 + $0x16c] sm:$0xf]
      %v4813 = vld [vmem:[%s165 + $0x170] sm:$0xf]
      %v4814 = vld [vmem:[%s165 + $0x174] sm:$0xf]
      %v4815 = vld [vmem:[%s165 + $0x178] sm:$0xf]
      %v4816 = vld [vmem:[%s165 + $0x17c] sm:$0xf]
      %v4817 = vld [vmem:[%s165 + $0x180] sm:$0xf]
      %v4818 = vld [vmem:[%s165 + $0x184] sm:$0xf]
      %v4819 = vld [vmem:[%s165 + $0x188] sm:$0xf]
      %v4820 = vld [vmem:[%s165 + $0x18c] sm:$0xf]
      %v4821 = vld [vmem:[%s165 + $0x190] sm:$0xf]
      %v4822 = vld [vmem:[%s165 + $0x194] sm:$0xf]
      %v4823 = vld [vmem:[%s165 + $0x198] sm:$0xf]
      %v4824 = vld [vmem:[%s165 + $0x19c] sm:$0xf]
      %v4825 = vld [vmem:[%s165 + $0x1a0] sm:$0xf]
      %v4826 = vld [vmem:[%s165 + $0x1a4] sm:$0xf]
      %v4827 = vld [vmem:[%s165 + $0x1a8] sm:$0xf]
      %v4828 = vld [vmem:[%s165 + $0x1ac] sm:$0xf]
      %v4829 = vld [vmem:[%s165 + $0x1b0] sm:$0xf]
      %v4830 = vld [vmem:[%s165 + $0x1b4] sm:$0xf]
      %v4831 = vld [vmem:[%s165 + $0x1b8] sm:$0xf]
      %v4832 = vld [vmem:[%s165 + $0x1bc] sm:$0xf]
      %v4833 = vld [vmem:[%s165 + $0x1c0] sm:$0xf]
      %v4834 = vld [vmem:[%s165 + $0x1c4] sm:$0xf]
      %v4835 = vld [vmem:[%s165 + $0x1c8] sm:$0xf]
      %v4836 = vld [vmem:[%s165 + $0x1cc] sm:$0xf]
      %v4837 = vld [vmem:[%s165 + $0x1d0] sm:$0xf]
      %v4838 = vld [vmem:[%s165 + $0x1d4] sm:$0xf]
      %v4839 = vld [vmem:[%s165 + $0x1d8] sm:$0xf]
      %v4840 = vld [vmem:[%s165 + $0x1dc] sm:$0xf]
      %v4841 = vld [vmem:[%s165 + $0x1e0] sm:$0xf]
      %v4842 = vld [vmem:[%s165 + $0x1e4] sm:$0xf]
      %v4843 = vld [vmem:[%s165 + $0x1e8] sm:$0xf]
      %v4844 = vld [vmem:[%s165 + $0x1ec] sm:$0xf]
      %v4845 = vld [vmem:[%s165 + $0x1f0] sm:$0xf]
      %v4846 = vld [vmem:[%s165 + $0x1f4] sm:$0xf]
      %v4847 = vld [vmem:[%s165 + $0x1f8] sm:$0xf]
      %v4848 = vld [vmem:[%s165 + $0x1fc] sm:$0xf]
      %v4849 = vld [vmem:[#allocation2] sm:$0xff]
      %v4850 = vld [vmem:[#allocation2 + $0x8] sm:$0xff]
      %v4851 = vld [vmem:[#allocation2 + $0x10] sm:$0xff]
      %v4852 = vld [vmem:[#allocation2 + $0x18] sm:$0xff]
      %v4853 = vld [vmem:[#allocation2 + $0x20] sm:$0xff]
      %v4854 = vld [vmem:[#allocation2 + $0x28] sm:$0xff]
      %v4855 = vld [vmem:[#allocation2 + $0x30] sm:$0xff]
      %v4856 = vld [vmem:[#allocation2 + $0x38] sm:$0xff]
      %v4857 = vld [vmem:[#allocation2 + $0x40] sm:$0xff]
      %v4858 = vld [vmem:[#allocation2 + $0x48] sm:$0xff]
      %v4859 = vld [vmem:[#allocation2 + $0x50] sm:$0xff]
      %v4860 = vld [vmem:[#allocation2 + $0x58] sm:$0xff]
      %v4861 = vld [vmem:[#allocation2 + $0x60] sm:$0xff]
      %v4862 = vld [vmem:[#allocation2 + $0x68] sm:$0xff]
      %v4863 = vld [vmem:[#allocation2 + $0x70] sm:$0xff]
      %v4864 = vld [vmem:[#allocation2 + $0x78] sm:$0xff]
      %v4865 = vld [vmem:[#allocation2 + $0x80] sm:$0xff]
      %v4866 = vld [vmem:[#allocation2 + $0x88] sm:$0xff]
      %v4867 = vld [vmem:[#allocation2 + $0x90] sm:$0xff]
      %v4868 = vld [vmem:[#allocation2 + $0x98] sm:$0xff]
      %v4869 = vld [vmem:[#allocation2 + $0xa0] sm:$0xff]
      %v4870 = vld [vmem:[#allocation2 + $0xa8] sm:$0xff]
      %v4871 = vld [vmem:[#allocation2 + $0xb0] sm:$0xff]
      %v4872 = vld [vmem:[#allocation2 + $0xb8] sm:$0xff]
      %v4873 = vld [vmem:[#allocation2 + $0xc0] sm:$0xff]
      %v4874 = vld [vmem:[#allocation2 + $0xc8] sm:$0xff]
      %v4875 = vld [vmem:[#allocation2 + $0xd0] sm:$0xff]
      %v4876 = vld [vmem:[#allocation2 + $0xd8] sm:$0xff]
      %v4877 = vld [vmem:[#allocation2 + $0xe0] sm:$0xff]
      %v4878 = vld [vmem:[#allocation2 + $0xe8] sm:$0xff]
      %v4879 = vld [vmem:[#allocation2 + $0xf0] sm:$0xff]
      %v4880 = vld [vmem:[#allocation2 + $0xf8] sm:$0xff]
      %v4881 = vld [vmem:[#allocation2 + $0x100] sm:$0xff]
      %v4882 = vld [vmem:[#allocation2 + $0x108] sm:$0xff]
      %v4883 = vld [vmem:[#allocation2 + $0x110] sm:$0xff]
      %v4884 = vld [vmem:[#allocation2 + $0x118] sm:$0xff]
      %v4885 = vld [vmem:[#allocation2 + $0x120] sm:$0xff]
      %v4886 = vld [vmem:[#allocation2 + $0x128] sm:$0xff]
      %v4887 = vld [vmem:[#allocation2 + $0x130] sm:$0xff]
      %v4888 = vld [vmem:[#allocation2 + $0x138] sm:$0xff]
      %v4889 = vld [vmem:[#allocation2 + $0x140] sm:$0xff]
      %v4890 = vld [vmem:[#allocation2 + $0x148] sm:$0xff]
      %v4891 = vld [vmem:[#allocation2 + $0x150] sm:$0xff]
      %v4892 = vld [vmem:[#allocation2 + $0x158] sm:$0xff]
      %v4893 = vld [vmem:[#allocation2 + $0x160] sm:$0xff]
      %v4894 = vld [vmem:[#allocation2 + $0x168] sm:$0xff]
      %v4895 = vld [vmem:[#allocation2 + $0x170] sm:$0xff]
      %v4896 = vld [vmem:[#allocation2 + $0x178] sm:$0xff]
      %v4897 = vld [vmem:[#allocation2 + $0x180] sm:$0xff]
      %v4898 = vld [vmem:[#allocation2 + $0x188] sm:$0xff]
      %v4899 = vld [vmem:[#allocation2 + $0x190] sm:$0xff]
      %v4900 = vld [vmem:[#allocation2 + $0x198] sm:$0xff]
      %v4901 = vld [vmem:[#allocation2 + $0x1a0] sm:$0xff]
      %v4902 = vld [vmem:[#allocation2 + $0x1a8] sm:$0xff]
      %v4903 = vld [vmem:[#allocation2 + $0x1b0] sm:$0xff]
      %v4904 = vld [vmem:[#allocation2 + $0x1b8] sm:$0xff]
      %v4905 = vld [vmem:[#allocation2 + $0x1c0] sm:$0xff]
      %v4906 = vld [vmem:[#allocation2 + $0x1c8] sm:$0xff]
      %v4907 = vld [vmem:[#allocation2 + $0x1d0] sm:$0xff]
      %v4908 = vld [vmem:[#allocation2 + $0x1d8] sm:$0xff]
      %v4909 = vld [vmem:[#allocation2 + $0x1e0] sm:$0xff]
      %v4910 = vld [vmem:[#allocation2 + $0x1e8] sm:$0xff]
      %v4911 = vld [vmem:[#allocation2 + $0x1f0] sm:$0xff]
      %v4912 = vld [vmem:[#allocation2 + $0x1f8] sm:$0xff]
      %v4913 = vld [vmem:[#allocation2 + $0x200] sm:$0xff]
      %v4914 = vld [vmem:[#allocation2 + $0x208] sm:$0xff]
      %v4915 = vld [vmem:[#allocation2 + $0x210] sm:$0xff]
      %v4916 = vld [vmem:[#allocation2 + $0x218] sm:$0xff]
      %v4917 = vld [vmem:[#allocation2 + $0x220] sm:$0xff]
      %v4918 = vld [vmem:[#allocation2 + $0x228] sm:$0xff]
      %v4919 = vld [vmem:[#allocation2 + $0x230] sm:$0xff]
      %v4920 = vld [vmem:[#allocation2 + $0x238] sm:$0xff]
      %v4921 = vld [vmem:[#allocation2 + $0x240] sm:$0xff]
      %v4922 = vld [vmem:[#allocation2 + $0x248] sm:$0xff]
      %v4923 = vld [vmem:[#allocation2 + $0x250] sm:$0xff]
      %v4924 = vld [vmem:[#allocation2 + $0x258] sm:$0xff]
      %v4925 = vld [vmem:[#allocation2 + $0x260] sm:$0xff]
      %v4926 = vld [vmem:[#allocation2 + $0x268] sm:$0xff]
      %v4927 = vld [vmem:[#allocation2 + $0x270] sm:$0xff]
      %v4928 = vld [vmem:[#allocation2 + $0x278] sm:$0xff]
      %v4929 = vld [vmem:[#allocation2 + $0x280] sm:$0xff]
      %v4930 = vld [vmem:[#allocation2 + $0x288] sm:$0xff]
      %v4931 = vld [vmem:[#allocation2 + $0x290] sm:$0xff]
      %v4932 = vld [vmem:[#allocation2 + $0x298] sm:$0xff]
      %v4933 = vld [vmem:[#allocation2 + $0x2a0] sm:$0xff]
      %v4934 = vld [vmem:[#allocation2 + $0x2a8] sm:$0xff]
      %v4935 = vld [vmem:[#allocation2 + $0x2b0] sm:$0xff]
      %v4936 = vld [vmem:[#allocation2 + $0x2b8] sm:$0xff]
      %v4937 = vld [vmem:[#allocation2 + $0x2c0] sm:$0xff]
      %v4938 = vld [vmem:[#allocation2 + $0x2c8] sm:$0xff]
      %v4939 = vld [vmem:[#allocation2 + $0x2d0] sm:$0xff]
      %v4940 = vld [vmem:[#allocation2 + $0x2d8] sm:$0xff]
      %v4941 = vld [vmem:[#allocation2 + $0x2e0] sm:$0xff]
      %v4942 = vld [vmem:[#allocation2 + $0x2e8] sm:$0xff]
      %v4943 = vld [vmem:[#allocation2 + $0x2f0] sm:$0xff]
      %v4944 = vld [vmem:[#allocation2 + $0x2f8] sm:$0xff]
      %v4945 = vld [vmem:[#allocation2 + $0x300] sm:$0xff]
      %v4946 = vld [vmem:[#allocation2 + $0x308] sm:$0xff]
      %v4947 = vld [vmem:[#allocation2 + $0x310] sm:$0xff]
      %v4948 = vld [vmem:[#allocation2 + $0x318] sm:$0xff]
      %v4949 = vld [vmem:[#allocation2 + $0x320] sm:$0xff]
      %v4950 = vld [vmem:[#allocation2 + $0x328] sm:$0xff]
      %v4951 = vld [vmem:[#allocation2 + $0x330] sm:$0xff]
      %v4952 = vld [vmem:[#allocation2 + $0x338] sm:$0xff]
      %v4953 = vld [vmem:[#allocation2 + $0x340] sm:$0xff]
      %v4954 = vld [vmem:[#allocation2 + $0x348] sm:$0xff]
      %v4955 = vld [vmem:[#allocation2 + $0x350] sm:$0xff]
      %v4956 = vld [vmem:[#allocation2 + $0x358] sm:$0xff]
      %v4957 = vld [vmem:[#allocation2 + $0x360] sm:$0xff]
      %v4958 = vld [vmem:[#allocation2 + $0x368] sm:$0xff]
      %v4959 = vld [vmem:[#allocation2 + $0x370] sm:$0xff]
      %v4960 = vld [vmem:[#allocation2 + $0x378] sm:$0xff]
      %s4961 = scalar_lea.vmem %s1, 32
      %v4962 = vld [vmem:[%s4961] sm:$0xf]
      %v4963 = vld [vmem:[%s4961 + $0x4] sm:$0xf]
      %v5076 = vunpack.c.l.b16 %v4737
      %v5077 = vunpack.c.l.b16 %v4738
      %v5078 = vunpack.c.l.b16 %v4739
      %v5079 = vunpack.c.l.b16 %v4740
      %v5080 = vunpack.c.l.b16 %v4741
      %v5081 = vunpack.c.l.b16 %v4742
      %v5082 = vunpack.c.l.b16 %v4743
      %v5083 = vunpack.c.l.b16 %v4744
      %v5084 = vunpack.c.l.b16 %v4745
      %v5085 = vunpack.c.l.b16 %v4746
      %v5086 = vunpack.c.l.b16 %v4747
      %v5087 = vunpack.c.l.b16 %v4748
      %v5088 = vunpack.c.l.b16 %v4749
      %v5089 = vunpack.c.l.b16 %v4750
      %v5090 = vunpack.c.l.b16 %v4751
      %v5091 = vunpack.c.l.b16 %v4752
      %v5092 = vunpack.c.l.b16 %v4753
      %v5093 = vunpack.c.l.b16 %v4754
      %v5094 = vunpack.c.l.b16 %v4755
      %v5095 = vunpack.c.l.b16 %v4756
      %v5096 = vunpack.c.l.b16 %v4757
      %v5097 = vunpack.c.l.b16 %v4758
      %v5098 = vunpack.c.l.b16 %v4759
      %v5099 = vunpack.c.l.b16 %v4760
      %v5100 = vunpack.c.l.b16 %v4761
      %v5101 = vunpack.c.l.b16 %v4762
      %v5102 = vunpack.c.l.b16 %v4763
      %v5103 = vunpack.c.l.b16 %v4764
      %v5104 = vunpack.c.l.b16 %v4765
      %v5105 = vunpack.c.l.b16 %v4766
      %v5106 = vunpack.c.l.b16 %v4767
      %v5107 = vunpack.c.l.b16 %v4768
      %v5108 = vunpack.c.l.b16 %v4769
      %v5109 = vunpack.c.l.b16 %v4770
      %v5110 = vunpack.c.l.b16 %v4771
      %v5111 = vunpack.c.l.b16 %v4772
      %v5112 = vunpack.c.l.b16 %v4773
      %v5113 = vunpack.c.l.b16 %v4774
      %v5114 = vunpack.c.l.b16 %v4775
      %v5115 = vunpack.c.l.b16 %v4776
      %v5116 = vunpack.c.l.b16 %v4777
      %v5117 = vunpack.c.l.b16 %v4778
      %v5118 = vunpack.c.l.b16 %v4779
      %v5119 = vunpack.c.l.b16 %v4780
      %v5120 = vunpack.c.l.b16 %v4781
      %v5121 = vunpack.c.l.b16 %v4782
      %v5122 = vunpack.c.l.b16 %v4783
      %v5123 = vunpack.c.l.b16 %v4784
      %v5124 = vunpack.c.l.b16 %v4785
      %v5125 = vunpack.c.l.b16 %v4786
      %v5126 = vunpack.c.l.b16 %v4787
      %v5127 = vunpack.c.l.b16 %v4788
      %v5128 = vunpack.c.l.b16 %v4789
      %v5129 = vunpack.c.l.b16 %v4790
      %v5130 = vunpack.c.l.b16 %v4791
      %v5131 = vunpack.c.l.b16 %v4792
      %v5132 = vunpack.c.l.b16 %v4793
      %v5133 = vunpack.c.l.b16 %v4794
      %v5134 = vunpack.c.l.b16 %v4795
      %v5135 = vunpack.c.l.b16 %v4796
      %v5136 = vunpack.c.l.b16 %v4797
      %v5137 = vunpack.c.l.b16 %v4798
      %v5138 = vunpack.c.l.b16 %v4799
      %v5139 = vunpack.c.l.b16 %v4800
      %v5140 = vunpack.c.l.b16 %v4801
      %v5141 = vunpack.c.l.b16 %v4802
      %v5142 = vunpack.c.l.b16 %v4803
      %v5143 = vunpack.c.l.b16 %v4804
      %v5144 = vunpack.c.l.b16 %v4805
      %v5145 = vunpack.c.l.b16 %v4806
      %v5146 = vunpack.c.l.b16 %v4807
      %v5147 = vunpack.c.l.b16 %v4808
      %v5148 = vunpack.c.l.b16 %v4809
      %v5149 = vunpack.c.l.b16 %v4810
      %v5150 = vunpack.c.l.b16 %v4811
      %v5151 = vunpack.c.l.b16 %v4812
      %v5152 = vunpack.c.l.b16 %v4813
      %v5153 = vunpack.c.l.b16 %v4814
      %v5154 = vunpack.c.l.b16 %v4815
      %v5155 = vunpack.c.l.b16 %v4816
      %v5156 = vunpack.c.l.b16 %v4817
      %v5157 = vunpack.c.l.b16 %v4818
      %v5158 = vunpack.c.l.b16 %v4819
      %v5159 = vunpack.c.l.b16 %v4820
      %v5160 = vunpack.c.l.b16 %v4821
      %v5161 = vunpack.c.l.b16 %v4822
      %v5162 = vunpack.c.l.b16 %v4823
      %v5163 = vunpack.c.l.b16 %v4824
      %v5164 = vunpack.c.l.b16 %v4825
      %v5165 = vunpack.c.l.b16 %v4826
      %v5166 = vunpack.c.l.b16 %v4827
      %v5167 = vunpack.c.l.b16 %v4828
      %v5168 = vunpack.c.l.b16 %v4829
      %v5169 = vunpack.c.l.b16 %v4830
      %v5170 = vunpack.c.l.b16 %v4831
      %v5171 = vunpack.c.l.b16 %v4832
      %v5172 = vunpack.c.l.b16 %v4833
      %v5173 = vunpack.c.l.b16 %v4834
      %v5174 = vunpack.c.l.b16 %v4835
      %v5175 = vunpack.c.l.b16 %v4836
      %v5176 = vunpack.c.l.b16 %v4837
      %v5177 = vunpack.c.l.b16 %v4838
      %v5178 = vunpack.c.l.b16 %v4839
      %v5179 = vunpack.c.l.b16 %v4840
      %v5180 = vunpack.c.l.b16 %v4841
      %v5181 = vunpack.c.l.b16 %v4842
      %v5182 = vunpack.c.l.b16 %v4843
      %v5183 = vunpack.c.l.b16 %v4844
      %v5184 = vunpack.c.l.b16 %v4845
      %v5185 = vunpack.c.l.b16 %v4846
      %v5186 = vunpack.c.l.b16 %v4847
      %v5187 = vunpack.c.l.b16 %v4848
      %v5188 = vpack.c.b16 %v5077, %v5076
      %v5189 = vpack.c.b16 %v5079, %v5078
      %v5190 = vpack.c.b16 %v5081, %v5080
      %v5191 = vpack.c.b16 %v5083, %v5082
      %v5192 = vpack.c.b16 %v5085, %v5084
      %v5193 = vpack.c.b16 %v5087, %v5086
      %v5194 = vpack.c.b16 %v5089, %v5088
      %v5195 = vpack.c.b16 %v5091, %v5090
      %v5196 = vpack.c.b16 %v5093, %v5092
      %v5197 = vpack.c.b16 %v5095, %v5094
      %v5198 = vpack.c.b16 %v5097, %v5096
      %v5199 = vpack.c.b16 %v5099, %v5098
      %v5200 = vpack.c.b16 %v5101, %v5100
      %v5201 = vpack.c.b16 %v5103, %v5102
      %v5202 = vpack.c.b16 %v5105, %v5104
      %v5203 = vpack.c.b16 %v5107, %v5106
      %v5204 = vpack.c.b16 %v5109, %v5108
      %v5205 = vpack.c.b16 %v5111, %v5110
      %v5206 = vpack.c.b16 %v5113, %v5112
      %v5207 = vpack.c.b16 %v5115, %v5114
      %v5208 = vpack.c.b16 %v5117, %v5116
      %v5209 = vpack.c.b16 %v5119, %v5118
      %v5210 = vpack.c.b16 %v5121, %v5120
      %v5211 = vpack.c.b16 %v5123, %v5122
      %v5212 = vpack.c.b16 %v5125, %v5124
      %v5213 = vpack.c.b16 %v5127, %v5126
      %v5214 = vpack.c.b16 %v5129, %v5128
      %v5215 = vpack.c.b16 %v5131, %v5130
      %v5216 = vpack.c.b16 %v5133, %v5132
      %v5217 = vpack.c.b16 %v5135, %v5134
      %v5218 = vpack.c.b16 %v5137, %v5136
      %v5219 = vpack.c.b16 %v5139, %v5138
      %v5220 = vpack.c.b16 %v5141, %v5140
      %v5221 = vpack.c.b16 %v5143, %v5142
      %v5222 = vpack.c.b16 %v5145, %v5144
      %v5223 = vpack.c.b16 %v5147, %v5146
      %v5224 = vpack.c.b16 %v5149, %v5148
      %v5225 = vpack.c.b16 %v5151, %v5150
      %v5226 = vpack.c.b16 %v5153, %v5152
      %v5227 = vpack.c.b16 %v5155, %v5154
      %v5228 = vpack.c.b16 %v5157, %v5156
      %v5229 = vpack.c.b16 %v5159, %v5158
      %v5230 = vpack.c.b16 %v5161, %v5160
      %v5231 = vpack.c.b16 %v5163, %v5162
      %v5232 = vpack.c.b16 %v5165, %v5164
      %v5233 = vpack.c.b16 %v5167, %v5166
      %v5234 = vpack.c.b16 %v5169, %v5168
      %v5235 = vpack.c.b16 %v5171, %v5170
      %v5236 = vpack.c.b16 %v5173, %v5172
      %v5237 = vpack.c.b16 %v5175, %v5174
      %v5238 = vpack.c.b16 %v5177, %v5176
      %v5239 = vpack.c.b16 %v5179, %v5178
      %v5240 = vpack.c.b16 %v5181, %v5180
      %v5241 = vpack.c.b16 %v5183, %v5182
      %v5242 = vpack.c.b16 %v5185, %v5184
      %v5243 = vpack.c.b16 %v5187, %v5186
      %v5246 = vunpack.c.l.b16 %v4962
      %v5247 = vunpack.c.l.b16 %v4963
      %v5248 = vpack.c.b16 %v5247, %v5246
      %v5250 = vsel %vm571, %v5188, 0
      %v5253 = vsel %vm571, %v5189, 0
      %v5256 = vsel %vm571, %v5190, 0
      %v5259 = vsel %vm571, %v5191, 0
      %v5262 = vsel %vm571, %v5192, 0
      %v5265 = vsel %vm571, %v5193, 0
      %v5268 = vsel %vm571, %v5194, 0
      %v5271 = vsel %vm571, %v5195, 0
      %v5274 = vsel %vm571, %v5196, 0
      %v5277 = vsel %vm571, %v5197, 0
      %v5280 = vsel %vm571, %v5198, 0
      %v5283 = vsel %vm571, %v5199, 0
      %v5286 = vsel %vm571, %v5200, 0
      %v5289 = vsel %vm571, %v5201, 0
      %v5292 = vsel %vm571, %v5202, 0
      %v5295 = vsel %vm571, %v5203, 0
      %v5298 = vsel %vm571, %v5204, 0
      %v5301 = vsel %vm571, %v5205, 0
      %v5304 = vsel %vm571, %v5206, 0
      %v5307 = vsel %vm571, %v5207, 0
      %v5310 = vsel %vm571, %v5208, 0
      %v5313 = vsel %vm571, %v5209, 0
      %v5316 = vsel %vm571, %v5210, 0
      %v5319 = vsel %vm571, %v5211, 0
      %v5322 = vsel %vm571, %v5212, 0
      %v5325 = vsel %vm571, %v5213, 0
      %v5328 = vsel %vm571, %v5214, 0
      %v5331 = vsel %vm571, %v5215, 0
      %v5334 = vsel %vm571, %v5216, 0
      %v5337 = vsel %vm571, %v5217, 0
      %v5340 = vsel %vm571, %v5218, 0
      %v5343 = vsel %vm571, %v5219, 0
      %v5346 = vsel %vm571, %v5220, 0
      %v5349 = vsel %vm571, %v5221, 0
      %v5352 = vsel %vm571, %v5222, 0
      %v5355 = vsel %vm571, %v5223, 0
      %v5358 = vsel %vm571, %v5224, 0
      %v5361 = vsel %vm571, %v5225, 0
      %v5364 = vsel %vm571, %v5226, 0
      %v5367 = vsel %vm571, %v5227, 0
      %v5370 = vsel %vm571, %v5228, 0
      %v5373 = vsel %vm571, %v5229, 0
      %v5376 = vsel %vm571, %v5230, 0
      %v5379 = vsel %vm571, %v5231, 0
      %v5382 = vsel %vm571, %v5232, 0
      %v5385 = vsel %vm571, %v5233, 0
      %v5388 = vsel %vm571, %v5234, 0
      %v5391 = vsel %vm571, %v5235, 0
      %v5394 = vsel %vm571, %v5236, 0
      %v5397 = vsel %vm571, %v5237, 0
      %v5400 = vsel %vm571, %v5238, 0
      %v5403 = vsel %vm571, %v5239, 0
      %v5406 = vsel %vm571, %v5240, 0
      %v5409 = vsel %vm571, %v5241, 0
      %v5412 = vsel %vm571, %v5242, 0
      %v5415 = vsel %vm571, %v5243, 0
      %v5418 = vand.u32 %v5248, %v743
      %5420 = vmatpush.bf16.msra.mxu0 0
      %5421 = vmatpush.bf16.msra.mxu0 0
      %5422 = vmatpush.bf16.msra.mxu0 0
      %5423 = vmatpush.bf16.msra.mxu0 0
      %5424 = vmatpush.bf16.msra.mxu0 0
      %5425 = vmatpush.bf16.msra.mxu0 0
      %5426 = vmatpush.bf16.msra.mxu0 0
      %5427 = vmatpush.bf16.msra.mxu0 %v5418
      %5428 = vmatmul.bf16.gmra.mxu0 %v5250
      %v5429 = vpop.f32.mrf.mxu0
      %v5430 = vadd.f32 0.0, %v5429
      %v5431 = vpop.f32.mrf.mxu0
      %v5432 = vadd.f32 0.0, %v5431
      %5433 = vmatmul.bf16.gmra.mxu0 %v5253
      %v5434 = vpop.f32.mrf.mxu0
      %v5435 = vadd.f32 0.0, %v5434
      %v5436 = vpop.f32.mrf.mxu0
      %v5437 = vadd.f32 0.0, %v5436
      %5438 = vmatmul.bf16.gmra.mxu0 %v5256
      %v5439 = vpop.f32.mrf.mxu0
      %v5440 = vadd.f32 0.0, %v5439
      %v5441 = vpop.f32.mrf.mxu0
      %v5442 = vadd.f32 0.0, %v5441
      %5443 = vmatmul.bf16.gmra.mxu0 %v5259
      %v5444 = vpop.f32.mrf.mxu0
      %v5445 = vadd.f32 0.0, %v5444
      %v5446 = vpop.f32.mrf.mxu0
      %v5447 = vadd.f32 0.0, %v5446
      %5448 = vmatmul.bf16.gmra.mxu0 %v5262
      %v5449 = vpop.f32.mrf.mxu0
      %v5450 = vadd.f32 0.0, %v5449
      %v5451 = vpop.f32.mrf.mxu0
      %v5452 = vadd.f32 0.0, %v5451
      %5453 = vmatmul.bf16.gmra.mxu0 %v5265
      %v5454 = vpop.f32.mrf.mxu0
      %v5455 = vadd.f32 0.0, %v5454
      %v5456 = vpop.f32.mrf.mxu0
      %v5457 = vadd.f32 0.0, %v5456
      %5458 = vmatmul.bf16.gmra.mxu0 %v5268
      %v5459 = vpop.f32.mrf.mxu0
      %v5460 = vadd.f32 0.0, %v5459
      %v5461 = vpop.f32.mrf.mxu0
      %v5462 = vadd.f32 0.0, %v5461
      %5463 = vmatmul.bf16.gmra.mxu0 %v5271
      %v5464 = vpop.f32.mrf.mxu0
      %v5465 = vadd.f32 0.0, %v5464
      %v5466 = vpop.f32.mrf.mxu0
      %v5467 = vadd.f32 0.0, %v5466
      %5468 = vmatmul.bf16.gmra.mxu0 %v5274
      %v5469 = vpop.f32.mrf.mxu0
      %v5470 = vadd.f32 0.0, %v5469
      %v5471 = vpop.f32.mrf.mxu0
      %v5472 = vadd.f32 0.0, %v5471
      %5473 = vmatmul.bf16.gmra.mxu0 %v5277
      %v5474 = vpop.f32.mrf.mxu0
      %v5475 = vadd.f32 0.0, %v5474
      %v5476 = vpop.f32.mrf.mxu0
      %v5477 = vadd.f32 0.0, %v5476
      %5478 = vmatmul.bf16.gmra.mxu0 %v5280
      %v5479 = vpop.f32.mrf.mxu0
      %v5480 = vadd.f32 0.0, %v5479
      %v5481 = vpop.f32.mrf.mxu0
      %v5482 = vadd.f32 0.0, %v5481
      %5483 = vmatmul.bf16.gmra.mxu0 %v5283
      %v5484 = vpop.f32.mrf.mxu0
      %v5485 = vadd.f32 0.0, %v5484
      %v5486 = vpop.f32.mrf.mxu0
      %v5487 = vadd.f32 0.0, %v5486
      %5488 = vmatmul.bf16.gmra.mxu0 %v5286
      %v5489 = vpop.f32.mrf.mxu0
      %v5490 = vadd.f32 0.0, %v5489
      %v5491 = vpop.f32.mrf.mxu0
      %v5492 = vadd.f32 0.0, %v5491
      %5493 = vmatmul.bf16.gmra.mxu0 %v5289
      %v5494 = vpop.f32.mrf.mxu0
      %v5495 = vadd.f32 0.0, %v5494
      %v5496 = vpop.f32.mrf.mxu0
      %v5497 = vadd.f32 0.0, %v5496
      %5498 = vmatmul.bf16.gmra.mxu0 %v5292
      %v5499 = vpop.f32.mrf.mxu0
      %v5500 = vadd.f32 0.0, %v5499
      %v5501 = vpop.f32.mrf.mxu0
      %v5502 = vadd.f32 0.0, %v5501
      %5503 = vmatmul.bf16.gmra.mxu0 %v5295
      %v5504 = vpop.f32.mrf.mxu0
      %v5505 = vadd.f32 0.0, %v5504
      %v5506 = vpop.f32.mrf.mxu0
      %v5507 = vadd.f32 0.0, %v5506
      %5508 = vmatmul.bf16.gmra.mxu0 %v5298
      %v5509 = vpop.f32.mrf.mxu0
      %v5510 = vadd.f32 0.0, %v5509
      %v5511 = vpop.f32.mrf.mxu0
      %v5512 = vadd.f32 0.0, %v5511
      %5513 = vmatmul.bf16.gmra.mxu0 %v5301
      %v5514 = vpop.f32.mrf.mxu0
      %v5515 = vadd.f32 0.0, %v5514
      %v5516 = vpop.f32.mrf.mxu0
      %v5517 = vadd.f32 0.0, %v5516
      %5518 = vmatmul.bf16.gmra.mxu0 %v5304
      %v5519 = vpop.f32.mrf.mxu0
      %v5520 = vadd.f32 0.0, %v5519
      %v5521 = vpop.f32.mrf.mxu0
      %v5522 = vadd.f32 0.0, %v5521
      %5523 = vmatmul.bf16.gmra.mxu0 %v5307
      %v5524 = vpop.f32.mrf.mxu0
      %v5525 = vadd.f32 0.0, %v5524
      %v5526 = vpop.f32.mrf.mxu0
      %v5527 = vadd.f32 0.0, %v5526
      %5528 = vmatmul.bf16.gmra.mxu0 %v5310
      %v5529 = vpop.f32.mrf.mxu0
      %v5530 = vadd.f32 0.0, %v5529
      %v5531 = vpop.f32.mrf.mxu0
      %v5532 = vadd.f32 0.0, %v5531
      %5533 = vmatmul.bf16.gmra.mxu0 %v5313
      %v5534 = vpop.f32.mrf.mxu0
      %v5535 = vadd.f32 0.0, %v5534
      %v5536 = vpop.f32.mrf.mxu0
      %v5537 = vadd.f32 0.0, %v5536
      %5538 = vmatmul.bf16.gmra.mxu0 %v5316
      %v5539 = vpop.f32.mrf.mxu0
      %v5540 = vadd.f32 0.0, %v5539
      %v5541 = vpop.f32.mrf.mxu0
      %v5542 = vadd.f32 0.0, %v5541
      %5543 = vmatmul.bf16.gmra.mxu0 %v5319
      %v5544 = vpop.f32.mrf.mxu0
      %v5545 = vadd.f32 0.0, %v5544
      %v5546 = vpop.f32.mrf.mxu0
      %v5547 = vadd.f32 0.0, %v5546
      %5548 = vmatmul.bf16.gmra.mxu0 %v5322
      %v5549 = vpop.f32.mrf.mxu0
      %v5550 = vadd.f32 0.0, %v5549
      %v5551 = vpop.f32.mrf.mxu0
      %v5552 = vadd.f32 0.0, %v5551
      %5553 = vmatmul.bf16.gmra.mxu0 %v5325
      %v5554 = vpop.f32.mrf.mxu0
      %v5555 = vadd.f32 0.0, %v5554
      %v5556 = vpop.f32.mrf.mxu0
      %v5557 = vadd.f32 0.0, %v5556
      %5558 = vmatmul.bf16.gmra.mxu0 %v5328
      %v5559 = vpop.f32.mrf.mxu0
      %v5560 = vadd.f32 0.0, %v5559
      %v5561 = vpop.f32.mrf.mxu0
      %v5562 = vadd.f32 0.0, %v5561
      %5563 = vmatmul.bf16.gmra.mxu0 %v5331
      %v5564 = vpop.f32.mrf.mxu0
      %v5565 = vadd.f32 0.0, %v5564
      %v5566 = vpop.f32.mrf.mxu0
      %v5567 = vadd.f32 0.0, %v5566
      %5568 = vmatmul.bf16.gmra.mxu0 %v5334
      %v5569 = vpop.f32.mrf.mxu0
      %v5570 = vadd.f32 0.0, %v5569
      %v5571 = vpop.f32.mrf.mxu0
      %v5572 = vadd.f32 0.0, %v5571
      %5573 = vmatmul.bf16.gmra.mxu0 %v5337
      %v5574 = vpop.f32.mrf.mxu0
      %v5575 = vadd.f32 0.0, %v5574
      %v5576 = vpop.f32.mrf.mxu0
      %v5577 = vadd.f32 0.0, %v5576
      %5578 = vmatmul.bf16.gmra.mxu0 %v5340
      %v5579 = vpop.f32.mrf.mxu0
      %v5580 = vadd.f32 0.0, %v5579
      %v5581 = vpop.f32.mrf.mxu0
      %v5582 = vadd.f32 0.0, %v5581
      %5583 = vmatmul.bf16.gmra.mxu0 %v5343
      %v5584 = vpop.f32.mrf.mxu0
      %v5585 = vadd.f32 0.0, %v5584
      %v5586 = vpop.f32.mrf.mxu0
      %v5587 = vadd.f32 0.0, %v5586
      %5588 = vmatmul.bf16.gmra.mxu0 %v5346
      %v5589 = vpop.f32.mrf.mxu0
      %v5590 = vadd.f32 0.0, %v5589
      %v5591 = vpop.f32.mrf.mxu0
      %v5592 = vadd.f32 0.0, %v5591
      %5593 = vmatmul.bf16.gmra.mxu0 %v5349
      %v5594 = vpop.f32.mrf.mxu0
      %v5595 = vadd.f32 0.0, %v5594
      %v5596 = vpop.f32.mrf.mxu0
      %v5597 = vadd.f32 0.0, %v5596
      %5598 = vmatmul.bf16.gmra.mxu0 %v5352
      %v5599 = vpop.f32.mrf.mxu0
      %v5600 = vadd.f32 0.0, %v5599
      %v5601 = vpop.f32.mrf.mxu0
      %v5602 = vadd.f32 0.0, %v5601
      %5603 = vmatmul.bf16.gmra.mxu0 %v5355
      %v5604 = vpop.f32.mrf.mxu0
      %v5605 = vadd.f32 0.0, %v5604
      %v5606 = vpop.f32.mrf.mxu0
      %v5607 = vadd.f32 0.0, %v5606
      %5608 = vmatmul.bf16.gmra.mxu0 %v5358
      %v5609 = vpop.f32.mrf.mxu0
      %v5610 = vadd.f32 0.0, %v5609
      %v5611 = vpop.f32.mrf.mxu0
      %v5612 = vadd.f32 0.0, %v5611
      %5613 = vmatmul.bf16.gmra.mxu0 %v5361
      %v5614 = vpop.f32.mrf.mxu0
      %v5615 = vadd.f32 0.0, %v5614
      %v5616 = vpop.f32.mrf.mxu0
      %v5617 = vadd.f32 0.0, %v5616
      %5618 = vmatmul.bf16.gmra.mxu0 %v5364
      %v5619 = vpop.f32.mrf.mxu0
      %v5620 = vadd.f32 0.0, %v5619
      %v5621 = vpop.f32.mrf.mxu0
      %v5622 = vadd.f32 0.0, %v5621
      %5623 = vmatmul.bf16.gmra.mxu0 %v5367
      %v5624 = vpop.f32.mrf.mxu0
      %v5625 = vadd.f32 0.0, %v5624
      %v5626 = vpop.f32.mrf.mxu0
      %v5627 = vadd.f32 0.0, %v5626
      %5628 = vmatmul.bf16.gmra.mxu0 %v5370
      %v5629 = vpop.f32.mrf.mxu0
      %v5630 = vadd.f32 0.0, %v5629
      %v5631 = vpop.f32.mrf.mxu0
      %v5632 = vadd.f32 0.0, %v5631
      %5633 = vmatmul.bf16.gmra.mxu0 %v5373
      %v5634 = vpop.f32.mrf.mxu0
      %v5635 = vadd.f32 0.0, %v5634
      %v5636 = vpop.f32.mrf.mxu0
      %v5637 = vadd.f32 0.0, %v5636
      %5638 = vmatmul.bf16.gmra.mxu0 %v5376
      %v5639 = vpop.f32.mrf.mxu0
      %v5640 = vadd.f32 0.0, %v5639
      %v5641 = vpop.f32.mrf.mxu0
      %v5642 = vadd.f32 0.0, %v5641
      %5643 = vmatmul.bf16.gmra.mxu0 %v5379
      %v5644 = vpop.f32.mrf.mxu0
      %v5645 = vadd.f32 0.0, %v5644
      %v5646 = vpop.f32.mrf.mxu0
      %v5647 = vadd.f32 0.0, %v5646
      %5648 = vmatmul.bf16.gmra.mxu0 %v5382
      %v5649 = vpop.f32.mrf.mxu0
      %v5650 = vadd.f32 0.0, %v5649
      %v5651 = vpop.f32.mrf.mxu0
      %v5652 = vadd.f32 0.0, %v5651
      %5653 = vmatmul.bf16.gmra.mxu0 %v5385
      %v5654 = vpop.f32.mrf.mxu0
      %v5655 = vadd.f32 0.0, %v5654
      %v5656 = vpop.f32.mrf.mxu0
      %v5657 = vadd.f32 0.0, %v5656
      %5658 = vmatmul.bf16.gmra.mxu0 %v5388
      %v5659 = vpop.f32.mrf.mxu0
      %v5660 = vadd.f32 0.0, %v5659
      %v5661 = vpop.f32.mrf.mxu0
      %v5662 = vadd.f32 0.0, %v5661
      %5663 = vmatmul.bf16.gmra.mxu0 %v5391
      %v5664 = vpop.f32.mrf.mxu0
      %v5665 = vadd.f32 0.0, %v5664
      %v5666 = vpop.f32.mrf.mxu0
      %v5667 = vadd.f32 0.0, %v5666
      %5668 = vmatmul.bf16.gmra.mxu0 %v5394
      %v5669 = vpop.f32.mrf.mxu0
      %v5670 = vadd.f32 0.0, %v5669
      %v5671 = vpop.f32.mrf.mxu0
      %v5672 = vadd.f32 0.0, %v5671
      %5673 = vmatmul.bf16.gmra.mxu0 %v5397
      %v5674 = vpop.f32.mrf.mxu0
      %v5675 = vadd.f32 0.0, %v5674
      %v5676 = vpop.f32.mrf.mxu0
      %v5677 = vadd.f32 0.0, %v5676
      %5678 = vmatmul.bf16.gmra.mxu0 %v5400
      %v5679 = vpop.f32.mrf.mxu0
      %v5680 = vadd.f32 0.0, %v5679
      %v5681 = vpop.f32.mrf.mxu0
      %v5682 = vadd.f32 0.0, %v5681
      %5683 = vmatmul.bf16.gmra.mxu0 %v5403
      %v5684 = vpop.f32.mrf.mxu0
      %v5685 = vadd.f32 0.0, %v5684
      %v5686 = vpop.f32.mrf.mxu0
      %v5687 = vadd.f32 0.0, %v5686
      %5688 = vmatmul.bf16.gmra.mxu0 %v5406
      %v5689 = vpop.f32.mrf.mxu0
      %v5690 = vadd.f32 0.0, %v5689
      %v5691 = vpop.f32.mrf.mxu0
      %v5692 = vadd.f32 0.0, %v5691
      %5693 = vmatmul.bf16.gmra.mxu0 %v5409
      %v5694 = vpop.f32.mrf.mxu0
      %v5695 = vadd.f32 0.0, %v5694
      %v5696 = vpop.f32.mrf.mxu0
      %v5697 = vadd.f32 0.0, %v5696
      %5698 = vmatmul.bf16.gmra.mxu0 %v5412
      %v5699 = vpop.f32.mrf.mxu0
      %v5700 = vadd.f32 0.0, %v5699
      %v5701 = vpop.f32.mrf.mxu0
      %v5702 = vadd.f32 0.0, %v5701
      %5703 = vmatmul.bf16.gmra.mxu0 %v5415
      %v5704 = vpop.f32.mrf.mxu0
      %v5705 = vadd.f32 0.0, %v5704
      %v5706 = vpop.f32.mrf.mxu0
      %v5707 = vadd.f32 0.0, %v5706
      %5708 = vdwg.mxu0
      %v5709 = vadd.f32 %v4849, %v5430
      %v5710 = vadd.f32 %v4850, %v5432
      %v5711 = vadd.f32 %v4851, %v5435
      %v5712 = vadd.f32 %v4852, %v5437
      %v5713 = vadd.f32 %v4853, %v5440
      %v5714 = vadd.f32 %v4854, %v5442
      %v5715 = vadd.f32 %v4855, %v5445
      %v5716 = vadd.f32 %v4856, %v5447
      %v5717 = vadd.f32 %v4857, %v5450
      %v5718 = vadd.f32 %v4858, %v5452
      %v5719 = vadd.f32 %v4859, %v5455
      %v5720 = vadd.f32 %v4860, %v5457
      %v5721 = vadd.f32 %v4861, %v5460
      %v5722 = vadd.f32 %v4862, %v5462
      %v5723 = vadd.f32 %v4863, %v5465
      %v5724 = vadd.f32 %v4864, %v5467
      %v5725 = vadd.f32 %v4865, %v5470
      %v5726 = vadd.f32 %v4866, %v5472
      %v5727 = vadd.f32 %v4867, %v5475
      %v5728 = vadd.f32 %v4868, %v5477
      %v5729 = vadd.f32 %v4869, %v5480
      %v5730 = vadd.f32 %v4870, %v5482
      %v5731 = vadd.f32 %v4871, %v5485
      %v5732 = vadd.f32 %v4872, %v5487
      %v5733 = vadd.f32 %v4873, %v5490
      %v5734 = vadd.f32 %v4874, %v5492
      %v5735 = vadd.f32 %v4875, %v5495
      %v5736 = vadd.f32 %v4876, %v5497
      %v5737 = vadd.f32 %v4877, %v5500
      %v5738 = vadd.f32 %v4878, %v5502
      %v5739 = vadd.f32 %v4879, %v5505
      %v5740 = vadd.f32 %v4880, %v5507
      %v5741 = vadd.f32 %v4881, %v5510
      %v5742 = vadd.f32 %v4882, %v5512
      %v5743 = vadd.f32 %v4883, %v5515
      %v5744 = vadd.f32 %v4884, %v5517
      %v5745 = vadd.f32 %v4885, %v5520
      %v5746 = vadd.f32 %v4886, %v5522
      %v5747 = vadd.f32 %v4887, %v5525
      %v5748 = vadd.f32 %v4888, %v5527
      %v5749 = vadd.f32 %v4889, %v5530
      %v5750 = vadd.f32 %v4890, %v5532
      %v5751 = vadd.f32 %v4891, %v5535
      %v5752 = vadd.f32 %v4892, %v5537
      %v5753 = vadd.f32 %v4893, %v5540
      %v5754 = vadd.f32 %v4894, %v5542
      %v5755 = vadd.f32 %v4895, %v5545
      %v5756 = vadd.f32 %v4896, %v5547
      %v5757 = vadd.f32 %v4897, %v5550
      %v5758 = vadd.f32 %v4898, %v5552
      %v5759 = vadd.f32 %v4899, %v5555
      %v5760 = vadd.f32 %v4900, %v5557
      %v5761 = vadd.f32 %v4901, %v5560
      %v5762 = vadd.f32 %v4902, %v5562
      %v5763 = vadd.f32 %v4903, %v5565
      %v5764 = vadd.f32 %v4904, %v5567
      %v5765 = vadd.f32 %v4905, %v5570
      %v5766 = vadd.f32 %v4906, %v5572
      %v5767 = vadd.f32 %v4907, %v5575
      %v5768 = vadd.f32 %v4908, %v5577
      %v5769 = vadd.f32 %v4909, %v5580
      %v5770 = vadd.f32 %v4910, %v5582
      %v5771 = vadd.f32 %v4911, %v5585
      %v5772 = vadd.f32 %v4912, %v5587
      %v5773 = vadd.f32 %v4913, %v5590
      %v5774 = vadd.f32 %v4914, %v5592
      %v5775 = vadd.f32 %v4915, %v5595
      %v5776 = vadd.f32 %v4916, %v5597
      %v5777 = vadd.f32 %v4917, %v5600
      %v5778 = vadd.f32 %v4918, %v5602
      %v5779 = vadd.f32 %v4919, %v5605
      %v5780 = vadd.f32 %v4920, %v5607
      %v5781 = vadd.f32 %v4921, %v5610
      %v5782 = vadd.f32 %v4922, %v5612
      %v5783 = vadd.f32 %v4923, %v5615
      %v5784 = vadd.f32 %v4924, %v5617
      %v5785 = vadd.f32 %v4925, %v5620
      %v5786 = vadd.f32 %v4926, %v5622
      %v5787 = vadd.f32 %v4927, %v5625
      %v5788 = vadd.f32 %v4928, %v5627
      %v5789 = vadd.f32 %v4929, %v5630
      %v5790 = vadd.f32 %v4930, %v5632
      %v5791 = vadd.f32 %v4931, %v5635
      %v5792 = vadd.f32 %v4932, %v5637
      %v5793 = vadd.f32 %v4933, %v5640
      %v5794 = vadd.f32 %v4934, %v5642
      %v5795 = vadd.f32 %v4935, %v5645
      %v5796 = vadd.f32 %v4936, %v5647
      %v5797 = vadd.f32 %v4937, %v5650
      %v5798 = vadd.f32 %v4938, %v5652
      %v5799 = vadd.f32 %v4939, %v5655
      %v5800 = vadd.f32 %v4940, %v5657
      %v5801 = vadd.f32 %v4941, %v5660
      %v5802 = vadd.f32 %v4942, %v5662
      %v5803 = vadd.f32 %v4943, %v5665
      %v5804 = vadd.f32 %v4944, %v5667
      %v5805 = vadd.f32 %v4945, %v5670
      %v5806 = vadd.f32 %v4946, %v5672
      %v5807 = vadd.f32 %v4947, %v5675
      %v5808 = vadd.f32 %v4948, %v5677
      %v5809 = vadd.f32 %v4949, %v5680
      %v5810 = vadd.f32 %v4950, %v5682
      %v5811 = vadd.f32 %v4951, %v5685
      %v5812 = vadd.f32 %v4952, %v5687
      %v5813 = vadd.f32 %v4953, %v5690
      %v5814 = vadd.f32 %v4954, %v5692
      %v5815 = vadd.f32 %v4955, %v5695
      %v5816 = vadd.f32 %v4956, %v5697
      %v5817 = vadd.f32 %v4957, %v5700
      %v5818 = vadd.f32 %v4958, %v5702
      %v5819 = vadd.f32 %v4959, %v5705
      %v5820 = vadd.f32 %v4960, %v5707
      %5821 = vst.msk [vmem:[#allocation2] sm:$0xff] %vm1036, %v5709
      %5822 = vst.msk [vmem:[#allocation2 + $0x8] sm:$0xff] %vm1036, %v5710
      %5823 = vst.msk [vmem:[#allocation2 + $0x10] sm:$0xff] %vm1036, %v5711
      %5824 = vst.msk [vmem:[#allocation2 + $0x18] sm:$0xff] %vm1036, %v5712
      %5825 = vst.msk [vmem:[#allocation2 + $0x20] sm:$0xff] %vm1036, %v5713
      %5826 = vst.msk [vmem:[#allocation2 + $0x28] sm:$0xff] %vm1036, %v5714
      %5827 = vst.msk [vmem:[#allocation2 + $0x30] sm:$0xff] %vm1036, %v5715
      %5828 = vst.msk [vmem:[#allocation2 + $0x38] sm:$0xff] %vm1036, %v5716
      %5829 = vst.msk [vmem:[#allocation2 + $0x40] sm:$0xff] %vm1036, %v5717
      %5830 = vst.msk [vmem:[#allocation2 + $0x48] sm:$0xff] %vm1036, %v5718
      %5831 = vst.msk [vmem:[#allocation2 + $0x50] sm:$0xff] %vm1036, %v5719
      %5832 = vst.msk [vmem:[#allocation2 + $0x58] sm:$0xff] %vm1036, %v5720
      %5833 = vst.msk [vmem:[#allocation2 + $0x60] sm:$0xff] %vm1036, %v5721
      %5834 = vst.msk [vmem:[#allocation2 + $0x68] sm:$0xff] %vm1036, %v5722
      %5835 = vst.msk [vmem:[#allocation2 + $0x70] sm:$0xff] %vm1036, %v5723
      %5836 = vst.msk [vmem:[#allocation2 + $0x78] sm:$0xff] %vm1036, %v5724
      %5837 = vst.msk [vmem:[#allocation2 + $0x80] sm:$0xff] %vm1036, %v5725
      %5838 = vst.msk [vmem:[#allocation2 + $0x88] sm:$0xff] %vm1036, %v5726
      %5839 = vst.msk [vmem:[#allocation2 + $0x90] sm:$0xff] %vm1036, %v5727
      %5840 = vst.msk [vmem:[#allocation2 + $0x98] sm:$0xff] %vm1036, %v5728
      %5841 = vst.msk [vmem:[#allocation2 + $0xa0] sm:$0xff] %vm1036, %v5729
      %5842 = vst.msk [vmem:[#allocation2 + $0xa8] sm:$0xff] %vm1036, %v5730
      %5843 = vst.msk [vmem:[#allocation2 + $0xb0] sm:$0xff] %vm1036, %v5731
      %5844 = vst.msk [vmem:[#allocation2 + $0xb8] sm:$0xff] %vm1036, %v5732
      %5845 = vst.msk [vmem:[#allocation2 + $0xc0] sm:$0xff] %vm1036, %v5733
      %5846 = vst.msk [vmem:[#allocation2 + $0xc8] sm:$0xff] %vm1036, %v5734
      %5847 = vst.msk [vmem:[#allocation2 + $0xd0] sm:$0xff] %vm1036, %v5735
      %5848 = vst.msk [vmem:[#allocation2 + $0xd8] sm:$0xff] %vm1036, %v5736
      %5849 = vst.msk [vmem:[#allocation2 + $0xe0] sm:$0xff] %vm1036, %v5737
      %5850 = vst.msk [vmem:[#allocation2 + $0xe8] sm:$0xff] %vm1036, %v5738
      %5851 = vst.msk [vmem:[#allocation2 + $0xf0] sm:$0xff] %vm1036, %v5739
      %5852 = vst.msk [vmem:[#allocation2 + $0xf8] sm:$0xff] %vm1036, %v5740
      %5853 = vst.msk [vmem:[#allocation2 + $0x100] sm:$0xff] %vm1036, %v5741
      %5854 = vst.msk [vmem:[#allocation2 + $0x108] sm:$0xff] %vm1036, %v5742
      %5855 = vst.msk [vmem:[#allocation2 + $0x110] sm:$0xff] %vm1036, %v5743
      %5856 = vst.msk [vmem:[#allocation2 + $0x118] sm:$0xff] %vm1036, %v5744
      %5857 = vst.msk [vmem:[#allocation2 + $0x120] sm:$0xff] %vm1036, %v5745
      %5858 = vst.msk [vmem:[#allocation2 + $0x128] sm:$0xff] %vm1036, %v5746
      %5859 = vst.msk [vmem:[#allocation2 + $0x130] sm:$0xff] %vm1036, %v5747
      %5860 = vst.msk [vmem:[#allocation2 + $0x138] sm:$0xff] %vm1036, %v5748
      %5861 = vst.msk [vmem:[#allocation2 + $0x140] sm:$0xff] %vm1036, %v5749
      %5862 = vst.msk [vmem:[#allocation2 + $0x148] sm:$0xff] %vm1036, %v5750
      %5863 = vst.msk [vmem:[#allocation2 + $0x150] sm:$0xff] %vm1036, %v5751
      %5864 = vst.msk [vmem:[#allocation2 + $0x158] sm:$0xff] %vm1036, %v5752
      %5865 = vst.msk [vmem:[#allocation2 + $0x160] sm:$0xff] %vm1036, %v5753
      %5866 = vst.msk [vmem:[#allocation2 + $0x168] sm:$0xff] %vm1036, %v5754
      %5867 = vst.msk [vmem:[#allocation2 + $0x170] sm:$0xff] %vm1036, %v5755
      %5868 = vst.msk [vmem:[#allocation2 + $0x178] sm:$0xff] %vm1036, %v5756
      %5869 = vst.msk [vmem:[#allocation2 + $0x180] sm:$0xff] %vm1036, %v5757
      %5870 = vst.msk [vmem:[#allocation2 + $0x188] sm:$0xff] %vm1036, %v5758
      %5871 = vst.msk [vmem:[#allocation2 + $0x190] sm:$0xff] %vm1036, %v5759
      %5872 = vst.msk [vmem:[#allocation2 + $0x198] sm:$0xff] %vm1036, %v5760
      %5873 = vst.msk [vmem:[#allocation2 + $0x1a0] sm:$0xff] %vm1036, %v5761
      %5874 = vst.msk [vmem:[#allocation2 + $0x1a8] sm:$0xff] %vm1036, %v5762
      %5875 = vst.msk [vmem:[#allocation2 + $0x1b0] sm:$0xff] %vm1036, %v5763
      %5876 = vst.msk [vmem:[#allocation2 + $0x1b8] sm:$0xff] %vm1036, %v5764
      %5877 = vst.msk [vmem:[#allocation2 + $0x1c0] sm:$0xff] %vm1036, %v5765
      %5878 = vst.msk [vmem:[#allocation2 + $0x1c8] sm:$0xff] %vm1036, %v5766
      %5879 = vst.msk [vmem:[#allocation2 + $0x1d0] sm:$0xff] %vm1036, %v5767
      %5880 = vst.msk [vmem:[#allocation2 + $0x1d8] sm:$0xff] %vm1036, %v5768
      %5881 = vst.msk [vmem:[#allocation2 + $0x1e0] sm:$0xff] %vm1036, %v5769
      %5882 = vst.msk [vmem:[#allocation2 + $0x1e8] sm:$0xff] %vm1036, %v5770
      %5883 = vst.msk [vmem:[#allocation2 + $0x1f0] sm:$0xff] %vm1036, %v5771
      %5884 = vst.msk [vmem:[#allocation2 + $0x1f8] sm:$0xff] %vm1036, %v5772
      %5885 = vst.msk [vmem:[#allocation2 + $0x200] sm:$0xff] %vm1036, %v5773
      %5886 = vst.msk [vmem:[#allocation2 + $0x208] sm:$0xff] %vm1036, %v5774
      %5887 = vst.msk [vmem:[#allocation2 + $0x210] sm:$0xff] %vm1036, %v5775
      %5888 = vst.msk [vmem:[#allocation2 + $0x218] sm:$0xff] %vm1036, %v5776
      %5889 = vst.msk [vmem:[#allocation2 + $0x220] sm:$0xff] %vm1036, %v5777
      %5890 = vst.msk [vmem:[#allocation2 + $0x228] sm:$0xff] %vm1036, %v5778
      %5891 = vst.msk [vmem:[#allocation2 + $0x230] sm:$0xff] %vm1036, %v5779
      %5892 = vst.msk [vmem:[#allocation2 + $0x238] sm:$0xff] %vm1036, %v5780
      %5893 = vst.msk [vmem:[#allocation2 + $0x240] sm:$0xff] %vm1036, %v5781
      %5894 = vst.msk [vmem:[#allocation2 + $0x248] sm:$0xff] %vm1036, %v5782
      %5895 = vst.msk [vmem:[#allocation2 + $0x250] sm:$0xff] %vm1036, %v5783
      %5896 = vst.msk [vmem:[#allocation2 + $0x258] sm:$0xff] %vm1036, %v5784
      %5897 = vst.msk [vmem:[#allocation2 + $0x260] sm:$0xff] %vm1036, %v5785
      %5898 = vst.msk [vmem:[#allocation2 + $0x268] sm:$0xff] %vm1036, %v5786
      %5899 = vst.msk [vmem:[#allocation2 + $0x270] sm:$0xff] %vm1036, %v5787
      %5900 = vst.msk [vmem:[#allocation2 + $0x278] sm:$0xff] %vm1036, %v5788
      %5901 = vst.msk [vmem:[#allocation2 + $0x280] sm:$0xff] %vm1036, %v5789
      %5902 = vst.msk [vmem:[#allocation2 + $0x288] sm:$0xff] %vm1036, %v5790
      %5903 = vst.msk [vmem:[#allocation2 + $0x290] sm:$0xff] %vm1036, %v5791
      %5904 = vst.msk [vmem:[#allocation2 + $0x298] sm:$0xff] %vm1036, %v5792
      %5905 = vst.msk [vmem:[#allocation2 + $0x2a0] sm:$0xff] %vm1036, %v5793
      %5906 = vst.msk [vmem:[#allocation2 + $0x2a8] sm:$0xff] %vm1036, %v5794
      %5907 = vst.msk [vmem:[#allocation2 + $0x2b0] sm:$0xff] %vm1036, %v5795
      %5908 = vst.msk [vmem:[#allocation2 + $0x2b8] sm:$0xff] %vm1036, %v5796
      %5909 = vst.msk [vmem:[#allocation2 + $0x2c0] sm:$0xff] %vm1036, %v5797
      %5910 = vst.msk [vmem:[#allocation2 + $0x2c8] sm:$0xff] %vm1036, %v5798
      %5911 = vst.msk [vmem:[#allocation2 + $0x2d0] sm:$0xff] %vm1036, %v5799
      %5912 = vst.msk [vmem:[#allocation2 + $0x2d8] sm:$0xff] %vm1036, %v5800
      %5913 = vst.msk [vmem:[#allocation2 + $0x2e0] sm:$0xff] %vm1036, %v5801
      %5914 = vst.msk [vmem:[#allocation2 + $0x2e8] sm:$0xff] %vm1036, %v5802
      %5915 = vst.msk [vmem:[#allocation2 + $0x2f0] sm:$0xff] %vm1036, %v5803
      %5916 = vst.msk [vmem:[#allocation2 + $0x2f8] sm:$0xff] %vm1036, %v5804
      %5917 = vst.msk [vmem:[#allocation2 + $0x300] sm:$0xff] %vm1036, %v5805
      %5918 = vst.msk [vmem:[#allocation2 + $0x308] sm:$0xff] %vm1036, %v5806
      %5919 = vst.msk [vmem:[#allocation2 + $0x310] sm:$0xff] %vm1036, %v5807
      %5920 = vst.msk [vmem:[#allocation2 + $0x318] sm:$0xff] %vm1036, %v5808
      %5921 = vst.msk [vmem:[#allocation2 + $0x320] sm:$0xff] %vm1036, %v5809
      %5922 = vst.msk [vmem:[#allocation2 + $0x328] sm:$0xff] %vm1036, %v5810
      %5923 = vst.msk [vmem:[#allocation2 + $0x330] sm:$0xff] %vm1036, %v5811
      %5924 = vst.msk [vmem:[#allocation2 + $0x338] sm:$0xff] %vm1036, %v5812
      %5925 = vst.msk [vmem:[#allocation2 + $0x340] sm:$0xff] %vm1036, %v5813
      %5926 = vst.msk [vmem:[#allocation2 + $0x348] sm:$0xff] %vm1036, %v5814
      %5927 = vst.msk [vmem:[#allocation2 + $0x350] sm:$0xff] %vm1036, %v5815
      %5928 = vst.msk [vmem:[#allocation2 + $0x358] sm:$0xff] %vm1036, %v5816
      %5929 = vst.msk [vmem:[#allocation2 + $0x360] sm:$0xff] %vm1036, %v5817
      %5930 = vst.msk [vmem:[#allocation2 + $0x368] sm:$0xff] %vm1036, %v5818
      %5931 = vst.msk [vmem:[#allocation2 + $0x370] sm:$0xff] %vm1036, %v5819
      %5932 = vst.msk [vmem:[#allocation2 + $0x378] sm:$0xff] %vm1036, %v5820
      %v5933 = vld [vmem:[#allocation2] sm:$0xff]
      %v5934 = vld [vmem:[#allocation2 + $0x8] sm:$0xff]
      %v5935 = vld [vmem:[#allocation2 + $0x10] sm:$0xff]
      %v5936 = vld [vmem:[#allocation2 + $0x18] sm:$0xff]
      %v5937 = vld [vmem:[#allocation2 + $0x20] sm:$0xff]
      %v5938 = vld [vmem:[#allocation2 + $0x28] sm:$0xff]
      %v5939 = vld [vmem:[#allocation2 + $0x30] sm:$0xff]
      %v5940 = vld [vmem:[#allocation2 + $0x38] sm:$0xff]
      %v5941 = vld [vmem:[#allocation2 + $0x40] sm:$0xff]
      %v5942 = vld [vmem:[#allocation2 + $0x48] sm:$0xff]
      %v5943 = vld [vmem:[#allocation2 + $0x50] sm:$0xff]
      %v5944 = vld [vmem:[#allocation2 + $0x58] sm:$0xff]
      %v5945 = vld [vmem:[#allocation2 + $0x60] sm:$0xff]
      %v5946 = vld [vmem:[#allocation2 + $0x68] sm:$0xff]
      %v5947 = vld [vmem:[#allocation2 + $0x70] sm:$0xff]
      %v5948 = vld [vmem:[#allocation2 + $0x78] sm:$0xff]
      %v5949 = vld [vmem:[#allocation2 + $0x80] sm:$0xff]
      %v5950 = vld [vmem:[#allocation2 + $0x88] sm:$0xff]
      %v5951 = vld [vmem:[#allocation2 + $0x90] sm:$0xff]
      %v5952 = vld [vmem:[#allocation2 + $0x98] sm:$0xff]
      %v5953 = vld [vmem:[#allocation2 + $0xa0] sm:$0xff]
      %v5954 = vld [vmem:[#allocation2 + $0xa8] sm:$0xff]
      %v5955 = vld [vmem:[#allocation2 + $0xb0] sm:$0xff]
      %v5956 = vld [vmem:[#allocation2 + $0xb8] sm:$0xff]
      %v5957 = vld [vmem:[#allocation2 + $0xc0] sm:$0xff]
      %v5958 = vld [vmem:[#allocation2 + $0xc8] sm:$0xff]
      %v5959 = vld [vmem:[#allocation2 + $0xd0] sm:$0xff]
      %v5960 = vld [vmem:[#allocation2 + $0xd8] sm:$0xff]
      %v5961 = vld [vmem:[#allocation2 + $0xe0] sm:$0xff]
      %v5962 = vld [vmem:[#allocation2 + $0xe8] sm:$0xff]
      %v5963 = vld [vmem:[#allocation2 + $0xf0] sm:$0xff]
      %v5964 = vld [vmem:[#allocation2 + $0xf8] sm:$0xff]
      %v5965 = vld [vmem:[#allocation2 + $0x100] sm:$0xff]
      %v5966 = vld [vmem:[#allocation2 + $0x108] sm:$0xff]
      %v5967 = vld [vmem:[#allocation2 + $0x110] sm:$0xff]
      %v5968 = vld [vmem:[#allocation2 + $0x118] sm:$0xff]
      %v5969 = vld [vmem:[#allocation2 + $0x120] sm:$0xff]
      %v5970 = vld [vmem:[#allocation2 + $0x128] sm:$0xff]
      %v5971 = vld [vmem:[#allocation2 + $0x130] sm:$0xff]
      %v5972 = vld [vmem:[#allocation2 + $0x138] sm:$0xff]
      %v5973 = vld [vmem:[#allocation2 + $0x140] sm:$0xff]
      %v5974 = vld [vmem:[#allocation2 + $0x148] sm:$0xff]
      %v5975 = vld [vmem:[#allocation2 + $0x150] sm:$0xff]
      %v5976 = vld [vmem:[#allocation2 + $0x158] sm:$0xff]
      %v5977 = vld [vmem:[#allocation2 + $0x160] sm:$0xff]
      %v5978 = vld [vmem:[#allocation2 + $0x168] sm:$0xff]
      %v5979 = vld [vmem:[#allocation2 + $0x170] sm:$0xff]
      %v5980 = vld [vmem:[#allocation2 + $0x178] sm:$0xff]
      %v5981 = vld [vmem:[#allocation2 + $0x180] sm:$0xff]
      %v5982 = vld [vmem:[#allocation2 + $0x188] sm:$0xff]
      %v5983 = vld [vmem:[#allocation2 + $0x190] sm:$0xff]
      %v5984 = vld [vmem:[#allocation2 + $0x198] sm:$0xff]
      %v5985 = vld [vmem:[#allocation2 + $0x1a0] sm:$0xff]
      %v5986 = vld [vmem:[#allocation2 + $0x1a8] sm:$0xff]
      %v5987 = vld [vmem:[#allocation2 + $0x1b0] sm:$0xff]
      %v5988 = vld [vmem:[#allocation2 + $0x1b8] sm:$0xff]
      %v5989 = vld [vmem:[#allocation2 + $0x1c0] sm:$0xff]
      %v5990 = vld [vmem:[#allocation2 + $0x1c8] sm:$0xff]
      %v5991 = vld [vmem:[#allocation2 + $0x1d0] sm:$0xff]
      %v5992 = vld [vmem:[#allocation2 + $0x1d8] sm:$0xff]
      %v5993 = vld [vmem:[#allocation2 + $0x1e0] sm:$0xff]
      %v5994 = vld [vmem:[#allocation2 + $0x1e8] sm:$0xff]
      %v5995 = vld [vmem:[#allocation2 + $0x1f0] sm:$0xff]
      %v5996 = vld [vmem:[#allocation2 + $0x1f8] sm:$0xff]
      %v5997 = vld [vmem:[#allocation2 + $0x200] sm:$0xff]
      %v5998 = vld [vmem:[#allocation2 + $0x208] sm:$0xff]
      %v5999 = vld [vmem:[#allocation2 + $0x210] sm:$0xff]
      %v6000 = vld [vmem:[#allocation2 + $0x218] sm:$0xff]
      %v6001 = vld [vmem:[#allocation2 + $0x220] sm:$0xff]
      %v6002 = vld [vmem:[#allocation2 + $0x228] sm:$0xff]
      %v6003 = vld [vmem:[#allocation2 + $0x230] sm:$0xff]
      %v6004 = vld [vmem:[#allocation2 + $0x238] sm:$0xff]
      %v6005 = vld [vmem:[#allocation2 + $0x240] sm:$0xff]
      %v6006 = vld [vmem:[#allocation2 + $0x248] sm:$0xff]
      %v6007 = vld [vmem:[#allocation2 + $0x250] sm:$0xff]
      %v6008 = vld [vmem:[#allocation2 + $0x258] sm:$0xff]
      %v6009 = vld [vmem:[#allocation2 + $0x260] sm:$0xff]
      %v6010 = vld [vmem:[#allocation2 + $0x268] sm:$0xff]
      %v6011 = vld [vmem:[#allocation2 + $0x270] sm:$0xff]
      %v6012 = vld [vmem:[#allocation2 + $0x278] sm:$0xff]
      %v6013 = vld [vmem:[#allocation2 + $0x280] sm:$0xff]
      %v6014 = vld [vmem:[#allocation2 + $0x288] sm:$0xff]
      %v6015 = vld [vmem:[#allocation2 + $0x290] sm:$0xff]
      %v6016 = vld [vmem:[#allocation2 + $0x298] sm:$0xff]
      %v6017 = vld [vmem:[#allocation2 + $0x2a0] sm:$0xff]
      %v6018 = vld [vmem:[#allocation2 + $0x2a8] sm:$0xff]
      %v6019 = vld [vmem:[#allocation2 + $0x2b0] sm:$0xff]
      %v6020 = vld [vmem:[#allocation2 + $0x2b8] sm:$0xff]
      %v6021 = vld [vmem:[#allocation2 + $0x2c0] sm:$0xff]
      %v6022 = vld [vmem:[#allocation2 + $0x2c8] sm:$0xff]
      %v6023 = vld [vmem:[#allocation2 + $0x2d0] sm:$0xff]
      %v6024 = vld [vmem:[#allocation2 + $0x2d8] sm:$0xff]
      %v6025 = vld [vmem:[#allocation2 + $0x2e0] sm:$0xff]
      %v6026 = vld [vmem:[#allocation2 + $0x2e8] sm:$0xff]
      %v6027 = vld [vmem:[#allocation2 + $0x2f0] sm:$0xff]
      %v6028 = vld [vmem:[#allocation2 + $0x2f8] sm:$0xff]
      %v6029 = vld [vmem:[#allocation2 + $0x300] sm:$0xff]
      %v6030 = vld [vmem:[#allocation2 + $0x308] sm:$0xff]
      %v6031 = vld [vmem:[#allocation2 + $0x310] sm:$0xff]
      %v6032 = vld [vmem:[#allocation2 + $0x318] sm:$0xff]
      %v6033 = vld [vmem:[#allocation2 + $0x320] sm:$0xff]
      %v6034 = vld [vmem:[#allocation2 + $0x328] sm:$0xff]
      %v6035 = vld [vmem:[#allocation2 + $0x330] sm:$0xff]
      %v6036 = vld [vmem:[#allocation2 + $0x338] sm:$0xff]
      %v6037 = vld [vmem:[#allocation2 + $0x340] sm:$0xff]
      %v6038 = vld [vmem:[#allocation2 + $0x348] sm:$0xff]
      %v6039 = vld [vmem:[#allocation2 + $0x350] sm:$0xff]
      %v6040 = vld [vmem:[#allocation2 + $0x358] sm:$0xff]
      %v6041 = vld [vmem:[#allocation2 + $0x360] sm:$0xff]
      %v6042 = vld [vmem:[#allocation2 + $0x368] sm:$0xff]
      %v6043 = vld [vmem:[#allocation2 + $0x370] sm:$0xff]
      %v6044 = vld [vmem:[#allocation2 + $0x378] sm:$0xff]
      %v6045 = vld [vmem:[%s2] sm:$0x1]
      %v6047 = vperm.slane %v6045, 0
      %v6049 = vadd.f32 %v5933, %v6047
      %v6050 = vadd.f32 %v5934, %v6047
      %v6051 = vadd.f32 %v5935, %v6047
      %v6052 = vadd.f32 %v5936, %v6047
      %v6053 = vadd.f32 %v5937, %v6047
      %v6054 = vadd.f32 %v5938, %v6047
      %v6055 = vadd.f32 %v5939, %v6047
      %v6056 = vadd.f32 %v5940, %v6047
      %v6057 = vadd.f32 %v5941, %v6047
      %v6058 = vadd.f32 %v5942, %v6047
      %v6059 = vadd.f32 %v5943, %v6047
      %v6060 = vadd.f32 %v5944, %v6047
      %v6061 = vadd.f32 %v5945, %v6047
      %v6062 = vadd.f32 %v5946, %v6047
      %v6063 = vadd.f32 %v5947, %v6047
      %v6064 = vadd.f32 %v5948, %v6047
      %v6065 = vadd.f32 %v5949, %v6047
      %v6066 = vadd.f32 %v5950, %v6047
      %v6067 = vadd.f32 %v5951, %v6047
      %v6068 = vadd.f32 %v5952, %v6047
      %v6069 = vadd.f32 %v5953, %v6047
      %v6070 = vadd.f32 %v5954, %v6047
      %v6071 = vadd.f32 %v5955, %v6047
      %v6072 = vadd.f32 %v5956, %v6047
      %v6073 = vadd.f32 %v5957, %v6047
      %v6074 = vadd.f32 %v5958, %v6047
      %v6075 = vadd.f32 %v5959, %v6047
      %v6076 = vadd.f32 %v5960, %v6047
      %v6077 = vadd.f32 %v5961, %v6047
      %v6078 = vadd.f32 %v5962, %v6047
      %v6079 = vadd.f32 %v5963, %v6047
      %v6080 = vadd.f32 %v5964, %v6047
      %v6081 = vadd.f32 %v5965, %v6047
      %v6082 = vadd.f32 %v5966, %v6047
      %v6083 = vadd.f32 %v5967, %v6047
      %v6084 = vadd.f32 %v5968, %v6047
      %v6085 = vadd.f32 %v5969, %v6047
      %v6086 = vadd.f32 %v5970, %v6047
      %v6087 = vadd.f32 %v5971, %v6047
      %v6088 = vadd.f32 %v5972, %v6047
      %v6089 = vadd.f32 %v5973, %v6047
      %v6090 = vadd.f32 %v5974, %v6047
      %v6091 = vadd.f32 %v5975, %v6047
      %v6092 = vadd.f32 %v5976, %v6047
      %v6093 = vadd.f32 %v5977, %v6047
      %v6094 = vadd.f32 %v5978, %v6047
      %v6095 = vadd.f32 %v5979, %v6047
      %v6096 = vadd.f32 %v5980, %v6047
      %v6097 = vadd.f32 %v5981, %v6047
      %v6098 = vadd.f32 %v5982, %v6047
      %v6099 = vadd.f32 %v5983, %v6047
      %v6100 = vadd.f32 %v5984, %v6047
      %v6101 = vadd.f32 %v5985, %v6047
      %v6102 = vadd.f32 %v5986, %v6047
      %v6103 = vadd.f32 %v5987, %v6047
      %v6104 = vadd.f32 %v5988, %v6047
      %v6105 = vadd.f32 %v5989, %v6047
      %v6106 = vadd.f32 %v5990, %v6047
      %v6107 = vadd.f32 %v5991, %v6047
      %v6108 = vadd.f32 %v5992, %v6047
      %v6109 = vadd.f32 %v5993, %v6047
      %v6110 = vadd.f32 %v5994, %v6047
      %v6111 = vadd.f32 %v5995, %v6047
      %v6112 = vadd.f32 %v5996, %v6047
      %v6113 = vadd.f32 %v5997, %v6047
      %v6114 = vadd.f32 %v5998, %v6047
      %v6115 = vadd.f32 %v5999, %v6047
      %v6116 = vadd.f32 %v6000, %v6047
      %v6117 = vadd.f32 %v6001, %v6047
      %v6118 = vadd.f32 %v6002, %v6047
      %v6119 = vadd.f32 %v6003, %v6047
      %v6120 = vadd.f32 %v6004, %v6047
      %v6121 = vadd.f32 %v6005, %v6047
      %v6122 = vadd.f32 %v6006, %v6047
      %v6123 = vadd.f32 %v6007, %v6047
      %v6124 = vadd.f32 %v6008, %v6047
      %v6125 = vadd.f32 %v6009, %v6047
      %v6126 = vadd.f32 %v6010, %v6047
      %v6127 = vadd.f32 %v6011, %v6047
      %v6128 = vadd.f32 %v6012, %v6047
      %v6129 = vadd.f32 %v6013, %v6047
      %v6130 = vadd.f32 %v6014, %v6047
      %v6131 = vadd.f32 %v6015, %v6047
      %v6132 = vadd.f32 %v6016, %v6047
      %v6133 = vadd.f32 %v6017, %v6047
      %v6134 = vadd.f32 %v6018, %v6047
      %v6135 = vadd.f32 %v6019, %v6047
      %v6136 = vadd.f32 %v6020, %v6047
      %v6137 = vadd.f32 %v6021, %v6047
      %v6138 = vadd.f32 %v6022, %v6047
      %v6139 = vadd.f32 %v6023, %v6047
      %v6140 = vadd.f32 %v6024, %v6047
      %v6141 = vadd.f32 %v6025, %v6047
      %v6142 = vadd.f32 %v6026, %v6047
      %v6143 = vadd.f32 %v6027, %v6047
      %v6144 = vadd.f32 %v6028, %v6047
      %v6145 = vadd.f32 %v6029, %v6047
      %v6146 = vadd.f32 %v6030, %v6047
      %v6147 = vadd.f32 %v6031, %v6047
      %v6148 = vadd.f32 %v6032, %v6047
      %v6149 = vadd.f32 %v6033, %v6047
      %v6150 = vadd.f32 %v6034, %v6047
      %v6151 = vadd.f32 %v6035, %v6047
      %v6152 = vadd.f32 %v6036, %v6047
      %v6153 = vadd.f32 %v6037, %v6047
      %v6154 = vadd.f32 %v6038, %v6047
      %v6155 = vadd.f32 %v6039, %v6047
      %v6156 = vadd.f32 %v6040, %v6047
      %v6157 = vadd.f32 %v6041, %v6047
      %v6158 = vadd.f32 %v6042, %v6047
      %v6159 = vadd.f32 %v6043, %v6047
      %v6160 = vadd.f32 %v6044, %v6047
      %v6161 = vmax.f32 %v6049, 0.0
      %v6162 = vmax.f32 %v6050, 0.0
      %v6163 = vmax.f32 %v6051, 0.0
      %v6164 = vmax.f32 %v6052, 0.0
      %v6165 = vmax.f32 %v6053, 0.0
      %v6166 = vmax.f32 %v6054, 0.0
      %v6167 = vmax.f32 %v6055, 0.0
      %v6168 = vmax.f32 %v6056, 0.0
      %v6169 = vmax.f32 %v6057, 0.0
      %v6170 = vmax.f32 %v6058, 0.0
      %v6171 = vmax.f32 %v6059, 0.0
      %v6172 = vmax.f32 %v6060, 0.0
      %v6173 = vmax.f32 %v6061, 0.0
      %v6174 = vmax.f32 %v6062, 0.0
      %v6175 = vmax.f32 %v6063, 0.0
      %v6176 = vmax.f32 %v6064, 0.0
      %v6177 = vmax.f32 %v6065, 0.0
      %v6178 = vmax.f32 %v6066, 0.0
      %v6179 = vmax.f32 %v6067, 0.0
      %v6180 = vmax.f32 %v6068, 0.0
      %v6181 = vmax.f32 %v6069, 0.0
      %v6182 = vmax.f32 %v6070, 0.0
      %v6183 = vmax.f32 %v6071, 0.0
      %v6184 = vmax.f32 %v6072, 0.0
      %v6185 = vmax.f32 %v6073, 0.0
      %v6186 = vmax.f32 %v6074, 0.0
      %v6187 = vmax.f32 %v6075, 0.0
      %v6188 = vmax.f32 %v6076, 0.0
      %v6189 = vmax.f32 %v6077, 0.0
      %v6190 = vmax.f32 %v6078, 0.0
      %v6191 = vmax.f32 %v6079, 0.0
      %v6192 = vmax.f32 %v6080, 0.0
      %v6193 = vmax.f32 %v6081, 0.0
      %v6194 = vmax.f32 %v6082, 0.0
      %v6195 = vmax.f32 %v6083, 0.0
      %v6196 = vmax.f32 %v6084, 0.0
      %v6197 = vmax.f32 %v6085, 0.0
      %v6198 = vmax.f32 %v6086, 0.0
      %v6199 = vmax.f32 %v6087, 0.0
      %v6200 = vmax.f32 %v6088, 0.0
      %v6201 = vmax.f32 %v6089, 0.0
      %v6202 = vmax.f32 %v6090, 0.0
      %v6203 = vmax.f32 %v6091, 0.0
      %v6204 = vmax.f32 %v6092, 0.0
      %v6205 = vmax.f32 %v6093, 0.0
      %v6206 = vmax.f32 %v6094, 0.0
      %v6207 = vmax.f32 %v6095, 0.0
      %v6208 = vmax.f32 %v6096, 0.0
      %v6209 = vmax.f32 %v6097, 0.0
      %v6210 = vmax.f32 %v6098, 0.0
      %v6211 = vmax.f32 %v6099, 0.0
      %v6212 = vmax.f32 %v6100, 0.0
      %v6213 = vmax.f32 %v6101, 0.0
      %v6214 = vmax.f32 %v6102, 0.0
      %v6215 = vmax.f32 %v6103, 0.0
      %v6216 = vmax.f32 %v6104, 0.0
      %v6217 = vmax.f32 %v6105, 0.0
      %v6218 = vmax.f32 %v6106, 0.0
      %v6219 = vmax.f32 %v6107, 0.0
      %v6220 = vmax.f32 %v6108, 0.0
      %v6221 = vmax.f32 %v6109, 0.0
      %v6222 = vmax.f32 %v6110, 0.0
      %v6223 = vmax.f32 %v6111, 0.0
      %v6224 = vmax.f32 %v6112, 0.0
      %v6225 = vmax.f32 %v6113, 0.0
      %v6226 = vmax.f32 %v6114, 0.0
      %v6227 = vmax.f32 %v6115, 0.0
      %v6228 = vmax.f32 %v6116, 0.0
      %v6229 = vmax.f32 %v6117, 0.0
      %v6230 = vmax.f32 %v6118, 0.0
      %v6231 = vmax.f32 %v6119, 0.0
      %v6232 = vmax.f32 %v6120, 0.0
      %v6233 = vmax.f32 %v6121, 0.0
      %v6234 = vmax.f32 %v6122, 0.0
      %v6235 = vmax.f32 %v6123, 0.0
      %v6236 = vmax.f32 %v6124, 0.0
      %v6237 = vmax.f32 %v6125, 0.0
      %v6238 = vmax.f32 %v6126, 0.0
      %v6239 = vmax.f32 %v6127, 0.0
      %v6240 = vmax.f32 %v6128, 0.0
      %v6241 = vmax.f32 %v6129, 0.0
      %v6242 = vmax.f32 %v6130, 0.0
      %v6243 = vmax.f32 %v6131, 0.0
      %v6244 = vmax.f32 %v6132, 0.0
      %v6245 = vmax.f32 %v6133, 0.0
      %v6246 = vmax.f32 %v6134, 0.0
      %v6247 = vmax.f32 %v6135, 0.0
      %v6248 = vmax.f32 %v6136, 0.0
      %v6249 = vmax.f32 %v6137, 0.0
      %v6250 = vmax.f32 %v6138, 0.0
      %v6251 = vmax.f32 %v6139, 0.0
      %v6252 = vmax.f32 %v6140, 0.0
      %v6253 = vmax.f32 %v6141, 0.0
      %v6254 = vmax.f32 %v6142, 0.0
      %v6255 = vmax.f32 %v6143, 0.0
      %v6256 = vmax.f32 %v6144, 0.0
      %v6257 = vmax.f32 %v6145, 0.0
      %v6258 = vmax.f32 %v6146, 0.0
      %v6259 = vmax.f32 %v6147, 0.0
      %v6260 = vmax.f32 %v6148, 0.0
      %v6261 = vmax.f32 %v6149, 0.0
      %v6262 = vmax.f32 %v6150, 0.0
      %v6263 = vmax.f32 %v6151, 0.0
      %v6264 = vmax.f32 %v6152, 0.0
      %v6265 = vmax.f32 %v6153, 0.0
      %v6266 = vmax.f32 %v6154, 0.0
      %v6267 = vmax.f32 %v6155, 0.0
      %v6268 = vmax.f32 %v6156, 0.0
      %v6269 = vmax.f32 %v6157, 0.0
      %v6270 = vmax.f32 %v6158, 0.0
      %v6271 = vmax.f32 %v6159, 0.0
      %v6272 = vmax.f32 %v6160, 0.0
      %6273 = vst.msk [vmem:[%s170] sm:$0xff] %vm1036, %v6161
      %6274 = vst.msk [vmem:[%s170 + $0x8] sm:$0xff] %vm1036, %v6162
      %6275 = vst.msk [vmem:[%s170 + $0x10] sm:$0xff] %vm1036, %v6163
      %6276 = vst.msk [vmem:[%s170 + $0x18] sm:$0xff] %vm1036, %v6164
      %6277 = vst.msk [vmem:[%s170 + $0x20] sm:$0xff] %vm1036, %v6165
      %6278 = vst.msk [vmem:[%s170 + $0x28] sm:$0xff] %vm1036, %v6166
      %6279 = vst.msk [vmem:[%s170 + $0x30] sm:$0xff] %vm1036, %v6167
      %6280 = vst.msk [vmem:[%s170 + $0x38] sm:$0xff] %vm1036, %v6168
      %6281 = vst.msk [vmem:[%s170 + $0x40] sm:$0xff] %vm1036, %v6169
      %6282 = vst.msk [vmem:[%s170 + $0x48] sm:$0xff] %vm1036, %v6170
      %6283 = vst.msk [vmem:[%s170 + $0x50] sm:$0xff] %vm1036, %v6171
      %6284 = vst.msk [vmem:[%s170 + $0x58] sm:$0xff] %vm1036, %v6172
      %6285 = vst.msk [vmem:[%s170 + $0x60] sm:$0xff] %vm1036, %v6173
      %6286 = vst.msk [vmem:[%s170 + $0x68] sm:$0xff] %vm1036, %v6174
      %6287 = vst.msk [vmem:[%s170 + $0x70] sm:$0xff] %vm1036, %v6175
      %6288 = vst.msk [vmem:[%s170 + $0x78] sm:$0xff] %vm1036, %v6176
      %6289 = vst.msk [vmem:[%s170 + $0x80] sm:$0xff] %vm1036, %v6177
      %6290 = vst.msk [vmem:[%s170 + $0x88] sm:$0xff] %vm1036, %v6178
      %6291 = vst.msk [vmem:[%s170 + $0x90] sm:$0xff] %vm1036, %v6179
      %6292 = vst.msk [vmem:[%s170 + $0x98] sm:$0xff] %vm1036, %v6180
      %6293 = vst.msk [vmem:[%s170 + $0xa0] sm:$0xff] %vm1036, %v6181
      %6294 = vst.msk [vmem:[%s170 + $0xa8] sm:$0xff] %vm1036, %v6182
      %6295 = vst.msk [vmem:[%s170 + $0xb0] sm:$0xff] %vm1036, %v6183
      %6296 = vst.msk [vmem:[%s170 + $0xb8] sm:$0xff] %vm1036, %v6184
      %6297 = vst.msk [vmem:[%s170 + $0xc0] sm:$0xff] %vm1036, %v6185
      %6298 = vst.msk [vmem:[%s170 + $0xc8] sm:$0xff] %vm1036, %v6186
      %6299 = vst.msk [vmem:[%s170 + $0xd0] sm:$0xff] %vm1036, %v6187
      %6300 = vst.msk [vmem:[%s170 + $0xd8] sm:$0xff] %vm1036, %v6188
      %6301 = vst.msk [vmem:[%s170 + $0xe0] sm:$0xff] %vm1036, %v6189
      %6302 = vst.msk [vmem:[%s170 + $0xe8] sm:$0xff] %vm1036, %v6190
      %6303 = vst.msk [vmem:[%s170 + $0xf0] sm:$0xff] %vm1036, %v6191
      %6304 = vst.msk [vmem:[%s170 + $0xf8] sm:$0xff] %vm1036, %v6192
      %6305 = vst.msk [vmem:[%s170 + $0x100] sm:$0xff] %vm1036, %v6193
      %6306 = vst.msk [vmem:[%s170 + $0x108] sm:$0xff] %vm1036, %v6194
      %6307 = vst.msk [vmem:[%s170 + $0x110] sm:$0xff] %vm1036, %v6195
      %6308 = vst.msk [vmem:[%s170 + $0x118] sm:$0xff] %vm1036, %v6196
      %6309 = vst.msk [vmem:[%s170 + $0x120] sm:$0xff] %vm1036, %v6197
      %6310 = vst.msk [vmem:[%s170 + $0x128] sm:$0xff] %vm1036, %v6198
      %6311 = vst.msk [vmem:[%s170 + $0x130] sm:$0xff] %vm1036, %v6199
      %6312 = vst.msk [vmem:[%s170 + $0x138] sm:$0xff] %vm1036, %v6200
      %6313 = vst.msk [vmem:[%s170 + $0x140] sm:$0xff] %vm1036, %v6201
      %6314 = vst.msk [vmem:[%s170 + $0x148] sm:$0xff] %vm1036, %v6202
      %6315 = vst.msk [vmem:[%s170 + $0x150] sm:$0xff] %vm1036, %v6203
      %6316 = vst.msk [vmem:[%s170 + $0x158] sm:$0xff] %vm1036, %v6204
      %6317 = vst.msk [vmem:[%s170 + $0x160] sm:$0xff] %vm1036, %v6205
      %6318 = vst.msk [vmem:[%s170 + $0x168] sm:$0xff] %vm1036, %v6206
      %6319 = vst.msk [vmem:[%s170 + $0x170] sm:$0xff] %vm1036, %v6207
      %6320 = vst.msk [vmem:[%s170 + $0x178] sm:$0xff] %vm1036, %v6208
      %6321 = vst.msk [vmem:[%s170 + $0x180] sm:$0xff] %vm1036, %v6209
      %6322 = vst.msk [vmem:[%s170 + $0x188] sm:$0xff] %vm1036, %v6210
      %6323 = vst.msk [vmem:[%s170 + $0x190] sm:$0xff] %vm1036, %v6211
      %6324 = vst.msk [vmem:[%s170 + $0x198] sm:$0xff] %vm1036, %v6212
      %6325 = vst.msk [vmem:[%s170 + $0x1a0] sm:$0xff] %vm1036, %v6213
      %6326 = vst.msk [vmem:[%s170 + $0x1a8] sm:$0xff] %vm1036, %v6214
      %6327 = vst.msk [vmem:[%s170 + $0x1b0] sm:$0xff] %vm1036, %v6215
      %6328 = vst.msk [vmem:[%s170 + $0x1b8] sm:$0xff] %vm1036, %v6216
      %6329 = vst.msk [vmem:[%s170 + $0x1c0] sm:$0xff] %vm1036, %v6217
      %6330 = vst.msk [vmem:[%s170 + $0x1c8] sm:$0xff] %vm1036, %v6218
      %6331 = vst.msk [vmem:[%s170 + $0x1d0] sm:$0xff] %vm1036, %v6219
      %6332 = vst.msk [vmem:[%s170 + $0x1d8] sm:$0xff] %vm1036, %v6220
      %6333 = vst.msk [vmem:[%s170 + $0x1e0] sm:$0xff] %vm1036, %v6221
      %6334 = vst.msk [vmem:[%s170 + $0x1e8] sm:$0xff] %vm1036, %v6222
      %6335 = vst.msk [vmem:[%s170 + $0x1f0] sm:$0xff] %vm1036, %v6223
      %6336 = vst.msk [vmem:[%s170 + $0x1f8] sm:$0xff] %vm1036, %v6224
      %6337 = vst.msk [vmem:[%s170 + $0x200] sm:$0xff] %vm1036, %v6225
      %6338 = vst.msk [vmem:[%s170 + $0x208] sm:$0xff] %vm1036, %v6226
      %6339 = vst.msk [vmem:[%s170 + $0x210] sm:$0xff] %vm1036, %v6227
      %6340 = vst.msk [vmem:[%s170 + $0x218] sm:$0xff] %vm1036, %v6228
      %6341 = vst.msk [vmem:[%s170 + $0x220] sm:$0xff] %vm1036, %v6229
      %6342 = vst.msk [vmem:[%s170 + $0x228] sm:$0xff] %vm1036, %v6230
      %6343 = vst.msk [vmem:[%s170 + $0x230] sm:$0xff] %vm1036, %v6231
      %6344 = vst.msk [vmem:[%s170 + $0x238] sm:$0xff] %vm1036, %v6232
      %6345 = vst.msk [vmem:[%s170 + $0x240] sm:$0xff] %vm1036, %v6233
      %6346 = vst.msk [vmem:[%s170 + $0x248] sm:$0xff] %vm1036, %v6234
      %6347 = vst.msk [vmem:[%s170 + $0x250] sm:$0xff] %vm1036, %v6235
      %6348 = vst.msk [vmem:[%s170 + $0x258] sm:$0xff] %vm1036, %v6236
      %6349 = vst.msk [vmem:[%s170 + $0x260] sm:$0xff] %vm1036, %v6237
      %6350 = vst.msk [vmem:[%s170 + $0x268] sm:$0xff] %vm1036, %v6238
      %6351 = vst.msk [vmem:[%s170 + $0x270] sm:$0xff] %vm1036, %v6239
      %6352 = vst.msk [vmem:[%s170 + $0x278] sm:$0xff] %vm1036, %v6240
      %6353 = vst.msk [vmem:[%s170 + $0x280] sm:$0xff] %vm1036, %v6241
      %6354 = vst.msk [vmem:[%s170 + $0x288] sm:$0xff] %vm1036, %v6242
      %6355 = vst.msk [vmem:[%s170 + $0x290] sm:$0xff] %vm1036, %v6243
      %6356 = vst.msk [vmem:[%s170 + $0x298] sm:$0xff] %vm1036, %v6244
      %6357 = vst.msk [vmem:[%s170 + $0x2a0] sm:$0xff] %vm1036, %v6245
      %6358 = vst.msk [vmem:[%s170 + $0x2a8] sm:$0xff] %vm1036, %v6246
      %6359 = vst.msk [vmem:[%s170 + $0x2b0] sm:$0xff] %vm1036, %v6247
      %6360 = vst.msk [vmem:[%s170 + $0x2b8] sm:$0xff] %vm1036, %v6248
      %6361 = vst.msk [vmem:[%s170 + $0x2c0] sm:$0xff] %vm1036, %v6249
      %6362 = vst.msk [vmem:[%s170 + $0x2c8] sm:$0xff] %vm1036, %v6250
      %6363 = vst.msk [vmem:[%s170 + $0x2d0] sm:$0xff] %vm1036, %v6251
      %6364 = vst.msk [vmem:[%s170 + $0x2d8] sm:$0xff] %vm1036, %v6252
      %6365 = vst.msk [vmem:[%s170 + $0x2e0] sm:$0xff] %vm1036, %v6253
      %6366 = vst.msk [vmem:[%s170 + $0x2e8] sm:$0xff] %vm1036, %v6254
      %6367 = vst.msk [vmem:[%s170 + $0x2f0] sm:$0xff] %vm1036, %v6255
      %6368 = vst.msk [vmem:[%s170 + $0x2f8] sm:$0xff] %vm1036, %v6256
      %6369 = vst.msk [vmem:[%s170 + $0x300] sm:$0xff] %vm1036, %v6257
      %6370 = vst.msk [vmem:[%s170 + $0x308] sm:$0xff] %vm1036, %v6258
      %6371 = vst.msk [vmem:[%s170 + $0x310] sm:$0xff] %vm1036, %v6259
      %6372 = vst.msk [vmem:[%s170 + $0x318] sm:$0xff] %vm1036, %v6260
      %6373 = vst.msk [vmem:[%s170 + $0x320] sm:$0xff] %vm1036, %v6261
      %6374 = vst.msk [vmem:[%s170 + $0x328] sm:$0xff] %vm1036, %v6262
      %6375 = vst.msk [vmem:[%s170 + $0x330] sm:$0xff] %vm1036, %v6263
      %6376 = vst.msk [vmem:[%s170 + $0x338] sm:$0xff] %vm1036, %v6264
      %6377 = vst.msk [vmem:[%s170 + $0x340] sm:$0xff] %vm1036, %v6265
      %6378 = vst.msk [vmem:[%s170 + $0x348] sm:$0xff] %vm1036, %v6266
      %6379 = vst.msk [vmem:[%s170 + $0x350] sm:$0xff] %vm1036, %v6267
      %6380 = vst.msk [vmem:[%s170 + $0x358] sm:$0xff] %vm1036, %v6268
      %6381 = vst.msk [vmem:[%s170 + $0x360] sm:$0xff] %vm1036, %v6269
      %6382 = vst.msk [vmem:[%s170 + $0x368] sm:$0xff] %vm1036, %v6270
      %6383 = vst.msk [vmem:[%s170 + $0x370] sm:$0xff] %vm1036, %v6271
      %6384 = vst.msk [vmem:[%s170 + $0x378] sm:$0xff] %vm1036, %v6272
      %p6385 = scmp.lt.s32.totalorder %s14, 1
      %s6386 = scalar_select %p6385, %s14, 1
      %s6387 = smul.addr %s6386, 112
      %s6388 = smul.addr %s6387, 8
      %s6389 = scalar_lea.vmem %s3, %s6388
      // Predicated region
      $region33: #{lenet_forward.3} parent=31 // pred_check
        %p6390 = pneg %p100
      $region34: #{lenet_forward.3} parent=31 // pred_check_branch
        %6392 = sbr.rel (%p6390) target = $region36
      $region35: #{lenet_forward.3} parent=31 // pred_region
        _
      $region36: #{lenet_forward.3} parent=31 // pred_fallthru
        _
    $region32: #{lenet_forward.3} parent=5 // pred_fallthru
      _
    %p6393 = scmp.le.s32.totalorder 2, %s9
    // Predicated region
    $region37: #{lenet_forward.3} parent=5 // pred_check
      %p6394 = pneg %p6393
    $region38: #{lenet_forward.3} parent=5 // pred_check_branch
      %6396 = sbr.rel (%p6394) target = $region40
    $region39: #{lenet_forward.3} parent=5 // pred_region
      %s6397 = ssub.s32 %s9, 2
      // Predicated region
      $region41: #{lenet_forward.3} parent=39 // pred_check
        %p6398 = pneg %p106
      $region42: #{lenet_forward.3} parent=39 // pred_check_branch
        %6400 = sbr.rel (%p6398) target = $region44
      $region43: #{lenet_forward.3} parent=39 // pred_region
        %p6401 = scmp.lt.s32.totalorder %s15, 1
        %s6402 = scalar_select %p6401, %s15, 1
        %s6403 = smul.addr %s6402, 112
        %s6404 = smul.addr %s6403, 8
        %s6405 = scalar_lea.vmem %s3, %s6404
      $region44: #{lenet_forward.3} parent=39 // pred_fallthru
        _
    $region40: #{lenet_forward.3} parent=5 // pred_fallthru
      _
  $region6: #{lenet_forward.3} parent=0 // loop_footer
    %s13 = sadd.s32 1, %s9
  $region7: #{lenet_forward.3} parent=0 // loop_footer_branch
    %8 = sbr.rel target = $region3
  $region8: #{lenet_forward.3} parent=0 // loop_exit
    _

// kernel: lenet_forward.4
$region0: #{lenet_forward.4}
  #allocation0 [shape = 'u32[]', space=smem, size = 0x4, offset = 0x4, fixed_abs, tag = 'smem constant byte address 0x4 - core index']
  #allocation1 [shape = 'u32[72,128]{1,0:T(1,128)}', space=vmem, size = 0x9000, scoped, tag = 'internal scratch']
  #allocation2 [shape = 'f32[160,32]{1,0:T(8,128)}', space=vmem, size = 0x14000, scoped, tag = 'scratch operand']
  %s0 = inlined_call_operand.vmem [shape: bf16[2,224,80], index: 0, kind: input, shape index: {}]
  %s1 = inlined_call_operand.vmem [shape: bf16[5,80,32], index: 1, kind: input, shape index: {}]
  %s2 = inlined_call_operand.vmem [shape: f32[1,32], index: 2, kind: input, shape index: {}]
  %s3 = inlined_call_operand.vmem [shape: f32[2,160,32], index: 3, kind: output, shape index: {}]
  %s4 = sld [smem:[#allocation0]]
  $region45: #{lenet_forward.4} parent=0
    _
  %s6 = ssub.s32 1, %s4
  %s7 = scalar_select 0, %s6, %s4
  loop: start=0, step=1, limit=4
  $region2: #{lenet_forward.4} parent=0 // loop_pre_header
    _
  $region3: #{lenet_forward.4} parent=0 // loop_header
    %s9 = sphi 0, %s13
    %p10 = scmp.ge.s32.totalorder %s9, 4
    %s19 = sphi 0, %s21
    %s22 = sphi 0, %s19
    %s23 = sphi 0, %s22
    %s39 = sphi 0, %s23
    %s43 = sphi 0, %s43
    %s45 = sphi 0, %s43
    %s46 = sphi 0, %s45
    %s60 = sphi 0, %s46
    %s64 = sphi 0, %s64
    %s66 = sphi 0, %s64
    %s67 = sphi 0, %s66
    %s81 = sphi 0, %s67
    %s87 = sphi 0, %s89
    %s90 = sphi 0, %s87
    %s91 = sphi 0, %s90
    %s107 = sphi 0, %s91
  $region4: #{lenet_forward.4} parent=0 // loop_header_branch
    %12 = sbr.rel (%p10) target = $region8
  $region5: #{lenet_forward.4} parent=0 // loop_body
    %s14 = ssub.s32 %s9, 1
    %s15 = ssub.s32 %s9, 2
    %s16 = sadd.s32 %s9, 1
    %s17 = ssub.s32 %s9, %s16
    %p18 = scmp.eq.s32.totalorder %s17, 0
    %s20 = sadd.s32 %s19, 1
    %s21 = scalar_select %p18, %s19, %s20
    %p24 = pneg %p18
    %p25 = scmp.eq.s32.totalorder %s9, 1
    %p26 = por %p24, %p25
    %p27 = scmp.ne.s32.totalorder %s19, %s22
    %p28 = scmp.eq.s32.totalorder %s9, 0
    %p29 = por %p27, %p28
    %p30 = scmp.ne.s32.totalorder %s19, %s22
    %p31 = scmp.eq.s32.totalorder %s14, 1
    %p32 = por %p30, %p31
    %p33 = scmp.ne.s32.totalorder %s22, %s23
    %p34 = scmp.eq.s32.totalorder %s14, 0
    %p35 = por %p33, %p34
    %p36 = scmp.ne.s32.totalorder %s22, %s23
    %p37 = scmp.eq.s32.totalorder %s15, 1
    %p38 = por %p36, %p37
    %p40 = scmp.ne.s32.totalorder %s23, %s39
    %p41 = scmp.eq.s32.totalorder %s15, 0
    %p42 = por %p40, %p41
    %s44 = sadd.s32 %s43, 1
    %p47 = scmp.eq.s32.totalorder %s9, 1
    %p48 = scmp.ne.s32.totalorder %s43, %s45
    %p49 = scmp.eq.s32.totalorder %s9, 0
    %p50 = por %p48, %p49
    %p51 = scmp.ne.s32.totalorder %s43, %s45
    %p52 = scmp.eq.s32.totalorder %s14, 1
    %p53 = por %p51, %p52
    %p54 = scmp.ne.s32.totalorder %s45, %s46
    %p55 = scmp.eq.s32.totalorder %s14, 0
    %p56 = por %p54, %p55
    %p57 = scmp.ne.s32.totalorder %s45, %s46
    %p58 = scmp.eq.s32.totalorder %s15, 1
    %p59 = por %p57, %p58
    %p61 = scmp.ne.s32.totalorder %s46, %s60
    %p62 = scmp.eq.s32.totalorder %s15, 0
    %p63 = por %p61, %p62
    %s65 = sadd.s32 %s64, 1
    %p68 = scmp.eq.s32.totalorder %s9, 1
    %p69 = scmp.ne.s32.totalorder %s64, %s66
    %p70 = scmp.eq.s32.totalorder %s9, 0
    %p71 = por %p69, %p70
    %p72 = scmp.ne.s32.totalorder %s64, %s66
    %p73 = scmp.eq.s32.totalorder %s14, 1
    %p74 = por %p72, %p73
    %p75 = scmp.ne.s32.totalorder %s66, %s67
    %p76 = scmp.eq.s32.totalorder %s14, 0
    %p77 = por %p75, %p76
    %p78 = scmp.ne.s32.totalorder %s66, %s67
    %p79 = scmp.eq.s32.totalorder %s15, 1
    %p80 = por %p78, %p79
    %p82 = scmp.ne.s32.totalorder %s67, %s81
    %p83 = scmp.eq.s32.totalorder %s15, 0
    %p84 = por %p82, %p83
    %s85 = ssub.s32 %s9, %s16
    %p86 = scmp.eq.s32.totalorder %s85, 0
    %s88 = sadd.s32 %s87, 1
    %s89 = scalar_select %p86, %s87, %s88
    %p92 = pneg %p86
    %p93 = scmp.eq.s32.totalorder %s9, 1
    %p94 = por %p92, %p93
    %p95 = scmp.ne.s32.totalorder %s87, %s90
    %p96 = scmp.eq.s32.totalorder %s9, 0
    %p97 = por %p95, %p96
    %p98 = scmp.ne.s32.totalorder %s87, %s90
    %p99 = scmp.eq.s32.totalorder %s14, 1
    %p100 = por %p98, %p99
    %p101 = scmp.ne.s32.totalorder %s90, %s91
    %p102 = scmp.eq.s32.totalorder %s14, 0
    %p103 = por %p101, %p102
    %p104 = scmp.ne.s32.totalorder %s90, %s91
    %p105 = scmp.eq.s32.totalorder %s15, 1
    %p106 = por %p104, %p105
    %p108 = scmp.ne.s32.totalorder %s91, %s107
    %p109 = scmp.eq.s32.totalorder %s15, 0
    %p110 = por %p108, %p109
    %p111 = scmp.le.s32.totalorder 1, %s9
    %p112 = scmp.lt.s32.totalorder %s9, 3
    %p113 = pnand %p111, %p112
    %p114 = pneg %p113
    // Predicated region
    $region9: #{lenet_forward.4} parent=5 // pred_check
      _
    $region10: #{lenet_forward.4} parent=5 // pred_check_branch
      %116 = sbr.rel (%p113) target = $region12
    $region11: #{lenet_forward.4} parent=5 // pred_region
      %s117 = ssub.s32 %s9, 1
      // Predicated region
      $region13: #{lenet_forward.4} parent=11 // pred_check
        %p118 = pneg %p56
      $region14: #{lenet_forward.4} parent=11 // pred_check_branch
        %120 = sbr.rel (%p118) target = $region16
      $region15: #{lenet_forward.4} parent=11 // pred_region
        _
      $region16: #{lenet_forward.4} parent=11 // pred_fallthru
        _
      // Predicated region
      $region17: #{lenet_forward.4} parent=11 // pred_check
        %p121 = pneg %p77
      $region18: #{lenet_forward.4} parent=11 // pred_check_branch
        %123 = sbr.rel (%p121) target = $region20
      $region19: #{lenet_forward.4} parent=11 // pred_region
        _
      $region20: #{lenet_forward.4} parent=11 // pred_fallthru
        _
    $region12: #{lenet_forward.4} parent=5 // pred_fallthru
      _
    %p124 = scmp.lt.s32.totalorder %s9, 2
    // Predicated region
    $region21: #{lenet_forward.4} parent=5 // pred_check
      %p125 = pneg %p124
    $region22: #{lenet_forward.4} parent=5 // pred_check_branch
      %127 = sbr.rel (%p125) target = $region24
    $region23: #{lenet_forward.4} parent=5 // pred_region
      // Predicated region
      $region25: #{lenet_forward.4} parent=23 // pred_check
        %p128 = pneg %p29
      $region26: #{lenet_forward.4} parent=23 // pred_check_branch
        %130 = sbr.rel (%p128) target = $region28
      $region27: #{lenet_forward.4} parent=23 // pred_region
        %p131 = scmp.lt.s32.totalorder %s9, 1
        %s132 = scalar_select %p131, %s9, 1
        %s133 = smul.addr %s132, 28
        %s134 = smul.addr %s133, 4
        %s135 = scalar_lea.vmem %s0, %s134
      $region28: #{lenet_forward.4} parent=23 // pred_fallthru
        _
    $region24: #{lenet_forward.4} parent=5 // pred_fallthru
      _
    %p136 = scmp.le.s32.totalorder 1, %s9
    %p137 = scmp.lt.s32.totalorder %s9, 3
    %p138 = pnand %p136, %p137
    %p139 = pneg %p138
    // Predicated region
    $region29: #{lenet_forward.4} parent=5 // pred_check
      _
    $region30: #{lenet_forward.4} parent=5 // pred_check_branch
      %141 = sbr.rel (%p138) target = $region32
    $region31: #{lenet_forward.4} parent=5 // pred_region
      %s142 = ssub.s32 %s9, 1
      %p143 = scmp.lt.s32.totalorder %s14, 1
      %s144 = scalar_select %p143, %s14, 1
      %s145 = smul.addr %s144, 28
      %s146 = smul.addr %s145, 4
      %s147 = scalar_lea.vmem %s0, %s146
      %p148 = pneg %p35
      %p149 = pneg %p32
      %p150 = pneg %p56
      %p151 = pneg %p53
      %p152 = pneg %p77
      %p153 = pneg %p74
      %p154 = pneg %p103
      %p155 = pneg %p100
      %p156 = scmp.lt.s32.totalorder %s14, 1
      %s157 = scalar_select %p156, %s14, 1
      %s158 = smul.addr %s157, 20
      %s159 = smul.addr %s158, 8
      %s160 = scalar_lea.vmem %s3, %s159
      %p161 = scmp.lt.s32.totalorder %s14, 1
      %s162 = scalar_select %p161, %s14, 1
      %s163 = smul.addr %s162, 28
      %s164 = smul.addr %s163, 4
      %s165 = scalar_lea.vmem %s0, %s164
      %p166 = scmp.lt.s32.totalorder %s14, 1
      %s167 = scalar_select %p166, %s14, 1
      %s168 = smul.addr %s167, 20
      %s169 = smul.addr %s168, 8
      %s170 = scalar_lea.vmem %s3, %s169
      %v172 = vld [vmem:[%s165] sm:$0xf]
      %v173 = vld [vmem:[%s165 + $0x4] sm:$0xf]
      %v174 = vld [vmem:[%s165 + $0x8] sm:$0xf]
      %v175 = vld [vmem:[%s165 + $0xc] sm:$0xf]
      %v176 = vld [vmem:[%s165 + $0x10] sm:$0xf]
      %v177 = vld [vmem:[%s165 + $0x14] sm:$0xf]
      %v178 = vld [vmem:[%s165 + $0x18] sm:$0xf]
      %v179 = vld [vmem:[%s165 + $0x1c] sm:$0xf]
      %v180 = vld [vmem:[%s165 + $0x20] sm:$0xf]
      %v181 = vld [vmem:[%s165 + $0x24] sm:$0xf]
      %v182 = vld [vmem:[%s165 + $0x28] sm:$0xf]
      %v183 = vld [vmem:[%s165 + $0x2c] sm:$0xf]
      %v184 = vld [vmem:[%s165 + $0x30] sm:$0xf]
      %v185 = vld [vmem:[%s165 + $0x34] sm:$0xf]
      %v186 = vld [vmem:[%s165 + $0x38] sm:$0xf]
      %v187 = vld [vmem:[%s165 + $0x3c] sm:$0xf]
      %v188 = vld [vmem:[%s165 + $0x40] sm:$0xf]
      %v189 = vld [vmem:[%s165 + $0x44] sm:$0xf]
      %v190 = vld [vmem:[%s165 + $0x48] sm:$0xf]
      %v191 = vld [vmem:[%s165 + $0x4c] sm:$0xf]
      %v192 = vld [vmem:[%s1] sm:$0xf]
      %v193 = vld [vmem:[%s1 + $0x4] sm:$0xf]
      %v194 = vld [vmem:[%s1 + $0x8] sm:$0xf]
      %v195 = vld [vmem:[%s1 + $0xc] sm:$0xf]
      %v196 = vld [vmem:[%s1 + $0x10] sm:$0xf]
      %v197 = vld [vmem:[%s1 + $0x14] sm:$0xf]
      %v198 = vld [vmem:[%s1 + $0x18] sm:$0xf]
      %v199 = vld [vmem:[%s1 + $0x1c] sm:$0xf]
      %v200 = vld [vmem:[%s1 + $0x20] sm:$0xf]
      %v201 = vld [vmem:[%s1 + $0x24] sm:$0xf]
      %v222 = vunpack.c.l.b16 %v172
      %v223 = vunpack.c.l.b16 %v173
      %v224 = vunpack.c.l.b16 %v174
      %v225 = vunpack.c.l.b16 %v175
      %v226 = vunpack.c.l.b16 %v176
      %v227 = vunpack.c.l.b16 %v177
      %v228 = vunpack.c.l.b16 %v178
      %v229 = vunpack.c.l.b16 %v179
      %v230 = vunpack.c.l.b16 %v180
      %v231 = vunpack.c.l.b16 %v181
      %v232 = vunpack.c.l.b16 %v182
      %v233 = vunpack.c.l.b16 %v183
      %v234 = vunpack.c.l.b16 %v184
      %v235 = vunpack.c.l.b16 %v185
      %v236 = vunpack.c.l.b16 %v186
      %v237 = vunpack.c.l.b16 %v187
      %v238 = vunpack.c.l.b16 %v188
      %v239 = vunpack.c.l.b16 %v189
      %v240 = vunpack.c.l.b16 %v190
      %v241 = vunpack.c.l.b16 %v191
      %v242 = vpack.c.b16 %v223, %v222
      %v243 = vpack.c.b16 %v225, %v224
      %v244 = vpack.c.b16 %v227, %v226
      %v245 = vpack.c.b16 %v229, %v228
      %v246 = vpack.c.b16 %v231, %v230
      %v247 = vpack.c.b16 %v233, %v232
      %v248 = vpack.c.b16 %v235, %v234
      %v249 = vpack.c.b16 %v237, %v236
      %v250 = vpack.c.b16 %v239, %v238
      %v251 = vpack.c.b16 %v241, %v240
      %v262 = vunpack.c.l.b16 %v192
      %v263 = vunpack.c.l.b16 %v193
      %v264 = vunpack.c.l.b16 %v194
      %v265 = vunpack.c.l.b16 %v195
      %v266 = vunpack.c.l.b16 %v196
      %v267 = vunpack.c.l.b16 %v197
      %v268 = vunpack.c.l.b16 %v198
      %v269 = vunpack.c.l.b16 %v199
      %v270 = vunpack.c.l.b16 %v200
      %v271 = vunpack.c.l.b16 %v201
      %v272 = vpack.c.b16 %v263, %v262
      %v273 = vpack.c.b16 %v265, %v264
      %v274 = vpack.c.b16 %v267, %v266
      %v275 = vpack.c.b16 %v269, %v268
      %v276 = vpack.c.b16 %v271, %v270
      %vm282 = vcmask 654336
      %v284 = vsel %vm282, %v242, 0
      %v287 = vsel %vm282, %v243, 0
      %v290 = vsel %vm282, %v244, 0
      %v293 = vsel %vm282, %v245, 0
      %v296 = vsel %vm282, %v246, 0
      %v299 = vsel %vm282, %v247, 0
      %v302 = vsel %vm282, %v248, 0
      %v305 = vsel %vm282, %v249, 0
      %v308 = vsel %vm282, %v250, 0
      %v311 = vsel %vm282, %v251, 0
      %313 = vmatpush.bf16.msra.mxu0 0
      %314 = vmatpush.bf16.msra.mxu0 0
      %315 = vmatpush.bf16.msra.mxu0 0
      %316 = vmatpush.bf16.msra.mxu0 %v276
      %317 = vmatpush.bf16.msra.mxu0 %v275
      %318 = vmatpush.bf16.msra.mxu0 %v274
      %319 = vmatpush.bf16.msra.mxu0 %v273
      %320 = vmatpush.bf16.msra.mxu0 %v272
      %321 = vmatmul.bf16.gmra.mxu0 %v284
      %v322 = vpop.f32.mrf.mxu0
      %v323 = vadd.f32 0.0, %v322
      %v324 = vpop.f32.mrf.mxu0
      %v325 = vadd.f32 0.0, %v324
      %326 = vmatmul.bf16.gmra.mxu0 %v287
      %v327 = vpop.f32.mrf.mxu0
      %v328 = vadd.f32 0.0, %v327
      %v329 = vpop.f32.mrf.mxu0
      %v330 = vadd.f32 0.0, %v329
      %331 = vmatmul.bf16.gmra.mxu0 %v290
      %v332 = vpop.f32.mrf.mxu0
      %v333 = vadd.f32 0.0, %v332
      %v334 = vpop.f32.mrf.mxu0
      %v335 = vadd.f32 0.0, %v334
      %336 = vmatmul.bf16.gmra.mxu0 %v293
      %v337 = vpop.f32.mrf.mxu0
      %v338 = vadd.f32 0.0, %v337
      %v339 = vpop.f32.mrf.mxu0
      %v340 = vadd.f32 0.0, %v339
      %341 = vmatmul.bf16.gmra.mxu0 %v296
      %v342 = vpop.f32.mrf.mxu0
      %v343 = vadd.f32 0.0, %v342
      %v344 = vpop.f32.mrf.mxu0
      %v345 = vadd.f32 0.0, %v344
      %346 = vmatmul.bf16.gmra.mxu0 %v299
      %v347 = vpop.f32.mrf.mxu0
      %v348 = vadd.f32 0.0, %v347
      %v349 = vpop.f32.mrf.mxu0
      %v350 = vadd.f32 0.0, %v349
      %351 = vmatmul.bf16.gmra.mxu0 %v302
      %v352 = vpop.f32.mrf.mxu0
      %v353 = vadd.f32 0.0, %v352
      %v354 = vpop.f32.mrf.mxu0
      %v355 = vadd.f32 0.0, %v354
      %356 = vmatmul.bf16.gmra.mxu0 %v305
      %v357 = vpop.f32.mrf.mxu0
      %v358 = vadd.f32 0.0, %v357
      %v359 = vpop.f32.mrf.mxu0
      %v360 = vadd.f32 0.0, %v359
      %361 = vmatmul.bf16.gmra.mxu0 %v308
      %v362 = vpop.f32.mrf.mxu0
      %v363 = vadd.f32 0.0, %v362
      %v364 = vpop.f32.mrf.mxu0
      %v365 = vadd.f32 0.0, %v364
      %366 = vmatmul.bf16.gmra.mxu0 %v311
      %v367 = vpop.f32.mrf.mxu0
      %v368 = vadd.f32 0.0, %v367
      %v369 = vpop.f32.mrf.mxu0
      %v370 = vadd.f32 0.0, %v369
      %371 = vdwg.mxu0
      %vm372 = vcmask 261120
      %373 = vst.msk [vmem:[#allocation2] sm:$0xff] %vm372, %v323
      %374 = vst.msk [vmem:[#allocation2 + $0x8] sm:$0xff] %vm372, %v325
      %375 = vst.msk [vmem:[#allocation2 + $0x10] sm:$0xff] %vm372, %v328
      %376 = vst.msk [vmem:[#allocation2 + $0x18] sm:$0xff] %vm372, %v330
      %377 = vst.msk [vmem:[#allocation2 + $0x20] sm:$0xff] %vm372, %v333
      %378 = vst.msk [vmem:[#allocation2 + $0x28] sm:$0xff] %vm372, %v335
      %379 = vst.msk [vmem:[#allocation2 + $0x30] sm:$0xff] %vm372, %v338
      %380 = vst.msk [vmem:[#allocation2 + $0x38] sm:$0xff] %vm372, %v340
      %381 = vst.msk [vmem:[#allocation2 + $0x40] sm:$0xff] %vm372, %v343
      %382 = vst.msk [vmem:[#allocation2 + $0x48] sm:$0xff] %vm372, %v345
      %383 = vst.msk [vmem:[#allocation2 + $0x50] sm:$0xff] %vm372, %v348
      %384 = vst.msk [vmem:[#allocation2 + $0x58] sm:$0xff] %vm372, %v350
      %385 = vst.msk [vmem:[#allocation2 + $0x60] sm:$0xff] %vm372, %v353
      %386 = vst.msk [vmem:[#allocation2 + $0x68] sm:$0xff] %vm372, %v355
      %387 = vst.msk [vmem:[#allocation2 + $0x70] sm:$0xff] %vm372, %v358
      %388 = vst.msk [vmem:[#allocation2 + $0x78] sm:$0xff] %vm372, %v360
      %389 = vst.msk [vmem:[#allocation2 + $0x80] sm:$0xff] %vm372, %v363
      %390 = vst.msk [vmem:[#allocation2 + $0x88] sm:$0xff] %vm372, %v365
      %391 = vst.msk [vmem:[#allocation2 + $0x90] sm:$0xff] %vm372, %v368
      %392 = vst.msk [vmem:[#allocation2 + $0x98] sm:$0xff] %vm372, %v370
      %v393 = vld [vmem:[%s165 + $0x8] sm:$0xf]
      %v394 = vld [vmem:[%s165 + $0xc] sm:$0xf]
      %v395 = vld [vmem:[%s165 + $0x10] sm:$0xf]
      %v396 = vld [vmem:[%s165 + $0x14] sm:$0xf]
      %v397 = vld [vmem:[%s165 + $0x18] sm:$0xf]
      %v398 = vld [vmem:[%s165 + $0x1c] sm:$0xf]
      %v399 = vld [vmem:[%s165 + $0x20] sm:$0xf]
      %v400 = vld [vmem:[%s165 + $0x24] sm:$0xf]
      %v401 = vld [vmem:[%s165 + $0x28] sm:$0xf]
      %v402 = vld [vmem:[%s165 + $0x2c] sm:$0xf]
      %v403 = vld [vmem:[%s165 + $0x30] sm:$0xf]
      %v404 = vld [vmem:[%s165 + $0x34] sm:$0xf]
      %v405 = vld [vmem:[%s165 + $0x38] sm:$0xf]
      %v406 = vld [vmem:[%s165 + $0x3c] sm:$0xf]
      %v407 = vld [vmem:[%s165 + $0x40] sm:$0xf]
      %v408 = vld [vmem:[%s165 + $0x44] sm:$0xf]
      %v409 = vld [vmem:[%s165 + $0x48] sm:$0xf]
      %v410 = vld [vmem:[%s165 + $0x4c] sm:$0xf]
      %v411 = vld [vmem:[%s165 + $0x50] sm:$0xf]
      %v412 = vld [vmem:[%s165 + $0x54] sm:$0xf]
      %v413 = vld [vmem:[#allocation2] sm:$0xff]
      %v414 = vld [vmem:[#allocation2 + $0x8] sm:$0xff]
      %v415 = vld [vmem:[#allocation2 + $0x10] sm:$0xff]
      %v416 = vld [vmem:[#allocation2 + $0x18] sm:$0xff]
      %v417 = vld [vmem:[#allocation2 + $0x20] sm:$0xff]
      %v418 = vld [vmem:[#allocation2 + $0x28] sm:$0xff]
      %v419 = vld [vmem:[#allocation2 + $0x30] sm:$0xff]
      %v420 = vld [vmem:[#allocation2 + $0x38] sm:$0xff]
      %v421 = vld [vmem:[#allocation2 + $0x40] sm:$0xff]
      %v422 = vld [vmem:[#allocation2 + $0x48] sm:$0xff]
      %v423 = vld [vmem:[#allocation2 + $0x50] sm:$0xff]
      %v424 = vld [vmem:[#allocation2 + $0x58] sm:$0xff]
      %v425 = vld [vmem:[#allocation2 + $0x60] sm:$0xff]
      %v426 = vld [vmem:[#allocation2 + $0x68] sm:$0xff]
      %v427 = vld [vmem:[#allocation2 + $0x70] sm:$0xff]
      %v428 = vld [vmem:[#allocation2 + $0x78] sm:$0xff]
      %v429 = vld [vmem:[#allocation2 + $0x80] sm:$0xff]
      %v430 = vld [vmem:[#allocation2 + $0x88] sm:$0xff]
      %v431 = vld [vmem:[#allocation2 + $0x90] sm:$0xff]
      %v432 = vld [vmem:[#allocation2 + $0x98] sm:$0xff]
      %s433 = scalar_lea.vmem %s1, 40
      %v434 = vld [vmem:[%s433] sm:$0xf]
      %v435 = vld [vmem:[%s433 + $0x4] sm:$0xf]
      %v436 = vld [vmem:[%s433 + $0x8] sm:$0xf]
      %v437 = vld [vmem:[%s433 + $0xc] sm:$0xf]
      %v438 = vld [vmem:[%s433 + $0x10] sm:$0xf]
      %v439 = vld [vmem:[%s433 + $0x14] sm:$0xf]
      %v440 = vld [vmem:[%s433 + $0x18] sm:$0xf]
      %v441 = vld [vmem:[%s433 + $0x1c] sm:$0xf]
      %v442 = vld [vmem:[%s433 + $0x20] sm:$0xf]
      %v443 = vld [vmem:[%s433 + $0x24] sm:$0xf]
      %v464 = vunpack.c.l.b16 %v393
      %v465 = vunpack.c.l.b16 %v394
      %v466 = vunpack.c.l.b16 %v395
      %v467 = vunpack.c.l.b16 %v396
      %v468 = vunpack.c.l.b16 %v397
      %v469 = vunpack.c.l.b16 %v398
      %v470 = vunpack.c.l.b16 %v399
      %v471 = vunpack.c.l.b16 %v400
      %v472 = vunpack.c.l.b16 %v401
      %v473 = vunpack.c.l.b16 %v402
      %v474 = vunpack.c.l.b16 %v403
      %v475 = vunpack.c.l.b16 %v404
      %v476 = vunpack.c.l.b16 %v405
      %v477 = vunpack.c.l.b16 %v406
      %v478 = vunpack.c.l.b16 %v407
      %v479 = vunpack.c.l.b16 %v408
      %v480 = vunpack.c.l.b16 %v409
      %v481 = vunpack.c.l.b16 %v410
      %v482 = vunpack.c.l.b16 %v411
      %v483 = vunpack.c.l.b16 %v412
      %v484 = vpack.c.b16 %v465, %v464
      %v485 = vpack.c.b16 %v467, %v466
      %v486 = vpack.c.b16 %v469, %v468
      %v487 = vpack.c.b16 %v471, %v470
      %v488 = vpack.c.b16 %v473, %v472
      %v489 = vpack.c.b16 %v475, %v474
      %v490 = vpack.c.b16 %v477, %v476
      %v491 = vpack.c.b16 %v479, %v478
      %v492 = vpack.c.b16 %v481, %v480
      %v493 = vpack.c.b16 %v483, %v482
      %v504 = vunpack.c.l.b16 %v434
      %v505 = vunpack.c.l.b16 %v435
      %v506 = vunpack.c.l.b16 %v436
      %v507 = vunpack.c.l.b16 %v437
      %v508 = vunpack.c.l.b16 %v438
      %v509 = vunpack.c.l.b16 %v439
      %v510 = vunpack.c.l.b16 %v440
      %v511 = vunpack.c.l.b16 %v441
      %v512 = vunpack.c.l.b16 %v442
      %v513 = vunpack.c.l.b16 %v443
      %v514 = vpack.c.b16 %v505, %v504
      %v515 = vpack.c.b16 %v507, %v506
      %v516 = vpack.c.b16 %v509, %v508
      %v517 = vpack.c.b16 %v511, %v510
      %v518 = vpack.c.b16 %v513, %v512
      %v525 = vsel %vm282, %v484, 0
      %v528 = vsel %vm282, %v485, 0
      %v531 = vsel %vm282, %v486, 0
      %v534 = vsel %vm282, %v487, 0
      %v537 = vsel %vm282, %v488, 0
      %v540 = vsel %vm282, %v489, 0
      %v543 = vsel %vm282, %v490, 0
      %v546 = vsel %vm282, %v491, 0
      %v549 = vsel %vm282, %v492, 0
      %v552 = vsel %vm282, %v493, 0
      %554 = vmatpush.bf16.msra.mxu0 0
      %555 = vmatpush.bf16.msra.mxu0 0
      %556 = vmatpush.bf16.msra.mxu0 0
      %557 = vmatpush.bf16.msra.mxu0 %v518
      %558 = vmatpush.bf16.msra.mxu0 %v517
      %559 = vmatpush.bf16.msra.mxu0 %v516
      %560 = vmatpush.bf16.msra.mxu0 %v515
      %561 = vmatpush.bf16.msra.mxu0 %v514
      %562 = vmatmul.bf16.gmra.mxu0 %v525
      %v563 = vpop.f32.mrf.mxu0
      %v564 = vadd.f32 0.0, %v563
      %v565 = vpop.f32.mrf.mxu0
      %v566 = vadd.f32 0.0, %v565
      %567 = vmatmul.bf16.gmra.mxu0 %v528
      %v568 = vpop.f32.mrf.mxu0
      %v569 = vadd.f32 0.0, %v568
      %v570 = vpop.f32.mrf.mxu0
      %v571 = vadd.f32 0.0, %v570
      %572 = vmatmul.bf16.gmra.mxu0 %v531
      %v573 = vpop.f32.mrf.mxu0
      %v574 = vadd.f32 0.0, %v573
      %v575 = vpop.f32.mrf.mxu0
      %v576 = vadd.f32 0.0, %v575
      %577 = vmatmul.bf16.gmra.mxu0 %v534
      %v578 = vpop.f32.mrf.mxu0
      %v579 = vadd.f32 0.0, %v578
      %v580 = vpop.f32.mrf.mxu0
      %v581 = vadd.f32 0.0, %v580
      %582 = vmatmul.bf16.gmra.mxu0 %v537
      %v583 = vpop.f32.mrf.mxu0
      %v584 = vadd.f32 0.0, %v583
      %v585 = vpop.f32.mrf.mxu0
      %v586 = vadd.f32 0.0, %v585
      %587 = vmatmul.bf16.gmra.mxu0 %v540
      %v588 = vpop.f32.mrf.mxu0
      %v589 = vadd.f32 0.0, %v588
      %v590 = vpop.f32.mrf.mxu0
      %v591 = vadd.f32 0.0, %v590
      %592 = vmatmul.bf16.gmra.mxu0 %v543
      %v593 = vpop.f32.mrf.mxu0
      %v594 = vadd.f32 0.0, %v593
      %v595 = vpop.f32.mrf.mxu0
      %v596 = vadd.f32 0.0, %v595
      %597 = vmatmul.bf16.gmra.mxu0 %v546
      %v598 = vpop.f32.mrf.mxu0
      %v599 = vadd.f32 0.0, %v598
      %v600 = vpop.f32.mrf.mxu0
      %v601 = vadd.f32 0.0, %v600
      %602 = vmatmul.bf16.gmra.mxu0 %v549
      %v603 = vpop.f32.mrf.mxu0
      %v604 = vadd.f32 0.0, %v603
      %v605 = vpop.f32.mrf.mxu0
      %v606 = vadd.f32 0.0, %v605
      %607 = vmatmul.bf16.gmra.mxu0 %v552
      %v608 = vpop.f32.mrf.mxu0
      %v609 = vadd.f32 0.0, %v608
      %v610 = vpop.f32.mrf.mxu0
      %v611 = vadd.f32 0.0, %v610
      %612 = vdwg.mxu0
      %v613 = vadd.f32 %v413, %v564
      %v614 = vadd.f32 %v414, %v566
      %v615 = vadd.f32 %v415, %v569
      %v616 = vadd.f32 %v416, %v571
      %v617 = vadd.f32 %v417, %v574
      %v618 = vadd.f32 %v418, %v576
      %v619 = vadd.f32 %v419, %v579
      %v620 = vadd.f32 %v420, %v581
      %v621 = vadd.f32 %v421, %v584
      %v622 = vadd.f32 %v422, %v586
      %v623 = vadd.f32 %v423, %v589
      %v624 = vadd.f32 %v424, %v591
      %v625 = vadd.f32 %v425, %v594
      %v626 = vadd.f32 %v426, %v596
      %v627 = vadd.f32 %v427, %v599
      %v628 = vadd.f32 %v428, %v601
      %v629 = vadd.f32 %v429, %v604
      %v630 = vadd.f32 %v430, %v606
      %v631 = vadd.f32 %v431, %v609
      %v632 = vadd.f32 %v432, %v611
      %633 = vst.msk [vmem:[#allocation2] sm:$0xff] %vm372, %v613
      %634 = vst.msk [vmem:[#allocation2 + $0x8] sm:$0xff] %vm372, %v614
      %635 = vst.msk [vmem:[#allocation2 + $0x10] sm:$0xff] %vm372, %v615
      %636 = vst.msk [vmem:[#allocation2 + $0x18] sm:$0xff] %vm372, %v616
      %637 = vst.msk [vmem:[#allocation2 + $0x20] sm:$0xff] %vm372, %v617
      %638 = vst.msk [vmem:[#allocation2 + $0x28] sm:$0xff] %vm372, %v618
      %639 = vst.msk [vmem:[#allocation2 + $0x30] sm:$0xff] %vm372, %v619
      %640 = vst.msk [vmem:[#allocation2 + $0x38] sm:$0xff] %vm372, %v620
      %641 = vst.msk [vmem:[#allocation2 + $0x40] sm:$0xff] %vm372, %v621
      %642 = vst.msk [vmem:[#allocation2 + $0x48] sm:$0xff] %vm372, %v622
      %643 = vst.msk [vmem:[#allocation2 + $0x50] sm:$0xff] %vm372, %v623
      %644 = vst.msk [vmem:[#allocation2 + $0x58] sm:$0xff] %vm372, %v624
      %645 = vst.msk [vmem:[#allocation2 + $0x60] sm:$0xff] %vm372, %v625
      %646 = vst.msk [vmem:[#allocation2 + $0x68] sm:$0xff] %vm372, %v626
      %647 = vst.msk [vmem:[#allocation2 + $0x70] sm:$0xff] %vm372, %v627
      %648 = vst.msk [vmem:[#allocation2 + $0x78] sm:$0xff] %vm372, %v628
      %649 = vst.msk [vmem:[#allocation2 + $0x80] sm:$0xff] %vm372, %v629
      %650 = vst.msk [vmem:[#allocation2 + $0x88] sm:$0xff] %vm372, %v630
      %651 = vst.msk [vmem:[#allocation2 + $0x90] sm:$0xff] %vm372, %v631
      %652 = vst.msk [vmem:[#allocation2 + $0x98] sm:$0xff] %vm372, %v632
      %v653 = vld [vmem:[%s165 + $0x10] sm:$0xf]
      %v654 = vld [vmem:[%s165 + $0x14] sm:$0xf]
      %v655 = vld [vmem:[%s165 + $0x18] sm:$0xf]
      %v656 = vld [vmem:[%s165 + $0x1c] sm:$0xf]
      %v657 = vld [vmem:[%s165 + $0x20] sm:$0xf]
      %v658 = vld [vmem:[%s165 + $0x24] sm:$0xf]
      %v659 = vld [vmem:[%s165 + $0x28] sm:$0xf]
      %v660 = vld [vmem:[%s165 + $0x2c] sm:$0xf]
      %v661 = vld [vmem:[%s165 + $0x30] sm:$0xf]
      %v662 = vld [vmem:[%s165 + $0x34] sm:$0xf]
      %v663 = vld [vmem:[%s165 + $0x38] sm:$0xf]
      %v664 = vld [vmem:[%s165 + $0x3c] sm:$0xf]
      %v665 = vld [vmem:[%s165 + $0x40] sm:$0xf]
      %v666 = vld [vmem:[%s165 + $0x44] sm:$0xf]
      %v667 = vld [vmem:[%s165 + $0x48] sm:$0xf]
      %v668 = vld [vmem:[%s165 + $0x4c] sm:$0xf]
      %v669 = vld [vmem:[%s165 + $0x50] sm:$0xf]
      %v670 = vld [vmem:[%s165 + $0x54] sm:$0xf]
      %v671 = vld [vmem:[%s165 + $0x58] sm:$0xf]
      %v672 = vld [vmem:[%s165 + $0x5c] sm:$0xf]
      %v673 = vld [vmem:[#allocation2] sm:$0xff]
      %v674 = vld [vmem:[#allocation2 + $0x8] sm:$0xff]
      %v675 = vld [vmem:[#allocation2 + $0x10] sm:$0xff]
      %v676 = vld [vmem:[#allocation2 + $0x18] sm:$0xff]
      %v677 = vld [vmem:[#allocation2 + $0x20] sm:$0xff]
      %v678 = vld [vmem:[#allocation2 + $0x28] sm:$0xff]
      %v679 = vld [vmem:[#allocation2 + $0x30] sm:$0xff]
      %v680 = vld [vmem:[#allocation2 + $0x38] sm:$0xff]
      %v681 = vld [vmem:[#allocation2 + $0x40] sm:$0xff]
      %v682 = vld [vmem:[#allocation2 + $0x48] sm:$0xff]
      %v683 = vld [vmem:[#allocation2 + $0x50] sm:$0xff]
      %v684 = vld [vmem:[#allocation2 + $0x58] sm:$0xff]
      %v685 = vld [vmem:[#allocation2 + $0x60] sm:$0xff]
      %v686 = vld [vmem:[#allocation2 + $0x68] sm:$0xff]
      %v687 = vld [vmem:[#allocation2 + $0x70] sm:$0xff]
      %v688 = vld [vmem:[#allocation2 + $0x78] sm:$0xff]
      %v689 = vld [vmem:[#allocation2 + $0x80] sm:$0xff]
      %v690 = vld [vmem:[#allocation2 + $0x88] sm:$0xff]
      %v691 = vld [vmem:[#allocation2 + $0x90] sm:$0xff]
      %v692 = vld [vmem:[#allocation2 + $0x98] sm:$0xff]
      %s693 = scalar_lea.vmem %s1, 80
      %v694 = vld [vmem:[%s693] sm:$0xf]
      %v695 = vld [vmem:[%s693 + $0x4] sm:$0xf]
      %v696 = vld [vmem:[%s693 + $0x8] sm:$0xf]
      %v697 = vld [vmem:[%s693 + $0xc] sm:$0xf]
      %v698 = vld [vmem:[%s693 + $0x10] sm:$0xf]
      %v699 = vld [vmem:[%s693 + $0x14] sm:$0xf]
      %v700 = vld [vmem:[%s693 + $0x18] sm:$0xf]
      %v701 = vld [vmem:[%s693 + $0x1c] sm:$0xf]
      %v702 = vld [vmem:[%s693 + $0x20] sm:$0xf]
      %v703 = vld [vmem:[%s693 + $0x24] sm:$0xf]
      %v724 = vunpack.c.l.b16 %v653
      %v725 = vunpack.c.l.b16 %v654
      %v726 = vunpack.c.l.b16 %v655
      %v727 = vunpack.c.l.b16 %v656
      %v728 = vunpack.c.l.b16 %v657
      %v729 = vunpack.c.l.b16 %v658
      %v730 = vunpack.c.l.b16 %v659
      %v731 = vunpack.c.l.b16 %v660
      %v732 = vunpack.c.l.b16 %v661
      %v733 = vunpack.c.l.b16 %v662
      %v734 = vunpack.c.l.b16 %v663
      %v735 = vunpack.c.l.b16 %v664
      %v736 = vunpack.c.l.b16 %v665
      %v737 = vunpack.c.l.b16 %v666
      %v738 = vunpack.c.l.b16 %v667
      %v739 = vunpack.c.l.b16 %v668
      %v740 = vunpack.c.l.b16 %v669
      %v741 = vunpack.c.l.b16 %v670
      %v742 = vunpack.c.l.b16 %v671
      %v743 = vunpack.c.l.b16 %v672
      %v744 = vpack.c.b16 %v725, %v724
      %v745 = vpack.c.b16 %v727, %v726
      %v746 = vpack.c.b16 %v729, %v728
      %v747 = vpack.c.b16 %v731, %v730
      %v748 = vpack.c.b16 %v733, %v732
      %v749 = vpack.c.b16 %v735, %v734
      %v750 = vpack.c.b16 %v737, %v736
      %v751 = vpack.c.b16 %v739, %v738
      %v752 = vpack.c.b16 %v741, %v740
      %v753 = vpack.c.b16 %v743, %v742
      %v764 = vunpack.c.l.b16 %v694
      %v765 = vunpack.c.l.b16 %v695
      %v766 = vunpack.c.l.b16 %v696
      %v767 = vunpack.c.l.b16 %v697
      %v768 = vunpack.c.l.b16 %v698
      %v769 = vunpack.c.l.b16 %v699
      %v770 = vunpack.c.l.b16 %v700
      %v771 = vunpack.c.l.b16 %v701
      %v772 = vunpack.c.l.b16 %v702
      %v773 = vunpack.c.l.b16 %v703
      %v774 = vpack.c.b16 %v765, %v764
      %v775 = vpack.c.b16 %v767, %v766
      %v776 = vpack.c.b16 %v769, %v768
      %v777 = vpack.c.b16 %v771, %v770
      %v778 = vpack.c.b16 %v773, %v772
      %v785 = vsel %vm282, %v744, 0
      %v788 = vsel %vm282, %v745, 0
      %v791 = vsel %vm282, %v746, 0
      %v794 = vsel %vm282, %v747, 0
      %v797 = vsel %vm282, %v748, 0
      %v800 = vsel %vm282, %v749, 0
      %v803 = vsel %vm282, %v750, 0
      %v806 = vsel %vm282, %v751, 0
      %v809 = vsel %vm282, %v752, 0
      %v812 = vsel %vm282, %v753, 0
      %814 = vmatpush.bf16.msra.mxu0 0
      %815 = vmatpush.bf16.msra.mxu0 0
      %816 = vmatpush.bf16.msra.mxu0 0
      %817 = vmatpush.bf16.msra.mxu0 %v778
      %818 = vmatpush.bf16.msra.mxu0 %v777
      %819 = vmatpush.bf16.msra.mxu0 %v776
      %820 = vmatpush.bf16.msra.mxu0 %v775
      %821 = vmatpush.bf16.msra.mxu0 %v774
      %822 = vmatmul.bf16.gmra.mxu0 %v785
      %v823 = vpop.f32.mrf.mxu0
      %v824 = vadd.f32 0.0, %v823
      %v825 = vpop.f32.mrf.mxu0
      %v826 = vadd.f32 0.0, %v825
      %827 = vmatmul.bf16.gmra.mxu0 %v788
      %v828 = vpop.f32.mrf.mxu0
      %v829 = vadd.f32 0.0, %v828
      %v830 = vpop.f32.mrf.mxu0
      %v831 = vadd.f32 0.0, %v830
      %832 = vmatmul.bf16.gmra.mxu0 %v791
      %v833 = vpop.f32.mrf.mxu0
      %v834 = vadd.f32 0.0, %v833
      %v835 = vpop.f32.mrf.mxu0
      %v836 = vadd.f32 0.0, %v835
      %837 = vmatmul.bf16.gmra.mxu0 %v794
      %v838 = vpop.f32.mrf.mxu0
      %v839 = vadd.f32 0.0, %v838
      %v840 = vpop.f32.mrf.mxu0
      %v841 = vadd.f32 0.0, %v840
      %842 = vmatmul.bf16.gmra.mxu0 %v797
      %v843 = vpop.f32.mrf.mxu0
      %v844 = vadd.f32 0.0, %v843
      %v845 = vpop.f32.mrf.mxu0
      %v846 = vadd.f32 0.0, %v845
      %847 = vmatmul.bf16.gmra.mxu0 %v800
      %v848 = vpop.f32.mrf.mxu0
      %v849 = vadd.f32 0.0, %v848
      %v850 = vpop.f32.mrf.mxu0
      %v851 = vadd.f32 0.0, %v850
      %852 = vmatmul.bf16.gmra.mxu0 %v803
      %v853 = vpop.f32.mrf.mxu0
      %v854 = vadd.f32 0.0, %v853
      %v855 = vpop.f32.mrf.mxu0
      %v856 = vadd.f32 0.0, %v855
      %857 = vmatmul.bf16.gmra.mxu0 %v806
      %v858 = vpop.f32.mrf.mxu0
      %v859 = vadd.f32 0.0, %v858
      %v860 = vpop.f32.mrf.mxu0
      %v861 = vadd.f32 0.0, %v860
      %862 = vmatmul.bf16.gmra.mxu0 %v809
      %v863 = vpop.f32.mrf.mxu0
      %v864 = vadd.f32 0.0, %v863
      %v865 = vpop.f32.mrf.mxu0
      %v866 = vadd.f32 0.0, %v865
      %867 = vmatmul.bf16.gmra.mxu0 %v812
      %v868 = vpop.f32.mrf.mxu0
      %v869 = vadd.f32 0.0, %v868
      %v870 = vpop.f32.mrf.mxu0
      %v871 = vadd.f32 0.0, %v870
      %872 = vdwg.mxu0
      %v873 = vadd.f32 %v673, %v824
      %v874 = vadd.f32 %v674, %v826
      %v875 = vadd.f32 %v675, %v829
      %v876 = vadd.f32 %v676, %v831
      %v877 = vadd.f32 %v677, %v834
      %v878 = vadd.f32 %v678, %v836
      %v879 = vadd.f32 %v679, %v839
      %v880 = vadd.f32 %v680, %v841
      %v881 = vadd.f32 %v681, %v844
      %v882 = vadd.f32 %v682, %v846
      %v883 = vadd.f32 %v683, %v849
      %v884 = vadd.f32 %v684, %v851
      %v885 = vadd.f32 %v685, %v854
      %v886 = vadd.f32 %v686, %v856
      %v887 = vadd.f32 %v687, %v859
      %v888 = vadd.f32 %v688, %v861
      %v889 = vadd.f32 %v689, %v864
      %v890 = vadd.f32 %v690, %v866
      %v891 = vadd.f32 %v691, %v869
      %v892 = vadd.f32 %v692, %v871
      %893 = vst.msk [vmem:[#allocation2] sm:$0xff] %vm372, %v873
      %894 = vst.msk [vmem:[#allocation2 + $0x8] sm:$0xff] %vm372, %v874
      %895 = vst.msk [vmem:[#allocation2 + $0x10] sm:$0xff] %vm372, %v875
      %896 = vst.msk [vmem:[#allocation2 + $0x18] sm:$0xff] %vm372, %v876
      %897 = vst.msk [vmem:[#allocation2 + $0x20] sm:$0xff] %vm372, %v877
      %898 = vst.msk [vmem:[#allocation2 + $0x28] sm:$0xff] %vm372, %v878
      %899 = vst.msk [vmem:[#allocation2 + $0x30] sm:$0xff] %vm372, %v879
      %900 = vst.msk [vmem:[#allocation2 + $0x38] sm:$0xff] %vm372, %v880
      %901 = vst.msk [vmem:[#allocation2 + $0x40] sm:$0xff] %vm372, %v881
      %902 = vst.msk [vmem:[#allocation2 + $0x48] sm:$0xff] %vm372, %v882
      %903 = vst.msk [vmem:[#allocation2 + $0x50] sm:$0xff] %vm372, %v883
      %904 = vst.msk [vmem:[#allocation2 + $0x58] sm:$0xff] %vm372, %v884
      %905 = vst.msk [vmem:[#allocation2 + $0x60] sm:$0xff] %vm372, %v885
      %906 = vst.msk [vmem:[#allocation2 + $0x68] sm:$0xff] %vm372, %v886
      %907 = vst.msk [vmem:[#allocation2 + $0x70] sm:$0xff] %vm372, %v887
      %908 = vst.msk [vmem:[#allocation2 + $0x78] sm:$0xff] %vm372, %v888
      %909 = vst.msk [vmem:[#allocation2 + $0x80] sm:$0xff] %vm372, %v889
      %910 = vst.msk [vmem:[#allocation2 + $0x88] sm:$0xff] %vm372, %v890
      %911 = vst.msk [vmem:[#allocation2 + $0x90] sm:$0xff] %vm372, %v891
      %912 = vst.msk [vmem:[#allocation2 + $0x98] sm:$0xff] %vm372, %v892
      %v913 = vld [vmem:[%s165 + $0x18] sm:$0xf]
      %v914 = vld [vmem:[%s165 + $0x1c] sm:$0xf]
      %v915 = vld [vmem:[%s165 + $0x20] sm:$0xf]
      %v916 = vld [vmem:[%s165 + $0x24] sm:$0xf]
      %v917 = vld [vmem:[%s165 + $0x28] sm:$0xf]
      %v918 = vld [vmem:[%s165 + $0x2c] sm:$0xf]
      %v919 = vld [vmem:[%s165 + $0x30] sm:$0xf]
      %v920 = vld [vmem:[%s165 + $0x34] sm:$0xf]
      %v921 = vld [vmem:[%s165 + $0x38] sm:$0xf]
      %v922 = vld [vmem:[%s165 + $0x3c] sm:$0xf]
      %v923 = vld [vmem:[%s165 + $0x40] sm:$0xf]
      %v924 = vld [vmem:[%s165 + $0x44] sm:$0xf]
      %v925 = vld [vmem:[%s165 + $0x48] sm:$0xf]
      %v926 = vld [vmem:[%s165 + $0x4c] sm:$0xf]
      %v927 = vld [vmem:[%s165 + $0x50] sm:$0xf]
      %v928 = vld [vmem:[%s165 + $0x54] sm:$0xf]
      %v929 = vld [vmem:[%s165 + $0x58] sm:$0xf]
      %v930 = vld [vmem:[%s165 + $0x5c] sm:$0xf]
      %v931 = vld [vmem:[%s165 + $0x60] sm:$0xf]
      %v932 = vld [vmem:[%s165 + $0x64] sm:$0xf]
      %v933 = vld [vmem:[#allocation2] sm:$0xff]
      %v934 = vld [vmem:[#allocation2 + $0x8] sm:$0xff]
      %v935 = vld [vmem:[#allocation2 + $0x10] sm:$0xff]
      %v936 = vld [vmem:[#allocation2 + $0x18] sm:$0xff]
      %v937 = vld [vmem:[#allocation2 + $0x20] sm:$0xff]
      %v938 = vld [vmem:[#allocation2 + $0x28] sm:$0xff]
      %v939 = vld [vmem:[#allocation2 + $0x30] sm:$0xff]
      %v940 = vld [vmem:[#allocation2 + $0x38] sm:$0xff]
      %v941 = vld [vmem:[#allocation2 + $0x40] sm:$0xff]
      %v942 = vld [vmem:[#allocation2 + $0x48] sm:$0xff]
      %v943 = vld [vmem:[#allocation2 + $0x50] sm:$0xff]
      %v944 = vld [vmem:[#allocation2 + $0x58] sm:$0xff]
      %v945 = vld [vmem:[#allocation2 + $0x60] sm:$0xff]
      %v946 = vld [vmem:[#allocation2 + $0x68] sm:$0xff]
      %v947 = vld [vmem:[#allocation2 + $0x70] sm:$0xff]
      %v948 = vld [vmem:[#allocation2 + $0x78] sm:$0xff]
      %v949 = vld [vmem:[#allocation2 + $0x80] sm:$0xff]
      %v950 = vld [vmem:[#allocation2 + $0x88] sm:$0xff]
      %v951 = vld [vmem:[#allocation2 + $0x90] sm:$0xff]
      %v952 = vld [vmem:[#allocation2 + $0x98] sm:$0xff]
      %s953 = scalar_lea.vmem %s1, 120
      %v954 = vld [vmem:[%s953] sm:$0xf]
      %v955 = vld [vmem:[%s953 + $0x4] sm:$0xf]
      %v956 = vld [vmem:[%s953 + $0x8] sm:$0xf]
      %v957 = vld [vmem:[%s953 + $0xc] sm:$0xf]
      %v958 = vld [vmem:[%s953 + $0x10] sm:$0xf]
      %v959 = vld [vmem:[%s953 + $0x14] sm:$0xf]
      %v960 = vld [vmem:[%s953 + $0x18] sm:$0xf]
      %v961 = vld [vmem:[%s953 + $0x1c] sm:$0xf]
      %v962 = vld [vmem:[%s953 + $0x20] sm:$0xf]
      %v963 = vld [vmem:[%s953 + $0x24] sm:$0xf]
      %v984 = vunpack.c.l.b16 %v913
      %v985 = vunpack.c.l.b16 %v914
      %v986 = vunpack.c.l.b16 %v915
      %v987 = vunpack.c.l.b16 %v916
      %v988 = vunpack.c.l.b16 %v917
      %v989 = vunpack.c.l.b16 %v918
      %v990 = vunpack.c.l.b16 %v919
      %v991 = vunpack.c.l.b16 %v920
      %v992 = vunpack.c.l.b16 %v921
      %v993 = vunpack.c.l.b16 %v922
      %v994 = vunpack.c.l.b16 %v923
      %v995 = vunpack.c.l.b16 %v924
      %v996 = vunpack.c.l.b16 %v925
      %v997 = vunpack.c.l.b16 %v926
      %v998 = vunpack.c.l.b16 %v927
      %v999 = vunpack.c.l.b16 %v928
      %v1000 = vunpack.c.l.b16 %v929
      %v1001 = vunpack.c.l.b16 %v930
      %v1002 = vunpack.c.l.b16 %v931
      %v1003 = vunpack.c.l.b16 %v932
      %v1004 = vpack.c.b16 %v985, %v984
      %v1005 = vpack.c.b16 %v987, %v986
      %v1006 = vpack.c.b16 %v989, %v988
      %v1007 = vpack.c.b16 %v991, %v990
      %v1008 = vpack.c.b16 %v993, %v992
      %v1009 = vpack.c.b16 %v995, %v994
      %v1010 = vpack.c.b16 %v997, %v996
      %v1011 = vpack.c.b16 %v999, %v998
      %v1012 = vpack.c.b16 %v1001, %v1000
      %v1013 = vpack.c.b16 %v1003, %v1002
      %v1024 = vunpack.c.l.b16 %v954
      %v1025 = vunpack.c.l.b16 %v955
      %v1026 = vunpack.c.l.b16 %v956
      %v1027 = vunpack.c.l.b16 %v957
      %v1028 = vunpack.c.l.b16 %v958
      %v1029 = vunpack.c.l.b16 %v959
      %v1030 = vunpack.c.l.b16 %v960
      %v1031 = vunpack.c.l.b16 %v961
      %v1032 = vunpack.c.l.b16 %v962
      %v1033 = vunpack.c.l.b16 %v963
      %v1034 = vpack.c.b16 %v1025, %v1024
      %v1035 = vpack.c.b16 %v1027, %v1026
      %v1036 = vpack.c.b16 %v1029, %v1028
      %v1037 = vpack.c.b16 %v1031, %v1030
      %v1038 = vpack.c.b16 %v1033, %v1032
      %v1045 = vsel %vm282, %v1004, 0
      %v1048 = vsel %vm282, %v1005, 0
      %v1051 = vsel %vm282, %v1006, 0
      %v1054 = vsel %vm282, %v1007, 0
      %v1057 = vsel %vm282, %v1008, 0
      %v1060 = vsel %vm282, %v1009, 0
      %v1063 = vsel %vm282, %v1010, 0
      %v1066 = vsel %vm282, %v1011, 0
      %v1069 = vsel %vm282, %v1012, 0
      %v1072 = vsel %vm282, %v1013, 0
      %1074 = vmatpush.bf16.msra.mxu0 0
      %1075 = vmatpush.bf16.msra.mxu0 0
      %1076 = vmatpush.bf16.msra.mxu0 0
      %1077 = vmatpush.bf16.msra.mxu0 %v1038
      %1078 = vmatpush.bf16.msra.mxu0 %v1037
      %1079 = vmatpush.bf16.msra.mxu0 %v1036
      %1080 = vmatpush.bf16.msra.mxu0 %v1035
      %1081 = vmatpush.bf16.msra.mxu0 %v1034
      %1082 = vmatmul.bf16.gmra.mxu0 %v1045
      %v1083 = vpop.f32.mrf.mxu0
      %v1084 = vadd.f32 0.0, %v1083
      %v1085 = vpop.f32.mrf.mxu0
      %v1086 = vadd.f32 0.0, %v1085
      %1087 = vmatmul.bf16.gmra.mxu0 %v1048
      %v1088 = vpop.f32.mrf.mxu0
      %v1089 = vadd.f32 0.0, %v1088
      %v1090 = vpop.f32.mrf.mxu0
      %v1091 = vadd.f32 0.0, %v1090
      %1092 = vmatmul.bf16.gmra.mxu0 %v1051
      %v1093 = vpop.f32.mrf.mxu0
      %v1094 = vadd.f32 0.0, %v1093
      %v1095 = vpop.f32.mrf.mxu0
      %v1096 = vadd.f32 0.0, %v1095
      %1097 = vmatmul.bf16.gmra.mxu0 %v1054
      %v1098 = vpop.f32.mrf.mxu0
      %v1099 = vadd.f32 0.0, %v1098
      %v1100 = vpop.f32.mrf.mxu0
      %v1101 = vadd.f32 0.0, %v1100
      %1102 = vmatmul.bf16.gmra.mxu0 %v1057
      %v1103 = vpop.f32.mrf.mxu0
      %v1104 = vadd.f32 0.0, %v1103
      %v1105 = vpop.f32.mrf.mxu0
      %v1106 = vadd.f32 0.0, %v1105
      %1107 = vmatmul.bf16.gmra.mxu0 %v1060
      %v1108 = vpop.f32.mrf.mxu0
      %v1109 = vadd.f32 0.0, %v1108
      %v1110 = vpop.f32.mrf.mxu0
      %v1111 = vadd.f32 0.0, %v1110
      %1112 = vmatmul.bf16.gmra.mxu0 %v1063
      %v1113 = vpop.f32.mrf.mxu0
      %v1114 = vadd.f32 0.0, %v1113
      %v1115 = vpop.f32.mrf.mxu0
      %v1116 = vadd.f32 0.0, %v1115
      %1117 = vmatmul.bf16.gmra.mxu0 %v1066
      %v1118 = vpop.f32.mrf.mxu0
      %v1119 = vadd.f32 0.0, %v1118
      %v1120 = vpop.f32.mrf.mxu0
      %v1121 = vadd.f32 0.0, %v1120
      %1122 = vmatmul.bf16.gmra.mxu0 %v1069
      %v1123 = vpop.f32.mrf.mxu0
      %v1124 = vadd.f32 0.0, %v1123
      %v1125 = vpop.f32.mrf.mxu0
      %v1126 = vadd.f32 0.0, %v1125
      %1127 = vmatmul.bf16.gmra.mxu0 %v1072
      %v1128 = vpop.f32.mrf.mxu0
      %v1129 = vadd.f32 0.0, %v1128
      %v1130 = vpop.f32.mrf.mxu0
      %v1131 = vadd.f32 0.0, %v1130
      %1132 = vdwg.mxu0
      %v1133 = vadd.f32 %v933, %v1084
      %v1134 = vadd.f32 %v934, %v1086
      %v1135 = vadd.f32 %v935, %v1089
      %v1136 = vadd.f32 %v936, %v1091
      %v1137 = vadd.f32 %v937, %v1094
      %v1138 = vadd.f32 %v938, %v1096
      %v1139 = vadd.f32 %v939, %v1099
      %v1140 = vadd.f32 %v940, %v1101
      %v1141 = vadd.f32 %v941, %v1104
      %v1142 = vadd.f32 %v942, %v1106
      %v1143 = vadd.f32 %v943, %v1109
      %v1144 = vadd.f32 %v944, %v1111
      %v1145 = vadd.f32 %v945, %v1114
      %v1146 = vadd.f32 %v946, %v1116
      %v1147 = vadd.f32 %v947, %v1119
      %v1148 = vadd.f32 %v948, %v1121
      %v1149 = vadd.f32 %v949, %v1124
      %v1150 = vadd.f32 %v950, %v1126
      %v1151 = vadd.f32 %v951, %v1129
      %v1152 = vadd.f32 %v952, %v1131
      %1153 = vst.msk [vmem:[#allocation2] sm:$0xff] %vm372, %v1133
      %1154 = vst.msk [vmem:[#allocation2 + $0x8] sm:$0xff] %vm372, %v1134
      %1155 = vst.msk [vmem:[#allocation2 + $0x10] sm:$0xff] %vm372, %v1135
      %1156 = vst.msk [vmem:[#allocation2 + $0x18] sm:$0xff] %vm372, %v1136
      %1157 = vst.msk [vmem:[#allocation2 + $0x20] sm:$0xff] %vm372, %v1137
      %1158 = vst.msk [vmem:[#allocation2 + $0x28] sm:$0xff] %vm372, %v1138
      %1159 = vst.msk [vmem:[#allocation2 + $0x30] sm:$0xff] %vm372, %v1139
      %1160 = vst.msk [vmem:[#allocation2 + $0x38] sm:$0xff] %vm372, %v1140
      %1161 = vst.msk [vmem:[#allocation2 + $0x40] sm:$0xff] %vm372, %v1141
      %1162 = vst.msk [vmem:[#allocation2 + $0x48] sm:$0xff] %vm372, %v1142
      %1163 = vst.msk [vmem:[#allocation2 + $0x50] sm:$0xff] %vm372, %v1143
      %1164 = vst.msk [vmem:[#allocation2 + $0x58] sm:$0xff] %vm372, %v1144
      %1165 = vst.msk [vmem:[#allocation2 + $0x60] sm:$0xff] %vm372, %v1145
      %1166 = vst.msk [vmem:[#allocation2 + $0x68] sm:$0xff] %vm372, %v1146
      %1167 = vst.msk [vmem:[#allocation2 + $0x70] sm:$0xff] %vm372, %v1147
      %1168 = vst.msk [vmem:[#allocation2 + $0x78] sm:$0xff] %vm372, %v1148
      %1169 = vst.msk [vmem:[#allocation2 + $0x80] sm:$0xff] %vm372, %v1149
      %1170 = vst.msk [vmem:[#allocation2 + $0x88] sm:$0xff] %vm372, %v1150
      %1171 = vst.msk [vmem:[#allocation2 + $0x90] sm:$0xff] %vm372, %v1151
      %1172 = vst.msk [vmem:[#allocation2 + $0x98] sm:$0xff] %vm372, %v1152
      %v1173 = vld [vmem:[%s165 + $0x20] sm:$0xf]
      %v1174 = vld [vmem:[%s165 + $0x24] sm:$0xf]
      %v1175 = vld [vmem:[%s165 + $0x28] sm:$0xf]
      %v1176 = vld [vmem:[%s165 + $0x2c] sm:$0xf]
      %v1177 = vld [vmem:[%s165 + $0x30] sm:$0xf]
      %v1178 = vld [vmem:[%s165 + $0x34] sm:$0xf]
      %v1179 = vld [vmem:[%s165 + $0x38] sm:$0xf]
      %v1180 = vld [vmem:[%s165 + $0x3c] sm:$0xf]
      %v1181 = vld [vmem:[%s165 + $0x40] sm:$0xf]
      %v1182 = vld [vmem:[%s165 + $0x44] sm:$0xf]
      %v1183 = vld [vmem:[%s165 + $0x48] sm:$0xf]
      %v1184 = vld [vmem:[%s165 + $0x4c] sm:$0xf]
      %v1185 = vld [vmem:[%s165 + $0x50] sm:$0xf]
      %v1186 = vld [vmem:[%s165 + $0x54] sm:$0xf]
      %v1187 = vld [vmem:[%s165 + $0x58] sm:$0xf]
      %v1188 = vld [vmem:[%s165 + $0x5c] sm:$0xf]
      %v1189 = vld [vmem:[%s165 + $0x60] sm:$0xf]
      %v1190 = vld [vmem:[%s165 + $0x64] sm:$0xf]
      %v1191 = vld [vmem:[%s165 + $0x68] sm:$0xf]
      %v1192 = vld [vmem:[%s165 + $0x6c] sm:$0xf]
      %v1193 = vld [vmem:[#allocation2] sm:$0xff]
      %v1194 = vld [vmem:[#allocation2 + $0x8] sm:$0xff]
      %v1195 = vld [vmem:[#allocation2 + $0x10] sm:$0xff]
      %v1196 = vld [vmem:[#allocation2 + $0x18] sm:$0xff]
      %v1197 = vld [vmem:[#allocation2 + $0x20] sm:$0xff]
      %v1198 = vld [vmem:[#allocation2 + $0x28] sm:$0xff]
      %v1199 = vld [vmem:[#allocation2 + $0x30] sm:$0xff]
      %v1200 = vld [vmem:[#allocation2 + $0x38] sm:$0xff]
      %v1201 = vld [vmem:[#allocation2 + $0x40] sm:$0xff]
      %v1202 = vld [vmem:[#allocation2 + $0x48] sm:$0xff]
      %v1203 = vld [vmem:[#allocation2 + $0x50] sm:$0xff]
      %v1204 = vld [vmem:[#allocation2 + $0x58] sm:$0xff]
      %v1205 = vld [vmem:[#allocation2 + $0x60] sm:$0xff]
      %v1206 = vld [vmem:[#allocation2 + $0x68] sm:$0xff]
      %v1207 = vld [vmem:[#allocation2 + $0x70] sm:$0xff]
      %v1208 = vld [vmem:[#allocation2 + $0x78] sm:$0xff]
      %v1209 = vld [vmem:[#allocation2 + $0x80] sm:$0xff]
      %v1210 = vld [vmem:[#allocation2 + $0x88] sm:$0xff]
      %v1211 = vld [vmem:[#allocation2 + $0x90] sm:$0xff]
      %v1212 = vld [vmem:[#allocation2 + $0x98] sm:$0xff]
      %s1213 = scalar_lea.vmem %s1, 160
      %v1214 = vld [vmem:[%s1213] sm:$0xf]
      %v1215 = vld [vmem:[%s1213 + $0x4] sm:$0xf]
      %v1216 = vld [vmem:[%s1213 + $0x8] sm:$0xf]
      %v1217 = vld [vmem:[%s1213 + $0xc] sm:$0xf]
      %v1218 = vld [vmem:[%s1213 + $0x10] sm:$0xf]
      %v1219 = vld [vmem:[%s1213 + $0x14] sm:$0xf]
      %v1220 = vld [vmem:[%s1213 + $0x18] sm:$0xf]
      %v1221 = vld [vmem:[%s1213 + $0x1c] sm:$0xf]
      %v1222 = vld [vmem:[%s1213 + $0x20] sm:$0xf]
      %v1223 = vld [vmem:[%s1213 + $0x24] sm:$0xf]
      %v1244 = vunpack.c.l.b16 %v1173
      %v1245 = vunpack.c.l.b16 %v1174
      %v1246 = vunpack.c.l.b16 %v1175
      %v1247 = vunpack.c.l.b16 %v1176
      %v1248 = vunpack.c.l.b16 %v1177
      %v1249 = vunpack.c.l.b16 %v1178
      %v1250 = vunpack.c.l.b16 %v1179
      %v1251 = vunpack.c.l.b16 %v1180
      %v1252 = vunpack.c.l.b16 %v1181
      %v1253 = vunpack.c.l.b16 %v1182
      %v1254 = vunpack.c.l.b16 %v1183
      %v1255 = vunpack.c.l.b16 %v1184
      %v1256 = vunpack.c.l.b16 %v1185
      %v1257 = vunpack.c.l.b16 %v1186
      %v1258 = vunpack.c.l.b16 %v1187
      %v1259 = vunpack.c.l.b16 %v1188
      %v1260 = vunpack.c.l.b16 %v1189
      %v1261 = vunpack.c.l.b16 %v1190
      %v1262 = vunpack.c.l.b16 %v1191
      %v1263 = vunpack.c.l.b16 %v1192
      %v1264 = vpack.c.b16 %v1245, %v1244
      %v1265 = vpack.c.b16 %v1247, %v1246
      %v1266 = vpack.c.b16 %v1249, %v1248
      %v1267 = vpack.c.b16 %v1251, %v1250
      %v1268 = vpack.c.b16 %v1253, %v1252
      %v1269 = vpack.c.b16 %v1255, %v1254
      %v1270 = vpack.c.b16 %v1257, %v1256
      %v1271 = vpack.c.b16 %v1259, %v1258
      %v1272 = vpack.c.b16 %v1261, %v1260
      %v1273 = vpack.c.b16 %v1263, %v1262
      %v1284 = vunpack.c.l.b16 %v1214
      %v1285 = vunpack.c.l.b16 %v1215
      %v1286 = vunpack.c.l.b16 %v1216
      %v1287 = vunpack.c.l.b16 %v1217
      %v1288 = vunpack.c.l.b16 %v1218
      %v1289 = vunpack.c.l.b16 %v1219
      %v1290 = vunpack.c.l.b16 %v1220
      %v1291 = vunpack.c.l.b16 %v1221
      %v1292 = vunpack.c.l.b16 %v1222
      %v1293 = vunpack.c.l.b16 %v1223
      %v1294 = vpack.c.b16 %v1285, %v1284
      %v1295 = vpack.c.b16 %v1287, %v1286
      %v1296 = vpack.c.b16 %v1289, %v1288
      %v1297 = vpack.c.b16 %v1291, %v1290
      %v1298 = vpack.c.b16 %v1293, %v1292
      %v1305 = vsel %vm282, %v1264, 0
      %v1308 = vsel %vm282, %v1265, 0
      %v1311 = vsel %vm282, %v1266, 0
      %v1314 = vsel %vm282, %v1267, 0
      %v1317 = vsel %vm282, %v1268, 0
      %v1320 = vsel %vm282, %v1269, 0
      %v1323 = vsel %vm282, %v1270, 0
      %v1326 = vsel %vm282, %v1271, 0
      %v1329 = vsel %vm282, %v1272, 0
      %v1332 = vsel %vm282, %v1273, 0
      %1334 = vmatpush.bf16.msra.mxu0 0
      %1335 = vmatpush.bf16.msra.mxu0 0
      %1336 = vmatpush.bf16.msra.mxu0 0
      %1337 = vmatpush.bf16.msra.mxu0 %v1298
      %1338 = vmatpush.bf16.msra.mxu0 %v1297
      %1339 = vmatpush.bf16.msra.mxu0 %v1296
      %1340 = vmatpush.bf16.msra.mxu0 %v1295
      %1341 = vmatpush.bf16.msra.mxu0 %v1294
      %1342 = vmatmul.bf16.gmra.mxu0 %v1305
      %v1343 = vpop.f32.mrf.mxu0
      %v1344 = vadd.f32 0.0, %v1343
      %v1345 = vpop.f32.mrf.mxu0
      %v1346 = vadd.f32 0.0, %v1345
      %1347 = vmatmul.bf16.gmra.mxu0 %v1308
      %v1348 = vpop.f32.mrf.mxu0
      %v1349 = vadd.f32 0.0, %v1348
      %v1350 = vpop.f32.mrf.mxu0
      %v1351 = vadd.f32 0.0, %v1350
      %1352 = vmatmul.bf16.gmra.mxu0 %v1311
      %v1353 = vpop.f32.mrf.mxu0
      %v1354 = vadd.f32 0.0, %v1353
      %v1355 = vpop.f32.mrf.mxu0
      %v1356 = vadd.f32 0.0, %v1355
      %1357 = vmatmul.bf16.gmra.mxu0 %v1314
      %v1358 = vpop.f32.mrf.mxu0
      %v1359 = vadd.f32 0.0, %v1358
      %v1360 = vpop.f32.mrf.mxu0
      %v1361 = vadd.f32 0.0, %v1360
      %1362 = vmatmul.bf16.gmra.mxu0 %v1317
      %v1363 = vpop.f32.mrf.mxu0
      %v1364 = vadd.f32 0.0, %v1363
      %v1365 = vpop.f32.mrf.mxu0
      %v1366 = vadd.f32 0.0, %v1365
      %1367 = vmatmul.bf16.gmra.mxu0 %v1320
      %v1368 = vpop.f32.mrf.mxu0
      %v1369 = vadd.f32 0.0, %v1368
      %v1370 = vpop.f32.mrf.mxu0
      %v1371 = vadd.f32 0.0, %v1370
      %1372 = vmatmul.bf16.gmra.mxu0 %v1323
      %v1373 = vpop.f32.mrf.mxu0
      %v1374 = vadd.f32 0.0, %v1373
      %v1375 = vpop.f32.mrf.mxu0
      %v1376 = vadd.f32 0.0, %v1375
      %1377 = vmatmul.bf16.gmra.mxu0 %v1326
      %v1378 = vpop.f32.mrf.mxu0
      %v1379 = vadd.f32 0.0, %v1378
      %v1380 = vpop.f32.mrf.mxu0
      %v1381 = vadd.f32 0.0, %v1380
      %1382 = vmatmul.bf16.gmra.mxu0 %v1329
      %v1383 = vpop.f32.mrf.mxu0
      %v1384 = vadd.f32 0.0, %v1383
      %v1385 = vpop.f32.mrf.mxu0
      %v1386 = vadd.f32 0.0, %v1385
      %1387 = vmatmul.bf16.gmra.mxu0 %v1332
      %v1388 = vpop.f32.mrf.mxu0
      %v1389 = vadd.f32 0.0, %v1388
      %v1390 = vpop.f32.mrf.mxu0
      %v1391 = vadd.f32 0.0, %v1390
      %1392 = vdwg.mxu0
      %v1393 = vadd.f32 %v1193, %v1344
      %v1394 = vadd.f32 %v1194, %v1346
      %v1395 = vadd.f32 %v1195, %v1349
      %v1396 = vadd.f32 %v1196, %v1351
      %v1397 = vadd.f32 %v1197, %v1354
      %v1398 = vadd.f32 %v1198, %v1356
      %v1399 = vadd.f32 %v1199, %v1359
      %v1400 = vadd.f32 %v1200, %v1361
      %v1401 = vadd.f32 %v1201, %v1364
      %v1402 = vadd.f32 %v1202, %v1366
      %v1403 = vadd.f32 %v1203, %v1369
      %v1404 = vadd.f32 %v1204, %v1371
      %v1405 = vadd.f32 %v1205, %v1374
      %v1406 = vadd.f32 %v1206, %v1376
      %v1407 = vadd.f32 %v1207, %v1379
      %v1408 = vadd.f32 %v1208, %v1381
      %v1409 = vadd.f32 %v1209, %v1384
      %v1410 = vadd.f32 %v1210, %v1386
      %v1411 = vadd.f32 %v1211, %v1389
      %v1412 = vadd.f32 %v1212, %v1391
      %1413 = vst.msk [vmem:[#allocation2] sm:$0xff] %vm372, %v1393
      %1414 = vst.msk [vmem:[#allocation2 + $0x8] sm:$0xff] %vm372, %v1394
      %1415 = vst.msk [vmem:[#allocation2 + $0x10] sm:$0xff] %vm372, %v1395
      %1416 = vst.msk [vmem:[#allocation2 + $0x18] sm:$0xff] %vm372, %v1396
      %1417 = vst.msk [vmem:[#allocation2 + $0x20] sm:$0xff] %vm372, %v1397
      %1418 = vst.msk [vmem:[#allocation2 + $0x28] sm:$0xff] %vm372, %v1398
      %1419 = vst.msk [vmem:[#allocation2 + $0x30] sm:$0xff] %vm372, %v1399
      %1420 = vst.msk [vmem:[#allocation2 + $0x38] sm:$0xff] %vm372, %v1400
      %1421 = vst.msk [vmem:[#allocation2 + $0x40] sm:$0xff] %vm372, %v1401
      %1422 = vst.msk [vmem:[#allocation2 + $0x48] sm:$0xff] %vm372, %v1402
      %1423 = vst.msk [vmem:[#allocation2 + $0x50] sm:$0xff] %vm372, %v1403
      %1424 = vst.msk [vmem:[#allocation2 + $0x58] sm:$0xff] %vm372, %v1404
      %1425 = vst.msk [vmem:[#allocation2 + $0x60] sm:$0xff] %vm372, %v1405
      %1426 = vst.msk [vmem:[#allocation2 + $0x68] sm:$0xff] %vm372, %v1406
      %1427 = vst.msk [vmem:[#allocation2 + $0x70] sm:$0xff] %vm372, %v1407
      %1428 = vst.msk [vmem:[#allocation2 + $0x78] sm:$0xff] %vm372, %v1408
      %1429 = vst.msk [vmem:[#allocation2 + $0x80] sm:$0xff] %vm372, %v1409
      %1430 = vst.msk [vmem:[#allocation2 + $0x88] sm:$0xff] %vm372, %v1410
      %1431 = vst.msk [vmem:[#allocation2 + $0x90] sm:$0xff] %vm372, %v1411
      %1432 = vst.msk [vmem:[#allocation2 + $0x98] sm:$0xff] %vm372, %v1412
      %v1433 = vld [vmem:[#allocation2] sm:$0xff]
      %v1434 = vld [vmem:[#allocation2 + $0x8] sm:$0xff]
      %v1435 = vld [vmem:[#allocation2 + $0x10] sm:$0xff]
      %v1436 = vld [vmem:[#allocation2 + $0x18] sm:$0xff]
      %v1437 = vld [vmem:[#allocation2 + $0x20] sm:$0xff]
      %v1438 = vld [vmem:[#allocation2 + $0x28] sm:$0xff]
      %v1439 = vld [vmem:[#allocation2 + $0x30] sm:$0xff]
      %v1440 = vld [vmem:[#allocation2 + $0x38] sm:$0xff]
      %v1441 = vld [vmem:[#allocation2 + $0x40] sm:$0xff]
      %v1442 = vld [vmem:[#allocation2 + $0x48] sm:$0xff]
      %v1443 = vld [vmem:[#allocation2 + $0x50] sm:$0xff]
      %v1444 = vld [vmem:[#allocation2 + $0x58] sm:$0xff]
      %v1445 = vld [vmem:[#allocation2 + $0x60] sm:$0xff]
      %v1446 = vld [vmem:[#allocation2 + $0x68] sm:$0xff]
      %v1447 = vld [vmem:[#allocation2 + $0x70] sm:$0xff]
      %v1448 = vld [vmem:[#allocation2 + $0x78] sm:$0xff]
      %v1449 = vld [vmem:[#allocation2 + $0x80] sm:$0xff]
      %v1450 = vld [vmem:[#allocation2 + $0x88] sm:$0xff]
      %v1451 = vld [vmem:[#allocation2 + $0x90] sm:$0xff]
      %v1452 = vld [vmem:[#allocation2 + $0x98] sm:$0xff]
      %v1453 = vld [vmem:[%s2] sm:$0x1]
      %v1455 = vperm.slane %v1453, 0
      %v1457 = vadd.f32 %v1433, %v1455
      %v1458 = vadd.f32 %v1434, %v1455
      %v1459 = vadd.f32 %v1435, %v1455
      %v1460 = vadd.f32 %v1436, %v1455
      %v1461 = vadd.f32 %v1437, %v1455
      %v1462 = vadd.f32 %v1438, %v1455
      %v1463 = vadd.f32 %v1439, %v1455
      %v1464 = vadd.f32 %v1440, %v1455
      %v1465 = vadd.f32 %v1441, %v1455
      %v1466 = vadd.f32 %v1442, %v1455
      %v1467 = vadd.f32 %v1443, %v1455
      %v1468 = vadd.f32 %v1444, %v1455
      %v1469 = vadd.f32 %v1445, %v1455
      %v1470 = vadd.f32 %v1446, %v1455
      %v1471 = vadd.f32 %v1447, %v1455
      %v1472 = vadd.f32 %v1448, %v1455
      %v1473 = vadd.f32 %v1449, %v1455
      %v1474 = vadd.f32 %v1450, %v1455
      %v1475 = vadd.f32 %v1451, %v1455
      %v1476 = vadd.f32 %v1452, %v1455
      %v1477 = vmax.f32 %v1457, 0.0
      %v1478 = vmax.f32 %v1458, 0.0
      %v1479 = vmax.f32 %v1459, 0.0
      %v1480 = vmax.f32 %v1460, 0.0
      %v1481 = vmax.f32 %v1461, 0.0
      %v1482 = vmax.f32 %v1462, 0.0
      %v1483 = vmax.f32 %v1463, 0.0
      %v1484 = vmax.f32 %v1464, 0.0
      %v1485 = vmax.f32 %v1465, 0.0
      %v1486 = vmax.f32 %v1466, 0.0
      %v1487 = vmax.f32 %v1467, 0.0
      %v1488 = vmax.f32 %v1468, 0.0
      %v1489 = vmax.f32 %v1469, 0.0
      %v1490 = vmax.f32 %v1470, 0.0
      %v1491 = vmax.f32 %v1471, 0.0
      %v1492 = vmax.f32 %v1472, 0.0
      %v1493 = vmax.f32 %v1473, 0.0
      %v1494 = vmax.f32 %v1474, 0.0
      %v1495 = vmax.f32 %v1475, 0.0
      %v1496 = vmax.f32 %v1476, 0.0
      %1497 = vst.msk [vmem:[%s170] sm:$0xff] %vm372, %v1477
      %1498 = vst.msk [vmem:[%s170 + $0x8] sm:$0xff] %vm372, %v1478
      %1499 = vst.msk [vmem:[%s170 + $0x10] sm:$0xff] %vm372, %v1479
      %1500 = vst.msk [vmem:[%s170 + $0x18] sm:$0xff] %vm372, %v1480
      %1501 = vst.msk [vmem:[%s170 + $0x20] sm:$0xff] %vm372, %v1481
      %1502 = vst.msk [vmem:[%s170 + $0x28] sm:$0xff] %vm372, %v1482
      %1503 = vst.msk [vmem:[%s170 + $0x30] sm:$0xff] %vm372, %v1483
      %1504 = vst.msk [vmem:[%s170 + $0x38] sm:$0xff] %vm372, %v1484
      %1505 = vst.msk [vmem:[%s170 + $0x40] sm:$0xff] %vm372, %v1485
      %1506 = vst.msk [vmem:[%s170 + $0x48] sm:$0xff] %vm372, %v1486
      %1507 = vst.msk [vmem:[%s170 + $0x50] sm:$0xff] %vm372, %v1487
      %1508 = vst.msk [vmem:[%s170 + $0x58] sm:$0xff] %vm372, %v1488
      %1509 = vst.msk [vmem:[%s170 + $0x60] sm:$0xff] %vm372, %v1489
      %1510 = vst.msk [vmem:[%s170 + $0x68] sm:$0xff] %vm372, %v1490
      %1511 = vst.msk [vmem:[%s170 + $0x70] sm:$0xff] %vm372, %v1491
      %1512 = vst.msk [vmem:[%s170 + $0x78] sm:$0xff] %vm372, %v1492
      %1513 = vst.msk [vmem:[%s170 + $0x80] sm:$0xff] %vm372, %v1493
      %1514 = vst.msk [vmem:[%s170 + $0x88] sm:$0xff] %vm372, %v1494
      %1515 = vst.msk [vmem:[%s170 + $0x90] sm:$0xff] %vm372, %v1495
      %1516 = vst.msk [vmem:[%s170 + $0x98] sm:$0xff] %vm372, %v1496
      %p1517 = scmp.lt.s32.totalorder %s14, 1
      %s1518 = scalar_select %p1517, %s14, 1
      %s1519 = smul.addr %s1518, 20
      %s1520 = smul.addr %s1519, 8
      %s1521 = scalar_lea.vmem %s3, %s1520
      // Predicated region
      $region33: #{lenet_forward.4} parent=31 // pred_check
        %p1522 = pneg %p100
      $region34: #{lenet_forward.4} parent=31 // pred_check_branch
        %1524 = sbr.rel (%p1522) target = $region36
      $region35: #{lenet_forward.4} parent=31 // pred_region
        _
      $region36: #{lenet_forward.4} parent=31 // pred_fallthru
        _
    $region32: #{lenet_forward.4} parent=5 // pred_fallthru
      _
    %p1525 = scmp.le.s32.totalorder 2, %s9
    // Predicated region
    $region37: #{lenet_forward.4} parent=5 // pred_check
      %p1526 = pneg %p1525
    $region38: #{lenet_forward.4} parent=5 // pred_check_branch
      %1528 = sbr.rel (%p1526) target = $region40
    $region39: #{lenet_forward.4} parent=5 // pred_region
      %s1529 = ssub.s32 %s9, 2
      // Predicated region
      $region41: #{lenet_forward.4} parent=39 // pred_check
        %p1530 = pneg %p106
      $region42: #{lenet_forward.4} parent=39 // pred_check_branch
        %1532 = sbr.rel (%p1530) target = $region44
      $region43: #{lenet_forward.4} parent=39 // pred_region
        %p1533 = scmp.lt.s32.totalorder %s15, 1
        %s1534 = scalar_select %p1533, %s15, 1
        %s1535 = smul.addr %s1534, 20
        %s1536 = smul.addr %s1535, 8
        %s1537 = scalar_lea.vmem %s3, %s1536
      $region44: #{lenet_forward.4} parent=39 // pred_fallthru
        _
    $region40: #{lenet_forward.4} parent=5 // pred_fallthru
      _
  $region6: #{lenet_forward.4} parent=0 // loop_footer
    %s13 = sadd.s32 1, %s9
  $region7: #{lenet_forward.4} parent=0 // loop_footer_branch
    %8 = sbr.rel target = $region3
  $region8: #{lenet_forward.4} parent=0 // loop_exit
    _

// kernel: lenet_forward.5
$region0: #{lenet_forward.5}
  #allocation0 [shape = 'u32[]', space=smem, size = 0x4, offset = 0x4, fixed_abs, tag = 'smem constant byte address 0x4 - core index']
  #allocation1 [shape = 'u32[72,128]{1,0:T(1,128)}', space=vmem, size = 0x9000, scoped, tag = 'internal scratch']
  %s0 = inlined_call_operand.vmem [shape: bf16[8,800], index: 0, kind: input, shape index: {}]
  %s1 = inlined_call_operand.vmem [shape: bf16[800,120], index: 1, kind: input, shape index: {}]
  %s2 = inlined_call_operand.vmem [shape: f32[1,120], index: 2, kind: input, shape index: {}]
  %s3 = inlined_call_operand.vmem [shape: bf16[120,84], index: 3, kind: input, shape index: {}]
  %s4 = inlined_call_operand.vmem [shape: f32[1,84], index: 4, kind: input, shape index: {}]
  %s5 = inlined_call_operand.vmem [shape: bf16[84,10], index: 5, kind: input, shape index: {}]
  %s6 = inlined_call_operand.vmem [shape: f32[1,10], index: 6, kind: input, shape index: {}]
  %s7 = inlined_call_operand.vmem [shape: f32[8,10], index: 7, kind: output, shape index: {}]
  %s8 = sld [smem:[#allocation0]]
  $region38: #{lenet_forward.5} parent=0
    _
  %s10 = ssub.s32 1, %s8
  %s11 = scalar_select 0, %s10, %s8
  // Predicated region
  $region2: #{lenet_forward.5} parent=0 // pred_check
    _
  $region3: #{lenet_forward.5} parent=0 // pred_check_branch
    %13 = sbr.rel (0) target = $region5
  $region4: #{lenet_forward.5} parent=0 // pred_region
    _
  $region5: #{lenet_forward.5} parent=0 // pred_fallthru
    _
  // Predicated region
  $region6: #{lenet_forward.5} parent=0 // pred_check
    _
  $region7: #{lenet_forward.5} parent=0 // pred_check_branch
    %15 = sbr.rel (0) target = $region9
  $region8: #{lenet_forward.5} parent=0 // pred_region
    _
  $region9: #{lenet_forward.5} parent=0 // pred_fallthru
    _
  // Predicated region
  $region10: #{lenet_forward.5} parent=0 // pred_check
    _
  $region11: #{lenet_forward.5} parent=0 // pred_check_branch
    %17 = sbr.rel (0) target = $region13
  $region12: #{lenet_forward.5} parent=0 // pred_region
    _
  $region13: #{lenet_forward.5} parent=0 // pred_fallthru
    _
  // Predicated region
  $region14: #{lenet_forward.5} parent=0 // pred_check
    _
  $region15: #{lenet_forward.5} parent=0 // pred_check_branch
    %19 = sbr.rel (0) target = $region17
  $region16: #{lenet_forward.5} parent=0 // pred_region
    _
  $region17: #{lenet_forward.5} parent=0 // pred_fallthru
    _
  // Predicated region
  $region18: #{lenet_forward.5} parent=0 // pred_check
    _
  $region19: #{lenet_forward.5} parent=0 // pred_check_branch
    %21 = sbr.rel (0) target = $region21
  $region20: #{lenet_forward.5} parent=0 // pred_region
    _
  $region21: #{lenet_forward.5} parent=0 // pred_fallthru
    _
  // Predicated region
  $region22: #{lenet_forward.5} parent=0 // pred_check
    _
  $region23: #{lenet_forward.5} parent=0 // pred_check_branch
    %23 = sbr.rel (0) target = $region25
  $region24: #{lenet_forward.5} parent=0 // pred_region
    _
  $region25: #{lenet_forward.5} parent=0 // pred_fallthru
    _
  // Predicated region
  $region26: #{lenet_forward.5} parent=0 // pred_check
    _
  $region27: #{lenet_forward.5} parent=0 // pred_check_branch
    %25 = sbr.rel (0) target = $region29
  $region28: #{lenet_forward.5} parent=0 // pred_region
    _
  $region29: #{lenet_forward.5} parent=0 // pred_fallthru
    _
  %v27 = vld [vmem:[%s0] sm:$0xff]
  %v28 = vld [vmem:[%s0 + $0x8] sm:$0xff]
  %v29 = vld [vmem:[%s0 + $0x10] sm:$0xff]
  %v30 = vld [vmem:[%s0 + $0x18] sm:$0xf]
  %v31 = vld [vmem:[%s1] sm:$0xf]
  %v32 = vld [vmem:[%s1 + $0x4] sm:$0xf]
  %v33 = vld [vmem:[%s1 + $0x8] sm:$0xf]
  %v34 = vld [vmem:[%s1 + $0xc] sm:$0xf]
  %v35 = vld [vmem:[%s1 + $0x10] sm:$0xf]
  %v36 = vld [vmem:[%s1 + $0x14] sm:$0xf]
  %v37 = vld [vmem:[%s1 + $0x18] sm:$0xf]
  %v38 = vld [vmem:[%s1 + $0x1c] sm:$0xf]
  %v39 = vld [vmem:[%s1 + $0x20] sm:$0xf]
  %v40 = vld [vmem:[%s1 + $0x24] sm:$0xf]
  %v41 = vld [vmem:[%s1 + $0x28] sm:$0xf]
  %v42 = vld [vmem:[%s1 + $0x2c] sm:$0xf]
  %v43 = vld [vmem:[%s1 + $0x30] sm:$0xf]
  %v44 = vld [vmem:[%s1 + $0x34] sm:$0xf]
  %v45 = vld [vmem:[%s1 + $0x38] sm:$0xf]
  %v46 = vld [vmem:[%s1 + $0x3c] sm:$0xf]
  %v47 = vld [vmem:[%s1 + $0x40] sm:$0xf]
  %v48 = vld [vmem:[%s1 + $0x44] sm:$0xf]
  %v49 = vld [vmem:[%s1 + $0x48] sm:$0xf]
  %v50 = vld [vmem:[%s1 + $0x4c] sm:$0xf]
  %v51 = vld [vmem:[%s1 + $0x50] sm:$0xf]
  %v52 = vld [vmem:[%s1 + $0x54] sm:$0xf]
  %v53 = vld [vmem:[%s1 + $0x58] sm:$0xf]
  %v54 = vld [vmem:[%s1 + $0x5c] sm:$0xf]
  %v55 = vld [vmem:[%s1 + $0x60] sm:$0xf]
  %v56 = vld [vmem:[%s1 + $0x64] sm:$0xf]
  %v57 = vld [vmem:[%s1 + $0x68] sm:$0xf]
  %v58 = vld [vmem:[%s1 + $0x6c] sm:$0xf]
  %v59 = vld [vmem:[%s1 + $0x70] sm:$0xf]
  %v60 = vld [vmem:[%s1 + $0x74] sm:$0xf]
  %v61 = vld [vmem:[%s1 + $0x78] sm:$0xf]
  %v62 = vld [vmem:[%s1 + $0x7c] sm:$0xf]
  %v63 = vld [vmem:[%s1 + $0x80] sm:$0xf]
  %v64 = vld [vmem:[%s1 + $0x84] sm:$0xf]
  %v65 = vld [vmem:[%s1 + $0x88] sm:$0xf]
  %v66 = vld [vmem:[%s1 + $0x8c] sm:$0xf]
  %v67 = vld [vmem:[%s1 + $0x90] sm:$0xf]
  %v68 = vld [vmem:[%s1 + $0x94] sm:$0xf]
  %v69 = vld [vmem:[%s1 + $0x98] sm:$0xf]
  %v70 = vld [vmem:[%s1 + $0x9c] sm:$0xf]
  %v71 = vld [vmem:[%s1 + $0xa0] sm:$0xf]
  %v72 = vld [vmem:[%s1 + $0xa4] sm:$0xf]
  %v73 = vld [vmem:[%s1 + $0xa8] sm:$0xf]
  %v74 = vld [vmem:[%s1 + $0xac] sm:$0xf]
  %v75 = vld [vmem:[%s1 + $0xb0] sm:$0xf]
  %v76 = vld [vmem:[%s1 + $0xb4] sm:$0xf]
  %v77 = vld [vmem:[%s1 + $0xb8] sm:$0xf]
  %v78 = vld [vmem:[%s1 + $0xbc] sm:$0xf]
  %v79 = vld [vmem:[%s1 + $0xc0] sm:$0xf]
  %v80 = vld [vmem:[%s1 + $0xc4] sm:$0xf]
  %v81 = vld [vmem:[%s1 + $0xc8] sm:$0xf]
  %v82 = vld [vmem:[%s1 + $0xcc] sm:$0xf]
  %v83 = vld [vmem:[%s1 + $0xd0] sm:$0xf]
  %v84 = vld [vmem:[%s1 + $0xd4] sm:$0xf]
  %v85 = vld [vmem:[%s1 + $0xd8] sm:$0xf]
  %v86 = vld [vmem:[%s1 + $0xdc] sm:$0xf]
  %v87 = vld [vmem:[%s1 + $0xe0] sm:$0xf]
  %v88 = vld [vmem:[%s1 + $0xe4] sm:$0xf]
  %v89 = vld [vmem:[%s1 + $0xe8] sm:$0xf]
  %v90 = vld [vmem:[%s1 + $0xec] sm:$0xf]
  %v91 = vld [vmem:[%s1 + $0xf0] sm:$0xf]
  %v92 = vld [vmem:[%s1 + $0xf4] sm:$0xf]
  %v93 = vld [vmem:[%s1 + $0xf8] sm:$0xf]
  %v94 = vld [vmem:[%s1 + $0xfc] sm:$0xf]
  %v95 = vld [vmem:[%s1 + $0x100] sm:$0xf]
  %v96 = vld [vmem:[%s1 + $0x104] sm:$0xf]
  %v97 = vld [vmem:[%s1 + $0x108] sm:$0xf]
  %v98 = vld [vmem:[%s1 + $0x10c] sm:$0xf]
  %v99 = vld [vmem:[%s1 + $0x110] sm:$0xf]
  %v100 = vld [vmem:[%s1 + $0x114] sm:$0xf]
  %v101 = vld [vmem:[%s1 + $0x118] sm:$0xf]
  %v102 = vld [vmem:[%s1 + $0x11c] sm:$0xf]
  %v103 = vld [vmem:[%s1 + $0x120] sm:$0xf]
  %v104 = vld [vmem:[%s1 + $0x124] sm:$0xf]
  %v105 = vld [vmem:[%s1 + $0x128] sm:$0xf]
  %v106 = vld [vmem:[%s1 + $0x12c] sm:$0xf]
  %v107 = vld [vmem:[%s1 + $0x130] sm:$0xf]
  %v108 = vld [vmem:[%s1 + $0x134] sm:$0xf]
  %v109 = vld [vmem:[%s1 + $0x138] sm:$0xf]
  %v110 = vld [vmem:[%s1 + $0x13c] sm:$0xf]
  %v111 = vld [vmem:[%s1 + $0x140] sm:$0xf]
  %v112 = vld [vmem:[%s1 + $0x144] sm:$0xf]
  %v113 = vld [vmem:[%s1 + $0x148] sm:$0xf]
  %v114 = vld [vmem:[%s1 + $0x14c] sm:$0xf]
  %v115 = vld [vmem:[%s1 + $0x150] sm:$0xf]
  %v116 = vld [vmem:[%s1 + $0x154] sm:$0xf]
  %v117 = vld [vmem:[%s1 + $0x158] sm:$0xf]
  %v118 = vld [vmem:[%s1 + $0x15c] sm:$0xf]
  %v119 = vld [vmem:[%s1 + $0x160] sm:$0xf]
  %v120 = vld [vmem:[%s1 + $0x164] sm:$0xf]
  %v121 = vld [vmem:[%s1 + $0x168] sm:$0xf]
  %v122 = vld [vmem:[%s1 + $0x16c] sm:$0xf]
  %v123 = vld [vmem:[%s1 + $0x170] sm:$0xf]
  %v124 = vld [vmem:[%s1 + $0x174] sm:$0xf]
  %v125 = vld [vmem:[%s1 + $0x178] sm:$0xf]
  %v126 = vld [vmem:[%s1 + $0x17c] sm:$0xf]
  %v127 = vld [vmem:[%s1 + $0x180] sm:$0xf]
  %v128 = vld [vmem:[%s1 + $0x184] sm:$0xf]
  %v129 = vld [vmem:[%s1 + $0x188] sm:$0xf]
  %v130 = vld [vmem:[%s1 + $0x18c] sm:$0xf]
  %v131 = vld [vmem:[%s2] sm:$0x1]
  %v133 = vperm.slane %v131, 0
  %v139 = vunpack.c.l.b16 %v27
  %v140 = vunpack.c.h.b16 %v27
  %v141 = vunpack.c.l.b16 %v28
  %v142 = vunpack.c.h.b16 %v28
  %v143 = vunpack.c.l.b16 %v29
  %v144 = vunpack.c.h.b16 %v29
  %v145 = vunpack.c.l.b16 %v30
  %v146 = vpack.c.b16 %v139, %v139
  %v147 = vpack.c.b16 %v140, %v140
  %v148 = vpack.c.b16 %v141, %v141
  %v149 = vpack.c.b16 %v142, %v142
  %v150 = vpack.c.b16 %v143, %v143
  %v151 = vpack.c.b16 %v144, %v144
  %v152 = vpack.c.b16 %v145, %v145
  %v259 = vunpack.c.l.b16 %v31
  %v260 = vunpack.c.l.b16 %v32
  %v261 = vunpack.c.l.b16 %v33
  %v262 = vunpack.c.l.b16 %v34
  %v263 = vunpack.c.l.b16 %v35
  %v264 = vunpack.c.l.b16 %v36
  %v265 = vunpack.c.l.b16 %v37
  %v266 = vunpack.c.l.b16 %v38
  %v267 = vunpack.c.l.b16 %v39
  %v268 = vunpack.c.l.b16 %v40
  %v269 = vunpack.c.l.b16 %v41
  %v270 = vunpack.c.l.b16 %v42
  %v271 = vunpack.c.l.b16 %v43
  %v272 = vunpack.c.l.b16 %v44
  %v273 = vunpack.c.l.b16 %v45
  %v274 = vunpack.c.l.b16 %v46
  %v275 = vunpack.c.l.b16 %v47
  %v276 = vunpack.c.l.b16 %v48
  %v277 = vunpack.c.l.b16 %v49
  %v278 = vunpack.c.l.b16 %v50
  %v279 = vunpack.c.l.b16 %v51
  %v280 = vunpack.c.l.b16 %v52
  %v281 = vunpack.c.l.b16 %v53
  %v282 = vunpack.c.l.b16 %v54
  %v283 = vunpack.c.l.b16 %v55
  %v284 = vunpack.c.l.b16 %v56
  %v285 = vunpack.c.l.b16 %v57
  %v286 = vunpack.c.l.b16 %v58
  %v287 = vunpack.c.l.b16 %v59
  %v288 = vunpack.c.l.b16 %v60
  %v289 = vunpack.c.l.b16 %v61
  %v290 = vunpack.c.l.b16 %v62
  %v291 = vunpack.c.l.b16 %v63
  %v292 = vunpack.c.l.b16 %v64
  %v293 = vunpack.c.l.b16 %v65
  %v294 = vunpack.c.l.b16 %v66
  %v295 = vunpack.c.l.b16 %v67
  %v296 = vunpack.c.l.b16 %v68
  %v297 = vunpack.c.l.b16 %v69
  %v298 = vunpack.c.l.b16 %v70
  %v299 = vunpack.c.l.b16 %v71
  %v300 = vunpack.c.l.b16 %v72
  %v301 = vunpack.c.l.b16 %v73
  %v302 = vunpack.c.l.b16 %v74
  %v303 = vunpack.c.l.b16 %v75
  %v304 = vunpack.c.l.b16 %v76
  %v305 = vunpack.c.l.b16 %v77
  %v306 = vunpack.c.l.b16 %v78
  %v307 = vunpack.c.l.b16 %v79
  %v308 = vunpack.c.l.b16 %v80
  %v309 = vunpack.c.l.b16 %v81
  %v310 = vunpack.c.l.b16 %v82
  %v311 = vunpack.c.l.b16 %v83
  %v312 = vunpack.c.l.b16 %v84
  %v313 = vunpack.c.l.b16 %v85
  %v314 = vunpack.c.l.b16 %v86
  %v315 = vunpack.c.l.b16 %v87
  %v316 = vunpack.c.l.b16 %v88
  %v317 = vunpack.c.l.b16 %v89
  %v318 = vunpack.c.l.b16 %v90
  %v319 = vunpack.c.l.b16 %v91
  %v320 = vunpack.c.l.b16 %v92
  %v321 = vunpack.c.l.b16 %v93
  %v322 = vunpack.c.l.b16 %v94
  %v323 = vunpack.c.l.b16 %v95
  %v324 = vunpack.c.l.b16 %v96
  %v325 = vunpack.c.l.b16 %v97
  %v326 = vunpack.c.l.b16 %v98
  %v327 = vunpack.c.l.b16 %v99
  %v328 = vunpack.c.l.b16 %v100
  %v329 = vunpack.c.l.b16 %v101
  %v330 = vunpack.c.l.b16 %v102
  %v331 = vunpack.c.l.b16 %v103
  %v332 = vunpack.c.l.b16 %v104
  %v333 = vunpack.c.l.b16 %v105
  %v334 = vunpack.c.l.b16 %v106
  %v335 = vunpack.c.l.b16 %v107
  %v336 = vunpack.c.l.b16 %v108
  %v337 = vunpack.c.l.b16 %v109
  %v338 = vunpack.c.l.b16 %v110
  %v339 = vunpack.c.l.b16 %v111
  %v340 = vunpack.c.l.b16 %v112
  %v341 = vunpack.c.l.b16 %v113
  %v342 = vunpack.c.l.b16 %v114
  %v343 = vunpack.c.l.b16 %v115
  %v344 = vunpack.c.l.b16 %v116
  %v345 = vunpack.c.l.b16 %v117
  %v346 = vunpack.c.l.b16 %v118
  %v347 = vunpack.c.l.b16 %v119
  %v348 = vunpack.c.l.b16 %v120
  %v349 = vunpack.c.l.b16 %v121
  %v350 = vunpack.c.l.b16 %v122
  %v351 = vunpack.c.l.b16 %v123
  %v352 = vunpack.c.l.b16 %v124
  %v353 = vunpack.c.l.b16 %v125
  %v354 = vunpack.c.l.b16 %v126
  %v355 = vunpack.c.l.b16 %v127
  %v356 = vunpack.c.l.b16 %v128
  %v357 = vunpack.c.l.b16 %v129
  %v358 = vunpack.c.l.b16 %v130
  %v359 = vpack.c.b16 %v260, %v259
  %v360 = vpack.c.b16 %v262, %v261
  %v361 = vpack.c.b16 %v264, %v263
  %v362 = vpack.c.b16 %v266, %v265
  %v363 = vpack.c.b16 %v268, %v267
  %v364 = vpack.c.b16 %v270, %v269
  %v365 = vpack.c.b16 %v272, %v271
  %v366 = vpack.c.b16 %v274, %v273
  %v367 = vpack.c.b16 %v276, %v275
  %v368 = vpack.c.b16 %v278, %v277
  %v369 = vpack.c.b16 %v280, %v279
  %v370 = vpack.c.b16 %v282, %v281
  %v371 = vpack.c.b16 %v284, %v283
  %v372 = vpack.c.b16 %v286, %v285
  %v373 = vpack.c.b16 %v288, %v287
  %v374 = vpack.c.b16 %v290, %v289
  %v375 = vpack.c.b16 %v292, %v291
  %v376 = vpack.c.b16 %v294, %v293
  %v377 = vpack.c.b16 %v296, %v295
  %v378 = vpack.c.b16 %v298, %v297
  %v379 = vpack.c.b16 %v300, %v299
  %v380 = vpack.c.b16 %v302, %v301
  %v381 = vpack.c.b16 %v304, %v303
  %v382 = vpack.c.b16 %v306, %v305
  %v383 = vpack.c.b16 %v308, %v307
  %v384 = vpack.c.b16 %v310, %v309
  %v385 = vpack.c.b16 %v312, %v311
  %v386 = vpack.c.b16 %v314, %v313
  %v387 = vpack.c.b16 %v316, %v315
  %v388 = vpack.c.b16 %v318, %v317
  %v389 = vpack.c.b16 %v320, %v319
  %v390 = vpack.c.b16 %v322, %v321
  %v391 = vpack.c.b16 %v324, %v323
  %v392 = vpack.c.b16 %v326, %v325
  %v393 = vpack.c.b16 %v328, %v327
  %v394 = vpack.c.b16 %v330, %v329
  %v395 = vpack.c.b16 %v332, %v331
  %v396 = vpack.c.b16 %v334, %v333
  %v397 = vpack.c.b16 %v336, %v335
  %v398 = vpack.c.b16 %v338, %v337
  %v399 = vpack.c.b16 %v340, %v339
  %v400 = vpack.c.b16 %v342, %v341
  %v401 = vpack.c.b16 %v344, %v343
  %v402 = vpack.c.b16 %v346, %v345
  %v403 = vpack.c.b16 %v348, %v347
  %v404 = vpack.c.b16 %v350, %v349
  %v405 = vpack.c.b16 %v352, %v351
  %v406 = vpack.c.b16 %v354, %v353
  %v407 = vpack.c.b16 %v356, %v355
  %v408 = vpack.c.b16 %v358, %v357
  %vm459 = vcmask 261120
  %v461 = vsel %vm459, %v152, 0
  %463 = vmatpush.bf16.msra.mxu0 %v366
  %464 = vmatpush.bf16.msra.mxu0 %v365
  %465 = vmatpush.bf16.msra.mxu0 %v364
  %466 = vmatpush.bf16.msra.mxu0 %v363
  %467 = vmatpush.bf16.msra.mxu0 %v362
  %468 = vmatpush.bf16.msra.mxu0 %v361
  %469 = vmatpush.bf16.msra.mxu0 %v360
  %470 = vmatpush.bf16.msra.mxu0 %v359
  %471 = vmatmul.bf16.gmra.mxu0 %v146
  %v472 = vpop.f32.mrf.mxu0
  %v473 = vadd.f32 %v133, %v472
  %v474 = vpop.f32.mrf.mxu0
  %475 = vdwg.mxu0
  %476 = vmatpush.bf16.msra.mxu0 %v374
  %477 = vmatpush.bf16.msra.mxu0 %v373
  %478 = vmatpush.bf16.msra.mxu0 %v372
  %479 = vmatpush.bf16.msra.mxu0 %v371
  %480 = vmatpush.bf16.msra.mxu0 %v370
  %481 = vmatpush.bf16.msra.mxu0 %v369
  %482 = vmatpush.bf16.msra.mxu0 %v368
  %483 = vmatpush.bf16.msra.mxu0 %v367
  %484 = vmatmul.bf16.gmra.mxu0 %v147
  %v485 = vpop.f32.mrf.mxu0
  %v486 = vadd.f32 %v473, %v485
  %v487 = vpop.f32.mrf.mxu0
  %488 = vdwg.mxu0
  %489 = vmatpush.bf16.msra.mxu0 %v382
  %490 = vmatpush.bf16.msra.mxu0 %v381
  %491 = vmatpush.bf16.msra.mxu0 %v380
  %492 = vmatpush.bf16.msra.mxu0 %v379
  %493 = vmatpush.bf16.msra.mxu0 %v378
  %494 = vmatpush.bf16.msra.mxu0 %v377
  %495 = vmatpush.bf16.msra.mxu0 %v376
  %496 = vmatpush.bf16.msra.mxu0 %v375
  %497 = vmatmul.bf16.gmra.mxu0 %v148
  %v498 = vpop.f32.mrf.mxu0
  %v499 = vadd.f32 %v486, %v498
  %v500 = vpop.f32.mrf.mxu0
  %501 = vdwg.mxu0
  %502 = vmatpush.bf16.msra.mxu0 %v390
  %503 = vmatpush.bf16.msra.mxu0 %v389
  %504 = vmatpush.bf16.msra.mxu0 %v388
  %505 = vmatpush.bf16.msra.mxu0 %v387
  %506 = vmatpush.bf16.msra.mxu0 %v386
  %507 = vmatpush.bf16.msra.mxu0 %v385
  %508 = vmatpush.bf16.msra.mxu0 %v384
  %509 = vmatpush.bf16.msra.mxu0 %v383
  %510 = vmatmul.bf16.gmra.mxu0 %v149
  %v511 = vpop.f32.mrf.mxu0
  %v512 = vadd.f32 %v499, %v511
  %v513 = vpop.f32.mrf.mxu0
  %514 = vdwg.mxu0
  %515 = vmatpush.bf16.msra.mxu0 %v398
  %516 = vmatpush.bf16.msra.mxu0 %v397
  %517 = vmatpush.bf16.msra.mxu0 %v396
  %518 = vmatpush.bf16.msra.mxu0 %v395
  %519 = vmatpush.bf16.msra.mxu0 %v394
  %520 = vmatpush.bf16.msra.mxu0 %v393
  %521 = vmatpush.bf16.msra.mxu0 %v392
  %522 = vmatpush.bf16.msra.mxu0 %v391
  %523 = vmatmul.bf16.gmra.mxu0 %v150
  %v524 = vpop.f32.mrf.mxu0
  %v525 = vadd.f32 %v512, %v524
  %v526 = vpop.f32.mrf.mxu0
  %527 = vdwg.mxu0
  %528 = vmatpush.bf16.msra.mxu0 %v406
  %529 = vmatpush.bf16.msra.mxu0 %v405
  %530 = vmatpush.bf16.msra.mxu0 %v404
  %531 = vmatpush.bf16.msra.mxu0 %v403
  %532 = vmatpush.bf16.msra.mxu0 %v402
  %533 = vmatpush.bf16.msra.mxu0 %v401
  %534 = vmatpush.bf16.msra.mxu0 %v400
  %535 = vmatpush.bf16.msra.mxu0 %v399
  %536 = vmatmul.bf16.gmra.mxu0 %v151
  %v537 = vpop.f32.mrf.mxu0
  %v538 = vadd.f32 %v525, %v537
  %v539 = vpop.f32.mrf.mxu0
  %540 = vdwg.mxu0
  %541 = vmatpush.bf16.msra.mxu0 0
  %542 = vmatpush.bf16.msra.mxu0 0
  %543 = vmatpush.bf16.msra.mxu0 0
  %544 = vmatpush.bf16.msra.mxu0 0
  %545 = vmatpush.bf16.msra.mxu0 0
  %546 = vmatpush.bf16.msra.mxu0 0
  %547 = vmatpush.bf16.msra.mxu0 %v408
  %548 = vmatpush.bf16.msra.mxu0 %v407
  %549 = vmatmul.bf16.gmra.mxu0 %v461
  %v550 = vpop.f32.mrf.mxu0
  %v551 = vadd.f32 %v538, %v550
  %v552 = vpop.f32.mrf.mxu0
  %553 = vdwg.mxu0
  %v554 = vmax.f32 %v551, 0.0
  %v555 = vpack.c.bf16 %v554, %v554
  %v556 = vld [vmem:[%s3] sm:$0xf]
  %v557 = vld [vmem:[%s3 + $0x4] sm:$0xf]
  %v558 = vld [vmem:[%s3 + $0x8] sm:$0xf]
  %v559 = vld [vmem:[%s3 + $0xc] sm:$0xf]
  %v560 = vld [vmem:[%s3 + $0x10] sm:$0xf]
  %v561 = vld [vmem:[%s3 + $0x14] sm:$0xf]
  %v562 = vld [vmem:[%s3 + $0x18] sm:$0xf]
  %v563 = vld [vmem:[%s3 + $0x1c] sm:$0xf]
  %v564 = vld [vmem:[%s3 + $0x20] sm:$0xf]
  %v565 = vld [vmem:[%s3 + $0x24] sm:$0xf]
  %v566 = vld [vmem:[%s3 + $0x28] sm:$0xf]
  %v567 = vld [vmem:[%s3 + $0x2c] sm:$0xf]
  %v568 = vld [vmem:[%s3 + $0x30] sm:$0xf]
  %v569 = vld [vmem:[%s3 + $0x34] sm:$0xf]
  %v570 = vld [vmem:[%s3 + $0x38] sm:$0xf]
  %v571 = vld [vmem:[%s4] sm:$0x1]
  %v573 = vperm.slane %v571, 0
  %v590 = vunpack.c.l.b16 %v556
  %v591 = vunpack.c.l.b16 %v557
  %v592 = vunpack.c.l.b16 %v558
  %v593 = vunpack.c.l.b16 %v559
  %v594 = vunpack.c.l.b16 %v560
  %v595 = vunpack.c.l.b16 %v561
  %v596 = vunpack.c.l.b16 %v562
  %v597 = vunpack.c.l.b16 %v563
  %v598 = vunpack.c.l.b16 %v564
  %v599 = vunpack.c.l.b16 %v565
  %v600 = vunpack.c.l.b16 %v566
  %v601 = vunpack.c.l.b16 %v567
  %v602 = vunpack.c.l.b16 %v568
  %v603 = vunpack.c.l.b16 %v569
  %v604 = vunpack.c.l.b16 %v570
  %v605 = vpack.c.b16 %v591, %v590
  %v606 = vpack.c.b16 %v593, %v592
  %v607 = vpack.c.b16 %v595, %v594
  %v608 = vpack.c.b16 %v597, %v596
  %v609 = vpack.c.b16 %v599, %v598
  %v610 = vpack.c.b16 %v601, %v600
  %v611 = vpack.c.b16 %v603, %v602
  %v612 = vpack.c.b16 %v604, %v604
  %vm620 = vcmask 982016
  %v622 = vsel %vm620, %v555, 0
  %vm624 = vcmask 1043456
  %v626 = vsel %vm624, %v612, 0
  %628 = vmatpush.bf16.msra.mxu0 %v626
  %629 = vmatpush.bf16.msra.mxu0 %v611
  %630 = vmatpush.bf16.msra.mxu0 %v610
  %631 = vmatpush.bf16.msra.mxu0 %v609
  %632 = vmatpush.bf16.msra.mxu0 %v608
  %633 = vmatpush.bf16.msra.mxu0 %v607
  %634 = vmatpush.bf16.msra.mxu0 %v606
  %635 = vmatpush.bf16.msra.mxu0 %v605
  %636 = vmatmul.bf16.gmra.mxu0 %v622
  %v637 = vpop.f32.mrf.mxu0
  %v638 = vadd.f32 %v573, %v637
  %v639 = vpop.f32.mrf.mxu0
  %640 = vdwg.mxu0
  %v641 = vmax.f32 %v638, 0.0
  %v642 = vpack.c.bf16 %v641, %v641
  %v643 = vld [vmem:[%s5] sm:$0xf]
  %v644 = vld [vmem:[%s5 + $0x4] sm:$0xf]
  %v645 = vld [vmem:[%s5 + $0x8] sm:$0xf]
  %v646 = vld [vmem:[%s5 + $0xc] sm:$0xf]
  %v647 = vld [vmem:[%s5 + $0x10] sm:$0xf]
  %v648 = vld [vmem:[%s5 + $0x14] sm:$0xf]
  %v649 = vld [vmem:[%s5 + $0x18] sm:$0xf]
  %v650 = vld [vmem:[%s5 + $0x1c] sm:$0xf]
  %v651 = vld [vmem:[%s5 + $0x20] sm:$0xf]
  %v652 = vld [vmem:[%s5 + $0x24] sm:$0xf]
  %v653 = vld [vmem:[%s5 + $0x28] sm:$0x3]
  %v654 = vld [vmem:[%s6] sm:$0x1]
  %v656 = vperm.slane %v654, 0
  %v669 = vunpack.c.l.b16 %v643
  %v670 = vunpack.c.l.b16 %v644
  %v671 = vunpack.c.l.b16 %v645
  %v672 = vunpack.c.l.b16 %v646
  %v673 = vunpack.c.l.b16 %v647
  %v674 = vunpack.c.l.b16 %v648
  %v675 = vunpack.c.l.b16 %v649
  %v676 = vunpack.c.l.b16 %v650
  %v677 = vunpack.c.l.b16 %v651
  %v678 = vunpack.c.l.b16 %v652
  %v679 = vunpack.c.l.b16 %v653
  %v680 = vpack.c.b16 %v670, %v669
  %v681 = vpack.c.b16 %v672, %v671
  %v682 = vpack.c.b16 %v674, %v673
  %v683 = vpack.c.b16 %v676, %v675
  %v684 = vpack.c.b16 %v678, %v677
  %v685 = vpack.c.b16 %v679, %v679
  %vm691 = vcmask 687104
  %v693 = vsel %vm691, %v642, 0
  %vm695 = vcmask 1041408
  %v697 = vsel %vm695, %v685, 0
  %699 = vmatpush.bf16.msra.mxu0 0
  %700 = vmatpush.bf16.msra.mxu0 0
  %701 = vmatpush.bf16.msra.mxu0 %v697
  %702 = vmatpush.bf16.msra.mxu0 %v684
  %703 = vmatpush.bf16.msra.mxu0 %v683
  %704 = vmatpush.bf16.msra.mxu0 %v682
  %705 = vmatpush.bf16.msra.mxu0 %v681
  %706 = vmatpush.bf16.msra.mxu0 %v680
  %707 = vmatmul.bf16.gmra.mxu0 %v693
  %v708 = vpop.f32.mrf.mxu0
  %v709 = vadd.f32 %v656, %v708
  %v710 = vpop.f32.mrf.mxu0
  %711 = vdwg.mxu0
  %v712 = vmax.f32 %v709, 0.0
  %vm713 = vcmask 80896
  %714 = vst.msk [vmem:[%s7] sm:$0xff] %vm713, %v712
  // Predicated region
  $region30: #{lenet_forward.5} parent=0 // pred_check
    _
  $region31: #{lenet_forward.5} parent=0 // pred_check_branch
    %716 = sbr.rel (0) target = $region33
  $region32: #{lenet_forward.5} parent=0 // pred_region
    _
  $region33: #{lenet_forward.5} parent=0 // pred_fallthru
    _
  // Predicated region
  $region34: #{lenet_forward.5} parent=0 // pred_check
    _
  $region35: #{lenet_forward.5} parent=0 // pred_check_branch
    %718 = sbr.rel (0) target = $region37
  $region36: #{lenet_forward.5} parent=0 // pred_region
    _
  $region37: #{lenet_forward.5} parent=0 // pred_fallthru
    _

</llo_original>
